<compile_context>
chip_gen: v5e
topology: v5e:2x2
jax: 0.10.0
libtpu: 0.0.40
codegen_flags: <defaults>
</compile_context>

<pallas_src>
import functools

import jax
import jax.numpy as jnp
from jax.experimental import pallas as pl
from jax.experimental.pallas import tpu as pltpu

EPS = 1e-5

# Matmul operand dtype.  Set to jnp.bfloat16 on v6e/v7x for ~2x MXU throughput and
# half the operand DMA bytes (accumulation stays f32 via preferred_element_type).
# Kept at f32 by default so results match the f32 PyTorch reference tightly.
MATMUL_DTYPE = jnp.float32

# Per-grid-step output-block budget.  Small enough to double-buffer comfortably on
# v7x (64 MiB VMEM/TC) and leave headroom on v5e/v6e (128 MiB); raise for big images.
_TILE_BYTES_BUDGET = 2 * 1024 * 1024
_VMEM_LIMIT_BYTES = 48 * 1024 * 1024   # < v7x physical 64 MiB, > default scoped limit


def _round_up(v, m):
    return ((v + m - 1) // m) * m


def _compiler_params():
    return pltpu.CompilerParams(
        dimension_semantics=("parallel", "parallel"),
        vmem_limit_bytes=_VMEM_LIMIT_BYTES,
    )


def _pick_tile_h(H, wp, cp):
    """Largest row-tile TH that divides H, keeps TH*wp a multiple of 8 (aligned,
    unmasked stores) and fits the per-step output-block budget.  Falls back to the
    full image (single tile) if no such divisor exists."""
    best = H
    for th in range(1, max(H // 2, 1) + 1):
        if H % th != 0:
            continue
        if (th * wp) % 8 != 0:
            continue
        if th * wp * cp * 4 > _TILE_BYTES_BUDGET:
            continue
        best = th
    return best


def _flatten_pad(x_nhwc, k, pad_value):
    """Pad spatially for a kxk window (top p, bottom p+1, left/right p) and flatten
    (H', W') into one axis so every in-kernel tap is a contiguous 2-D slice."""
    p = (k - 1) // 2
    N, H, W, C = x_nhwc.shape
    xp = jnp.pad(x_nhwc, ((0, 0), (p, p + 1), (p, p), (0, 0)),
                 constant_values=pad_value)
    wp = W + 2 * p
    return xp.reshape(N, (H + k) * wp, C), wp


# ---------------------------------------------------------------------------
# Pallas kernels
# ---------------------------------------------------------------------------
def _stage1_kernel(x_ref, w_ref, s_ref, b_ref, o_ref, *, wp):
    """Fused: [1x1 convs for b1 / b2_red / b3_red] + [maxpool3x3(s1,p1) -> 1x1 conv].

    x_ref: (1, (H+3)*wp, Cin)  flattened, -BIG padded image (resident per batch elem)
    w_ref: (2, Cin, Cp)        [0]: columns for the three 1x1 convs (input = x)
                               [1]: columns for the pool-branch 1x1 conv (input = pool(x))
    s_ref, b_ref: (1, Cp)      folded BatchNorm scale / bias (0 on padded channels)
    o_ref: (1, TH*wp, Cp)      lane-dense output tile
    """
    h = pl.program_id(1)
    _, m, _ = o_ref.shape
    start = pl.multiple_of(h * m, 8)
    seg = x_ref[0, pl.ds(start, m + 3 * wp), :]           # (m + 3*wp, Cin)

    center = seg[wp + 1: wp + 1 + m, :]                   # the original x tile
    pooled = center
    for dh in range(3):
        for dw in range(3):
            if dh == 1 and dw == 1:
                continue
            off = dh * wp + dw
            pooled = jnp.maximum(pooled, seg[off: off + m, :])

    acc = jnp.dot(center.astype(w_ref.dtype), w_ref[0],
                  preferred_element_type=jnp.float32)
    acc = acc + jnp.dot(pooled.astype(w_ref.dtype), w_ref[1],
                        preferred_element_type=jnp.float32)
    y = jnp.maximum(acc * s_ref[...] + b_ref[...], 0.0)
    o_ref[0] = y.astype(o_ref.dtype)


def _conv_bn_relu_kernel(x_ref, w_ref, s_ref, b_ref, o_ref, *, k, wp):
    """kxk conv (stride 1, 'same') + folded BN + ReLU as k*k accumulated matmuls.

    x_ref: (1, (H+k)*wp, Cin)  flattened, zero-padded input (resident per batch elem)
    w_ref: (k*k, Cin, Cp)      per-tap weight matrices, Cp = round_up(Cout, 128)
    o_ref: (1, TH*wp, Cp)
    """
    h = pl.program_id(1)
    _, m, cp = o_ref.shape
    start = pl.multiple_of(h * m, 8)
    seg = x_ref[0, pl.ds(start, m + k * wp), :]           # (m + k*wp, Cin)

    acc = jnp.zeros((m, cp), jnp.float32)
    for dh in range(k):
        for dw in range(k):
            off = dh * wp + dw
            tap = seg[off: off + m, :]
            acc = acc + jnp.dot(tap.astype(w_ref.dtype), w_ref[dh * k + dw],
                                preferred_element_type=jnp.float32)
    y = jnp.maximum(acc * s_ref[...] + b_ref[...], 0.0)
    o_ref[0] = y.astype(o_ref.dtype)


# ---------------------------------------------------------------------------
# pallas_call wrappers
# ---------------------------------------------------------------------------
def stage1_fused(x_nhwc, w2, scale, bias):
    N, H, W, Cin = x_nhwc.shape
    Cp = w2.shape[-1]
    # Maxpool padding is "-inf"; a finite lowest is identical (center pixel is always
    # real) and avoids inf*0 NaNs in the discarded wrap columns.
    xf, wp = _flatten_pad(x_nhwc, 3, jnp.finfo(jnp.float32).min)
    TH = _pick_tile_h(H, wp, Cp)
    m = TH * wp

    out = pl.pallas_call(
        functools.partial(_stage1_kernel, wp=wp),
        out_shape=jax.ShapeDtypeStruct((N, H * wp, Cp), x_nhwc.dtype),
        grid=(N, H // TH),
        in_specs=[
            pl.BlockSpec((1, (H + 3) * wp, Cin), lambda n, h: (n, 0, 0)),
            pl.BlockSpec((2, Cin, Cp), lambda n, h: (0, 0, 0)),
            pl.BlockSpec((1, Cp), lambda n, h: (0, 0)),
            pl.BlockSpec((1, Cp), lambda n, h: (0, 0)),
        ],
        out_specs=pl.BlockSpec((1, m, Cp), lambda n, h: (n, h, 0)),
        compiler_params=_compiler_params(),
    )(xf, w2, scale.reshape(1, Cp), bias.reshape(1, Cp))
    # drop the wrap columns computed at padded-width positions
    return out.reshape(N, H, wp, Cp)[:, :, :W, :]


def conv_bn_relu(x_nhwc, w_taps, scale, bias, k):
    N, H, W, Cin = x_nhwc.shape
    Cp = w_taps.shape[-1]
    xf, wp = _flatten_pad(x_nhwc, k, 0.0)
    TH = _pick_tile_h(H, wp, Cp)
    m = TH * wp

    out = pl.pallas_call(
        functools.partial(_conv_bn_relu_kernel, k=k, wp=wp),
        out_shape=jax.ShapeDtypeStruct((N, H * wp, Cp), x_nhwc.dtype),
        grid=(N, H // TH),
        in_specs=[
            pl.BlockSpec((1, (H + k) * wp, Cin), lambda n, h: (n, 0, 0)),
            pl.BlockSpec((k * k, Cin, Cp), lambda n, h: (0, 0, 0)),
            pl.BlockSpec((1, Cp), lambda n, h: (0, 0)),
            pl.BlockSpec((1, Cp), lambda n, h: (0, 0)),
        ],
        out_specs=pl.BlockSpec((1, m, Cp), lambda n, h: (n, h, 0)),
        compiler_params=_compiler_params(),
    )(xf, w_taps, scale.reshape(1, Cp), bias.reshape(1, Cp))
    return out.reshape(N, H, wp, Cp)[:, :, :W, :]


# ---------------------------------------------------------------------------
# Parameter folding / packing
# ---------------------------------------------------------------------------
def _fold_bn(p):
    weight, conv_bias, gamma, beta, r_mean, r_var = p
    scale = gamma / jnp.sqrt(r_var + EPS)
    bias = scale * (conv_bias - r_mean) + beta
    return scale, bias


def prepare_inception_params(params, matmul_dtype=jnp.float32):
    p1, p2r, p2o = params["b1"], params["b2_red"], params["b2_out"]
    p3r, p3o, p4 = params["b3_red"], params["b3_out"], params["b4_out"]
    cin = p1[0].shape[1]

    def w_1x1(p):                                  # (Cout, Cin, 1, 1) -> (Cin, Cout)
        return p[0].reshape(p[0].shape[0], cin).T

    sizes = (p1[0].shape[0], p2r[0].shape[0], p3r[0].shape[0], p4[0].shape[0])
    c123 = sizes[0] + sizes[1] + sizes[2]
    c_tot = c123 + sizes[3]
    cp1 = _round_up(c_tot, 128)                    # lane-dense stage-1 channel count

    w_s1 = jnp.zeros((2, cin, cp1), jnp.float32)
    w_s1 = w_s1.at[0, :, :c123].set(
        jnp.concatenate([w_1x1(p1), w_1x1(p2r), w_1x1(p3r)], axis=1))
    w_s1 = w_s1.at[1, :, c123:c_tot].set(w_1x1(p4))

    sb = [_fold_bn(p) for p in (p1, p2r, p3r, p4)]
    s_s1 = jnp.zeros((cp1,), jnp.float32).at[:c_tot].set(
        jnp.concatenate([s for s, _ in sb]))
    b_s1 = jnp.zeros((cp1,), jnp.float32).at[:c_tot].set(
        jnp.concatenate([b for _, b in sb]))

    def conv_taps(p, k):
        w = p[0]                                   # (Cout, Cin_r, k, k)
        cout, cin_r = w.shape[0], w.shape[1]
        cp = _round_up(cout, 128)
        taps = jnp.zeros((k * k, cin_r, cp), jnp.float32)
        taps = taps.at[:, :, :cout].set(
            jnp.transpose(w, (2, 3, 1, 0)).reshape(k * k, cin_r, cout))
        s, b = _fold_bn(p)
        sp = jnp.zeros((cp,), jnp.float32).at[:cout].set(s)
        bp = jnp.zeros((cp,), jnp.float32).at[:cout].set(b)
        return taps.astype(matmul_dtype), sp, bp, cout

    w3, s3, bb3, out3 = conv_taps(p2o, 3)
    w5, s5, bb5, out5 = conv_taps(p3o, 5)

    return dict(
        w_s1=w_s1.astype(matmul_dtype), s_s1=s_s1, b_s1=b_s1, splits=sizes,
        w3=w3, s3=s3, bb3=bb3, out3=out3,
        w5=w5, s5=s5, bb5=bb5, out5=out5)


# ---------------------------------------------------------------------------
# InceptionBlock forward
# ---------------------------------------------------------------------------
def inception_block(x_nchw, prep):
    x = jnp.transpose(x_nchw, (0, 2, 3, 1))                 # -> NHWC
    s1 = stage1_fused(x, prep["w_s1"], prep["s_s1"], prep["b_s1"])

    o1, r3, r5, opool = prep["splits"]
    b1 = s1[..., :o1]
    b2r = s1[..., o1:o1 + r3]
    b3r = s1[..., o1 + r3:o1 + r3 + r5]
    b4 = s1[..., o1 + r3 + r5:o1 + r3 + r5 + opool]

    b2 = conv_bn_relu(b2r, prep["w3"], prep["s3"], prep["bb3"], 3)[..., :prep["out3"]]
    b3 = conv_bn_relu(b3r, prep["w5"], prep["s5"], prep["bb5"], 5)[..., :prep["out5"]]

    # TODO(synk): have each branch kernel write its channel slice of one preallocated
    # NHWC buffer (input_output_aliases) so this XLA concat + transpose disappears.
    out = jnp.concatenate([b1, b2, b3, b4], axis=-1)
    return jnp.transpose(out, (0, 3, 1, 2))                 # -> NCHW (torch.cat dim=1)


# ---------------------------------------------------------------------------
# Deterministic synthetic parameters
# ---------------------------------------------------------------------------
def make_convblock_params(key, cin, cout, k):
    k_w, k_b, k_g, k_be, k_m, k_v = jax.random.split(key, 6)
    weight = 0.1 * jax.random.normal(k_w, (cout, cin, k, k), jnp.float32)
    conv_bias = 0.1 * jax.random.normal(k_b, (cout,), jnp.float32)
    gamma = 1.0 + 0.1 * jax.random.normal(k_g, (cout,), jnp.float32)
    beta = 0.1 * jax.random.normal(k_be, (cout,), jnp.float32)
    r_mean = 0.1 * jax.random.normal(k_m, (cout,), jnp.float32)
    r_var = jnp.abs(jax.random.normal(k_v, (cout,), jnp.float32)) + 0.5
    return (weight, conv_bias, gamma, beta, r_mean, r_var)


# ---------------------------------------------------------------------------
# Pure-JAX reference (correctness check)
# ---------------------------------------------------------------------------
def _ref_conv_bn_relu(x_nhwc, params, k):
    weight, conv_bias, gamma, beta, r_mean, r_var = params
    pad = (k - 1) // 2
    w_hwio = jnp.transpose(weight, (2, 3, 1, 0))
    y = jax.lax.conv_general_dilated(
        x_nhwc, w_hwio, (1, 1), [(pad, pad), (pad, pad)],
        dimension_numbers=("NHWC", "HWIO", "NHWC")) + conv_bias
    scale = gamma / jnp.sqrt(r_var + EPS)
    return jnp.maximum(scale * (y - r_mean) + beta, 0.0)


def _ref_maxpool(x_nhwc):
    return jax.lax.reduce_window(
        x_nhwc, -jnp.inf, jax.lax.max, (1, 3, 3, 1), (1, 1, 1, 1),
        [(0, 0), (1, 1), (1, 1), (0, 0)])


def _ref_inception(x_nchw, params):
    x = jnp.transpose(x_nchw, (0, 2, 3, 1))
    b1 = _ref_conv_bn_relu(x, params["b1"], 1)
    b2 = _ref_conv_bn_relu(_ref_conv_bn_relu(x, params["b2_red"], 1), params["b2_out"], 3)
    b3 = _ref_conv_bn_relu(_ref_conv_bn_relu(x, params["b3_red"], 1), params["b3_out"], 5)
    b4 = _ref_conv_bn_relu(_ref_maxpool(x), params["b4_out"], 1)
    out = jnp.concatenate([b1, b2, b3, b4], axis=-1)
    return jnp.transpose(out, (0, 3, 1, 2))


# ---------------------------------------------------------------------------
if __name__ == "__main__":
    # Small InceptionBlock config:
    #   in_channels=4, out_1x1=8, red_3x3=4, out_3x3=8, red_5x5=4, out_5x5=8, out_pool=8
    in_channels, out_1x1 = 4, 8
    red_3x3, out_3x3 = 4, 8
    red_5x5, out_5x5 = 4, 8
    out_pool = 8

    root = jax.random.PRNGKey(0)
    k_x, k1, k2a, k2b, k3a, k3b, k4 = jax.random.split(root, 7)

    params = {
        "b1":     make_convblock_params(k1, in_channels, out_1x1, 1),
        "b2_red": make_convblock_params(k2a, in_channels, red_3x3, 1),
        "b2_out": make_convblock_params(k2b, red_3x3, out_3x3, 3),
        "b3_red": make_convblock_params(k3a, in_channels, red_5x5, 1),
        "b3_out": make_convblock_params(k3b, red_5x5, out_5x5, 5),
        "b4_out": make_convblock_params(k4, in_channels, out_pool, 1),
    }

    x = jax.random.normal(k_x, (2, in_channels, 16, 16), jnp.float32)  # NCHW

    prep = prepare_inception_params(params, matmul_dtype=MATMUL_DTYPE)
    fwd = jax.jit(lambda t: inception_block(t, prep))

    out = jax.block_until_ready(fwd(x))
    ref = jax.block_until_ready(_ref_inception(x, params))

    assert out.shape == (2, out_1x1 + out_3x3 + out_5x5 + out_pool, 16, 16), out.shape
    max_err = jnp.max(jnp.abs(out - ref))
    assert jnp.allclose(out, ref, atol=1e-3, rtol=1e-3), f"max abs diff {max_err}"

    print("KERNEL_OK")
</pallas_src>

<mosaic_0001>
module attributes {stable_mosaic.version = 11 : i64} {
  func.func @_stage1_kernel(%arg0: i32, %arg1: i32, %arg2: memref<1x342x4xf32, #tpu.memory_space<vmem>>, %arg3: memref<2x4x128xf32, #tpu.memory_space<vmem>>, %arg4: memref<1x128xf32, #tpu.memory_space<vmem>>, %arg5: memref<1x128xf32, #tpu.memory_space<vmem>>, %arg6: memref<1x144x128xf32, #tpu.memory_space<vmem>>) attributes {dimension_semantics = [#tpu.dimension_semantics<parallel>, #tpu.dimension_semantics<parallel>], iteration_bounds = array<i64: 2, 2>, scalar_prefetch = 0 : i64, scratch_operands = 0 : i64, tpu.core_type = #tpu.core_type<tc>, window_params = [{transform_indices = @transform_0, window_bounds = array<i64: 1, 342, 4>}, {pipeline_mode = #tpu.pipeline_mode<synchronous>, transform_indices = @transform_1, window_bounds = array<i64: 2, 4, 128>}, {pipeline_mode = #tpu.pipeline_mode<synchronous>, transform_indices = @transform_2, window_bounds = array<i64: 1, 128>}, {pipeline_mode = #tpu.pipeline_mode<synchronous>, transform_indices = @transform_3, window_bounds = array<i64: 1, 128>}, {transform_indices = @transform_4, window_bounds = array<i64: 1, 144, 128>}]} {
    %c144_i32 = arith.constant 144 : i32
    %0 = arith.muli %arg1, %c144_i32 : i32
    %1 = tpu.assume_multiple %0, 8 : i32
    %c0 = arith.constant 0 : index
    %2 = arith.index_cast %1 : i32 to index
    %c0_0 = arith.constant 0 : index
    %3 = vector.load %arg2[%c0, %2, %c0_0] : memref<1x342x4xf32, #tpu.memory_space<vmem>>, vector<1x198x4xf32>
    %4 = vector.shape_cast %3 : vector<1x198x4xf32> to vector<198x4xf32>
    %5 = vector.extract_strided_slice %4 {offsets = [19, 0], sizes = [144, 4], strides = [1, 1]} : vector<198x4xf32> to vector<144x4xf32>
    %6 = vector.extract_strided_slice %4 {offsets = [0, 0], sizes = [144, 4], strides = [1, 1]} : vector<198x4xf32> to vector<144x4xf32>
    %7 = arith.maximumf %5, %6 : vector<144x4xf32>
    %8 = vector.extract_strided_slice %4 {offsets = [1, 0], sizes = [144, 4], strides = [1, 1]} : vector<198x4xf32> to vector<144x4xf32>
    %9 = arith.maximumf %7, %8 : vector<144x4xf32>
    %10 = vector.extract_strided_slice %4 {offsets = [2, 0], sizes = [144, 4], strides = [1, 1]} : vector<198x4xf32> to vector<144x4xf32>
    %11 = arith.maximumf %9, %10 : vector<144x4xf32>
    %12 = vector.extract_strided_slice %4 {offsets = [18, 0], sizes = [144, 4], strides = [1, 1]} : vector<198x4xf32> to vector<144x4xf32>
    %13 = arith.maximumf %11, %12 : vector<144x4xf32>
    %14 = vector.extract_strided_slice %4 {offsets = [20, 0], sizes = [144, 4], strides = [1, 1]} : vector<198x4xf32> to vector<144x4xf32>
    %15 = arith.maximumf %13, %14 : vector<144x4xf32>
    %16 = vector.extract_strided_slice %4 {offsets = [36, 0], sizes = [144, 4], strides = [1, 1]} : vector<198x4xf32> to vector<144x4xf32>
    %17 = arith.maximumf %15, %16 : vector<144x4xf32>
    %18 = vector.extract_strided_slice %4 {offsets = [37, 0], sizes = [144, 4], strides = [1, 1]} : vector<198x4xf32> to vector<144x4xf32>
    %19 = arith.maximumf %17, %18 : vector<144x4xf32>
    %20 = vector.extract_strided_slice %4 {offsets = [38, 0], sizes = [144, 4], strides = [1, 1]} : vector<198x4xf32> to vector<144x4xf32>
    %21 = arith.maximumf %19, %20 : vector<144x4xf32>
    %c0_1 = arith.constant 0 : index
    %c0_2 = arith.constant 0 : index
    %c0_3 = arith.constant 0 : index
    %22 = vector.load %arg3[%c0_1, %c0_2, %c0_3] : memref<2x4x128xf32, #tpu.memory_space<vmem>>, vector<1x4x128xf32>
    %23 = vector.shape_cast %22 : vector<1x4x128xf32> to vector<4x128xf32>
    %cst = arith.constant dense<0.000000e+00> : vector<144x128xf32>
    %24 = tpu.matmul %5, %23, %cst {dimension_numbers = #tpu.dot_dimension_numbers<[1], [0], [0], [1], [0, 0, 1, 1], [], []>} : vector<144x4xf32>, vector<4x128xf32>, vector<144x128xf32> -> vector<144x128xf32>
    %c1 = arith.constant 1 : index
    %c0_4 = arith.constant 0 : index
    %c0_5 = arith.constant 0 : index
    %25 = vector.load %arg3[%c1, %c0_4, %c0_5] : memref<2x4x128xf32, #tpu.memory_space<vmem>>, vector<1x4x128xf32>
    %26 = vector.shape_cast %25 : vector<1x4x128xf32> to vector<4x128xf32>
    %cst_6 = arith.constant dense<0.000000e+00> : vector<144x128xf32>
    %27 = tpu.matmul %21, %26, %cst_6 {dimension_numbers = #tpu.dot_dimension_numbers<[1], [0], [0], [1], [0, 0, 1, 1], [], []>} : vector<144x4xf32>, vector<4x128xf32>, vector<144x128xf32> -> vector<144x128xf32>
    %28 = arith.addf %24, %27 : vector<144x128xf32>
    %c0_7 = arith.constant 0 : index
    %c0_8 = arith.constant 0 : index
    %29 = vector.load %arg4[%c0_7, %c0_8] : memref<1x128xf32, #tpu.memory_space<vmem>>, vector<1x128xf32>
    %30 = vector.broadcast %29 : vector<1x128xf32> to vector<144x128xf32>
    %31 = arith.mulf %28, %30 : vector<144x128xf32>
    %c0_9 = arith.constant 0 : index
    %c0_10 = arith.constant 0 : index
    %32 = vector.load %arg5[%c0_9, %c0_10] : memref<1x128xf32, #tpu.memory_space<vmem>>, vector<1x128xf32>
    %33 = vector.broadcast %32 : vector<1x128xf32> to vector<144x128xf32>
    %34 = arith.addf %31, %33 : vector<144x128xf32>
    %cst_11 = arith.constant 0.000000e+00 : f32
    %35 = vector.broadcast %cst_11 : f32 to vector<144x128xf32>
    %36 = arith.maximumf %34, %35 : vector<144x128xf32>
    %c0_12 = arith.constant 0 : index
    %c0_13 = arith.constant 0 : index
    %c0_14 = arith.constant 0 : index
    %37 = vector.load %arg6[%c0_12, %c0_13, %c0_14] : memref<1x144x128xf32, #tpu.memory_space<vmem>>, vector<1x144x128xf32>
    %38 = vector.shape_cast %37 : vector<1x144x128xf32> to vector<144x128xf32>
    %39 = vector.shape_cast %36 : vector<144x128xf32> to vector<1x144x128xf32>
    tpu.vector_store %arg6[%c0_12, %c0_13, %c0_14], %39 {strides = array<i32>} : memref<1x144x128xf32, #tpu.memory_space<vmem>>, vector<1x144x128xf32>,
    return
  }
  func.func @transform_0(%arg0: i32, %arg1: i32) -> (i32, i32, i32) {
    %c0_i32 = arith.constant 0 : i32
    %c0_i32_0 = arith.constant 0 : i32
    %c0_i32_1 = arith.constant 0 : i32
    return %arg0, %c0_i32, %c0_i32_0 : i32, i32, i32
  }
  func.func @transform_1(%arg0: i32, %arg1: i32) -> (i32, i32, i32) {
    %c0_i32 = arith.constant 0 : i32
    %c0_i32_0 = arith.constant 0 : i32
    %c0_i32_1 = arith.constant 0 : i32
    %c0_i32_2 = arith.constant 0 : i32
    return %c0_i32, %c0_i32_0, %c0_i32_1 : i32, i32, i32
  }
  func.func @transform_2(%arg0: i32, %arg1: i32) -> (i32, i32) {
    %c0_i32 = arith.constant 0 : i32
    %c0_i32_0 = arith.constant 0 : i32
    %c0_i32_1 = arith.constant 0 : i32
    return %c0_i32, %c0_i32_0 : i32, i32
  }
  func.func @transform_3(%arg0: i32, %arg1: i32) -> (i32, i32) {
    %c0_i32 = arith.constant 0 : i32
    %c0_i32_0 = arith.constant 0 : i32
    %c0_i32_1 = arith.constant 0 : i32
    return %c0_i32, %c0_i32_0 : i32, i32
  }
  func.func @transform_4(%arg0: i32, %arg1: i32) -> (i32, i32, i32) {
    %c0_i32 = arith.constant 0 : i32
    %c0_i32_0 = arith.constant 0 : i32
    return %arg0, %arg1, %c0_i32 : i32, i32, i32
  }
}

module attributes {stable_mosaic.version = 11 : i64} {
  func.func @_conv_bn_relu_kernel(%arg0: i32, %arg1: i32, %arg2: memref<1x420x4xf32, #tpu.memory_space<vmem>>, %arg3: memref<25x4x128xf32, #tpu.memory_space<vmem>>, %arg4: memref<1x128xf32, #tpu.memory_space<vmem>>, %arg5: memref<1x128xf32, #tpu.memory_space<vmem>>, %arg6: memref<1x160x128xf32, #tpu.memory_space<vmem>>) attributes {dimension_semantics = [#tpu.dimension_semantics<parallel>, #tpu.dimension_semantics<parallel>], iteration_bounds = array<i64: 2, 2>, scalar_prefetch = 0 : i64, scratch_operands = 0 : i64, tpu.core_type = #tpu.core_type<tc>, window_params = [{transform_indices = @transform_0, window_bounds = array<i64: 1, 420, 4>}, {pipeline_mode = #tpu.pipeline_mode<synchronous>, transform_indices = @transform_1, window_bounds = array<i64: 25, 4, 128>}, {pipeline_mode = #tpu.pipeline_mode<synchronous>, transform_indices = @transform_2, window_bounds = array<i64: 1, 128>}, {pipeline_mode = #tpu.pipeline_mode<synchronous>, transform_indices = @transform_3, window_bounds = array<i64: 1, 128>}, {transform_indices = @transform_4, window_bounds = array<i64: 1, 160, 128>}]} {
    %c160_i32 = arith.constant 160 : i32
    %0 = arith.muli %arg1, %c160_i32 : i32
    %1 = tpu.assume_multiple %0, 8 : i32
    %c0 = arith.constant 0 : index
    %2 = arith.index_cast %1 : i32 to index
    %c0_0 = arith.constant 0 : index
    %3 = vector.load %arg2[%c0, %2, %c0_0] : memref<1x420x4xf32, #tpu.memory_space<vmem>>, vector<1x260x4xf32>
    %4 = vector.shape_cast %3 : vector<1x260x4xf32> to vector<260x4xf32>
    %cst = arith.constant 0.000000e+00 : f32
    %5 = vector.broadcast %cst : f32 to vector<160x128xf32>
    %6 = vector.extract_strided_slice %4 {offsets = [0, 0], sizes = [160, 4], strides = [1, 1]} : vector<260x4xf32> to vector<160x4xf32>
    %c0_1 = arith.constant 0 : index
    %c0_2 = arith.constant 0 : index
    %c0_3 = arith.constant 0 : index
    %7 = vector.load %arg3[%c0_1, %c0_2, %c0_3] : memref<25x4x128xf32, #tpu.memory_space<vmem>>, vector<1x4x128xf32>
    %8 = vector.shape_cast %7 : vector<1x4x128xf32> to vector<4x128xf32>
    %cst_4 = arith.constant dense<0.000000e+00> : vector<160x128xf32>
    %9 = tpu.matmul %6, %8, %cst_4 {dimension_numbers = #tpu.dot_dimension_numbers<[1], [0], [0], [1], [0, 0, 1, 1], [], []>} : vector<160x4xf32>, vector<4x128xf32>, vector<160x128xf32> -> vector<160x128xf32>
    %10 = arith.addf %5, %9 : vector<160x128xf32>
    %11 = vector.extract_strided_slice %4 {offsets = [1, 0], sizes = [160, 4], strides = [1, 1]} : vector<260x4xf32> to vector<160x4xf32>
    %c1 = arith.constant 1 : index
    %c0_5 = arith.constant 0 : index
    %c0_6 = arith.constant 0 : index
    %12 = vector.load %arg3[%c1, %c0_5, %c0_6] : memref<25x4x128xf32, #tpu.memory_space<vmem>>, vector<1x4x128xf32>
    %13 = vector.shape_cast %12 : vector<1x4x128xf32> to vector<4x128xf32>
    %cst_7 = arith.constant dense<0.000000e+00> : vector<160x128xf32>
    %14 = tpu.matmul %11, %13, %cst_7 {dimension_numbers = #tpu.dot_dimension_numbers<[1], [0], [0], [1], [0, 0, 1, 1], [], []>} : vector<160x4xf32>, vector<4x128xf32>, vector<160x128xf32> -> vector<160x128xf32>
    %15 = arith.addf %10, %14 : vector<160x128xf32>
    %16 = vector.extract_strided_slice %4 {offsets = [2, 0], sizes = [160, 4], strides = [1, 1]} : vector<260x4xf32> to vector<160x4xf32>
    %c2 = arith.constant 2 : index
    %c0_8 = arith.constant 0 : index
    %c0_9 = arith.constant 0 : index
    %17 = vector.load %arg3[%c2, %c0_8, %c0_9] : memref<25x4x128xf32, #tpu.memory_space<vmem>>, vector<1x4x128xf32>
    %18 = vector.shape_cast %17 : vector<1x4x128xf32> to vector<4x128xf32>
    %cst_10 = arith.constant dense<0.000000e+00> : vector<160x128xf32>
    %19 = tpu.matmul %16, %18, %cst_10 {dimension_numbers = #tpu.dot_dimension_numbers<[1], [0], [0], [1], [0, 0, 1, 1], [], []>} : vector<160x4xf32>, vector<4x128xf32>, vector<160x128xf32> -> vector<160x128xf32>
    %20 = arith.addf %15, %19 : vector<160x128xf32>
    %21 = vector.extract_strided_slice %4 {offsets = [3, 0], sizes = [160, 4], strides = [1, 1]} : vector<260x4xf32> to vector<160x4xf32>
    %c3 = arith.constant 3 : index
    %c0_11 = arith.constant 0 : index
    %c0_12 = arith.constant 0 : index
    %22 = vector.load %arg3[%c3, %c0_11, %c0_12] : memref<25x4x128xf32, #tpu.memory_space<vmem>>, vector<1x4x128xf32>
    %23 = vector.shape_cast %22 : vector<1x4x128xf32> to vector<4x128xf32>
    %cst_13 = arith.constant dense<0.000000e+00> : vector<160x128xf32>
    %24 = tpu.matmul %21, %23, %cst_13 {dimension_numbers = #tpu.dot_dimension_numbers<[1], [0], [0], [1], [0, 0, 1, 1], [], []>} : vector<160x4xf32>, vector<4x128xf32>, vector<160x128xf32> -> vector<160x128xf32>
    %25 = arith.addf %20, %24 : vector<160x128xf32>
    %26 = vector.extract_strided_slice %4 {offsets = [4, 0], sizes = [160, 4], strides = [1, 1]} : vector<260x4xf32> to vector<160x4xf32>
    %c4 = arith.constant 4 : index
    %c0_14 = arith.constant 0 : index
    %c0_15 = arith.constant 0 : index
    %27 = vector.load %arg3[%c4, %c0_14, %c0_15] : memref<25x4x128xf32, #tpu.memory_space<vmem>>, vector<1x4x128xf32>
    %28 = vector.shape_cast %27 : vector<1x4x128xf32> to vector<4x128xf32>
    %cst_16 = arith.constant dense<0.000000e+00> : vector<160x128xf32>
    %29 = tpu.matmul %26, %28, %cst_16 {dimension_numbers = #tpu.dot_dimension_numbers<[1], [0], [0], [1], [0, 0, 1, 1], [], []>} : vector<160x4xf32>, vector<4x128xf32>, vector<160x128xf32> -> vector<160x128xf32>
    %30 = arith.addf %25, %29 : vector<160x128xf32>
    %31 = vector.extract_strided_slice %4 {offsets = [20, 0], sizes = [160, 4], strides = [1, 1]} : vector<260x4xf32> to vector<160x4xf32>
    %c5 = arith.constant 5 : index
    %c0_17 = arith.constant 0 : index
    %c0_18 = arith.constant 0 : index
    %32 = vector.load %arg3[%c5, %c0_17, %c0_18] : memref<25x4x128xf32, #tpu.memory_space<vmem>>, vector<1x4x128xf32>
    %33 = vector.shape_cast %32 : vector<1x4x128xf32> to vector<4x128xf32>
    %cst_19 = arith.constant dense<0.000000e+00> : vector<160x128xf32>
    %34 = tpu.matmul %31, %33, %cst_19 {dimension_numbers = #tpu.dot_dimension_numbers<[1], [0], [0], [1], [0, 0, 1, 1], [], []>} : vector<160x4xf32>, vector<4x128xf32>, vector<160x128xf32> -> vector<160x128xf32>
    %35 = arith.addf %30, %34 : vector<160x128xf32>
    %36 = vector.extract_strided_slice %4 {offsets = [21, 0], sizes = [160, 4], strides = [1, 1]} : vector<260x4xf32> to vector<160x4xf32>
    %c6 = arith.constant 6 : index
    %c0_20 = arith.constant 0 : index
    %c0_21 = arith.constant 0 : index
    %37 = vector.load %arg3[%c6, %c0_20, %c0_21] : memref<25x4x128xf32, #tpu.memory_space<vmem>>, vector<1x4x128xf32>
    %38 = vector.shape_cast %37 : vector<1x4x128xf32> to vector<4x128xf32>
    %cst_22 = arith.constant dense<0.000000e+00> : vector<160x128xf32>
    %39 = tpu.matmul %36, %38, %cst_22 {dimension_numbers = #tpu.dot_dimension_numbers<[1], [0], [0], [1], [0, 0, 1, 1], [], []>} : vector<160x4xf32>, vector<4x128xf32>, vector<160x128xf32> -> vector<160x128xf32>
    %40 = arith.addf %35, %39 : vector<160x128xf32>
    %41 = vector.extract_strided_slice %4 {offsets = [22, 0], sizes = [160, 4], strides = [1, 1]} : vector<260x4xf32> to vector<160x4xf32>
    %c7 = arith.constant 7 : index
    %c0_23 = arith.constant 0 : index
    %c0_24 = arith.constant 0 : index
    %42 = vector.load %arg3[%c7, %c0_23, %c0_24] : memref<25x4x128xf32, #tpu.memory_space<vmem>>, vector<1x4x128xf32>
    %43 = vector.shape_cast %42 : vector<1x4x128xf32> to vector<4x128xf32>
    %cst_25 = arith.constant dense<0.000000e+00> : vector<160x128xf32>
    %44 = tpu.matmul %41, %43, %cst_25 {dimension_numbers = #tpu.dot_dimension_numbers<[1], [0], [0], [1], [0, 0, 1, 1], [], []>} : vector<160x4xf32>, vector<4x128xf32>, vector<160x128xf32> -> vector<160x128xf32>
    %45 = arith.addf %40, %44 : vector<160x128xf32>
    %46 = vector.extract_strided_slice %4 {offsets = [23, 0], sizes = [160, 4], strides = [1, 1]} : vector<260x4xf32> to vector<160x4xf32>
    %c8 = arith.constant 8 : index
    %c0_26 = arith.constant 0 : index
    %c0_27 = arith.constant 0 : index
    %47 = vector.load %arg3[%c8, %c0_26, %c0_27] : memref<25x4x128xf32, #tpu.memory_space<vmem>>, vector<1x4x128xf32>
    %48 = vector.shape_cast %47 : vector<1x4x128xf32> to vector<4x128xf32>
    %cst_28 = arith.constant dense<0.000000e+00> : vector<160x128xf32>
    %49 = tpu.matmul %46, %48, %cst_28 {dimension_numbers = #tpu.dot_dimension_numbers<[1], [0], [0], [1], [0, 0, 1, 1], [], []>} : vector<160x4xf32>, vector<4x128xf32>, vector<160x128xf32> -> vector<160x128xf32>
    %50 = arith.addf %45, %49 : vector<160x128xf32>
    %51 = vector.extract_strided_slice %4 {offsets = [24, 0], sizes = [160, 4], strides = [1, 1]} : vector<260x4xf32> to vector<160x4xf32>
    %c9 = arith.constant 9 : index
    %c0_29 = arith.constant 0 : index
    %c0_30 = arith.constant 0 : index
    %52 = vector.load %arg3[%c9, %c0_29, %c0_30] : memref<25x4x128xf32, #tpu.memory_space<vmem>>, vector<1x4x128xf32>
    %53 = vector.shape_cast %52 : vector<1x4x128xf32> to vector<4x128xf32>
    %cst_31 = arith.constant dense<0.000000e+00> : vector<160x128xf32>
    %54 = tpu.matmul %51, %53, %cst_31 {dimension_numbers = #tpu.dot_dimension_numbers<[1], [0], [0], [1], [0, 0, 1, 1], [], []>} : vector<160x4xf32>, vector<4x128xf32>, vector<160x128xf32> -> vector<160x128xf32>
    %55 = arith.addf %50, %54 : vector<160x128xf32>
    %56 = vector.extract_strided_slice %4 {offsets = [40, 0], sizes = [160, 4], strides = [1, 1]} : vector<260x4xf32> to vector<160x4xf32>
    %c10 = arith.constant 10 : index
    %c0_32 = arith.constant 0 : index
    %c0_33 = arith.constant 0 : index
    %57 = vector.load %arg3[%c10, %c0_32, %c0_33] : memref<25x4x128xf32, #tpu.memory_space<vmem>>, vector<1x4x128xf32>
    %58 = vector.shape_cast %57 : vector<1x4x128xf32> to vector<4x128xf32>
    %cst_34 = arith.constant dense<0.000000e+00> : vector<160x128xf32>
    %59 = tpu.matmul %56, %58, %cst_34 {dimension_numbers = #tpu.dot_dimension_numbers<[1], [0], [0], [1], [0, 0, 1, 1], [], []>} : vector<160x4xf32>, vector<4x128xf32>, vector<160x128xf32> -> vector<160x128xf32>
    %60 = arith.addf %55, %59 : vector<160x128xf32>
    %61 = vector.extract_strided_slice %4 {offsets = [41, 0], sizes = [160, 4], strides = [1, 1]} : vector<260x4xf32> to vector<160x4xf32>
    %c11 = arith.constant 11 : index
    %c0_35 = arith.constant 0 : index
    %c0_36 = arith.constant 0 : index
    %62 = vector.load %arg3[%c11, %c0_35, %c0_36] : memref<25x4x128xf32, #tpu.memory_space<vmem>>, vector<1x4x128xf32>
    %63 = vector.shape_cast %62 : vector<1x4x128xf32> to vector<4x128xf32>
    %cst_37 = arith.constant dense<0.000000e+00> : vector<160x128xf32>
    %64 = tpu.matmul %61, %63, %cst_37 {dimension_numbers = #tpu.dot_dimension_numbers<[1], [0], [0], [1], [0, 0, 1, 1], [], []>} : vector<160x4xf32>, vector<4x128xf32>, vector<160x128xf32> -> vector<160x128xf32>
    %65 = arith.addf %60, %64 : vector<160x128xf32>
    %66 = vector.extract_strided_slice %4 {offsets = [42, 0], sizes = [160, 4], strides = [1, 1]} : vector<260x4xf32> to vector<160x4xf32>
    %c12 = arith.constant 12 : index
    %c0_38 = arith.constant 0 : index
    %c0_39 = arith.constant 0 : index
    %67 = vector.load %arg3[%c12, %c0_38, %c0_39] : memref<25x4x128xf32, #tpu.memory_space<vmem>>, vector<1x4x128xf32>
    %68 = vector.shape_cast %67 : vector<1x4x128xf32> to vector<4x128xf32>
    %cst_40 = arith.constant dense<0.000000e+00> : vector<160x128xf32>
    %69 = tpu.matmul %66, %68, %cst_40 {dimension_numbers = #tpu.dot_dimension_numbers<[1], [0], [0], [1], [0, 0, 1, 1], [], []>} : vector<160x4xf32>, vector<4x128xf32>, vector<160x128xf32> -> vector<160x128xf32>
    %70 = arith.addf %65, %69 : vector<160x128xf32>
    %71 = vector.extract_strided_slice %4 {offsets = [43, 0], sizes = [160, 4], strides = [1, 1]} : vector<260x4xf32> to vector<160x4xf32>
    %c13 = arith.constant 13 : index
    %c0_41 = arith.constant 0 : index
    %c0_42 = arith.constant 0 : index
    %72 = vector.load %arg3[%c13, %c0_41, %c0_42] : memref<25x4x128xf32, #tpu.memory_space<vmem>>, vector<1x4x128xf32>
    %73 = vector.shape_cast %72 : vector<1x4x128xf32> to vector<4x128xf32>
    %cst_43 = arith.constant dense<0.000000e+00> : vector<160x128xf32>
    %74 = tpu.matmul %71, %73, %cst_43 {dimension_numbers = #tpu.dot_dimension_numbers<[1], [0], [0], [1], [0, 0, 1, 1], [], []>} : vector<160x4xf32>, vector<4x128xf32>, vector<160x128xf32> -> vector<160x128xf32>
    %75 = arith.addf %70, %74 : vector<160x128xf32>
    %76 = vector.extract_strided_slice %4 {offsets = [44, 0], sizes = [160, 4], strides = [1, 1]} : vector<260x4xf32> to vector<160x4xf32>
    %c14 = arith.constant 14 : index
    %c0_44 = arith.constant 0 : index
    %c0_45 = arith.constant 0 : index
    %77 = vector.load %arg3[%c14, %c0_44, %c0_45] : memref<25x4x128xf32, #tpu.memory_space<vmem>>, vector<1x4x128xf32>
    %78 = vector.shape_cast %77 : vector<1x4x128xf32> to vector<4x128xf32>
    %cst_46 = arith.constant dense<0.000000e+00> : vector<160x128xf32>
    %79 = tpu.matmul %76, %78, %cst_46 {dimension_numbers = #tpu.dot_dimension_numbers<[1], [0], [0], [1], [0, 0, 1, 1], [], []>} : vector<160x4xf32>, vector<4x128xf32>, vector<160x128xf32> -> vector<160x128xf32>
    %80 = arith.addf %75, %79 : vector<160x128xf32>
    %81 = vector.extract_strided_slice %4 {offsets = [60, 0], sizes = [160, 4], strides = [1, 1]} : vector<260x4xf32> to vector<160x4xf32>
    %c15 = arith.constant 15 : index
    %c0_47 = arith.constant 0 : index
    %c0_48 = arith.constant 0 : index
    %82 = vector.load %arg3[%c15, %c0_47, %c0_48] : memref<25x4x128xf32, #tpu.memory_space<vmem>>, vector<1x4x128xf32>
    %83 = vector.shape_cast %82 : vector<1x4x128xf32> to vector<4x128xf32>
    %cst_49 = arith.constant dense<0.000000e+00> : vector<160x128xf32>
    %84 = tpu.matmul %81, %83, %cst_49 {dimension_numbers = #tpu.dot_dimension_numbers<[1], [0], [0], [1], [0, 0, 1, 1], [], []>} : vector<160x4xf32>, vector<4x128xf32>, vector<160x128xf32> -> vector<160x128xf32>
    %85 = arith.addf %80, %84 : vector<160x128xf32>
    %86 = vector.extract_strided_slice %4 {offsets = [61, 0], sizes = [160, 4], strides = [1, 1]} : vector<260x4xf32> to vector<160x4xf32>
    %c16 = arith.constant 16 : index
    %c0_50 = arith.constant 0 : index
    %c0_51 = arith.constant 0 : index
    %87 = vector.load %arg3[%c16, %c0_50, %c0_51] : memref<25x4x128xf32, #tpu.memory_space<vmem>>, vector<1x4x128xf32>
    %88 = vector.shape_cast %87 : vector<1x4x128xf32> to vector<4x128xf32>
    %cst_52 = arith.constant dense<0.000000e+00> : vector<160x128xf32>
    %89 = tpu.matmul %86, %88, %cst_52 {dimension_numbers = #tpu.dot_dimension_numbers<[1], [0], [0], [1], [0, 0, 1, 1], [], []>} : vector<160x4xf32>, vector<4x128xf32>, vector<160x128xf32> -> vector<160x128xf32>
    %90 = arith.addf %85, %89 : vector<160x128xf32>
    %91 = vector.extract_strided_slice %4 {offsets = [62, 0], sizes = [160, 4], strides = [1, 1]} : vector<260x4xf32> to vector<160x4xf32>
    %c17 = arith.constant 17 : index
    %c0_53 = arith.constant 0 : index
    %c0_54 = arith.constant 0 : index
    %92 = vector.load %arg3[%c17, %c0_53, %c0_54] : memref<25x4x128xf32, #tpu.memory_space<vmem>>, vector<1x4x128xf32>
    %93 = vector.shape_cast %92 : vector<1x4x128xf32> to vector<4x128xf32>
    %cst_55 = arith.constant dense<0.000000e+00> : vector<160x128xf32>
    %94 = tpu.matmul %91, %93, %cst_55 {dimension_numbers = #tpu.dot_dimension_numbers<[1], [0], [0], [1], [0, 0, 1, 1], [], []>} : vector<160x4xf32>, vector<4x128xf32>, vector<160x128xf32> -> vector<160x128xf32>
    %95 = arith.addf %90, %94 : vector<160x128xf32>
    %96 = vector.extract_strided_slice %4 {offsets = [63, 0], sizes = [160, 4], strides = [1, 1]} : vector<260x4xf32> to vector<160x4xf32>
    %c18 = arith.constant 18 : index
    %c0_56 = arith.constant 0 : index
    %c0_57 = arith.constant 0 : index
    %97 = vector.load %arg3[%c18, %c0_56, %c0_57] : memref<25x4x128xf32, #tpu.memory_space<vmem>>, vector<1x4x128xf32>
    %98 = vector.shape_cast %97 : vector<1x4x128xf32> to vector<4x128xf32>
    %cst_58 = arith.constant dense<0.000000e+00> : vector<160x128xf32>
    %99 = tpu.matmul %96, %98, %cst_58 {dimension_numbers = #tpu.dot_dimension_numbers<[1], [0], [0], [1], [0, 0, 1, 1], [], []>} : vector<160x4xf32>, vector<4x128xf32>, vector<160x128xf32> -> vector<160x128xf32>
    %100 = arith.addf %95, %99 : vector<160x128xf32>
    %101 = vector.extract_strided_slice %4 {offsets = [64, 0], sizes = [160, 4], strides = [1, 1]} : vector<260x4xf32> to vector<160x4xf32>
    %c19 = arith.constant 19 : index
    %c0_59 = arith.constant 0 : index
    %c0_60 = arith.constant 0 : index
    %102 = vector.load %arg3[%c19, %c0_59, %c0_60] : memref<25x4x128xf32, #tpu.memory_space<vmem>>, vector<1x4x128xf32>
    %103 = vector.shape_cast %102 : vector<1x4x128xf32> to vector<4x128xf32>
    %cst_61 = arith.constant dense<0.000000e+00> : vector<160x128xf32>
    %104 = tpu.matmul %101, %103, %cst_61 {dimension_numbers = #tpu.dot_dimension_numbers<[1], [0], [0], [1], [0, 0, 1, 1], [], []>} : vector<160x4xf32>, vector<4x128xf32>, vector<160x128xf32> -> vector<160x128xf32>
    %105 = arith.addf %100, %104 : vector<160x128xf32>
    %106 = vector.extract_strided_slice %4 {offsets = [80, 0], sizes = [160, 4], strides = [1, 1]} : vector<260x4xf32> to vector<160x4xf32>
    %c20 = arith.constant 20 : index
    %c0_62 = arith.constant 0 : index
    %c0_63 = arith.constant 0 : index
    %107 = vector.load %arg3[%c20, %c0_62, %c0_63] : memref<25x4x128xf32, #tpu.memory_space<vmem>>, vector<1x4x128xf32>
    %108 = vector.shape_cast %107 : vector<1x4x128xf32> to vector<4x128xf32>
    %cst_64 = arith.constant dense<0.000000e+00> : vector<160x128xf32>
    %109 = tpu.matmul %106, %108, %cst_64 {dimension_numbers = #tpu.dot_dimension_numbers<[1], [0], [0], [1], [0, 0, 1, 1], [], []>} : vector<160x4xf32>, vector<4x128xf32>, vector<160x128xf32> -> vector<160x128xf32>
    %110 = arith.addf %105, %109 : vector<160x128xf32>
    %111 = vector.extract_strided_slice %4 {offsets = [81, 0], sizes = [160, 4], strides = [1, 1]} : vector<260x4xf32> to vector<160x4xf32>
    %c21 = arith.constant 21 : index
    %c0_65 = arith.constant 0 : index
    %c0_66 = arith.constant 0 : index
    %112 = vector.load %arg3[%c21, %c0_65, %c0_66] : memref<25x4x128xf32, #tpu.memory_space<vmem>>, vector<1x4x128xf32>
    %113 = vector.shape_cast %112 : vector<1x4x128xf32> to vector<4x128xf32>
    %cst_67 = arith.constant dense<0.000000e+00> : vector<160x128xf32>
    %114 = tpu.matmul %111, %113, %cst_67 {dimension_numbers = #tpu.dot_dimension_numbers<[1], [0], [0], [1], [0, 0, 1, 1], [], []>} : vector<160x4xf32>, vector<4x128xf32>, vector<160x128xf32> -> vector<160x128xf32>
    %115 = arith.addf %110, %114 : vector<160x128xf32>
    %116 = vector.extract_strided_slice %4 {offsets = [82, 0], sizes = [160, 4], strides = [1, 1]} : vector<260x4xf32> to vector<160x4xf32>
    %c22 = arith.constant 22 : index
    %c0_68 = arith.constant 0 : index
    %c0_69 = arith.constant 0 : index
    %117 = vector.load %arg3[%c22, %c0_68, %c0_69] : memref<25x4x128xf32, #tpu.memory_space<vmem>>, vector<1x4x128xf32>
    %118 = vector.shape_cast %117 : vector<1x4x128xf32> to vector<4x128xf32>
    %cst_70 = arith.constant dense<0.000000e+00> : vector<160x128xf32>
    %119 = tpu.matmul %116, %118, %cst_70 {dimension_numbers = #tpu.dot_dimension_numbers<[1], [0], [0], [1], [0, 0, 1, 1], [], []>} : vector<160x4xf32>, vector<4x128xf32>, vector<160x128xf32> -> vector<160x128xf32>
    %120 = arith.addf %115, %119 : vector<160x128xf32>
    %121 = vector.extract_strided_slice %4 {offsets = [83, 0], sizes = [160, 4], strides = [1, 1]} : vector<260x4xf32> to vector<160x4xf32>
    %c23 = arith.constant 23 : index
    %c0_71 = arith.constant 0 : index
    %c0_72 = arith.constant 0 : index
    %122 = vector.load %arg3[%c23, %c0_71, %c0_72] : memref<25x4x128xf32, #tpu.memory_space<vmem>>, vector<1x4x128xf32>
    %123 = vector.shape_cast %122 : vector<1x4x128xf32> to vector<4x128xf32>
    %cst_73 = arith.constant dense<0.000000e+00> : vector<160x128xf32>
    %124 = tpu.matmul %121, %123, %cst_73 {dimension_numbers = #tpu.dot_dimension_numbers<[1], [0], [0], [1], [0, 0, 1, 1], [], []>} : vector<160x4xf32>, vector<4x128xf32>, vector<160x128xf32> -> vector<160x128xf32>
    %125 = arith.addf %120, %124 : vector<160x128xf32>
    %126 = vector.extract_strided_slice %4 {offsets = [84, 0], sizes = [160, 4], strides = [1, 1]} : vector<260x4xf32> to vector<160x4xf32>
    %c24 = arith.constant 24 : index
    %c0_74 = arith.constant 0 : index
    %c0_75 = arith.constant 0 : index
    %127 = vector.load %arg3[%c24, %c0_74, %c0_75] : memref<25x4x128xf32, #tpu.memory_space<vmem>>, vector<1x4x128xf32>
    %128 = vector.shape_cast %127 : vector<1x4x128xf32> to vector<4x128xf32>
    %cst_76 = arith.constant dense<0.000000e+00> : vector<160x128xf32>
    %129 = tpu.matmul %126, %128, %cst_76 {dimension_numbers = #tpu.dot_dimension_numbers<[1], [0], [0], [1], [0, 0, 1, 1], [], []>} : vector<160x4xf32>, vector<4x128xf32>, vector<160x128xf32> -> vector<160x128xf32>
    %130 = arith.addf %125, %129 : vector<160x128xf32>
    %c0_77 = arith.constant 0 : index
    %c0_78 = arith.constant 0 : index
    %131 = vector.load %arg4[%c0_77, %c0_78] : memref<1x128xf32, #tpu.memory_space<vmem>>, vector<1x128xf32>
    %132 = vector.broadcast %131 : vector<1x128xf32> to vector<160x128xf32>
    %133 = arith.mulf %130, %132 : vector<160x128xf32>
    %c0_79 = arith.constant 0 : index
    %c0_80 = arith.constant 0 : index
    %134 = vector.load %arg5[%c0_79, %c0_80] : memref<1x128xf32, #tpu.memory_space<vmem>>, vector<1x128xf32>
    %135 = vector.broadcast %134 : vector<1x128xf32> to vector<160x128xf32>
    %136 = arith.addf %133, %135 : vector<160x128xf32>
    %cst_81 = arith.constant 0.000000e+00 : f32
    %137 = vector.broadcast %cst_81 : f32 to vector<160x128xf32>
    %138 = arith.maximumf %136, %137 : vector<160x128xf32>
    %c0_82 = arith.constant 0 : index
    %c0_83 = arith.constant 0 : index
    %c0_84 = arith.constant 0 : index
    %139 = vector.load %arg6[%c0_82, %c0_83, %c0_84] : memref<1x160x128xf32, #tpu.memory_space<vmem>>, vector<1x160x128xf32>
    %140 = vector.shape_cast %139 : vector<1x160x128xf32> to vector<160x128xf32>
    %141 = vector.shape_cast %138 : vector<160x128xf32> to vector<1x160x128xf32>
    tpu.vector_store %arg6[%c0_82, %c0_83, %c0_84], %141 {strides = array<i32>} : memref<1x160x128xf32, #tpu.memory_space<vmem>>, vector<1x160x128xf32>,
    return
  }
  func.func @transform_0(%arg0: i32, %arg1: i32) -> (i32, i32, i32) {
    %c0_i32 = arith.constant 0 : i32
    %c0_i32_0 = arith.constant 0 : i32
    %c0_i32_1 = arith.constant 0 : i32
    return %arg0, %c0_i32, %c0_i32_0 : i32, i32, i32
  }
  func.func @transform_1(%arg0: i32, %arg1: i32) -> (i32, i32, i32) {
    %c0_i32 = arith.constant 0 : i32
    %c0_i32_0 = arith.constant 0 : i32
    %c0_i32_1 = arith.constant 0 : i32
    %c0_i32_2 = arith.constant 0 : i32
    return %c0_i32, %c0_i32_0, %c0_i32_1 : i32, i32, i32
  }
  func.func @transform_2(%arg0: i32, %arg1: i32) -> (i32, i32) {
    %c0_i32 = arith.constant 0 : i32
    %c0_i32_0 = arith.constant 0 : i32
    %c0_i32_1 = arith.constant 0 : i32
    return %c0_i32, %c0_i32_0 : i32, i32
  }
  func.func @transform_3(%arg0: i32, %arg1: i32) -> (i32, i32) {
    %c0_i32 = arith.constant 0 : i32
    %c0_i32_0 = arith.constant 0 : i32
    %c0_i32_1 = arith.constant 0 : i32
    return %c0_i32, %c0_i32_0 : i32, i32
  }
  func.func @transform_4(%arg0: i32, %arg1: i32) -> (i32, i32, i32) {
    %c0_i32 = arith.constant 0 : i32
    %c0_i32_0 = arith.constant 0 : i32
    return %arg0, %arg1, %c0_i32 : i32, i32, i32
  }
}

module attributes {stable_mosaic.version = 11 : i64} {
  func.func @_conv_bn_relu_kernel(%arg0: i32, %arg1: i32, %arg2: memref<1x342x4xf32, #tpu.memory_space<vmem>>, %arg3: memref<9x4x128xf32, #tpu.memory_space<vmem>>, %arg4: memref<1x128xf32, #tpu.memory_space<vmem>>, %arg5: memref<1x128xf32, #tpu.memory_space<vmem>>, %arg6: memref<1x144x128xf32, #tpu.memory_space<vmem>>) attributes {dimension_semantics = [#tpu.dimension_semantics<parallel>, #tpu.dimension_semantics<parallel>], iteration_bounds = array<i64: 2, 2>, scalar_prefetch = 0 : i64, scratch_operands = 0 : i64, tpu.core_type = #tpu.core_type<tc>, window_params = [{transform_indices = @transform_0, window_bounds = array<i64: 1, 342, 4>}, {pipeline_mode = #tpu.pipeline_mode<synchronous>, transform_indices = @transform_1, window_bounds = array<i64: 9, 4, 128>}, {pipeline_mode = #tpu.pipeline_mode<synchronous>, transform_indices = @transform_2, window_bounds = array<i64: 1, 128>}, {pipeline_mode = #tpu.pipeline_mode<synchronous>, transform_indices = @transform_3, window_bounds = array<i64: 1, 128>}, {transform_indices = @transform_4, window_bounds = array<i64: 1, 144, 128>}]} {
    %c144_i32 = arith.constant 144 : i32
    %0 = arith.muli %arg1, %c144_i32 : i32
    %1 = tpu.assume_multiple %0, 8 : i32
    %c0 = arith.constant 0 : index
    %2 = arith.index_cast %1 : i32 to index
    %c0_0 = arith.constant 0 : index
    %3 = vector.load %arg2[%c0, %2, %c0_0] : memref<1x342x4xf32, #tpu.memory_space<vmem>>, vector<1x198x4xf32>
    %4 = vector.shape_cast %3 : vector<1x198x4xf32> to vector<198x4xf32>
    %cst = arith.constant 0.000000e+00 : f32
    %5 = vector.broadcast %cst : f32 to vector<144x128xf32>
    %6 = vector.extract_strided_slice %4 {offsets = [0, 0], sizes = [144, 4], strides = [1, 1]} : vector<198x4xf32> to vector<144x4xf32>
    %c0_1 = arith.constant 0 : index
    %c0_2 = arith.constant 0 : index
    %c0_3 = arith.constant 0 : index
    %7 = vector.load %arg3[%c0_1, %c0_2, %c0_3] : memref<9x4x128xf32, #tpu.memory_space<vmem>>, vector<1x4x128xf32>
    %8 = vector.shape_cast %7 : vector<1x4x128xf32> to vector<4x128xf32>
    %cst_4 = arith.constant dense<0.000000e+00> : vector<144x128xf32>
    %9 = tpu.matmul %6, %8, %cst_4 {dimension_numbers = #tpu.dot_dimension_numbers<[1], [0], [0], [1], [0, 0, 1, 1], [], []>} : vector<144x4xf32>, vector<4x128xf32>, vector<144x128xf32> -> vector<144x128xf32>
    %10 = arith.addf %5, %9 : vector<144x128xf32>
    %11 = vector.extract_strided_slice %4 {offsets = [1, 0], sizes = [144, 4], strides = [1, 1]} : vector<198x4xf32> to vector<144x4xf32>
    %c1 = arith.constant 1 : index
    %c0_5 = arith.constant 0 : index
    %c0_6 = arith.constant 0 : index
    %12 = vector.load %arg3[%c1, %c0_5, %c0_6] : memref<9x4x128xf32, #tpu.memory_space<vmem>>, vector<1x4x128xf32>
    %13 = vector.shape_cast %12 : vector<1x4x128xf32> to vector<4x128xf32>
    %cst_7 = arith.constant dense<0.000000e+00> : vector<144x128xf32>
    %14 = tpu.matmul %11, %13, %cst_7 {dimension_numbers = #tpu.dot_dimension_numbers<[1], [0], [0], [1], [0, 0, 1, 1], [], []>} : vector<144x4xf32>, vector<4x128xf32>, vector<144x128xf32> -> vector<144x128xf32>
    %15 = arith.addf %10, %14 : vector<144x128xf32>
    %16 = vector.extract_strided_slice %4 {offsets = [2, 0], sizes = [144, 4], strides = [1, 1]} : vector<198x4xf32> to vector<144x4xf32>
    %c2 = arith.constant 2 : index
    %c0_8 = arith.constant 0 : index
    %c0_9 = arith.constant 0 : index
    %17 = vector.load %arg3[%c2, %c0_8, %c0_9] : memref<9x4x128xf32, #tpu.memory_space<vmem>>, vector<1x4x128xf32>
    %18 = vector.shape_cast %17 : vector<1x4x128xf32> to vector<4x128xf32>
    %cst_10 = arith.constant dense<0.000000e+00> : vector<144x128xf32>
    %19 = tpu.matmul %16, %18, %cst_10 {dimension_numbers = #tpu.dot_dimension_numbers<[1], [0], [0], [1], [0, 0, 1, 1], [], []>} : vector<144x4xf32>, vector<4x128xf32>, vector<144x128xf32> -> vector<144x128xf32>
    %20 = arith.addf %15, %19 : vector<144x128xf32>
    %21 = vector.extract_strided_slice %4 {offsets = [18, 0], sizes = [144, 4], strides = [1, 1]} : vector<198x4xf32> to vector<144x4xf32>
    %c3 = arith.constant 3 : index
    %c0_11 = arith.constant 0 : index
    %c0_12 = arith.constant 0 : index
    %22 = vector.load %arg3[%c3, %c0_11, %c0_12] : memref<9x4x128xf32, #tpu.memory_space<vmem>>, vector<1x4x128xf32>
    %23 = vector.shape_cast %22 : vector<1x4x128xf32> to vector<4x128xf32>
    %cst_13 = arith.constant dense<0.000000e+00> : vector<144x128xf32>
    %24 = tpu.matmul %21, %23, %cst_13 {dimension_numbers = #tpu.dot_dimension_numbers<[1], [0], [0], [1], [0, 0, 1, 1], [], []>} : vector<144x4xf32>, vector<4x128xf32>, vector<144x128xf32> -> vector<144x128xf32>
    %25 = arith.addf %20, %24 : vector<144x128xf32>
    %26 = vector.extract_strided_slice %4 {offsets = [19, 0], sizes = [144, 4], strides = [1, 1]} : vector<198x4xf32> to vector<144x4xf32>
    %c4 = arith.constant 4 : index
    %c0_14 = arith.constant 0 : index
    %c0_15 = arith.constant 0 : index
    %27 = vector.load %arg3[%c4, %c0_14, %c0_15] : memref<9x4x128xf32, #tpu.memory_space<vmem>>, vector<1x4x128xf32>
    %28 = vector.shape_cast %27 : vector<1x4x128xf32> to vector<4x128xf32>
    %cst_16 = arith.constant dense<0.000000e+00> : vector<144x128xf32>
    %29 = tpu.matmul %26, %28, %cst_16 {dimension_numbers = #tpu.dot_dimension_numbers<[1], [0], [0], [1], [0, 0, 1, 1], [], []>} : vector<144x4xf32>, vector<4x128xf32>, vector<144x128xf32> -> vector<144x128xf32>
    %30 = arith.addf %25, %29 : vector<144x128xf32>
    %31 = vector.extract_strided_slice %4 {offsets = [20, 0], sizes = [144, 4], strides = [1, 1]} : vector<198x4xf32> to vector<144x4xf32>
    %c5 = arith.constant 5 : index
    %c0_17 = arith.constant 0 : index
    %c0_18 = arith.constant 0 : index
    %32 = vector.load %arg3[%c5, %c0_17, %c0_18] : memref<9x4x128xf32, #tpu.memory_space<vmem>>, vector<1x4x128xf32>
    %33 = vector.shape_cast %32 : vector<1x4x128xf32> to vector<4x128xf32>
    %cst_19 = arith.constant dense<0.000000e+00> : vector<144x128xf32>
    %34 = tpu.matmul %31, %33, %cst_19 {dimension_numbers = #tpu.dot_dimension_numbers<[1], [0], [0], [1], [0, 0, 1, 1], [], []>} : vector<144x4xf32>, vector<4x128xf32>, vector<144x128xf32> -> vector<144x128xf32>
    %35 = arith.addf %30, %34 : vector<144x128xf32>
    %36 = vector.extract_strided_slice %4 {offsets = [36, 0], sizes = [144, 4], strides = [1, 1]} : vector<198x4xf32> to vector<144x4xf32>
    %c6 = arith.constant 6 : index
    %c0_20 = arith.constant 0 : index
    %c0_21 = arith.constant 0 : index
    %37 = vector.load %arg3[%c6, %c0_20, %c0_21] : memref<9x4x128xf32, #tpu.memory_space<vmem>>, vector<1x4x128xf32>
    %38 = vector.shape_cast %37 : vector<1x4x128xf32> to vector<4x128xf32>
    %cst_22 = arith.constant dense<0.000000e+00> : vector<144x128xf32>
    %39 = tpu.matmul %36, %38, %cst_22 {dimension_numbers = #tpu.dot_dimension_numbers<[1], [0], [0], [1], [0, 0, 1, 1], [], []>} : vector<144x4xf32>, vector<4x128xf32>, vector<144x128xf32> -> vector<144x128xf32>
    %40 = arith.addf %35, %39 : vector<144x128xf32>
    %41 = vector.extract_strided_slice %4 {offsets = [37, 0], sizes = [144, 4], strides = [1, 1]} : vector<198x4xf32> to vector<144x4xf32>
    %c7 = arith.constant 7 : index
    %c0_23 = arith.constant 0 : index
    %c0_24 = arith.constant 0 : index
    %42 = vector.load %arg3[%c7, %c0_23, %c0_24] : memref<9x4x128xf32, #tpu.memory_space<vmem>>, vector<1x4x128xf32>
    %43 = vector.shape_cast %42 : vector<1x4x128xf32> to vector<4x128xf32>
    %cst_25 = arith.constant dense<0.000000e+00> : vector<144x128xf32>
    %44 = tpu.matmul %41, %43, %cst_25 {dimension_numbers = #tpu.dot_dimension_numbers<[1], [0], [0], [1], [0, 0, 1, 1], [], []>} : vector<144x4xf32>, vector<4x128xf32>, vector<144x128xf32> -> vector<144x128xf32>
    %45 = arith.addf %40, %44 : vector<144x128xf32>
    %46 = vector.extract_strided_slice %4 {offsets = [38, 0], sizes = [144, 4], strides = [1, 1]} : vector<198x4xf32> to vector<144x4xf32>
    %c8 = arith.constant 8 : index
    %c0_26 = arith.constant 0 : index
    %c0_27 = arith.constant 0 : index
    %47 = vector.load %arg3[%c8, %c0_26, %c0_27] : memref<9x4x128xf32, #tpu.memory_space<vmem>>, vector<1x4x128xf32>
    %48 = vector.shape_cast %47 : vector<1x4x128xf32> to vector<4x128xf32>
    %cst_28 = arith.constant dense<0.000000e+00> : vector<144x128xf32>
    %49 = tpu.matmul %46, %48, %cst_28 {dimension_numbers = #tpu.dot_dimension_numbers<[1], [0], [0], [1], [0, 0, 1, 1], [], []>} : vector<144x4xf32>, vector<4x128xf32>, vector<144x128xf32> -> vector<144x128xf32>
    %50 = arith.addf %45, %49 : vector<144x128xf32>
    %c0_29 = arith.constant 0 : index
    %c0_30 = arith.constant 0 : index
    %51 = vector.load %arg4[%c0_29, %c0_30] : memref<1x128xf32, #tpu.memory_space<vmem>>, vector<1x128xf32>
    %52 = vector.broadcast %51 : vector<1x128xf32> to vector<144x128xf32>
    %53 = arith.mulf %50, %52 : vector<144x128xf32>
    %c0_31 = arith.constant 0 : index
    %c0_32 = arith.constant 0 : index
    %54 = vector.load %arg5[%c0_31, %c0_32] : memref<1x128xf32, #tpu.memory_space<vmem>>, vector<1x128xf32>
    %55 = vector.broadcast %54 : vector<1x128xf32> to vector<144x128xf32>
    %56 = arith.addf %53, %55 : vector<144x128xf32>
    %cst_33 = arith.constant 0.000000e+00 : f32
    %57 = vector.broadcast %cst_33 : f32 to vector<144x128xf32>
    %58 = arith.maximumf %56, %57 : vector<144x128xf32>
    %c0_34 = arith.constant 0 : index
    %c0_35 = arith.constant 0 : index
    %c0_36 = arith.constant 0 : index
    %59 = vector.load %arg6[%c0_34, %c0_35, %c0_36] : memref<1x144x128xf32, #tpu.memory_space<vmem>>, vector<1x144x128xf32>
    %60 = vector.shape_cast %59 : vector<1x144x128xf32> to vector<144x128xf32>
    %61 = vector.shape_cast %58 : vector<144x128xf32> to vector<1x144x128xf32>
    tpu.vector_store %arg6[%c0_34, %c0_35, %c0_36], %61 {strides = array<i32>} : memref<1x144x128xf32, #tpu.memory_space<vmem>>, vector<1x144x128xf32>,
    return
  }
  func.func @transform_0(%arg0: i32, %arg1: i32) -> (i32, i32, i32) {
    %c0_i32 = arith.constant 0 : i32
    %c0_i32_0 = arith.constant 0 : i32
    %c0_i32_1 = arith.constant 0 : i32
    return %arg0, %c0_i32, %c0_i32_0 : i32, i32, i32
  }
  func.func @transform_1(%arg0: i32, %arg1: i32) -> (i32, i32, i32) {
    %c0_i32 = arith.constant 0 : i32
    %c0_i32_0 = arith.constant 0 : i32
    %c0_i32_1 = arith.constant 0 : i32
    %c0_i32_2 = arith.constant 0 : i32
    return %c0_i32, %c0_i32_0, %c0_i32_1 : i32, i32, i32
  }
  func.func @transform_2(%arg0: i32, %arg1: i32) -> (i32, i32) {
    %c0_i32 = arith.constant 0 : i32
    %c0_i32_0 = arith.constant 0 : i32
    %c0_i32_1 = arith.constant 0 : i32
    return %c0_i32, %c0_i32_0 : i32, i32
  }
  func.func @transform_3(%arg0: i32, %arg1: i32) -> (i32, i32) {
    %c0_i32 = arith.constant 0 : i32
    %c0_i32_0 = arith.constant 0 : i32
    %c0_i32_1 = arith.constant 0 : i32
    return %c0_i32, %c0_i32_0 : i32, i32
  }
  func.func @transform_4(%arg0: i32, %arg1: i32) -> (i32, i32, i32) {
    %c0_i32 = arith.constant 0 : i32
    %c0_i32_0 = arith.constant 0 : i32
    return %arg0, %arg1, %c0_i32 : i32, i32, i32
  }
}

</mosaic_0001>

<llo_original>
// kernel: _lambda_.3
$region0: #{_lambda_.3}
  #allocation0 [shape = 'u32[]', space=smem, size = 0x4, offset = 0x4, fixed_abs, tag = 'smem constant byte address 0x4 - core index']
  #allocation1 [shape = 'u32[72,128]{1,0:T(1,128)}', space=vmem, size = 0x9000, scoped, tag = 'internal scratch']
  %s0 = inlined_call_operand.vmem [shape: f32[2,342,4], index: 0, kind: input, shape index: {}]
  %s1 = inlined_call_operand.vmem [shape: f32[2,4,128], index: 1, kind: input, shape index: {}]
  %s2 = inlined_call_operand.vmem [shape: f32[1,128], index: 2, kind: input, shape index: {}]
  %s3 = inlined_call_operand.vmem [shape: f32[1,128], index: 3, kind: input, shape index: {}]
  %s4 = inlined_call_operand.vmem [shape: f32[2,288,128], index: 4, kind: output, shape index: {}]
  %s5 = sld [smem:[#allocation0]]
  $region49: #{_lambda_.3} parent=0
    _
  %s7 = ssub.s32 1, %s5
  %s8 = scalar_select 0, %s7, %s5
  loop: start=0, step=1, limit=6
  $region2: #{_lambda_.3} parent=0 // loop_pre_header
    _
  $region3: #{_lambda_.3} parent=0 // loop_header
    %s10 = sphi 0, %s14
    %p11 = scmp.ge.s32.totalorder %s10, 6
    %s17 = sphi 0, %s29
    %s18 = sphi 0, %s25
    %s19 = sphi 0, %s17
    %s20 = sphi 0, %s18
    %s21 = sphi 0, %s19
    %s22 = sphi 0, %s20
    %s32 = sphi 0, %s34
    %s35 = sphi 0, %s32
    %s36 = sphi 0, %s35
    %s52 = sphi 0, %s36
    %s56 = sphi 0, %s56
    %s58 = sphi 0, %s56
    %s59 = sphi 0, %s58
    %s73 = sphi 0, %s59
    %s77 = sphi 0, %s77
    %s79 = sphi 0, %s77
    %s80 = sphi 0, %s79
    %s94 = sphi 0, %s80
    %s98 = sphi 0, %s98
    %s100 = sphi 0, %s98
    %s101 = sphi 0, %s100
    %s115 = sphi 0, %s101
    %s123 = sphi 0, %s125
    %s126 = sphi 0, %s123
    %s127 = sphi 0, %s126
    %s143 = sphi 0, %s127
  $region4: #{_lambda_.3} parent=0 // loop_header_branch
    %13 = sbr.rel (%p11) target = $region8
  $region5: #{_lambda_.3} parent=0 // loop_body
    %s15 = ssub.s32 %s10, 1
    %s16 = ssub.s32 %s10, 2
    %s23 = sadd.s32 1, %s18
    %p24 = scmp.ge.s32.totalorder %s23, 2
    %s25 = scalar_select %p24, 0, %s23
    %s26 = sadd.s32 1, %s17
    %s27 = scalar_select %p24, %s26, %s17
    %p28 = scmp.ge.s32.totalorder %s27, 2
    %s29 = scalar_select %p28, 0, %s27
    %s30 = ssub.s32 %s17, %s29
    %p31 = scmp.eq.s32.totalorder %s30, 0
    %s33 = sadd.s32 %s32, 1
    %s34 = scalar_select %p31, %s32, %s33
    %p37 = pneg %p31
    %p38 = scmp.eq.s32.totalorder %s10, 3
    %p39 = por %p37, %p38
    %p40 = scmp.ne.s32.totalorder %s32, %s35
    %p41 = scmp.eq.s32.totalorder %s10, 0
    %p42 = por %p40, %p41
    %p43 = scmp.ne.s32.totalorder %s32, %s35
    %p44 = scmp.eq.s32.totalorder %s15, 3
    %p45 = por %p43, %p44
    %p46 = scmp.ne.s32.totalorder %s35, %s36
    %p47 = scmp.eq.s32.totalorder %s15, 0
    %p48 = por %p46, %p47
    %p49 = scmp.ne.s32.totalorder %s35, %s36
    %p50 = scmp.eq.s32.totalorder %s16, 3
    %p51 = por %p49, %p50
    %p53 = scmp.ne.s32.totalorder %s36, %s52
    %p54 = scmp.eq.s32.totalorder %s16, 0
    %p55 = por %p53, %p54
    %s57 = sadd.s32 %s56, 1
    %p60 = scmp.eq.s32.totalorder %s10, 3
    %p61 = scmp.ne.s32.totalorder %s56, %s58
    %p62 = scmp.eq.s32.totalorder %s10, 0
    %p63 = por %p61, %p62
    %p64 = scmp.ne.s32.totalorder %s56, %s58
    %p65 = scmp.eq.s32.totalorder %s15, 3
    %p66 = por %p64, %p65
    %p67 = scmp.ne.s32.totalorder %s58, %s59
    %p68 = scmp.eq.s32.totalorder %s15, 0
    %p69 = por %p67, %p68
    %p70 = scmp.ne.s32.totalorder %s58, %s59
    %p71 = scmp.eq.s32.totalorder %s16, 3
    %p72 = por %p70, %p71
    %p74 = scmp.ne.s32.totalorder %s59, %s73
    %p75 = scmp.eq.s32.totalorder %s16, 0
    %p76 = por %p74, %p75
    %s78 = sadd.s32 %s77, 1
    %p81 = scmp.eq.s32.totalorder %s10, 3
    %p82 = scmp.ne.s32.totalorder %s77, %s79
    %p83 = scmp.eq.s32.totalorder %s10, 0
    %p84 = por %p82, %p83
    %p85 = scmp.ne.s32.totalorder %s77, %s79
    %p86 = scmp.eq.s32.totalorder %s15, 3
    %p87 = por %p85, %p86
    %p88 = scmp.ne.s32.totalorder %s79, %s80
    %p89 = scmp.eq.s32.totalorder %s15, 0
    %p90 = por %p88, %p89
    %p91 = scmp.ne.s32.totalorder %s79, %s80
    %p92 = scmp.eq.s32.totalorder %s16, 3
    %p93 = por %p91, %p92
    %p95 = scmp.ne.s32.totalorder %s80, %s94
    %p96 = scmp.eq.s32.totalorder %s16, 0
    %p97 = por %p95, %p96
    %s99 = sadd.s32 %s98, 1
    %p102 = scmp.eq.s32.totalorder %s10, 3
    %p103 = scmp.ne.s32.totalorder %s98, %s100
    %p104 = scmp.eq.s32.totalorder %s10, 0
    %p105 = por %p103, %p104
    %p106 = scmp.ne.s32.totalorder %s98, %s100
    %p107 = scmp.eq.s32.totalorder %s15, 3
    %p108 = por %p106, %p107
    %p109 = scmp.ne.s32.totalorder %s100, %s101
    %p110 = scmp.eq.s32.totalorder %s15, 0
    %p111 = por %p109, %p110
    %p112 = scmp.ne.s32.totalorder %s100, %s101
    %p113 = scmp.eq.s32.totalorder %s16, 3
    %p114 = por %p112, %p113
    %p116 = scmp.ne.s32.totalorder %s101, %s115
    %p117 = scmp.eq.s32.totalorder %s16, 0
    %p118 = por %p116, %p117
    %s119 = ssub.s32 %s17, %s29
    %s120 = ssub.s32 %s18, %s25
    %s121 = sor.u32 %s119, %s120
    %p122 = scmp.eq.s32.totalorder %s121, 0
    %s124 = sadd.s32 %s123, 1
    %s125 = scalar_select %p122, %s123, %s124
    %p128 = pneg %p122
    %p129 = scmp.eq.s32.totalorder %s10, 3
    %p130 = por %p128, %p129
    %p131 = scmp.ne.s32.totalorder %s123, %s126
    %p132 = scmp.eq.s32.totalorder %s10, 0
    %p133 = por %p131, %p132
    %p134 = scmp.ne.s32.totalorder %s123, %s126
    %p135 = scmp.eq.s32.totalorder %s15, 3
    %p136 = por %p134, %p135
    %p137 = scmp.ne.s32.totalorder %s126, %s127
    %p138 = scmp.eq.s32.totalorder %s15, 0
    %p139 = por %p137, %p138
    %p140 = scmp.ne.s32.totalorder %s126, %s127
    %p141 = scmp.eq.s32.totalorder %s16, 3
    %p142 = por %p140, %p141
    %p144 = scmp.ne.s32.totalorder %s127, %s143
    %p145 = scmp.eq.s32.totalorder %s16, 0
    %p146 = por %p144, %p145
    %p147 = scmp.le.s32.totalorder 1, %s10
    %p148 = scmp.lt.s32.totalorder %s10, 5
    %p149 = pnand %p147, %p148
    %p150 = pneg %p149
    // Predicated region
    $region9: #{_lambda_.3} parent=5 // pred_check
      _
    $region10: #{_lambda_.3} parent=5 // pred_check_branch
      %152 = sbr.rel (%p149) target = $region12
    $region11: #{_lambda_.3} parent=5 // pred_region
      %s153 = ssub.s32 %s10, 1
      // Predicated region
      $region13: #{_lambda_.3} parent=11 // pred_check
        %p154 = pneg %p69
      $region14: #{_lambda_.3} parent=11 // pred_check_branch
        %156 = sbr.rel (%p154) target = $region16
      $region15: #{_lambda_.3} parent=11 // pred_region
        _
      $region16: #{_lambda_.3} parent=11 // pred_fallthru
        _
      // Predicated region
      $region17: #{_lambda_.3} parent=11 // pred_check
        %p157 = pneg %p90
      $region18: #{_lambda_.3} parent=11 // pred_check_branch
        %159 = sbr.rel (%p157) target = $region20
      $region19: #{_lambda_.3} parent=11 // pred_region
        _
      $region20: #{_lambda_.3} parent=11 // pred_fallthru
        _
      // Predicated region
      $region21: #{_lambda_.3} parent=11 // pred_check
        %p160 = pneg %p111
      $region22: #{_lambda_.3} parent=11 // pred_check_branch
        %162 = sbr.rel (%p160) target = $region24
      $region23: #{_lambda_.3} parent=11 // pred_region
        _
      $region24: #{_lambda_.3} parent=11 // pred_fallthru
        _
    $region12: #{_lambda_.3} parent=5 // pred_fallthru
      _
    %p163 = scmp.lt.s32.totalorder %s10, 4
    // Predicated region
    $region25: #{_lambda_.3} parent=5 // pred_check
      %p164 = pneg %p163
    $region26: #{_lambda_.3} parent=5 // pred_check_branch
      %166 = sbr.rel (%p164) target = $region28
    $region27: #{_lambda_.3} parent=5 // pred_region
      // Predicated region
      $region29: #{_lambda_.3} parent=27 // pred_check
        %p167 = pneg %p42
      $region30: #{_lambda_.3} parent=27 // pred_check_branch
        %169 = sbr.rel (%p167) target = $region32
      $region31: #{_lambda_.3} parent=27 // pred_region
        %p170 = scmp.lt.s32.totalorder %s17, 1
        %s171 = scalar_select %p170, %s17, 1
        %s172 = smul.addr %s171, 43
        %s173 = smul.addr %s172, 8
        %s174 = scalar_lea.vmem %s0, %s173
      $region32: #{_lambda_.3} parent=27 // pred_fallthru
        _
    $region28: #{_lambda_.3} parent=5 // pred_fallthru
      _
    %p175 = scmp.le.s32.totalorder 1, %s10
    %p176 = scmp.lt.s32.totalorder %s10, 5
    %p177 = pnand %p175, %p176
    %p178 = pneg %p177
    // Predicated region
    $region33: #{_lambda_.3} parent=5 // pred_check
      _
    $region34: #{_lambda_.3} parent=5 // pred_check_branch
      %180 = sbr.rel (%p177) target = $region36
    $region35: #{_lambda_.3} parent=5 // pred_region
      %s181 = ssub.s32 %s10, 1
      %p182 = scmp.lt.s32.totalorder %s19, 1
      %s183 = scalar_select %p182, %s19, 1
      %s184 = smul.addr %s183, 43
      %s185 = smul.addr %s184, 8
      %s186 = scalar_lea.vmem %s0, %s185
      %p187 = pneg %p48
      %p188 = pneg %p45
      %p189 = pneg %p69
      %p190 = pneg %p66
      %p191 = pneg %p90
      %p192 = pneg %p87
      %p193 = pneg %p111
      %p194 = pneg %p108
      %p195 = pneg %p139
      %p196 = pneg %p136
      %s197 = smul.u32 18, %s20
      %p198 = scmp.lt.s32.totalorder %s19, 1
      %s199 = scalar_select %p198, %s19, 1
      %p200 = scmp.lt.s32.totalorder %s197, 35
      %s201 = scalar_select %p200, %s197, 35
      %s202 = smul.addr %s199, 36
      %s203 = sadd.s32 %s201, %s202
      %s204 = smul.addr %s203, 8
      %s205 = scalar_lea.vmem %s4, %s204
      %p206 = scmp.lt.s32.totalorder %s19, 1
      %s207 = scalar_select %p206, %s19, 1
      %s208 = smul.addr %s207, 43
      %s209 = smul.addr %s208, 8
      %s210 = scalar_lea.vmem %s0, %s209
      %s211 = smul.u32 18, %s20
      %p212 = scmp.lt.s32.totalorder %s19, 1
      %s213 = scalar_select %p212, %s19, 1
      %p214 = scmp.lt.s32.totalorder %s211, 35
      %s215 = scalar_select %p214, %s211, 35
      %s216 = smul.addr %s213, 36
      %s217 = sadd.s32 %s215, %s216
      %s218 = smul.addr %s217, 8
      %s219 = scalar_lea.vmem %s4, %s218
      %s220 = smul.u32 18, %s20
      %s221 = smul.u32 %s20, 144
      %s222 = scalar_lea.vmem %s210, %s221
      %v223 = vld [vmem:[%s222] sm:$0xff]
      %v224 = vld [vmem:[%s222 + $0x8] sm:$0xff]
      %v225 = vld [vmem:[%s222 + $0x10] sm:$0xff]
      %v226 = vld [vmem:[%s222 + $0x18] sm:$0xff]
      %v227 = vld [vmem:[%s222 + $0x20] sm:$0xff]
      %v228 = vld [vmem:[%s222 + $0x28] sm:$0xff]
      %v229 = vld [vmem:[%s222 + $0x30] sm:$0xff]
      %v230 = vld [vmem:[%s222 + $0x38] sm:$0xff]
      %v231 = vld [vmem:[%s222 + $0x40] sm:$0xff]
      %v232 = vld [vmem:[%s222 + $0x48] sm:$0xff]
      %v233 = vld [vmem:[%s222 + $0x50] sm:$0xff]
      %v234 = vld [vmem:[%s222 + $0x58] sm:$0xff]
      %v235 = vld [vmem:[%s222 + $0x60] sm:$0xff]
      %v236 = vld [vmem:[%s222 + $0x68] sm:$0xff]
      %v237 = vld [vmem:[%s222 + $0x70] sm:$0xff]
      %v238 = vld [vmem:[%s222 + $0x78] sm:$0xff]
      %v239 = vld [vmem:[%s222 + $0x80] sm:$0xff]
      %v240 = vld [vmem:[%s222 + $0x88] sm:$0xff]
      %v241 = vld [vmem:[%s222 + $0x90] sm:$0xff]
      %v242 = vld [vmem:[%s222 + $0x98] sm:$0xff]
      %v243 = vld [vmem:[%s222 + $0xa0] sm:$0xff]
      %v244 = vld [vmem:[%s222 + $0xa8] sm:$0xff]
      %v245 = vld [vmem:[%s222 + $0xb0] sm:$0xff]
      %vm264 = vcmask 1042432
      %v265 = vrot.slane %v223, 5
      %v266 = vrot.slane %v224, 5
      %v267 = vsel %vm264, %v265, %v266
      %v268 = vrot.slane %v225, 5
      %v269 = vsel %vm264, %v266, %v268
      %v270 = vrot.slane %v226, 5
      %v271 = vsel %vm264, %v268, %v270
      %v272 = vrot.slane %v227, 5
      %v273 = vsel %vm264, %v270, %v272
      %v274 = vrot.slane %v228, 5
      %v275 = vsel %vm264, %v272, %v274
      %v276 = vrot.slane %v229, 5
      %v277 = vsel %vm264, %v274, %v276
      %v278 = vrot.slane %v230, 5
      %v279 = vsel %vm264, %v276, %v278
      %v280 = vrot.slane %v231, 5
      %v281 = vsel %vm264, %v278, %v280
      %v282 = vrot.slane %v232, 5
      %v283 = vsel %vm264, %v280, %v282
      %v284 = vrot.slane %v233, 5
      %v285 = vsel %vm264, %v282, %v284
      %v286 = vrot.slane %v234, 5
      %v287 = vsel %vm264, %v284, %v286
      %v288 = vrot.slane %v235, 5
      %v289 = vsel %vm264, %v286, %v288
      %v290 = vrot.slane %v236, 5
      %v291 = vsel %vm264, %v288, %v290
      %v292 = vrot.slane %v237, 5
      %v293 = vsel %vm264, %v290, %v292
      %v294 = vrot.slane %v238, 5
      %v295 = vsel %vm264, %v292, %v294
      %v296 = vrot.slane %v239, 5
      %v297 = vsel %vm264, %v294, %v296
      %v298 = vrot.slane %v240, 5
      %v299 = vsel %vm264, %v296, %v298
      %v319 = vmax.f32 %v225, %v265
      %v320 = vmax.f32 %v226, %v267
      %v321 = vmax.f32 %v227, %v269
      %v322 = vmax.f32 %v228, %v271
      %v323 = vmax.f32 %v229, %v273
      %v324 = vmax.f32 %v230, %v275
      %v325 = vmax.f32 %v231, %v277
      %v326 = vmax.f32 %v232, %v279
      %v327 = vmax.f32 %v233, %v281
      %v328 = vmax.f32 %v234, %v283
      %v329 = vmax.f32 %v235, %v285
      %v330 = vmax.f32 %v236, %v287
      %v331 = vmax.f32 %v237, %v289
      %v332 = vmax.f32 %v238, %v291
      %v333 = vmax.f32 %v239, %v293
      %v334 = vmax.f32 %v240, %v295
      %v335 = vmax.f32 %v241, %v297
      %v336 = vmax.f32 %v242, %v299
      %v337 = vmax.f32 %v243, %v298
      %vm339 = vcmask 1041408
      %v340 = vrot.slane %v223, 6
      %v341 = vrot.slane %v224, 6
      %v342 = vsel %vm339, %v340, %v341
      %v343 = vrot.slane %v225, 6
      %v344 = vsel %vm339, %v341, %v343
      %v345 = vrot.slane %v226, 6
      %v346 = vsel %vm339, %v343, %v345
      %v347 = vrot.slane %v227, 6
      %v348 = vsel %vm339, %v345, %v347
      %v349 = vrot.slane %v228, 6
      %v350 = vsel %vm339, %v347, %v349
      %v351 = vrot.slane %v229, 6
      %v352 = vsel %vm339, %v349, %v351
      %v353 = vrot.slane %v230, 6
      %v354 = vsel %vm339, %v351, %v353
      %v355 = vrot.slane %v231, 6
      %v356 = vsel %vm339, %v353, %v355
      %v357 = vrot.slane %v232, 6
      %v358 = vsel %vm339, %v355, %v357
      %v359 = vrot.slane %v233, 6
      %v360 = vsel %vm339, %v357, %v359
      %v361 = vrot.slane %v234, 6
      %v362 = vsel %vm339, %v359, %v361
      %v363 = vrot.slane %v235, 6
      %v364 = vsel %vm339, %v361, %v363
      %v365 = vrot.slane %v236, 6
      %v366 = vsel %vm339, %v363, %v365
      %v367 = vrot.slane %v237, 6
      %v368 = vsel %vm339, %v365, %v367
      %v369 = vrot.slane %v238, 6
      %v370 = vsel %vm339, %v367, %v369
      %v371 = vrot.slane %v239, 6
      %v372 = vsel %vm339, %v369, %v371
      %v373 = vrot.slane %v240, 6
      %v374 = vsel %vm339, %v371, %v373
      %v375 = vrot.slane %v241, 6
      %v376 = vsel %vm339, %v373, %v375
      %v396 = vmax.f32 %v319, %v340
      %v397 = vmax.f32 %v320, %v342
      %v398 = vmax.f32 %v321, %v344
      %v399 = vmax.f32 %v322, %v346
      %v400 = vmax.f32 %v323, %v348
      %v401 = vmax.f32 %v324, %v350
      %v402 = vmax.f32 %v325, %v352
      %v403 = vmax.f32 %v326, %v354
      %v404 = vmax.f32 %v327, %v356
      %v405 = vmax.f32 %v328, %v358
      %v406 = vmax.f32 %v329, %v360
      %v407 = vmax.f32 %v330, %v362
      %v408 = vmax.f32 %v331, %v364
      %v409 = vmax.f32 %v332, %v366
      %v410 = vmax.f32 %v333, %v368
      %v411 = vmax.f32 %v334, %v370
      %v412 = vmax.f32 %v335, %v372
      %v413 = vmax.f32 %v336, %v374
      %v414 = vmax.f32 %v337, %v376
      %vm415 = vcmask 1040384
      %v416 = vrot.slane %v223, 7
      %v417 = vrot.slane %v224, 7
      %v418 = vsel %vm415, %v416, %v417
      %v419 = vrot.slane %v225, 7
      %v420 = vsel %vm415, %v417, %v419
      %v421 = vrot.slane %v226, 7
      %v422 = vsel %vm415, %v419, %v421
      %v423 = vrot.slane %v227, 7
      %v424 = vsel %vm415, %v421, %v423
      %v425 = vrot.slane %v228, 7
      %v426 = vsel %vm415, %v423, %v425
      %v427 = vrot.slane %v229, 7
      %v428 = vsel %vm415, %v425, %v427
      %v429 = vrot.slane %v230, 7
      %v430 = vsel %vm415, %v427, %v429
      %v431 = vrot.slane %v231, 7
      %v432 = vsel %vm415, %v429, %v431
      %v433 = vrot.slane %v232, 7
      %v434 = vsel %vm415, %v431, %v433
      %v435 = vrot.slane %v233, 7
      %v436 = vsel %vm415, %v433, %v435
      %v437 = vrot.slane %v234, 7
      %v438 = vsel %vm415, %v435, %v437
      %v439 = vrot.slane %v235, 7
      %v440 = vsel %vm415, %v437, %v439
      %v441 = vrot.slane %v236, 7
      %v442 = vsel %vm415, %v439, %v441
      %v443 = vrot.slane %v237, 7
      %v444 = vsel %vm415, %v441, %v443
      %v445 = vrot.slane %v238, 7
      %v446 = vsel %vm415, %v443, %v445
      %v447 = vrot.slane %v239, 7
      %v448 = vsel %vm415, %v445, %v447
      %v449 = vrot.slane %v240, 7
      %v450 = vsel %vm415, %v447, %v449
      %v451 = vrot.slane %v241, 7
      %v452 = vsel %vm415, %v449, %v451
      %v472 = vmax.f32 %v396, %v416
      %v473 = vmax.f32 %v397, %v418
      %v474 = vmax.f32 %v398, %v420
      %v475 = vmax.f32 %v399, %v422
      %v476 = vmax.f32 %v400, %v424
      %v477 = vmax.f32 %v401, %v426
      %v478 = vmax.f32 %v402, %v428
      %v479 = vmax.f32 %v403, %v430
      %v480 = vmax.f32 %v404, %v432
      %v481 = vmax.f32 %v405, %v434
      %v482 = vmax.f32 %v406, %v436
      %v483 = vmax.f32 %v407, %v438
      %v484 = vmax.f32 %v408, %v440
      %v485 = vmax.f32 %v409, %v442
      %v486 = vmax.f32 %v410, %v444
      %v487 = vmax.f32 %v411, %v446
      %v488 = vmax.f32 %v412, %v448
      %v489 = vmax.f32 %v413, %v450
      %v490 = vmax.f32 %v414, %v452
      %v493 = vrot.slane %v242, 7
      %v494 = vsel %vm415, %v451, %v493
      %v495 = vrot.slane %v243, 7
      %v496 = vsel %vm415, %v493, %v495
      %v500 = vmax.f32 %v472, %v419
      %v501 = vmax.f32 %v473, %v422
      %v502 = vmax.f32 %v474, %v424
      %v503 = vmax.f32 %v475, %v426
      %v504 = vmax.f32 %v476, %v428
      %v505 = vmax.f32 %v477, %v430
      %v506 = vmax.f32 %v478, %v432
      %v507 = vmax.f32 %v479, %v434
      %v508 = vmax.f32 %v480, %v436
      %v509 = vmax.f32 %v481, %v438
      %v510 = vmax.f32 %v482, %v440
      %v511 = vmax.f32 %v483, %v442
      %v512 = vmax.f32 %v484, %v444
      %v513 = vmax.f32 %v485, %v446
      %v514 = vmax.f32 %v486, %v448
      %v515 = vmax.f32 %v487, %v450
      %v516 = vmax.f32 %v488, %v452
      %v517 = vmax.f32 %v489, %v494
      %v518 = vmax.f32 %v490, %v496
      %vm519 = vcmask 1046528
      %v520 = vrot.slane %v225, 1
      %v521 = vrot.slane %v226, 1
      %v522 = vsel %vm519, %v520, %v521
      %v523 = vrot.slane %v227, 1
      %v524 = vsel %vm519, %v521, %v523
      %v525 = vrot.slane %v228, 1
      %v526 = vsel %vm519, %v523, %v525
      %v527 = vrot.slane %v229, 1
      %v528 = vsel %vm519, %v525, %v527
      %v529 = vrot.slane %v230, 1
      %v530 = vsel %vm519, %v527, %v529
      %v531 = vrot.slane %v231, 1
      %v532 = vsel %vm519, %v529, %v531
      %v533 = vrot.slane %v232, 1
      %v534 = vsel %vm519, %v531, %v533
      %v535 = vrot.slane %v233, 1
      %v536 = vsel %vm519, %v533, %v535
      %v537 = vrot.slane %v234, 1
      %v538 = vsel %vm519, %v535, %v537
      %v539 = vrot.slane %v235, 1
      %v540 = vsel %vm519, %v537, %v539
      %v541 = vrot.slane %v236, 1
      %v542 = vsel %vm519, %v539, %v541
      %v543 = vrot.slane %v237, 1
      %v544 = vsel %vm519, %v541, %v543
      %v545 = vrot.slane %v238, 1
      %v546 = vsel %vm519, %v543, %v545
      %v547 = vrot.slane %v239, 1
      %v548 = vsel %vm519, %v545, %v547
      %v549 = vrot.slane %v240, 1
      %v550 = vsel %vm519, %v547, %v549
      %v551 = vrot.slane %v241, 1
      %v552 = vsel %vm519, %v549, %v551
      %v553 = vrot.slane %v242, 1
      %v554 = vsel %vm519, %v551, %v553
      %v555 = vrot.slane %v243, 1
      %v556 = vsel %vm519, %v553, %v555
      %v576 = vmax.f32 %v500, %v522
      %v577 = vmax.f32 %v501, %v524
      %v578 = vmax.f32 %v502, %v526
      %v579 = vmax.f32 %v503, %v528
      %v580 = vmax.f32 %v504, %v530
      %v581 = vmax.f32 %v505, %v532
      %v582 = vmax.f32 %v506, %v534
      %v583 = vmax.f32 %v507, %v536
      %v584 = vmax.f32 %v508, %v538
      %v585 = vmax.f32 %v509, %v540
      %v586 = vmax.f32 %v510, %v542
      %v587 = vmax.f32 %v511, %v544
      %v588 = vmax.f32 %v512, %v546
      %v589 = vmax.f32 %v513, %v548
      %v590 = vmax.f32 %v514, %v550
      %v591 = vmax.f32 %v515, %v552
      %v592 = vmax.f32 %v516, %v554
      %v593 = vmax.f32 %v517, %v556
      %v594 = vmax.f32 %v518, %v555
      %v597 = vrot.slane %v244, 1
      %v598 = vsel %vm519, %v555, %v597
      %v599 = vrot.slane %v245, 1
      %v600 = vsel %vm519, %v597, %v599
      %v604 = vmax.f32 %v576, %v526
      %v605 = vmax.f32 %v577, %v528
      %v606 = vmax.f32 %v578, %v530
      %v607 = vmax.f32 %v579, %v532
      %v608 = vmax.f32 %v580, %v534
      %v609 = vmax.f32 %v581, %v536
      %v610 = vmax.f32 %v582, %v538
      %v611 = vmax.f32 %v583, %v540
      %v612 = vmax.f32 %v584, %v542
      %v613 = vmax.f32 %v585, %v544
      %v614 = vmax.f32 %v586, %v546
      %v615 = vmax.f32 %v587, %v548
      %v616 = vmax.f32 %v588, %v550
      %v617 = vmax.f32 %v589, %v552
      %v618 = vmax.f32 %v590, %v554
      %v619 = vmax.f32 %v591, %v556
      %v620 = vmax.f32 %v592, %v598
      %v621 = vmax.f32 %v593, %v600
      %v622 = vmax.f32 %v594, %v599
      %vm623 = vcmask 1045504
      %v624 = vrot.slane %v227, 2
      %v625 = vrot.slane %v228, 2
      %v626 = vsel %vm623, %v624, %v625
      %v627 = vrot.slane %v229, 2
      %v628 = vsel %vm623, %v625, %v627
      %v629 = vrot.slane %v230, 2
      %v630 = vsel %vm623, %v627, %v629
      %v631 = vrot.slane %v231, 2
      %v632 = vsel %vm623, %v629, %v631
      %v633 = vrot.slane %v232, 2
      %v634 = vsel %vm623, %v631, %v633
      %v635 = vrot.slane %v233, 2
      %v636 = vsel %vm623, %v633, %v635
      %v637 = vrot.slane %v234, 2
      %v638 = vsel %vm623, %v635, %v637
      %v639 = vrot.slane %v235, 2
      %v640 = vsel %vm623, %v637, %v639
      %v641 = vrot.slane %v236, 2
      %v642 = vsel %vm623, %v639, %v641
      %v643 = vrot.slane %v237, 2
      %v644 = vsel %vm623, %v641, %v643
      %v645 = vrot.slane %v238, 2
      %v646 = vsel %vm623, %v643, %v645
      %v647 = vrot.slane %v239, 2
      %v648 = vsel %vm623, %v645, %v647
      %v649 = vrot.slane %v240, 2
      %v650 = vsel %vm623, %v647, %v649
      %v651 = vrot.slane %v241, 2
      %v652 = vsel %vm623, %v649, %v651
      %v653 = vrot.slane %v242, 2
      %v654 = vsel %vm623, %v651, %v653
      %v655 = vrot.slane %v243, 2
      %v656 = vsel %vm623, %v653, %v655
      %v657 = vrot.slane %v244, 2
      %v658 = vsel %vm623, %v655, %v657
      %v659 = vrot.slane %v245, 2
      %v660 = vsel %vm623, %v657, %v659
      %v680 = vmax.f32 %v604, %v626
      %v681 = vmax.f32 %v605, %v628
      %v682 = vmax.f32 %v606, %v630
      %v683 = vmax.f32 %v607, %v632
      %v684 = vmax.f32 %v608, %v634
      %v685 = vmax.f32 %v609, %v636
      %v686 = vmax.f32 %v610, %v638
      %v687 = vmax.f32 %v611, %v640
      %v688 = vmax.f32 %v612, %v642
      %v689 = vmax.f32 %v613, %v644
      %v690 = vmax.f32 %v614, %v646
      %v691 = vmax.f32 %v615, %v648
      %v692 = vmax.f32 %v616, %v650
      %v693 = vmax.f32 %v617, %v652
      %v694 = vmax.f32 %v618, %v654
      %v695 = vmax.f32 %v619, %v656
      %v696 = vmax.f32 %v620, %v658
      %v697 = vmax.f32 %v621, %v660
      %v698 = vmax.f32 %v622, %v659
      %vm699 = vcmask 1044480
      %v700 = vrot.slane %v227, 3
      %v701 = vrot.slane %v228, 3
      %v702 = vsel %vm699, %v700, %v701
      %v703 = vrot.slane %v229, 3
      %v704 = vsel %vm699, %v701, %v703
      %v705 = vrot.slane %v230, 3
      %v706 = vsel %vm699, %v703, %v705
      %v707 = vrot.slane %v231, 3
      %v708 = vsel %vm699, %v705, %v707
      %v709 = vrot.slane %v232, 3
      %v710 = vsel %vm699, %v707, %v709
      %v711 = vrot.slane %v233, 3
      %v712 = vsel %vm699, %v709, %v711
      %v713 = vrot.slane %v234, 3
      %v714 = vsel %vm699, %v711, %v713
      %v715 = vrot.slane %v235, 3
      %v716 = vsel %vm699, %v713, %v715
      %v717 = vrot.slane %v236, 3
      %v718 = vsel %vm699, %v715, %v717
      %v719 = vrot.slane %v237, 3
      %v720 = vsel %vm699, %v717, %v719
      %v721 = vrot.slane %v238, 3
      %v722 = vsel %vm699, %v719, %v721
      %v723 = vrot.slane %v239, 3
      %v724 = vsel %vm699, %v721, %v723
      %v725 = vrot.slane %v240, 3
      %v726 = vsel %vm699, %v723, %v725
      %v727 = vrot.slane %v241, 3
      %v728 = vsel %vm699, %v725, %v727
      %v729 = vrot.slane %v242, 3
      %v730 = vsel %vm699, %v727, %v729
      %v731 = vrot.slane %v243, 3
      %v732 = vsel %vm699, %v729, %v731
      %v733 = vrot.slane %v244, 3
      %v734 = vsel %vm699, %v731, %v733
      %v735 = vrot.slane %v245, 3
      %v736 = vsel %vm699, %v733, %v735
      %v756 = vmax.f32 %v680, %v702
      %v757 = vmax.f32 %v681, %v704
      %v758 = vmax.f32 %v682, %v706
      %v759 = vmax.f32 %v683, %v708
      %v760 = vmax.f32 %v684, %v710
      %v761 = vmax.f32 %v685, %v712
      %v762 = vmax.f32 %v686, %v714
      %v763 = vmax.f32 %v687, %v716
      %v764 = vmax.f32 %v688, %v718
      %v765 = vmax.f32 %v689, %v720
      %v766 = vmax.f32 %v690, %v722
      %v767 = vmax.f32 %v691, %v724
      %v768 = vmax.f32 %v692, %v726
      %v769 = vmax.f32 %v693, %v728
      %v770 = vmax.f32 %v694, %v730
      %v771 = vmax.f32 %v695, %v732
      %v772 = vmax.f32 %v696, %v734
      %v773 = vmax.f32 %v697, %v736
      %v774 = vmax.f32 %v698, %v735
      %v775 = vld [vmem:[%s1] sm:$0xf]
      %s776 = scalar_lea.vmem %s1, 4
      %v777 = vld [vmem:[%s776] sm:$0xf]
      %v797 = vrot.slane %v756, 3
      %v798 = vrot.slane %v757, 3
      %v799 = vsel %vm699, %v797, %v798
      %v800 = vrot.slane %v758, 3
      %v801 = vsel %vm699, %v798, %v800
      %v802 = vrot.slane %v759, 3
      %v803 = vsel %vm699, %v800, %v802
      %v804 = vrot.slane %v760, 3
      %v805 = vsel %vm699, %v802, %v804
      %v806 = vrot.slane %v761, 3
      %v807 = vsel %vm699, %v804, %v806
      %v808 = vrot.slane %v762, 3
      %v809 = vsel %vm699, %v806, %v808
      %v810 = vrot.slane %v763, 3
      %v811 = vsel %vm699, %v808, %v810
      %v812 = vrot.slane %v764, 3
      %v813 = vsel %vm699, %v810, %v812
      %v814 = vrot.slane %v765, 3
      %v815 = vsel %vm699, %v812, %v814
      %v816 = vrot.slane %v766, 3
      %v817 = vsel %vm699, %v814, %v816
      %v818 = vrot.slane %v767, 3
      %v819 = vsel %vm699, %v816, %v818
      %v820 = vrot.slane %v768, 3
      %v821 = vsel %vm699, %v818, %v820
      %v822 = vrot.slane %v769, 3
      %v823 = vsel %vm699, %v820, %v822
      %v824 = vrot.slane %v770, 3
      %v825 = vsel %vm699, %v822, %v824
      %v826 = vrot.slane %v771, 3
      %v827 = vsel %vm699, %v824, %v826
      %v828 = vrot.slane %v772, 3
      %v829 = vsel %vm699, %v826, %v828
      %v830 = vrot.slane %v773, 3
      %v831 = vsel %vm699, %v828, %v830
      %v832 = vrot.slane %v774, 3
      %v833 = vsel %vm699, %v830, %v832
      %vm834 = vcmask 31744
      %v835 = vsel %vm834, %v799, 0
      %v837 = vsel %vm834, %v801, 0
      %v839 = vsel %vm834, %v803, 0
      %v841 = vsel %vm834, %v805, 0
      %v843 = vsel %vm834, %v807, 0
      %v845 = vsel %vm834, %v809, 0
      %v847 = vsel %vm834, %v811, 0
      %v849 = vsel %vm834, %v813, 0
      %v851 = vsel %vm834, %v815, 0
      %v853 = vsel %vm834, %v817, 0
      %v855 = vsel %vm834, %v819, 0
      %v857 = vsel %vm834, %v821, 0
      %v859 = vsel %vm834, %v823, 0
      %v861 = vsel %vm834, %v825, 0
      %v863 = vsel %vm834, %v827, 0
      %v865 = vsel %vm834, %v829, 0
      %v867 = vsel %vm834, %v831, 0
      %v869 = vsel %vm834, %v833, 0
      %vm871 = vcmask 1043456
      %v873 = vsel %vm871, %v777, 0
      %875 = vmatpush.msra.mxu0 0.0
      %876 = vmatpush.msra.mxu0 0.0
      %877 = vmatpush.msra.mxu0 0.0
      %878 = vmatpush.msra.mxu0 0.0
      %879 = vmatpush.msra.mxu0 0.0
      %880 = vmatpush.msra.mxu0 0.0
      %881 = vmatpush.msra.mxu0 0.0
      %882 = vmatpush.msra.mxu0 0.0
      %883 = vmatpush.msra.mxu0 0.0
      %884 = vmatpush.msra.mxu0 0.0
      %885 = vmatpush.msra.mxu0 0.0
      %886 = vmatpush.msra.mxu0 0.0
      %887 = vmatpush.msra.mxu0 0.0
      %888 = vmatpush.msra.mxu0 0.0
      %889 = vmatpush.msra.mxu0 0.0
      %890 = vmatpush.msra.mxu0 %v873
      %891 = vmatmul.f32.gmra.mxu0 %v835
      %v892 = vpop.f32.mrf.mxu0
      %v893 = vadd.f32 0.0, %v892
      %894 = vmatmul.f32.gmra.mxu0 %v837
      %v895 = vpop.f32.mrf.mxu0
      %v896 = vadd.f32 0.0, %v895
      %897 = vmatmul.f32.gmra.mxu0 %v839
      %v898 = vpop.f32.mrf.mxu0
      %v899 = vadd.f32 0.0, %v898
      %900 = vmatmul.f32.gmra.mxu0 %v841
      %v901 = vpop.f32.mrf.mxu0
      %v902 = vadd.f32 0.0, %v901
      %903 = vmatmul.f32.gmra.mxu0 %v843
      %v904 = vpop.f32.mrf.mxu0
      %v905 = vadd.f32 0.0, %v904
      %906 = vmatmul.f32.gmra.mxu0 %v845
      %v907 = vpop.f32.mrf.mxu0
      %v908 = vadd.f32 0.0, %v907
      %909 = vmatmul.f32.gmra.mxu0 %v847
      %v910 = vpop.f32.mrf.mxu0
      %v911 = vadd.f32 0.0, %v910
      %912 = vmatmul.f32.gmra.mxu0 %v849
      %v913 = vpop.f32.mrf.mxu0
      %v914 = vadd.f32 0.0, %v913
      %915 = vmatmul.f32.gmra.mxu0 %v851
      %v916 = vpop.f32.mrf.mxu0
      %v917 = vadd.f32 0.0, %v916
      %918 = vmatmul.f32.gmra.mxu0 %v853
      %v919 = vpop.f32.mrf.mxu0
      %v920 = vadd.f32 0.0, %v919
      %921 = vmatmul.f32.gmra.mxu0 %v855
      %v922 = vpop.f32.mrf.mxu0
      %v923 = vadd.f32 0.0, %v922
      %924 = vmatmul.f32.gmra.mxu0 %v857
      %v925 = vpop.f32.mrf.mxu0
      %v926 = vadd.f32 0.0, %v925
      %927 = vmatmul.f32.gmra.mxu0 %v859
      %v928 = vpop.f32.mrf.mxu0
      %v929 = vadd.f32 0.0, %v928
      %930 = vmatmul.f32.gmra.mxu0 %v861
      %v931 = vpop.f32.mrf.mxu0
      %v932 = vadd.f32 0.0, %v931
      %933 = vmatmul.f32.gmra.mxu0 %v863
      %v934 = vpop.f32.mrf.mxu0
      %v935 = vadd.f32 0.0, %v934
      %936 = vmatmul.f32.gmra.mxu0 %v865
      %v937 = vpop.f32.mrf.mxu0
      %v938 = vadd.f32 0.0, %v937
      %939 = vmatmul.f32.gmra.mxu0 %v867
      %v940 = vpop.f32.mrf.mxu0
      %v941 = vadd.f32 0.0, %v940
      %942 = vmatmul.f32.gmra.mxu0 %v869
      %v943 = vpop.f32.mrf.mxu0
      %v944 = vadd.f32 0.0, %v943
      %945 = vdwg.mxu0
      %v946 = vrot.slane %v225, 3
      %v947 = vrot.slane %v226, 3
      %v948 = vsel %vm699, %v946, %v947
      %v949 = vsel %vm699, %v947, %v700
      %v950 = vsel %vm834, %v948, 0
      %v952 = vsel %vm834, %v949, 0
      %v954 = vsel %vm834, %v702, 0
      %v956 = vsel %vm834, %v704, 0
      %v958 = vsel %vm834, %v706, 0
      %v960 = vsel %vm834, %v708, 0
      %v962 = vsel %vm834, %v710, 0
      %v964 = vsel %vm834, %v712, 0
      %v966 = vsel %vm834, %v714, 0
      %v968 = vsel %vm834, %v716, 0
      %v970 = vsel %vm834, %v718, 0
      %v972 = vsel %vm834, %v720, 0
      %v974 = vsel %vm834, %v722, 0
      %v976 = vsel %vm834, %v724, 0
      %v978 = vsel %vm834, %v726, 0
      %v980 = vsel %vm834, %v728, 0
      %v982 = vsel %vm834, %v730, 0
      %v984 = vsel %vm834, %v732, 0
      %v987 = vsel %vm871, %v775, 0
      %989 = vmatpush.msra.mxu0 0.0
      %990 = vmatpush.msra.mxu0 0.0
      %991 = vmatpush.msra.mxu0 0.0
      %992 = vmatpush.msra.mxu0 0.0
      %993 = vmatpush.msra.mxu0 0.0
      %994 = vmatpush.msra.mxu0 0.0
      %995 = vmatpush.msra.mxu0 0.0
      %996 = vmatpush.msra.mxu0 0.0
      %997 = vmatpush.msra.mxu0 0.0
      %998 = vmatpush.msra.mxu0 0.0
      %999 = vmatpush.msra.mxu0 0.0
      %1000 = vmatpush.msra.mxu0 0.0
      %1001 = vmatpush.msra.mxu0 0.0
      %1002 = vmatpush.msra.mxu0 0.0
      %1003 = vmatpush.msra.mxu0 0.0
      %1004 = vmatpush.msra.mxu0 %v987
      %1005 = vmatmul.f32.gmra.mxu0 %v950
      %v1006 = vpop.f32.mrf.mxu0
      %v1007 = vadd.f32 %v893, %v1006
      %1008 = vmatmul.f32.gmra.mxu0 %v952
      %v1009 = vpop.f32.mrf.mxu0
      %v1010 = vadd.f32 %v896, %v1009
      %1011 = vmatmul.f32.gmra.mxu0 %v954
      %v1012 = vpop.f32.mrf.mxu0
      %v1013 = vadd.f32 %v899, %v1012
      %1014 = vmatmul.f32.gmra.mxu0 %v956
      %v1015 = vpop.f32.mrf.mxu0
      %v1016 = vadd.f32 %v902, %v1015
      %1017 = vmatmul.f32.gmra.mxu0 %v958
      %v1018 = vpop.f32.mrf.mxu0
      %v1019 = vadd.f32 %v905, %v1018
      %1020 = vmatmul.f32.gmra.mxu0 %v960
      %v1021 = vpop.f32.mrf.mxu0
      %v1022 = vadd.f32 %v908, %v1021
      %1023 = vmatmul.f32.gmra.mxu0 %v962
      %v1024 = vpop.f32.mrf.mxu0
      %v1025 = vadd.f32 %v911, %v1024
      %1026 = vmatmul.f32.gmra.mxu0 %v964
      %v1027 = vpop.f32.mrf.mxu0
      %v1028 = vadd.f32 %v914, %v1027
      %1029 = vmatmul.f32.gmra.mxu0 %v966
      %v1030 = vpop.f32.mrf.mxu0
      %v1031 = vadd.f32 %v917, %v1030
      %1032 = vmatmul.f32.gmra.mxu0 %v968
      %v1033 = vpop.f32.mrf.mxu0
      %v1034 = vadd.f32 %v920, %v1033
      %1035 = vmatmul.f32.gmra.mxu0 %v970
      %v1036 = vpop.f32.mrf.mxu0
      %v1037 = vadd.f32 %v923, %v1036
      %1038 = vmatmul.f32.gmra.mxu0 %v972
      %v1039 = vpop.f32.mrf.mxu0
      %v1040 = vadd.f32 %v926, %v1039
      %1041 = vmatmul.f32.gmra.mxu0 %v974
      %v1042 = vpop.f32.mrf.mxu0
      %v1043 = vadd.f32 %v929, %v1042
      %1044 = vmatmul.f32.gmra.mxu0 %v976
      %v1045 = vpop.f32.mrf.mxu0
      %v1046 = vadd.f32 %v932, %v1045
      %1047 = vmatmul.f32.gmra.mxu0 %v978
      %v1048 = vpop.f32.mrf.mxu0
      %v1049 = vadd.f32 %v935, %v1048
      %1050 = vmatmul.f32.gmra.mxu0 %v980
      %v1051 = vpop.f32.mrf.mxu0
      %v1052 = vadd.f32 %v938, %v1051
      %1053 = vmatmul.f32.gmra.mxu0 %v982
      %v1054 = vpop.f32.mrf.mxu0
      %v1055 = vadd.f32 %v941, %v1054
      %1056 = vmatmul.f32.gmra.mxu0 %v984
      %v1057 = vpop.f32.mrf.mxu0
      %v1058 = vadd.f32 %v944, %v1057
      %1059 = vdwg.mxu0
      %v1060 = vld [vmem:[%s2] sm:$0x1]
      %v1062 = vperm.slane %v1060, 0
      %v1064 = vmul.f32 %v1007, %v1062
      %v1065 = vmul.f32 %v1010, %v1062
      %v1066 = vmul.f32 %v1013, %v1062
      %v1067 = vmul.f32 %v1016, %v1062
      %v1068 = vmul.f32 %v1019, %v1062
      %v1069 = vmul.f32 %v1022, %v1062
      %v1070 = vmul.f32 %v1025, %v1062
      %v1071 = vmul.f32 %v1028, %v1062
      %v1072 = vmul.f32 %v1031, %v1062
      %v1073 = vmul.f32 %v1034, %v1062
      %v1074 = vmul.f32 %v1037, %v1062
      %v1075 = vmul.f32 %v1040, %v1062
      %v1076 = vmul.f32 %v1043, %v1062
      %v1077 = vmul.f32 %v1046, %v1062
      %v1078 = vmul.f32 %v1049, %v1062
      %v1079 = vmul.f32 %v1052, %v1062
      %v1080 = vmul.f32 %v1055, %v1062
      %v1081 = vmul.f32 %v1058, %v1062
      %v1082 = vld [vmem:[%s3] sm:$0x1]
      %v1084 = vperm.slane %v1082, 0
      %v1086 = vadd.f32 %v1064, %v1084
      %v1087 = vadd.f32 %v1065, %v1084
      %v1088 = vadd.f32 %v1066, %v1084
      %v1089 = vadd.f32 %v1067, %v1084
      %v1090 = vadd.f32 %v1068, %v1084
      %v1091 = vadd.f32 %v1069, %v1084
      %v1092 = vadd.f32 %v1070, %v1084
      %v1093 = vadd.f32 %v1071, %v1084
      %v1094 = vadd.f32 %v1072, %v1084
      %v1095 = vadd.f32 %v1073, %v1084
      %v1096 = vadd.f32 %v1074, %v1084
      %v1097 = vadd.f32 %v1075, %v1084
      %v1098 = vadd.f32 %v1076, %v1084
      %v1099 = vadd.f32 %v1077, %v1084
      %v1100 = vadd.f32 %v1078, %v1084
      %v1101 = vadd.f32 %v1079, %v1084
      %v1102 = vadd.f32 %v1080, %v1084
      %v1103 = vadd.f32 %v1081, %v1084
      %v1104 = vmax.f32 %v1086, 0.0
      %v1105 = vmax.f32 %v1087, 0.0
      %v1106 = vmax.f32 %v1088, 0.0
      %v1107 = vmax.f32 %v1089, 0.0
      %v1108 = vmax.f32 %v1090, 0.0
      %v1109 = vmax.f32 %v1091, 0.0
      %v1110 = vmax.f32 %v1092, 0.0
      %v1111 = vmax.f32 %v1093, 0.0
      %v1112 = vmax.f32 %v1094, 0.0
      %v1113 = vmax.f32 %v1095, 0.0
      %v1114 = vmax.f32 %v1096, 0.0
      %v1115 = vmax.f32 %v1097, 0.0
      %v1116 = vmax.f32 %v1098, 0.0
      %v1117 = vmax.f32 %v1099, 0.0
      %v1118 = vmax.f32 %v1100, 0.0
      %v1119 = vmax.f32 %v1101, 0.0
      %v1120 = vmax.f32 %v1102, 0.0
      %v1121 = vmax.f32 %v1103, 0.0
      %1122 = vst [vmem:[%s219] sm:$0xff] %v1104
      %1123 = vst [vmem:[%s219 + $0x8] sm:$0xff] %v1105
      %1124 = vst [vmem:[%s219 + $0x10] sm:$0xff] %v1106
      %1125 = vst [vmem:[%s219 + $0x18] sm:$0xff] %v1107
      %1126 = vst [vmem:[%s219 + $0x20] sm:$0xff] %v1108
      %1127 = vst [vmem:[%s219 + $0x28] sm:$0xff] %v1109
      %1128 = vst [vmem:[%s219 + $0x30] sm:$0xff] %v1110
      %1129 = vst [vmem:[%s219 + $0x38] sm:$0xff] %v1111
      %1130 = vst [vmem:[%s219 + $0x40] sm:$0xff] %v1112
      %1131 = vst [vmem:[%s219 + $0x48] sm:$0xff] %v1113
      %1132 = vst [vmem:[%s219 + $0x50] sm:$0xff] %v1114
      %1133 = vst [vmem:[%s219 + $0x58] sm:$0xff] %v1115
      %1134 = vst [vmem:[%s219 + $0x60] sm:$0xff] %v1116
      %1135 = vst [vmem:[%s219 + $0x68] sm:$0xff] %v1117
      %1136 = vst [vmem:[%s219 + $0x70] sm:$0xff] %v1118
      %1137 = vst [vmem:[%s219 + $0x78] sm:$0xff] %v1119
      %1138 = vst [vmem:[%s219 + $0x80] sm:$0xff] %v1120
      %1139 = vst [vmem:[%s219 + $0x88] sm:$0xff] %v1121
      %s1140 = smul.u32 18, %s20
      %p1141 = scmp.lt.s32.totalorder %s19, 1
      %s1142 = scalar_select %p1141, %s19, 1
      %p1143 = scmp.lt.s32.totalorder %s1140, 35
      %s1144 = scalar_select %p1143, %s1140, 35
      %s1145 = smul.addr %s1142, 36
      %s1146 = sadd.s32 %s1144, %s1145
      %s1147 = smul.addr %s1146, 8
      %s1148 = scalar_lea.vmem %s4, %s1147
      // Predicated region
      $region37: #{_lambda_.3} parent=35 // pred_check
        %p1149 = pneg %p136
      $region38: #{_lambda_.3} parent=35 // pred_check_branch
        %1151 = sbr.rel (%p1149) target = $region40
      $region39: #{_lambda_.3} parent=35 // pred_region
        %s1152 = smul.u32 18, %s20
      $region40: #{_lambda_.3} parent=35 // pred_fallthru
        _
    $region36: #{_lambda_.3} parent=5 // pred_fallthru
      _
    %p1153 = scmp.le.s32.totalorder 2, %s10
    // Predicated region
    $region41: #{_lambda_.3} parent=5 // pred_check
      %p1154 = pneg %p1153
    $region42: #{_lambda_.3} parent=5 // pred_check_branch
      %1156 = sbr.rel (%p1154) target = $region44
    $region43: #{_lambda_.3} parent=5 // pred_region
      %s1157 = ssub.s32 %s10, 2
      // Predicated region
      $region45: #{_lambda_.3} parent=43 // pred_check
        %p1158 = pneg %p142
      $region46: #{_lambda_.3} parent=43 // pred_check_branch
        %1160 = sbr.rel (%p1158) target = $region48
      $region47: #{_lambda_.3} parent=43 // pred_region
        %s1161 = smul.u32 18, %s22
        %p1162 = scmp.lt.s32.totalorder %s21, 1
        %s1163 = scalar_select %p1162, %s21, 1
        %p1164 = scmp.lt.s32.totalorder %s1161, 35
        %s1165 = scalar_select %p1164, %s1161, 35
        %s1166 = smul.addr %s1163, 36
        %s1167 = sadd.s32 %s1165, %s1166
        %s1168 = smul.addr %s1167, 8
        %s1169 = scalar_lea.vmem %s4, %s1168
      $region48: #{_lambda_.3} parent=43 // pred_fallthru
        _
    $region44: #{_lambda_.3} parent=5 // pred_fallthru
      _
  $region6: #{_lambda_.3} parent=0 // loop_footer
    %s14 = sadd.s32 1, %s10
  $region7: #{_lambda_.3} parent=0 // loop_footer_branch
    %9 = sbr.rel target = $region3
  $region8: #{_lambda_.3} parent=0 // loop_exit
    _

// kernel: _lambda_.5
$region0: #{_lambda_.5}
  #allocation0 [shape = 'u32[]', space=smem, size = 0x4, offset = 0x4, fixed_abs, tag = 'smem constant byte address 0x4 - core index']
  #allocation1 [shape = 'u32[72,128]{1,0:T(1,128)}', space=vmem, size = 0x9000, scoped, tag = 'internal scratch']
  %s0 = inlined_call_operand.vmem [shape: f32[2,420,4], index: 0, kind: input, shape index: {}]
  %s1 = inlined_call_operand.vmem [shape: f32[25,4,128], index: 1, kind: input, shape index: {}]
  %s2 = inlined_call_operand.vmem [shape: f32[1,128], index: 2, kind: input, shape index: {}]
  %s3 = inlined_call_operand.vmem [shape: f32[1,128], index: 3, kind: input, shape index: {}]
  %s4 = inlined_call_operand.vmem [shape: f32[2,320,128], index: 4, kind: output, shape index: {}]
  %s5 = sld [smem:[#allocation0]]
  $region49: #{_lambda_.5} parent=0
    _
  %s7 = ssub.s32 1, %s5
  %s8 = scalar_select 0, %s7, %s5
  loop: start=0, step=1, limit=6
  $region2: #{_lambda_.5} parent=0 // loop_pre_header
    _
  $region3: #{_lambda_.5} parent=0 // loop_header
    %s10 = sphi 0, %s14
    %p11 = scmp.ge.s32.totalorder %s10, 6
    %s17 = sphi 0, %s29
    %s18 = sphi 0, %s25
    %s19 = sphi 0, %s17
    %s20 = sphi 0, %s18
    %s21 = sphi 0, %s19
    %s22 = sphi 0, %s20
    %s32 = sphi 0, %s34
    %s35 = sphi 0, %s32
    %s36 = sphi 0, %s35
    %s52 = sphi 0, %s36
    %s56 = sphi 0, %s56
    %s58 = sphi 0, %s56
    %s59 = sphi 0, %s58
    %s73 = sphi 0, %s59
    %s77 = sphi 0, %s77
    %s79 = sphi 0, %s77
    %s80 = sphi 0, %s79
    %s94 = sphi 0, %s80
    %s98 = sphi 0, %s98
    %s100 = sphi 0, %s98
    %s101 = sphi 0, %s100
    %s115 = sphi 0, %s101
    %s123 = sphi 0, %s125
    %s126 = sphi 0, %s123
    %s127 = sphi 0, %s126
    %s143 = sphi 0, %s127
  $region4: #{_lambda_.5} parent=0 // loop_header_branch
    %13 = sbr.rel (%p11) target = $region8
  $region5: #{_lambda_.5} parent=0 // loop_body
    %s15 = ssub.s32 %s10, 1
    %s16 = ssub.s32 %s10, 2
    %s23 = sadd.s32 1, %s18
    %p24 = scmp.ge.s32.totalorder %s23, 2
    %s25 = scalar_select %p24, 0, %s23
    %s26 = sadd.s32 1, %s17
    %s27 = scalar_select %p24, %s26, %s17
    %p28 = scmp.ge.s32.totalorder %s27, 2
    %s29 = scalar_select %p28, 0, %s27
    %s30 = ssub.s32 %s17, %s29
    %p31 = scmp.eq.s32.totalorder %s30, 0
    %s33 = sadd.s32 %s32, 1
    %s34 = scalar_select %p31, %s32, %s33
    %p37 = pneg %p31
    %p38 = scmp.eq.s32.totalorder %s10, 3
    %p39 = por %p37, %p38
    %p40 = scmp.ne.s32.totalorder %s32, %s35
    %p41 = scmp.eq.s32.totalorder %s10, 0
    %p42 = por %p40, %p41
    %p43 = scmp.ne.s32.totalorder %s32, %s35
    %p44 = scmp.eq.s32.totalorder %s15, 3
    %p45 = por %p43, %p44
    %p46 = scmp.ne.s32.totalorder %s35, %s36
    %p47 = scmp.eq.s32.totalorder %s15, 0
    %p48 = por %p46, %p47
    %p49 = scmp.ne.s32.totalorder %s35, %s36
    %p50 = scmp.eq.s32.totalorder %s16, 3
    %p51 = por %p49, %p50
    %p53 = scmp.ne.s32.totalorder %s36, %s52
    %p54 = scmp.eq.s32.totalorder %s16, 0
    %p55 = por %p53, %p54
    %s57 = sadd.s32 %s56, 1
    %p60 = scmp.eq.s32.totalorder %s10, 3
    %p61 = scmp.ne.s32.totalorder %s56, %s58
    %p62 = scmp.eq.s32.totalorder %s10, 0
    %p63 = por %p61, %p62
    %p64 = scmp.ne.s32.totalorder %s56, %s58
    %p65 = scmp.eq.s32.totalorder %s15, 3
    %p66 = por %p64, %p65
    %p67 = scmp.ne.s32.totalorder %s58, %s59
    %p68 = scmp.eq.s32.totalorder %s15, 0
    %p69 = por %p67, %p68
    %p70 = scmp.ne.s32.totalorder %s58, %s59
    %p71 = scmp.eq.s32.totalorder %s16, 3
    %p72 = por %p70, %p71
    %p74 = scmp.ne.s32.totalorder %s59, %s73
    %p75 = scmp.eq.s32.totalorder %s16, 0
    %p76 = por %p74, %p75
    %s78 = sadd.s32 %s77, 1
    %p81 = scmp.eq.s32.totalorder %s10, 3
    %p82 = scmp.ne.s32.totalorder %s77, %s79
    %p83 = scmp.eq.s32.totalorder %s10, 0
    %p84 = por %p82, %p83
    %p85 = scmp.ne.s32.totalorder %s77, %s79
    %p86 = scmp.eq.s32.totalorder %s15, 3
    %p87 = por %p85, %p86
    %p88 = scmp.ne.s32.totalorder %s79, %s80
    %p89 = scmp.eq.s32.totalorder %s15, 0
    %p90 = por %p88, %p89
    %p91 = scmp.ne.s32.totalorder %s79, %s80
    %p92 = scmp.eq.s32.totalorder %s16, 3
    %p93 = por %p91, %p92
    %p95 = scmp.ne.s32.totalorder %s80, %s94
    %p96 = scmp.eq.s32.totalorder %s16, 0
    %p97 = por %p95, %p96
    %s99 = sadd.s32 %s98, 1
    %p102 = scmp.eq.s32.totalorder %s10, 3
    %p103 = scmp.ne.s32.totalorder %s98, %s100
    %p104 = scmp.eq.s32.totalorder %s10, 0
    %p105 = por %p103, %p104
    %p106 = scmp.ne.s32.totalorder %s98, %s100
    %p107 = scmp.eq.s32.totalorder %s15, 3
    %p108 = por %p106, %p107
    %p109 = scmp.ne.s32.totalorder %s100, %s101
    %p110 = scmp.eq.s32.totalorder %s15, 0
    %p111 = por %p109, %p110
    %p112 = scmp.ne.s32.totalorder %s100, %s101
    %p113 = scmp.eq.s32.totalorder %s16, 3
    %p114 = por %p112, %p113
    %p116 = scmp.ne.s32.totalorder %s101, %s115
    %p117 = scmp.eq.s32.totalorder %s16, 0
    %p118 = por %p116, %p117
    %s119 = ssub.s32 %s17, %s29
    %s120 = ssub.s32 %s18, %s25
    %s121 = sor.u32 %s119, %s120
    %p122 = scmp.eq.s32.totalorder %s121, 0
    %s124 = sadd.s32 %s123, 1
    %s125 = scalar_select %p122, %s123, %s124
    %p128 = pneg %p122
    %p129 = scmp.eq.s32.totalorder %s10, 3
    %p130 = por %p128, %p129
    %p131 = scmp.ne.s32.totalorder %s123, %s126
    %p132 = scmp.eq.s32.totalorder %s10, 0
    %p133 = por %p131, %p132
    %p134 = scmp.ne.s32.totalorder %s123, %s126
    %p135 = scmp.eq.s32.totalorder %s15, 3
    %p136 = por %p134, %p135
    %p137 = scmp.ne.s32.totalorder %s126, %s127
    %p138 = scmp.eq.s32.totalorder %s15, 0
    %p139 = por %p137, %p138
    %p140 = scmp.ne.s32.totalorder %s126, %s127
    %p141 = scmp.eq.s32.totalorder %s16, 3
    %p142 = por %p140, %p141
    %p144 = scmp.ne.s32.totalorder %s127, %s143
    %p145 = scmp.eq.s32.totalorder %s16, 0
    %p146 = por %p144, %p145
    %p147 = scmp.le.s32.totalorder 1, %s10
    %p148 = scmp.lt.s32.totalorder %s10, 5
    %p149 = pnand %p147, %p148
    %p150 = pneg %p149
    // Predicated region
    $region9: #{_lambda_.5} parent=5 // pred_check
      _
    $region10: #{_lambda_.5} parent=5 // pred_check_branch
      %152 = sbr.rel (%p149) target = $region12
    $region11: #{_lambda_.5} parent=5 // pred_region
      %s153 = ssub.s32 %s10, 1
      // Predicated region
      $region13: #{_lambda_.5} parent=11 // pred_check
        %p154 = pneg %p69
      $region14: #{_lambda_.5} parent=11 // pred_check_branch
        %156 = sbr.rel (%p154) target = $region16
      $region15: #{_lambda_.5} parent=11 // pred_region
        _
      $region16: #{_lambda_.5} parent=11 // pred_fallthru
        _
      // Predicated region
      $region17: #{_lambda_.5} parent=11 // pred_check
        %p157 = pneg %p90
      $region18: #{_lambda_.5} parent=11 // pred_check_branch
        %159 = sbr.rel (%p157) target = $region20
      $region19: #{_lambda_.5} parent=11 // pred_region
        _
      $region20: #{_lambda_.5} parent=11 // pred_fallthru
        _
      // Predicated region
      $region21: #{_lambda_.5} parent=11 // pred_check
        %p160 = pneg %p111
      $region22: #{_lambda_.5} parent=11 // pred_check_branch
        %162 = sbr.rel (%p160) target = $region24
      $region23: #{_lambda_.5} parent=11 // pred_region
        _
      $region24: #{_lambda_.5} parent=11 // pred_fallthru
        _
    $region12: #{_lambda_.5} parent=5 // pred_fallthru
      _
    %p163 = scmp.lt.s32.totalorder %s10, 4
    // Predicated region
    $region25: #{_lambda_.5} parent=5 // pred_check
      %p164 = pneg %p163
    $region26: #{_lambda_.5} parent=5 // pred_check_branch
      %166 = sbr.rel (%p164) target = $region28
    $region27: #{_lambda_.5} parent=5 // pred_region
      // Predicated region
      $region29: #{_lambda_.5} parent=27 // pred_check
        %p167 = pneg %p42
      $region30: #{_lambda_.5} parent=27 // pred_check_branch
        %169 = sbr.rel (%p167) target = $region32
      $region31: #{_lambda_.5} parent=27 // pred_region
        %p170 = scmp.lt.s32.totalorder %s17, 1
        %s171 = scalar_select %p170, %s17, 1
        %s172 = smul.addr %s171, 53
        %s173 = smul.addr %s172, 8
        %s174 = scalar_lea.vmem %s0, %s173
      $region32: #{_lambda_.5} parent=27 // pred_fallthru
        _
    $region28: #{_lambda_.5} parent=5 // pred_fallthru
      _
    %p175 = scmp.le.s32.totalorder 1, %s10
    %p176 = scmp.lt.s32.totalorder %s10, 5
    %p177 = pnand %p175, %p176
    %p178 = pneg %p177
    // Predicated region
    $region33: #{_lambda_.5} parent=5 // pred_check
      _
    $region34: #{_lambda_.5} parent=5 // pred_check_branch
      %180 = sbr.rel (%p177) target = $region36
    $region35: #{_lambda_.5} parent=5 // pred_region
      %s181 = ssub.s32 %s10, 1
      %p182 = scmp.lt.s32.totalorder %s19, 1
      %s183 = scalar_select %p182, %s19, 1
      %s184 = smul.addr %s183, 53
      %s185 = smul.addr %s184, 8
      %s186 = scalar_lea.vmem %s0, %s185
      %p187 = pneg %p48
      %p188 = pneg %p45
      %p189 = pneg %p69
      %p190 = pneg %p66
      %p191 = pneg %p90
      %p192 = pneg %p87
      %p193 = pneg %p111
      %p194 = pneg %p108
      %p195 = pneg %p139
      %p196 = pneg %p136
      %s197 = smul.u32 20, %s20
      %p198 = scmp.lt.s32.totalorder %s19, 1
      %s199 = scalar_select %p198, %s19, 1
      %p200 = scmp.lt.s32.totalorder %s197, 39
      %s201 = scalar_select %p200, %s197, 39
      %s202 = smul.addr %s199, 40
      %s203 = sadd.s32 %s201, %s202
      %s204 = smul.addr %s203, 8
      %s205 = scalar_lea.vmem %s4, %s204
      %p206 = scmp.lt.s32.totalorder %s19, 1
      %s207 = scalar_select %p206, %s19, 1
      %s208 = smul.addr %s207, 53
      %s209 = smul.addr %s208, 8
      %s210 = scalar_lea.vmem %s0, %s209
      %s211 = smul.u32 20, %s20
      %p212 = scmp.lt.s32.totalorder %s19, 1
      %s213 = scalar_select %p212, %s19, 1
      %p214 = scmp.lt.s32.totalorder %s211, 39
      %s215 = scalar_select %p214, %s211, 39
      %s216 = smul.addr %s213, 40
      %s217 = sadd.s32 %s215, %s216
      %s218 = smul.addr %s217, 8
      %s219 = scalar_lea.vmem %s4, %s218
      %s220 = smul.u32 20, %s20
      %s221 = smul.u32 %s20, 160
      %s222 = scalar_lea.vmem %s210, %s221
      %v223 = vld [vmem:[%s222] sm:$0xff]
      %v224 = vld [vmem:[%s222 + $0x8] sm:$0xff]
      %v225 = vld [vmem:[%s222 + $0x10] sm:$0xff]
      %v226 = vld [vmem:[%s222 + $0x18] sm:$0xff]
      %v227 = vld [vmem:[%s222 + $0x20] sm:$0xff]
      %v228 = vld [vmem:[%s222 + $0x28] sm:$0xff]
      %v229 = vld [vmem:[%s222 + $0x30] sm:$0xff]
      %v230 = vld [vmem:[%s222 + $0x38] sm:$0xff]
      %v231 = vld [vmem:[%s222 + $0x40] sm:$0xff]
      %v232 = vld [vmem:[%s222 + $0x48] sm:$0xff]
      %v233 = vld [vmem:[%s222 + $0x50] sm:$0xff]
      %v234 = vld [vmem:[%s222 + $0x58] sm:$0xff]
      %v235 = vld [vmem:[%s222 + $0x60] sm:$0xff]
      %v236 = vld [vmem:[%s222 + $0x68] sm:$0xff]
      %v237 = vld [vmem:[%s222 + $0x70] sm:$0xff]
      %v238 = vld [vmem:[%s222 + $0x78] sm:$0xff]
      %v239 = vld [vmem:[%s222 + $0x80] sm:$0xff]
      %v240 = vld [vmem:[%s222 + $0x88] sm:$0xff]
      %v241 = vld [vmem:[%s222 + $0x90] sm:$0xff]
      %v242 = vld [vmem:[%s222 + $0x98] sm:$0xff]
      %v243 = vld [vmem:[%s222 + $0xa0] sm:$0xff]
      %v244 = vld [vmem:[%s222 + $0xa8] sm:$0xff]
      %v245 = vld [vmem:[%s222 + $0xb0] sm:$0xff]
      %v246 = vld [vmem:[%s222 + $0xb8] sm:$0xff]
      %v247 = vld [vmem:[%s222 + $0xc0] sm:$0xff]
      %v248 = vld [vmem:[%s222 + $0xc8] sm:$0xff]
      %v249 = vld [vmem:[%s222 + $0xd0] sm:$0xff]
      %v250 = vld [vmem:[%s222 + $0xd8] sm:$0xff]
      %v251 = vld [vmem:[%s222 + $0xe0] sm:$0xff]
      %v252 = vld [vmem:[%s222 + $0xe8] sm:$0xff]
      %v253 = vld [vmem:[%s222 + $0xf0] sm:$0xff]
      %v254 = vld [vmem:[%s1] sm:$0xf]
      %s255 = scalar_lea.vmem %s1, 4
      %v256 = vld [vmem:[%s255] sm:$0xf]
      %vm278 = vcmask 1046528
      %v279 = vrot.slane %v223, 1
      %v280 = vrot.slane %v224, 1
      %v281 = vsel %vm278, %v279, %v280
      %v282 = vrot.slane %v225, 1
      %v283 = vsel %vm278, %v280, %v282
      %v284 = vrot.slane %v226, 1
      %v285 = vsel %vm278, %v282, %v284
      %v286 = vrot.slane %v227, 1
      %v287 = vsel %vm278, %v284, %v286
      %v288 = vrot.slane %v228, 1
      %v289 = vsel %vm278, %v286, %v288
      %v290 = vrot.slane %v229, 1
      %v291 = vsel %vm278, %v288, %v290
      %v292 = vrot.slane %v230, 1
      %v293 = vsel %vm278, %v290, %v292
      %v294 = vrot.slane %v231, 1
      %v295 = vsel %vm278, %v292, %v294
      %v296 = vrot.slane %v232, 1
      %v297 = vsel %vm278, %v294, %v296
      %v298 = vrot.slane %v233, 1
      %v299 = vsel %vm278, %v296, %v298
      %v300 = vrot.slane %v234, 1
      %v301 = vsel %vm278, %v298, %v300
      %v302 = vrot.slane %v235, 1
      %v303 = vsel %vm278, %v300, %v302
      %v304 = vrot.slane %v236, 1
      %v305 = vsel %vm278, %v302, %v304
      %v306 = vrot.slane %v237, 1
      %v307 = vsel %vm278, %v304, %v306
      %v308 = vrot.slane %v238, 1
      %v309 = vsel %vm278, %v306, %v308
      %v310 = vrot.slane %v239, 1
      %v311 = vsel %vm278, %v308, %v310
      %v312 = vrot.slane %v240, 1
      %v313 = vsel %vm278, %v310, %v312
      %v314 = vrot.slane %v241, 1
      %v315 = vsel %vm278, %v312, %v314
      %v316 = vrot.slane %v242, 1
      %v317 = vsel %vm278, %v314, %v316
      %v318 = vrot.slane %v243, 1
      %v319 = vsel %vm278, %v316, %v318
      %vm320 = vcmask 31744
      %v321 = vsel %vm320, %v281, 0
      %v323 = vsel %vm320, %v283, 0
      %v325 = vsel %vm320, %v285, 0
      %v327 = vsel %vm320, %v287, 0
      %v329 = vsel %vm320, %v289, 0
      %v331 = vsel %vm320, %v291, 0
      %v333 = vsel %vm320, %v293, 0
      %v335 = vsel %vm320, %v295, 0
      %v337 = vsel %vm320, %v297, 0
      %v339 = vsel %vm320, %v299, 0
      %v341 = vsel %vm320, %v301, 0
      %v343 = vsel %vm320, %v303, 0
      %v345 = vsel %vm320, %v305, 0
      %v347 = vsel %vm320, %v307, 0
      %v349 = vsel %vm320, %v309, 0
      %v351 = vsel %vm320, %v311, 0
      %v353 = vsel %vm320, %v313, 0
      %v355 = vsel %vm320, %v315, 0
      %v357 = vsel %vm320, %v317, 0
      %v359 = vsel %vm320, %v319, 0
      %vm361 = vcmask 1043456
      %v363 = vsel %vm361, %v256, 0
      %365 = vmatpush.msra.mxu0 0.0
      %366 = vmatpush.msra.mxu0 0.0
      %367 = vmatpush.msra.mxu0 0.0
      %368 = vmatpush.msra.mxu0 0.0
      %369 = vmatpush.msra.mxu0 0.0
      %370 = vmatpush.msra.mxu0 0.0
      %371 = vmatpush.msra.mxu0 0.0
      %372 = vmatpush.msra.mxu0 0.0
      %373 = vmatpush.msra.mxu0 0.0
      %374 = vmatpush.msra.mxu0 0.0
      %375 = vmatpush.msra.mxu0 0.0
      %376 = vmatpush.msra.mxu0 0.0
      %377 = vmatpush.msra.mxu0 0.0
      %378 = vmatpush.msra.mxu0 0.0
      %379 = vmatpush.msra.mxu0 0.0
      %380 = vmatpush.msra.mxu0 %v363
      %381 = vmatmul.f32.gmra.mxu0 %v321
      %v382 = vpop.f32.mrf.mxu0
      %v383 = vadd.f32 0.0, %v382
      %384 = vmatmul.f32.gmra.mxu0 %v323
      %v385 = vpop.f32.mrf.mxu0
      %v386 = vadd.f32 0.0, %v385
      %387 = vmatmul.f32.gmra.mxu0 %v325
      %v388 = vpop.f32.mrf.mxu0
      %v389 = vadd.f32 0.0, %v388
      %390 = vmatmul.f32.gmra.mxu0 %v327
      %v391 = vpop.f32.mrf.mxu0
      %v392 = vadd.f32 0.0, %v391
      %393 = vmatmul.f32.gmra.mxu0 %v329
      %v394 = vpop.f32.mrf.mxu0
      %v395 = vadd.f32 0.0, %v394
      %396 = vmatmul.f32.gmra.mxu0 %v331
      %v397 = vpop.f32.mrf.mxu0
      %v398 = vadd.f32 0.0, %v397
      %399 = vmatmul.f32.gmra.mxu0 %v333
      %v400 = vpop.f32.mrf.mxu0
      %v401 = vadd.f32 0.0, %v400
      %402 = vmatmul.f32.gmra.mxu0 %v335
      %v403 = vpop.f32.mrf.mxu0
      %v404 = vadd.f32 0.0, %v403
      %405 = vmatmul.f32.gmra.mxu0 %v337
      %v406 = vpop.f32.mrf.mxu0
      %v407 = vadd.f32 0.0, %v406
      %408 = vmatmul.f32.gmra.mxu0 %v339
      %v409 = vpop.f32.mrf.mxu0
      %v410 = vadd.f32 0.0, %v409
      %411 = vmatmul.f32.gmra.mxu0 %v341
      %v412 = vpop.f32.mrf.mxu0
      %v413 = vadd.f32 0.0, %v412
      %414 = vmatmul.f32.gmra.mxu0 %v343
      %v415 = vpop.f32.mrf.mxu0
      %v416 = vadd.f32 0.0, %v415
      %417 = vmatmul.f32.gmra.mxu0 %v345
      %v418 = vpop.f32.mrf.mxu0
      %v419 = vadd.f32 0.0, %v418
      %420 = vmatmul.f32.gmra.mxu0 %v347
      %v421 = vpop.f32.mrf.mxu0
      %v422 = vadd.f32 0.0, %v421
      %423 = vmatmul.f32.gmra.mxu0 %v349
      %v424 = vpop.f32.mrf.mxu0
      %v425 = vadd.f32 0.0, %v424
      %426 = vmatmul.f32.gmra.mxu0 %v351
      %v427 = vpop.f32.mrf.mxu0
      %v428 = vadd.f32 0.0, %v427
      %429 = vmatmul.f32.gmra.mxu0 %v353
      %v430 = vpop.f32.mrf.mxu0
      %v431 = vadd.f32 0.0, %v430
      %432 = vmatmul.f32.gmra.mxu0 %v355
      %v433 = vpop.f32.mrf.mxu0
      %v434 = vadd.f32 0.0, %v433
      %435 = vmatmul.f32.gmra.mxu0 %v357
      %v436 = vpop.f32.mrf.mxu0
      %v437 = vadd.f32 0.0, %v436
      %438 = vmatmul.f32.gmra.mxu0 %v359
      %v439 = vpop.f32.mrf.mxu0
      %v440 = vadd.f32 0.0, %v439
      %441 = vdwg.mxu0
      %v442 = vsel %vm320, %v223, 0
      %v444 = vsel %vm320, %v224, 0
      %v446 = vsel %vm320, %v225, 0
      %v448 = vsel %vm320, %v226, 0
      %v450 = vsel %vm320, %v227, 0
      %v452 = vsel %vm320, %v228, 0
      %v454 = vsel %vm320, %v229, 0
      %v456 = vsel %vm320, %v230, 0
      %v458 = vsel %vm320, %v231, 0
      %v460 = vsel %vm320, %v232, 0
      %v462 = vsel %vm320, %v233, 0
      %v464 = vsel %vm320, %v234, 0
      %v466 = vsel %vm320, %v235, 0
      %v468 = vsel %vm320, %v236, 0
      %v470 = vsel %vm320, %v237, 0
      %v472 = vsel %vm320, %v238, 0
      %v474 = vsel %vm320, %v239, 0
      %v476 = vsel %vm320, %v240, 0
      %v478 = vsel %vm320, %v241, 0
      %v480 = vsel %vm320, %v242, 0
      %v483 = vsel %vm361, %v254, 0
      %485 = vmatpush.msra.mxu0 0.0
      %486 = vmatpush.msra.mxu0 0.0
      %487 = vmatpush.msra.mxu0 0.0
      %488 = vmatpush.msra.mxu0 0.0
      %489 = vmatpush.msra.mxu0 0.0
      %490 = vmatpush.msra.mxu0 0.0
      %491 = vmatpush.msra.mxu0 0.0
      %492 = vmatpush.msra.mxu0 0.0
      %493 = vmatpush.msra.mxu0 0.0
      %494 = vmatpush.msra.mxu0 0.0
      %495 = vmatpush.msra.mxu0 0.0
      %496 = vmatpush.msra.mxu0 0.0
      %497 = vmatpush.msra.mxu0 0.0
      %498 = vmatpush.msra.mxu0 0.0
      %499 = vmatpush.msra.mxu0 0.0
      %500 = vmatpush.msra.mxu0 %v483
      %501 = vmatmul.f32.gmra.mxu0 %v442
      %v502 = vpop.f32.mrf.mxu0
      %v503 = vadd.f32 %v383, %v502
      %504 = vmatmul.f32.gmra.mxu0 %v444
      %v505 = vpop.f32.mrf.mxu0
      %v506 = vadd.f32 %v386, %v505
      %507 = vmatmul.f32.gmra.mxu0 %v446
      %v508 = vpop.f32.mrf.mxu0
      %v509 = vadd.f32 %v389, %v508
      %510 = vmatmul.f32.gmra.mxu0 %v448
      %v511 = vpop.f32.mrf.mxu0
      %v512 = vadd.f32 %v392, %v511
      %513 = vmatmul.f32.gmra.mxu0 %v450
      %v514 = vpop.f32.mrf.mxu0
      %v515 = vadd.f32 %v395, %v514
      %516 = vmatmul.f32.gmra.mxu0 %v452
      %v517 = vpop.f32.mrf.mxu0
      %v518 = vadd.f32 %v398, %v517
      %519 = vmatmul.f32.gmra.mxu0 %v454
      %v520 = vpop.f32.mrf.mxu0
      %v521 = vadd.f32 %v401, %v520
      %522 = vmatmul.f32.gmra.mxu0 %v456
      %v523 = vpop.f32.mrf.mxu0
      %v524 = vadd.f32 %v404, %v523
      %525 = vmatmul.f32.gmra.mxu0 %v458
      %v526 = vpop.f32.mrf.mxu0
      %v527 = vadd.f32 %v407, %v526
      %528 = vmatmul.f32.gmra.mxu0 %v460
      %v529 = vpop.f32.mrf.mxu0
      %v530 = vadd.f32 %v410, %v529
      %531 = vmatmul.f32.gmra.mxu0 %v462
      %v532 = vpop.f32.mrf.mxu0
      %v533 = vadd.f32 %v413, %v532
      %534 = vmatmul.f32.gmra.mxu0 %v464
      %v535 = vpop.f32.mrf.mxu0
      %v536 = vadd.f32 %v416, %v535
      %537 = vmatmul.f32.gmra.mxu0 %v466
      %v538 = vpop.f32.mrf.mxu0
      %v539 = vadd.f32 %v419, %v538
      %540 = vmatmul.f32.gmra.mxu0 %v468
      %v541 = vpop.f32.mrf.mxu0
      %v542 = vadd.f32 %v422, %v541
      %543 = vmatmul.f32.gmra.mxu0 %v470
      %v544 = vpop.f32.mrf.mxu0
      %v545 = vadd.f32 %v425, %v544
      %546 = vmatmul.f32.gmra.mxu0 %v472
      %v547 = vpop.f32.mrf.mxu0
      %v548 = vadd.f32 %v428, %v547
      %549 = vmatmul.f32.gmra.mxu0 %v474
      %v550 = vpop.f32.mrf.mxu0
      %v551 = vadd.f32 %v431, %v550
      %552 = vmatmul.f32.gmra.mxu0 %v476
      %v553 = vpop.f32.mrf.mxu0
      %v554 = vadd.f32 %v434, %v553
      %555 = vmatmul.f32.gmra.mxu0 %v478
      %v556 = vpop.f32.mrf.mxu0
      %v557 = vadd.f32 %v437, %v556
      %558 = vmatmul.f32.gmra.mxu0 %v480
      %v559 = vpop.f32.mrf.mxu0
      %v560 = vadd.f32 %v440, %v559
      %561 = vdwg.mxu0
      %s562 = scalar_lea.vmem %s1, 8
      %v563 = vld [vmem:[%s562] sm:$0xf]
      %vm564 = vcmask 1045504
      %v565 = vrot.slane %v223, 2
      %v566 = vrot.slane %v224, 2
      %v567 = vsel %vm564, %v565, %v566
      %v568 = vrot.slane %v225, 2
      %v569 = vsel %vm564, %v566, %v568
      %v570 = vrot.slane %v226, 2
      %v571 = vsel %vm564, %v568, %v570
      %v572 = vrot.slane %v227, 2
      %v573 = vsel %vm564, %v570, %v572
      %v574 = vrot.slane %v228, 2
      %v575 = vsel %vm564, %v572, %v574
      %v576 = vrot.slane %v229, 2
      %v577 = vsel %vm564, %v574, %v576
      %v578 = vrot.slane %v230, 2
      %v579 = vsel %vm564, %v576, %v578
      %v580 = vrot.slane %v231, 2
      %v581 = vsel %vm564, %v578, %v580
      %v582 = vrot.slane %v232, 2
      %v583 = vsel %vm564, %v580, %v582
      %v584 = vrot.slane %v233, 2
      %v585 = vsel %vm564, %v582, %v584
      %v586 = vrot.slane %v234, 2
      %v587 = vsel %vm564, %v584, %v586
      %v588 = vrot.slane %v235, 2
      %v589 = vsel %vm564, %v586, %v588
      %v590 = vrot.slane %v236, 2
      %v591 = vsel %vm564, %v588, %v590
      %v592 = vrot.slane %v237, 2
      %v593 = vsel %vm564, %v590, %v592
      %v594 = vrot.slane %v238, 2
      %v595 = vsel %vm564, %v592, %v594
      %v596 = vrot.slane %v239, 2
      %v597 = vsel %vm564, %v594, %v596
      %v598 = vrot.slane %v240, 2
      %v599 = vsel %vm564, %v596, %v598
      %v600 = vrot.slane %v241, 2
      %v601 = vsel %vm564, %v598, %v600
      %v602 = vrot.slane %v242, 2
      %v603 = vsel %vm564, %v600, %v602
      %v604 = vrot.slane %v243, 2
      %v605 = vsel %vm564, %v602, %v604
      %v606 = vsel %vm320, %v567, 0
      %v608 = vsel %vm320, %v569, 0
      %v610 = vsel %vm320, %v571, 0
      %v612 = vsel %vm320, %v573, 0
      %v614 = vsel %vm320, %v575, 0
      %v616 = vsel %vm320, %v577, 0
      %v618 = vsel %vm320, %v579, 0
      %v620 = vsel %vm320, %v581, 0
      %v622 = vsel %vm320, %v583, 0
      %v624 = vsel %vm320, %v585, 0
      %v626 = vsel %vm320, %v587, 0
      %v628 = vsel %vm320, %v589, 0
      %v630 = vsel %vm320, %v591, 0
      %v632 = vsel %vm320, %v593, 0
      %v634 = vsel %vm320, %v595, 0
      %v636 = vsel %vm320, %v597, 0
      %v638 = vsel %vm320, %v599, 0
      %v640 = vsel %vm320, %v601, 0
      %v642 = vsel %vm320, %v603, 0
      %v644 = vsel %vm320, %v605, 0
      %v647 = vsel %vm361, %v563, 0
      %649 = vmatpush.msra.mxu0 0.0
      %650 = vmatpush.msra.mxu0 0.0
      %651 = vmatpush.msra.mxu0 0.0
      %652 = vmatpush.msra.mxu0 0.0
      %653 = vmatpush.msra.mxu0 0.0
      %654 = vmatpush.msra.mxu0 0.0
      %655 = vmatpush.msra.mxu0 0.0
      %656 = vmatpush.msra.mxu0 0.0
      %657 = vmatpush.msra.mxu0 0.0
      %658 = vmatpush.msra.mxu0 0.0
      %659 = vmatpush.msra.mxu0 0.0
      %660 = vmatpush.msra.mxu0 0.0
      %661 = vmatpush.msra.mxu0 0.0
      %662 = vmatpush.msra.mxu0 0.0
      %663 = vmatpush.msra.mxu0 0.0
      %664 = vmatpush.msra.mxu0 %v647
      %665 = vmatmul.f32.gmra.mxu0 %v606
      %v666 = vpop.f32.mrf.mxu0
      %v667 = vadd.f32 0.0, %v666
      %668 = vmatmul.f32.gmra.mxu0 %v608
      %v669 = vpop.f32.mrf.mxu0
      %v670 = vadd.f32 0.0, %v669
      %671 = vmatmul.f32.gmra.mxu0 %v610
      %v672 = vpop.f32.mrf.mxu0
      %v673 = vadd.f32 0.0, %v672
      %674 = vmatmul.f32.gmra.mxu0 %v612
      %v675 = vpop.f32.mrf.mxu0
      %v676 = vadd.f32 0.0, %v675
      %677 = vmatmul.f32.gmra.mxu0 %v614
      %v678 = vpop.f32.mrf.mxu0
      %v679 = vadd.f32 0.0, %v678
      %680 = vmatmul.f32.gmra.mxu0 %v616
      %v681 = vpop.f32.mrf.mxu0
      %v682 = vadd.f32 0.0, %v681
      %683 = vmatmul.f32.gmra.mxu0 %v618
      %v684 = vpop.f32.mrf.mxu0
      %v685 = vadd.f32 0.0, %v684
      %686 = vmatmul.f32.gmra.mxu0 %v620
      %v687 = vpop.f32.mrf.mxu0
      %v688 = vadd.f32 0.0, %v687
      %689 = vmatmul.f32.gmra.mxu0 %v622
      %v690 = vpop.f32.mrf.mxu0
      %v691 = vadd.f32 0.0, %v690
      %692 = vmatmul.f32.gmra.mxu0 %v624
      %v693 = vpop.f32.mrf.mxu0
      %v694 = vadd.f32 0.0, %v693
      %695 = vmatmul.f32.gmra.mxu0 %v626
      %v696 = vpop.f32.mrf.mxu0
      %v697 = vadd.f32 0.0, %v696
      %698 = vmatmul.f32.gmra.mxu0 %v628
      %v699 = vpop.f32.mrf.mxu0
      %v700 = vadd.f32 0.0, %v699
      %701 = vmatmul.f32.gmra.mxu0 %v630
      %v702 = vpop.f32.mrf.mxu0
      %v703 = vadd.f32 0.0, %v702
      %704 = vmatmul.f32.gmra.mxu0 %v632
      %v705 = vpop.f32.mrf.mxu0
      %v706 = vadd.f32 0.0, %v705
      %707 = vmatmul.f32.gmra.mxu0 %v634
      %v708 = vpop.f32.mrf.mxu0
      %v709 = vadd.f32 0.0, %v708
      %710 = vmatmul.f32.gmra.mxu0 %v636
      %v711 = vpop.f32.mrf.mxu0
      %v712 = vadd.f32 0.0, %v711
      %713 = vmatmul.f32.gmra.mxu0 %v638
      %v714 = vpop.f32.mrf.mxu0
      %v715 = vadd.f32 0.0, %v714
      %716 = vmatmul.f32.gmra.mxu0 %v640
      %v717 = vpop.f32.mrf.mxu0
      %v718 = vadd.f32 0.0, %v717
      %719 = vmatmul.f32.gmra.mxu0 %v642
      %v720 = vpop.f32.mrf.mxu0
      %v721 = vadd.f32 0.0, %v720
      %722 = vmatmul.f32.gmra.mxu0 %v644
      %v723 = vpop.f32.mrf.mxu0
      %v724 = vadd.f32 0.0, %v723
      %725 = vdwg.mxu0
      %v726 = vadd.f32 %v503, %v667
      %v727 = vadd.f32 %v506, %v670
      %v728 = vadd.f32 %v509, %v673
      %v729 = vadd.f32 %v512, %v676
      %v730 = vadd.f32 %v515, %v679
      %v731 = vadd.f32 %v518, %v682
      %v732 = vadd.f32 %v521, %v685
      %v733 = vadd.f32 %v524, %v688
      %v734 = vadd.f32 %v527, %v691
      %v735 = vadd.f32 %v530, %v694
      %v736 = vadd.f32 %v533, %v697
      %v737 = vadd.f32 %v536, %v700
      %v738 = vadd.f32 %v539, %v703
      %v739 = vadd.f32 %v542, %v706
      %v740 = vadd.f32 %v545, %v709
      %v741 = vadd.f32 %v548, %v712
      %v742 = vadd.f32 %v551, %v715
      %v743 = vadd.f32 %v554, %v718
      %v744 = vadd.f32 %v557, %v721
      %v745 = vadd.f32 %v560, %v724
      %s746 = scalar_lea.vmem %s1, 12
      %v747 = vld [vmem:[%s746] sm:$0xf]
      %vm748 = vcmask 1044480
      %v749 = vrot.slane %v223, 3
      %v750 = vrot.slane %v224, 3
      %v751 = vsel %vm748, %v749, %v750
      %v752 = vrot.slane %v225, 3
      %v753 = vsel %vm748, %v750, %v752
      %v754 = vrot.slane %v226, 3
      %v755 = vsel %vm748, %v752, %v754
      %v756 = vrot.slane %v227, 3
      %v757 = vsel %vm748, %v754, %v756
      %v758 = vrot.slane %v228, 3
      %v759 = vsel %vm748, %v756, %v758
      %v760 = vrot.slane %v229, 3
      %v761 = vsel %vm748, %v758, %v760
      %v762 = vrot.slane %v230, 3
      %v763 = vsel %vm748, %v760, %v762
      %v764 = vrot.slane %v231, 3
      %v765 = vsel %vm748, %v762, %v764
      %v766 = vrot.slane %v232, 3
      %v767 = vsel %vm748, %v764, %v766
      %v768 = vrot.slane %v233, 3
      %v769 = vsel %vm748, %v766, %v768
      %v770 = vrot.slane %v234, 3
      %v771 = vsel %vm748, %v768, %v770
      %v772 = vrot.slane %v235, 3
      %v773 = vsel %vm748, %v770, %v772
      %v774 = vrot.slane %v236, 3
      %v775 = vsel %vm748, %v772, %v774
      %v776 = vrot.slane %v237, 3
      %v777 = vsel %vm748, %v774, %v776
      %v778 = vrot.slane %v238, 3
      %v779 = vsel %vm748, %v776, %v778
      %v780 = vrot.slane %v239, 3
      %v781 = vsel %vm748, %v778, %v780
      %v782 = vrot.slane %v240, 3
      %v783 = vsel %vm748, %v780, %v782
      %v784 = vrot.slane %v241, 3
      %v785 = vsel %vm748, %v782, %v784
      %v786 = vrot.slane %v242, 3
      %v787 = vsel %vm748, %v784, %v786
      %v788 = vrot.slane %v243, 3
      %v789 = vsel %vm748, %v786, %v788
      %v790 = vsel %vm320, %v751, 0
      %v792 = vsel %vm320, %v753, 0
      %v794 = vsel %vm320, %v755, 0
      %v796 = vsel %vm320, %v757, 0
      %v798 = vsel %vm320, %v759, 0
      %v800 = vsel %vm320, %v761, 0
      %v802 = vsel %vm320, %v763, 0
      %v804 = vsel %vm320, %v765, 0
      %v806 = vsel %vm320, %v767, 0
      %v808 = vsel %vm320, %v769, 0
      %v810 = vsel %vm320, %v771, 0
      %v812 = vsel %vm320, %v773, 0
      %v814 = vsel %vm320, %v775, 0
      %v816 = vsel %vm320, %v777, 0
      %v818 = vsel %vm320, %v779, 0
      %v820 = vsel %vm320, %v781, 0
      %v822 = vsel %vm320, %v783, 0
      %v824 = vsel %vm320, %v785, 0
      %v826 = vsel %vm320, %v787, 0
      %v828 = vsel %vm320, %v789, 0
      %v831 = vsel %vm361, %v747, 0
      %833 = vmatpush.msra.mxu0 0.0
      %834 = vmatpush.msra.mxu0 0.0
      %835 = vmatpush.msra.mxu0 0.0
      %836 = vmatpush.msra.mxu0 0.0
      %837 = vmatpush.msra.mxu0 0.0
      %838 = vmatpush.msra.mxu0 0.0
      %839 = vmatpush.msra.mxu0 0.0
      %840 = vmatpush.msra.mxu0 0.0
      %841 = vmatpush.msra.mxu0 0.0
      %842 = vmatpush.msra.mxu0 0.0
      %843 = vmatpush.msra.mxu0 0.0
      %844 = vmatpush.msra.mxu0 0.0
      %845 = vmatpush.msra.mxu0 0.0
      %846 = vmatpush.msra.mxu0 0.0
      %847 = vmatpush.msra.mxu0 0.0
      %848 = vmatpush.msra.mxu0 %v831
      %849 = vmatmul.f32.gmra.mxu0 %v790
      %v850 = vpop.f32.mrf.mxu0
      %v851 = vadd.f32 0.0, %v850
      %852 = vmatmul.f32.gmra.mxu0 %v792
      %v853 = vpop.f32.mrf.mxu0
      %v854 = vadd.f32 0.0, %v853
      %855 = vmatmul.f32.gmra.mxu0 %v794
      %v856 = vpop.f32.mrf.mxu0
      %v857 = vadd.f32 0.0, %v856
      %858 = vmatmul.f32.gmra.mxu0 %v796
      %v859 = vpop.f32.mrf.mxu0
      %v860 = vadd.f32 0.0, %v859
      %861 = vmatmul.f32.gmra.mxu0 %v798
      %v862 = vpop.f32.mrf.mxu0
      %v863 = vadd.f32 0.0, %v862
      %864 = vmatmul.f32.gmra.mxu0 %v800
      %v865 = vpop.f32.mrf.mxu0
      %v866 = vadd.f32 0.0, %v865
      %867 = vmatmul.f32.gmra.mxu0 %v802
      %v868 = vpop.f32.mrf.mxu0
      %v869 = vadd.f32 0.0, %v868
      %870 = vmatmul.f32.gmra.mxu0 %v804
      %v871 = vpop.f32.mrf.mxu0
      %v872 = vadd.f32 0.0, %v871
      %873 = vmatmul.f32.gmra.mxu0 %v806
      %v874 = vpop.f32.mrf.mxu0
      %v875 = vadd.f32 0.0, %v874
      %876 = vmatmul.f32.gmra.mxu0 %v808
      %v877 = vpop.f32.mrf.mxu0
      %v878 = vadd.f32 0.0, %v877
      %879 = vmatmul.f32.gmra.mxu0 %v810
      %v880 = vpop.f32.mrf.mxu0
      %v881 = vadd.f32 0.0, %v880
      %882 = vmatmul.f32.gmra.mxu0 %v812
      %v883 = vpop.f32.mrf.mxu0
      %v884 = vadd.f32 0.0, %v883
      %885 = vmatmul.f32.gmra.mxu0 %v814
      %v886 = vpop.f32.mrf.mxu0
      %v887 = vadd.f32 0.0, %v886
      %888 = vmatmul.f32.gmra.mxu0 %v816
      %v889 = vpop.f32.mrf.mxu0
      %v890 = vadd.f32 0.0, %v889
      %891 = vmatmul.f32.gmra.mxu0 %v818
      %v892 = vpop.f32.mrf.mxu0
      %v893 = vadd.f32 0.0, %v892
      %894 = vmatmul.f32.gmra.mxu0 %v820
      %v895 = vpop.f32.mrf.mxu0
      %v896 = vadd.f32 0.0, %v895
      %897 = vmatmul.f32.gmra.mxu0 %v822
      %v898 = vpop.f32.mrf.mxu0
      %v899 = vadd.f32 0.0, %v898
      %900 = vmatmul.f32.gmra.mxu0 %v824
      %v901 = vpop.f32.mrf.mxu0
      %v902 = vadd.f32 0.0, %v901
      %903 = vmatmul.f32.gmra.mxu0 %v826
      %v904 = vpop.f32.mrf.mxu0
      %v905 = vadd.f32 0.0, %v904
      %906 = vmatmul.f32.gmra.mxu0 %v828
      %v907 = vpop.f32.mrf.mxu0
      %v908 = vadd.f32 0.0, %v907
      %909 = vdwg.mxu0
      %v910 = vadd.f32 %v726, %v851
      %v911 = vadd.f32 %v727, %v854
      %v912 = vadd.f32 %v728, %v857
      %v913 = vadd.f32 %v729, %v860
      %v914 = vadd.f32 %v730, %v863
      %v915 = vadd.f32 %v731, %v866
      %v916 = vadd.f32 %v732, %v869
      %v917 = vadd.f32 %v733, %v872
      %v918 = vadd.f32 %v734, %v875
      %v919 = vadd.f32 %v735, %v878
      %v920 = vadd.f32 %v736, %v881
      %v921 = vadd.f32 %v737, %v884
      %v922 = vadd.f32 %v738, %v887
      %v923 = vadd.f32 %v739, %v890
      %v924 = vadd.f32 %v740, %v893
      %v925 = vadd.f32 %v741, %v896
      %v926 = vadd.f32 %v742, %v899
      %v927 = vadd.f32 %v743, %v902
      %v928 = vadd.f32 %v744, %v905
      %v929 = vadd.f32 %v745, %v908
      %s930 = scalar_lea.vmem %s1, 16
      %v931 = vld [vmem:[%s930] sm:$0xf]
      %v932 = vrot.slane %v223, 4
      %v933 = vrot.slane %v224, 4
      %v934 = vsel %vm361, %v932, %v933
      %v935 = vrot.slane %v225, 4
      %v936 = vsel %vm361, %v933, %v935
      %v937 = vrot.slane %v226, 4
      %v938 = vsel %vm361, %v935, %v937
      %v939 = vrot.slane %v227, 4
      %v940 = vsel %vm361, %v937, %v939
      %v941 = vrot.slane %v228, 4
      %v942 = vsel %vm361, %v939, %v941
      %v943 = vrot.slane %v229, 4
      %v944 = vsel %vm361, %v941, %v943
      %v945 = vrot.slane %v230, 4
      %v946 = vsel %vm361, %v943, %v945
      %v947 = vrot.slane %v231, 4
      %v948 = vsel %vm361, %v945, %v947
      %v949 = vrot.slane %v232, 4
      %v950 = vsel %vm361, %v947, %v949
      %v951 = vrot.slane %v233, 4
      %v952 = vsel %vm361, %v949, %v951
      %v953 = vrot.slane %v234, 4
      %v954 = vsel %vm361, %v951, %v953
      %v955 = vrot.slane %v235, 4
      %v956 = vsel %vm361, %v953, %v955
      %v957 = vrot.slane %v236, 4
      %v958 = vsel %vm361, %v955, %v957
      %v959 = vrot.slane %v237, 4
      %v960 = vsel %vm361, %v957, %v959
      %v961 = vrot.slane %v238, 4
      %v962 = vsel %vm361, %v959, %v961
      %v963 = vrot.slane %v239, 4
      %v964 = vsel %vm361, %v961, %v963
      %v965 = vrot.slane %v240, 4
      %v966 = vsel %vm361, %v963, %v965
      %v967 = vrot.slane %v241, 4
      %v968 = vsel %vm361, %v965, %v967
      %v969 = vrot.slane %v242, 4
      %v970 = vsel %vm361, %v967, %v969
      %v971 = vrot.slane %v243, 4
      %v972 = vsel %vm361, %v969, %v971
      %v973 = vsel %vm320, %v934, 0
      %v975 = vsel %vm320, %v936, 0
      %v977 = vsel %vm320, %v938, 0
      %v979 = vsel %vm320, %v940, 0
      %v981 = vsel %vm320, %v942, 0
      %v983 = vsel %vm320, %v944, 0
      %v985 = vsel %vm320, %v946, 0
      %v987 = vsel %vm320, %v948, 0
      %v989 = vsel %vm320, %v950, 0
      %v991 = vsel %vm320, %v952, 0
      %v993 = vsel %vm320, %v954, 0
      %v995 = vsel %vm320, %v956, 0
      %v997 = vsel %vm320, %v958, 0
      %v999 = vsel %vm320, %v960, 0
      %v1001 = vsel %vm320, %v962, 0
      %v1003 = vsel %vm320, %v964, 0
      %v1005 = vsel %vm320, %v966, 0
      %v1007 = vsel %vm320, %v968, 0
      %v1009 = vsel %vm320, %v970, 0
      %v1011 = vsel %vm320, %v972, 0
      %v1014 = vsel %vm361, %v931, 0
      %1016 = vmatpush.msra.mxu0 0.0
      %1017 = vmatpush.msra.mxu0 0.0
      %1018 = vmatpush.msra.mxu0 0.0
      %1019 = vmatpush.msra.mxu0 0.0
      %1020 = vmatpush.msra.mxu0 0.0
      %1021 = vmatpush.msra.mxu0 0.0
      %1022 = vmatpush.msra.mxu0 0.0
      %1023 = vmatpush.msra.mxu0 0.0
      %1024 = vmatpush.msra.mxu0 0.0
      %1025 = vmatpush.msra.mxu0 0.0
      %1026 = vmatpush.msra.mxu0 0.0
      %1027 = vmatpush.msra.mxu0 0.0
      %1028 = vmatpush.msra.mxu0 0.0
      %1029 = vmatpush.msra.mxu0 0.0
      %1030 = vmatpush.msra.mxu0 0.0
      %1031 = vmatpush.msra.mxu0 %v1014
      %1032 = vmatmul.f32.gmra.mxu0 %v973
      %v1033 = vpop.f32.mrf.mxu0
      %v1034 = vadd.f32 0.0, %v1033
      %1035 = vmatmul.f32.gmra.mxu0 %v975
      %v1036 = vpop.f32.mrf.mxu0
      %v1037 = vadd.f32 0.0, %v1036
      %1038 = vmatmul.f32.gmra.mxu0 %v977
      %v1039 = vpop.f32.mrf.mxu0
      %v1040 = vadd.f32 0.0, %v1039
      %1041 = vmatmul.f32.gmra.mxu0 %v979
      %v1042 = vpop.f32.mrf.mxu0
      %v1043 = vadd.f32 0.0, %v1042
      %1044 = vmatmul.f32.gmra.mxu0 %v981
      %v1045 = vpop.f32.mrf.mxu0
      %v1046 = vadd.f32 0.0, %v1045
      %1047 = vmatmul.f32.gmra.mxu0 %v983
      %v1048 = vpop.f32.mrf.mxu0
      %v1049 = vadd.f32 0.0, %v1048
      %1050 = vmatmul.f32.gmra.mxu0 %v985
      %v1051 = vpop.f32.mrf.mxu0
      %v1052 = vadd.f32 0.0, %v1051
      %1053 = vmatmul.f32.gmra.mxu0 %v987
      %v1054 = vpop.f32.mrf.mxu0
      %v1055 = vadd.f32 0.0, %v1054
      %1056 = vmatmul.f32.gmra.mxu0 %v989
      %v1057 = vpop.f32.mrf.mxu0
      %v1058 = vadd.f32 0.0, %v1057
      %1059 = vmatmul.f32.gmra.mxu0 %v991
      %v1060 = vpop.f32.mrf.mxu0
      %v1061 = vadd.f32 0.0, %v1060
      %1062 = vmatmul.f32.gmra.mxu0 %v993
      %v1063 = vpop.f32.mrf.mxu0
      %v1064 = vadd.f32 0.0, %v1063
      %1065 = vmatmul.f32.gmra.mxu0 %v995
      %v1066 = vpop.f32.mrf.mxu0
      %v1067 = vadd.f32 0.0, %v1066
      %1068 = vmatmul.f32.gmra.mxu0 %v997
      %v1069 = vpop.f32.mrf.mxu0
      %v1070 = vadd.f32 0.0, %v1069
      %1071 = vmatmul.f32.gmra.mxu0 %v999
      %v1072 = vpop.f32.mrf.mxu0
      %v1073 = vadd.f32 0.0, %v1072
      %1074 = vmatmul.f32.gmra.mxu0 %v1001
      %v1075 = vpop.f32.mrf.mxu0
      %v1076 = vadd.f32 0.0, %v1075
      %1077 = vmatmul.f32.gmra.mxu0 %v1003
      %v1078 = vpop.f32.mrf.mxu0
      %v1079 = vadd.f32 0.0, %v1078
      %1080 = vmatmul.f32.gmra.mxu0 %v1005
      %v1081 = vpop.f32.mrf.mxu0
      %v1082 = vadd.f32 0.0, %v1081
      %1083 = vmatmul.f32.gmra.mxu0 %v1007
      %v1084 = vpop.f32.mrf.mxu0
      %v1085 = vadd.f32 0.0, %v1084
      %1086 = vmatmul.f32.gmra.mxu0 %v1009
      %v1087 = vpop.f32.mrf.mxu0
      %v1088 = vadd.f32 0.0, %v1087
      %1089 = vmatmul.f32.gmra.mxu0 %v1011
      %v1090 = vpop.f32.mrf.mxu0
      %v1091 = vadd.f32 0.0, %v1090
      %1092 = vdwg.mxu0
      %v1093 = vadd.f32 %v910, %v1034
      %v1094 = vadd.f32 %v911, %v1037
      %v1095 = vadd.f32 %v912, %v1040
      %v1096 = vadd.f32 %v913, %v1043
      %v1097 = vadd.f32 %v914, %v1046
      %v1098 = vadd.f32 %v915, %v1049
      %v1099 = vadd.f32 %v916, %v1052
      %v1100 = vadd.f32 %v917, %v1055
      %v1101 = vadd.f32 %v918, %v1058
      %v1102 = vadd.f32 %v919, %v1061
      %v1103 = vadd.f32 %v920, %v1064
      %v1104 = vadd.f32 %v921, %v1067
      %v1105 = vadd.f32 %v922, %v1070
      %v1106 = vadd.f32 %v923, %v1073
      %v1107 = vadd.f32 %v924, %v1076
      %v1108 = vadd.f32 %v925, %v1079
      %v1109 = vadd.f32 %v926, %v1082
      %v1110 = vadd.f32 %v927, %v1085
      %v1111 = vadd.f32 %v928, %v1088
      %v1112 = vadd.f32 %v929, %v1091
      %s1113 = scalar_lea.vmem %s1, 20
      %v1114 = vld [vmem:[%s1113] sm:$0xf]
      %v1117 = vrot.slane %v244, 4
      %v1118 = vsel %vm361, %v971, %v1117
      %v1119 = vrot.slane %v245, 4
      %v1120 = vsel %vm361, %v1117, %v1119
      %v1121 = vsel %vm320, %v1118, 0
      %v1123 = vsel %vm320, %v1120, 0
      %v1126 = vsel %vm361, %v1114, 0
      %1128 = vmatpush.msra.mxu0 0.0
      %1129 = vmatpush.msra.mxu0 0.0
      %1130 = vmatpush.msra.mxu0 0.0
      %1131 = vmatpush.msra.mxu0 0.0
      %1132 = vmatpush.msra.mxu0 0.0
      %1133 = vmatpush.msra.mxu0 0.0
      %1134 = vmatpush.msra.mxu0 0.0
      %1135 = vmatpush.msra.mxu0 0.0
      %1136 = vmatpush.msra.mxu0 0.0
      %1137 = vmatpush.msra.mxu0 0.0
      %1138 = vmatpush.msra.mxu0 0.0
      %1139 = vmatpush.msra.mxu0 0.0
      %1140 = vmatpush.msra.mxu0 0.0
      %1141 = vmatpush.msra.mxu0 0.0
      %1142 = vmatpush.msra.mxu0 0.0
      %1143 = vmatpush.msra.mxu0 %v1126
      %1144 = vmatmul.f32.gmra.mxu0 %v977
      %v1145 = vpop.f32.mrf.mxu0
      %v1146 = vadd.f32 0.0, %v1145
      %1147 = vmatmul.f32.gmra.mxu0 %v979
      %v1148 = vpop.f32.mrf.mxu0
      %v1149 = vadd.f32 0.0, %v1148
      %1150 = vmatmul.f32.gmra.mxu0 %v981
      %v1151 = vpop.f32.mrf.mxu0
      %v1152 = vadd.f32 0.0, %v1151
      %1153 = vmatmul.f32.gmra.mxu0 %v983
      %v1154 = vpop.f32.mrf.mxu0
      %v1155 = vadd.f32 0.0, %v1154
      %1156 = vmatmul.f32.gmra.mxu0 %v985
      %v1157 = vpop.f32.mrf.mxu0
      %v1158 = vadd.f32 0.0, %v1157
      %1159 = vmatmul.f32.gmra.mxu0 %v987
      %v1160 = vpop.f32.mrf.mxu0
      %v1161 = vadd.f32 0.0, %v1160
      %1162 = vmatmul.f32.gmra.mxu0 %v989
      %v1163 = vpop.f32.mrf.mxu0
      %v1164 = vadd.f32 0.0, %v1163
      %1165 = vmatmul.f32.gmra.mxu0 %v991
      %v1166 = vpop.f32.mrf.mxu0
      %v1167 = vadd.f32 0.0, %v1166
      %1168 = vmatmul.f32.gmra.mxu0 %v993
      %v1169 = vpop.f32.mrf.mxu0
      %v1170 = vadd.f32 0.0, %v1169
      %1171 = vmatmul.f32.gmra.mxu0 %v995
      %v1172 = vpop.f32.mrf.mxu0
      %v1173 = vadd.f32 0.0, %v1172
      %1174 = vmatmul.f32.gmra.mxu0 %v997
      %v1175 = vpop.f32.mrf.mxu0
      %v1176 = vadd.f32 0.0, %v1175
      %1177 = vmatmul.f32.gmra.mxu0 %v999
      %v1178 = vpop.f32.mrf.mxu0
      %v1179 = vadd.f32 0.0, %v1178
      %1180 = vmatmul.f32.gmra.mxu0 %v1001
      %v1181 = vpop.f32.mrf.mxu0
      %v1182 = vadd.f32 0.0, %v1181
      %1183 = vmatmul.f32.gmra.mxu0 %v1003
      %v1184 = vpop.f32.mrf.mxu0
      %v1185 = vadd.f32 0.0, %v1184
      %1186 = vmatmul.f32.gmra.mxu0 %v1005
      %v1187 = vpop.f32.mrf.mxu0
      %v1188 = vadd.f32 0.0, %v1187
      %1189 = vmatmul.f32.gmra.mxu0 %v1007
      %v1190 = vpop.f32.mrf.mxu0
      %v1191 = vadd.f32 0.0, %v1190
      %1192 = vmatmul.f32.gmra.mxu0 %v1009
      %v1193 = vpop.f32.mrf.mxu0
      %v1194 = vadd.f32 0.0, %v1193
      %1195 = vmatmul.f32.gmra.mxu0 %v1011
      %v1196 = vpop.f32.mrf.mxu0
      %v1197 = vadd.f32 0.0, %v1196
      %1198 = vmatmul.f32.gmra.mxu0 %v1121
      %v1199 = vpop.f32.mrf.mxu0
      %v1200 = vadd.f32 0.0, %v1199
      %1201 = vmatmul.f32.gmra.mxu0 %v1123
      %v1202 = vpop.f32.mrf.mxu0
      %v1203 = vadd.f32 0.0, %v1202
      %1204 = vdwg.mxu0
      %v1205 = vadd.f32 %v1093, %v1146
      %v1206 = vadd.f32 %v1094, %v1149
      %v1207 = vadd.f32 %v1095, %v1152
      %v1208 = vadd.f32 %v1096, %v1155
      %v1209 = vadd.f32 %v1097, %v1158
      %v1210 = vadd.f32 %v1098, %v1161
      %v1211 = vadd.f32 %v1099, %v1164
      %v1212 = vadd.f32 %v1100, %v1167
      %v1213 = vadd.f32 %v1101, %v1170
      %v1214 = vadd.f32 %v1102, %v1173
      %v1215 = vadd.f32 %v1103, %v1176
      %v1216 = vadd.f32 %v1104, %v1179
      %v1217 = vadd.f32 %v1105, %v1182
      %v1218 = vadd.f32 %v1106, %v1185
      %v1219 = vadd.f32 %v1107, %v1188
      %v1220 = vadd.f32 %v1108, %v1191
      %v1221 = vadd.f32 %v1109, %v1194
      %v1222 = vadd.f32 %v1110, %v1197
      %v1223 = vadd.f32 %v1111, %v1200
      %v1224 = vadd.f32 %v1112, %v1203
      %s1225 = scalar_lea.vmem %s1, 24
      %v1226 = vld [vmem:[%s1225] sm:$0xf]
      %vm1227 = vcmask 1042432
      %v1228 = vrot.slane %v225, 5
      %v1229 = vrot.slane %v226, 5
      %v1230 = vsel %vm1227, %v1228, %v1229
      %v1231 = vrot.slane %v227, 5
      %v1232 = vsel %vm1227, %v1229, %v1231
      %v1233 = vrot.slane %v228, 5
      %v1234 = vsel %vm1227, %v1231, %v1233
      %v1235 = vrot.slane %v229, 5
      %v1236 = vsel %vm1227, %v1233, %v1235
      %v1237 = vrot.slane %v230, 5
      %v1238 = vsel %vm1227, %v1235, %v1237
      %v1239 = vrot.slane %v231, 5
      %v1240 = vsel %vm1227, %v1237, %v1239
      %v1241 = vrot.slane %v232, 5
      %v1242 = vsel %vm1227, %v1239, %v1241
      %v1243 = vrot.slane %v233, 5
      %v1244 = vsel %vm1227, %v1241, %v1243
      %v1245 = vrot.slane %v234, 5
      %v1246 = vsel %vm1227, %v1243, %v1245
      %v1247 = vrot.slane %v235, 5
      %v1248 = vsel %vm1227, %v1245, %v1247
      %v1249 = vrot.slane %v236, 5
      %v1250 = vsel %vm1227, %v1247, %v1249
      %v1251 = vrot.slane %v237, 5
      %v1252 = vsel %vm1227, %v1249, %v1251
      %v1253 = vrot.slane %v238, 5
      %v1254 = vsel %vm1227, %v1251, %v1253
      %v1255 = vrot.slane %v239, 5
      %v1256 = vsel %vm1227, %v1253, %v1255
      %v1257 = vrot.slane %v240, 5
      %v1258 = vsel %vm1227, %v1255, %v1257
      %v1259 = vrot.slane %v241, 5
      %v1260 = vsel %vm1227, %v1257, %v1259
      %v1261 = vrot.slane %v242, 5
      %v1262 = vsel %vm1227, %v1259, %v1261
      %v1263 = vrot.slane %v243, 5
      %v1264 = vsel %vm1227, %v1261, %v1263
      %v1265 = vrot.slane %v244, 5
      %v1266 = vsel %vm1227, %v1263, %v1265
      %v1267 = vrot.slane %v245, 5
      %v1268 = vsel %vm1227, %v1265, %v1267
      %v1269 = vsel %vm320, %v1230, 0
      %v1271 = vsel %vm320, %v1232, 0
      %v1273 = vsel %vm320, %v1234, 0
      %v1275 = vsel %vm320, %v1236, 0
      %v1277 = vsel %vm320, %v1238, 0
      %v1279 = vsel %vm320, %v1240, 0
      %v1281 = vsel %vm320, %v1242, 0
      %v1283 = vsel %vm320, %v1244, 0
      %v1285 = vsel %vm320, %v1246, 0
      %v1287 = vsel %vm320, %v1248, 0
      %v1289 = vsel %vm320, %v1250, 0
      %v1291 = vsel %vm320, %v1252, 0
      %v1293 = vsel %vm320, %v1254, 0
      %v1295 = vsel %vm320, %v1256, 0
      %v1297 = vsel %vm320, %v1258, 0
      %v1299 = vsel %vm320, %v1260, 0
      %v1301 = vsel %vm320, %v1262, 0
      %v1303 = vsel %vm320, %v1264, 0
      %v1305 = vsel %vm320, %v1266, 0
      %v1307 = vsel %vm320, %v1268, 0
      %v1310 = vsel %vm361, %v1226, 0
      %1312 = vmatpush.msra.mxu0 0.0
      %1313 = vmatpush.msra.mxu0 0.0
      %1314 = vmatpush.msra.mxu0 0.0
      %1315 = vmatpush.msra.mxu0 0.0
      %1316 = vmatpush.msra.mxu0 0.0
      %1317 = vmatpush.msra.mxu0 0.0
      %1318 = vmatpush.msra.mxu0 0.0
      %1319 = vmatpush.msra.mxu0 0.0
      %1320 = vmatpush.msra.mxu0 0.0
      %1321 = vmatpush.msra.mxu0 0.0
      %1322 = vmatpush.msra.mxu0 0.0
      %1323 = vmatpush.msra.mxu0 0.0
      %1324 = vmatpush.msra.mxu0 0.0
      %1325 = vmatpush.msra.mxu0 0.0
      %1326 = vmatpush.msra.mxu0 0.0
      %1327 = vmatpush.msra.mxu0 %v1310
      %1328 = vmatmul.f32.gmra.mxu0 %v1269
      %v1329 = vpop.f32.mrf.mxu0
      %v1330 = vadd.f32 0.0, %v1329
      %1331 = vmatmul.f32.gmra.mxu0 %v1271
      %v1332 = vpop.f32.mrf.mxu0
      %v1333 = vadd.f32 0.0, %v1332
      %1334 = vmatmul.f32.gmra.mxu0 %v1273
      %v1335 = vpop.f32.mrf.mxu0
      %v1336 = vadd.f32 0.0, %v1335
      %1337 = vmatmul.f32.gmra.mxu0 %v1275
      %v1338 = vpop.f32.mrf.mxu0
      %v1339 = vadd.f32 0.0, %v1338
      %1340 = vmatmul.f32.gmra.mxu0 %v1277
      %v1341 = vpop.f32.mrf.mxu0
      %v1342 = vadd.f32 0.0, %v1341
      %1343 = vmatmul.f32.gmra.mxu0 %v1279
      %v1344 = vpop.f32.mrf.mxu0
      %v1345 = vadd.f32 0.0, %v1344
      %1346 = vmatmul.f32.gmra.mxu0 %v1281
      %v1347 = vpop.f32.mrf.mxu0
      %v1348 = vadd.f32 0.0, %v1347
      %1349 = vmatmul.f32.gmra.mxu0 %v1283
      %v1350 = vpop.f32.mrf.mxu0
      %v1351 = vadd.f32 0.0, %v1350
      %1352 = vmatmul.f32.gmra.mxu0 %v1285
      %v1353 = vpop.f32.mrf.mxu0
      %v1354 = vadd.f32 0.0, %v1353
      %1355 = vmatmul.f32.gmra.mxu0 %v1287
      %v1356 = vpop.f32.mrf.mxu0
      %v1357 = vadd.f32 0.0, %v1356
      %1358 = vmatmul.f32.gmra.mxu0 %v1289
      %v1359 = vpop.f32.mrf.mxu0
      %v1360 = vadd.f32 0.0, %v1359
      %1361 = vmatmul.f32.gmra.mxu0 %v1291
      %v1362 = vpop.f32.mrf.mxu0
      %v1363 = vadd.f32 0.0, %v1362
      %1364 = vmatmul.f32.gmra.mxu0 %v1293
      %v1365 = vpop.f32.mrf.mxu0
      %v1366 = vadd.f32 0.0, %v1365
      %1367 = vmatmul.f32.gmra.mxu0 %v1295
      %v1368 = vpop.f32.mrf.mxu0
      %v1369 = vadd.f32 0.0, %v1368
      %1370 = vmatmul.f32.gmra.mxu0 %v1297
      %v1371 = vpop.f32.mrf.mxu0
      %v1372 = vadd.f32 0.0, %v1371
      %1373 = vmatmul.f32.gmra.mxu0 %v1299
      %v1374 = vpop.f32.mrf.mxu0
      %v1375 = vadd.f32 0.0, %v1374
      %1376 = vmatmul.f32.gmra.mxu0 %v1301
      %v1377 = vpop.f32.mrf.mxu0
      %v1378 = vadd.f32 0.0, %v1377
      %1379 = vmatmul.f32.gmra.mxu0 %v1303
      %v1380 = vpop.f32.mrf.mxu0
      %v1381 = vadd.f32 0.0, %v1380
      %1382 = vmatmul.f32.gmra.mxu0 %v1305
      %v1383 = vpop.f32.mrf.mxu0
      %v1384 = vadd.f32 0.0, %v1383
      %1385 = vmatmul.f32.gmra.mxu0 %v1307
      %v1386 = vpop.f32.mrf.mxu0
      %v1387 = vadd.f32 0.0, %v1386
      %1388 = vdwg.mxu0
      %v1389 = vadd.f32 %v1205, %v1330
      %v1390 = vadd.f32 %v1206, %v1333
      %v1391 = vadd.f32 %v1207, %v1336
      %v1392 = vadd.f32 %v1208, %v1339
      %v1393 = vadd.f32 %v1209, %v1342
      %v1394 = vadd.f32 %v1210, %v1345
      %v1395 = vadd.f32 %v1211, %v1348
      %v1396 = vadd.f32 %v1212, %v1351
      %v1397 = vadd.f32 %v1213, %v1354
      %v1398 = vadd.f32 %v1214, %v1357
      %v1399 = vadd.f32 %v1215, %v1360
      %v1400 = vadd.f32 %v1216, %v1363
      %v1401 = vadd.f32 %v1217, %v1366
      %v1402 = vadd.f32 %v1218, %v1369
      %v1403 = vadd.f32 %v1219, %v1372
      %v1404 = vadd.f32 %v1220, %v1375
      %v1405 = vadd.f32 %v1221, %v1378
      %v1406 = vadd.f32 %v1222, %v1381
      %v1407 = vadd.f32 %v1223, %v1384
      %v1408 = vadd.f32 %v1224, %v1387
      %s1409 = scalar_lea.vmem %s1, 28
      %v1410 = vld [vmem:[%s1409] sm:$0xf]
      %vm1411 = vcmask 1041408
      %v1412 = vrot.slane %v225, 6
      %v1413 = vrot.slane %v226, 6
      %v1414 = vsel %vm1411, %v1412, %v1413
      %v1415 = vrot.slane %v227, 6
      %v1416 = vsel %vm1411, %v1413, %v1415
      %v1417 = vrot.slane %v228, 6
      %v1418 = vsel %vm1411, %v1415, %v1417
      %v1419 = vrot.slane %v229, 6
      %v1420 = vsel %vm1411, %v1417, %v1419
      %v1421 = vrot.slane %v230, 6
      %v1422 = vsel %vm1411, %v1419, %v1421
      %v1423 = vrot.slane %v231, 6
      %v1424 = vsel %vm1411, %v1421, %v1423
      %v1425 = vrot.slane %v232, 6
      %v1426 = vsel %vm1411, %v1423, %v1425
      %v1427 = vrot.slane %v233, 6
      %v1428 = vsel %vm1411, %v1425, %v1427
      %v1429 = vrot.slane %v234, 6
      %v1430 = vsel %vm1411, %v1427, %v1429
      %v1431 = vrot.slane %v235, 6
      %v1432 = vsel %vm1411, %v1429, %v1431
      %v1433 = vrot.slane %v236, 6
      %v1434 = vsel %vm1411, %v1431, %v1433
      %v1435 = vrot.slane %v237, 6
      %v1436 = vsel %vm1411, %v1433, %v1435
      %v1437 = vrot.slane %v238, 6
      %v1438 = vsel %vm1411, %v1435, %v1437
      %v1439 = vrot.slane %v239, 6
      %v1440 = vsel %vm1411, %v1437, %v1439
      %v1441 = vrot.slane %v240, 6
      %v1442 = vsel %vm1411, %v1439, %v1441
      %v1443 = vrot.slane %v241, 6
      %v1444 = vsel %vm1411, %v1441, %v1443
      %v1445 = vrot.slane %v242, 6
      %v1446 = vsel %vm1411, %v1443, %v1445
      %v1447 = vrot.slane %v243, 6
      %v1448 = vsel %vm1411, %v1445, %v1447
      %v1449 = vrot.slane %v244, 6
      %v1450 = vsel %vm1411, %v1447, %v1449
      %v1451 = vrot.slane %v245, 6
      %v1452 = vsel %vm1411, %v1449, %v1451
      %v1453 = vsel %vm320, %v1414, 0
      %v1455 = vsel %vm320, %v1416, 0
      %v1457 = vsel %vm320, %v1418, 0
      %v1459 = vsel %vm320, %v1420, 0
      %v1461 = vsel %vm320, %v1422, 0
      %v1463 = vsel %vm320, %v1424, 0
      %v1465 = vsel %vm320, %v1426, 0
      %v1467 = vsel %vm320, %v1428, 0
      %v1469 = vsel %vm320, %v1430, 0
      %v1471 = vsel %vm320, %v1432, 0
      %v1473 = vsel %vm320, %v1434, 0
      %v1475 = vsel %vm320, %v1436, 0
      %v1477 = vsel %vm320, %v1438, 0
      %v1479 = vsel %vm320, %v1440, 0
      %v1481 = vsel %vm320, %v1442, 0
      %v1483 = vsel %vm320, %v1444, 0
      %v1485 = vsel %vm320, %v1446, 0
      %v1487 = vsel %vm320, %v1448, 0
      %v1489 = vsel %vm320, %v1450, 0
      %v1491 = vsel %vm320, %v1452, 0
      %v1494 = vsel %vm361, %v1410, 0
      %1496 = vmatpush.msra.mxu0 0.0
      %1497 = vmatpush.msra.mxu0 0.0
      %1498 = vmatpush.msra.mxu0 0.0
      %1499 = vmatpush.msra.mxu0 0.0
      %1500 = vmatpush.msra.mxu0 0.0
      %1501 = vmatpush.msra.mxu0 0.0
      %1502 = vmatpush.msra.mxu0 0.0
      %1503 = vmatpush.msra.mxu0 0.0
      %1504 = vmatpush.msra.mxu0 0.0
      %1505 = vmatpush.msra.mxu0 0.0
      %1506 = vmatpush.msra.mxu0 0.0
      %1507 = vmatpush.msra.mxu0 0.0
      %1508 = vmatpush.msra.mxu0 0.0
      %1509 = vmatpush.msra.mxu0 0.0
      %1510 = vmatpush.msra.mxu0 0.0
      %1511 = vmatpush.msra.mxu0 %v1494
      %1512 = vmatmul.f32.gmra.mxu0 %v1453
      %v1513 = vpop.f32.mrf.mxu0
      %v1514 = vadd.f32 0.0, %v1513
      %1515 = vmatmul.f32.gmra.mxu0 %v1455
      %v1516 = vpop.f32.mrf.mxu0
      %v1517 = vadd.f32 0.0, %v1516
      %1518 = vmatmul.f32.gmra.mxu0 %v1457
      %v1519 = vpop.f32.mrf.mxu0
      %v1520 = vadd.f32 0.0, %v1519
      %1521 = vmatmul.f32.gmra.mxu0 %v1459
      %v1522 = vpop.f32.mrf.mxu0
      %v1523 = vadd.f32 0.0, %v1522
      %1524 = vmatmul.f32.gmra.mxu0 %v1461
      %v1525 = vpop.f32.mrf.mxu0
      %v1526 = vadd.f32 0.0, %v1525
      %1527 = vmatmul.f32.gmra.mxu0 %v1463
      %v1528 = vpop.f32.mrf.mxu0
      %v1529 = vadd.f32 0.0, %v1528
      %1530 = vmatmul.f32.gmra.mxu0 %v1465
      %v1531 = vpop.f32.mrf.mxu0
      %v1532 = vadd.f32 0.0, %v1531
      %1533 = vmatmul.f32.gmra.mxu0 %v1467
      %v1534 = vpop.f32.mrf.mxu0
      %v1535 = vadd.f32 0.0, %v1534
      %1536 = vmatmul.f32.gmra.mxu0 %v1469
      %v1537 = vpop.f32.mrf.mxu0
      %v1538 = vadd.f32 0.0, %v1537
      %1539 = vmatmul.f32.gmra.mxu0 %v1471
      %v1540 = vpop.f32.mrf.mxu0
      %v1541 = vadd.f32 0.0, %v1540
      %1542 = vmatmul.f32.gmra.mxu0 %v1473
      %v1543 = vpop.f32.mrf.mxu0
      %v1544 = vadd.f32 0.0, %v1543
      %1545 = vmatmul.f32.gmra.mxu0 %v1475
      %v1546 = vpop.f32.mrf.mxu0
      %v1547 = vadd.f32 0.0, %v1546
      %1548 = vmatmul.f32.gmra.mxu0 %v1477
      %v1549 = vpop.f32.mrf.mxu0
      %v1550 = vadd.f32 0.0, %v1549
      %1551 = vmatmul.f32.gmra.mxu0 %v1479
      %v1552 = vpop.f32.mrf.mxu0
      %v1553 = vadd.f32 0.0, %v1552
      %1554 = vmatmul.f32.gmra.mxu0 %v1481
      %v1555 = vpop.f32.mrf.mxu0
      %v1556 = vadd.f32 0.0, %v1555
      %1557 = vmatmul.f32.gmra.mxu0 %v1483
      %v1558 = vpop.f32.mrf.mxu0
      %v1559 = vadd.f32 0.0, %v1558
      %1560 = vmatmul.f32.gmra.mxu0 %v1485
      %v1561 = vpop.f32.mrf.mxu0
      %v1562 = vadd.f32 0.0, %v1561
      %1563 = vmatmul.f32.gmra.mxu0 %v1487
      %v1564 = vpop.f32.mrf.mxu0
      %v1565 = vadd.f32 0.0, %v1564
      %1566 = vmatmul.f32.gmra.mxu0 %v1489
      %v1567 = vpop.f32.mrf.mxu0
      %v1568 = vadd.f32 0.0, %v1567
      %1569 = vmatmul.f32.gmra.mxu0 %v1491
      %v1570 = vpop.f32.mrf.mxu0
      %v1571 = vadd.f32 0.0, %v1570
      %1572 = vdwg.mxu0
      %v1573 = vadd.f32 %v1389, %v1514
      %v1574 = vadd.f32 %v1390, %v1517
      %v1575 = vadd.f32 %v1391, %v1520
      %v1576 = vadd.f32 %v1392, %v1523
      %v1577 = vadd.f32 %v1393, %v1526
      %v1578 = vadd.f32 %v1394, %v1529
      %v1579 = vadd.f32 %v1395, %v1532
      %v1580 = vadd.f32 %v1396, %v1535
      %v1581 = vadd.f32 %v1397, %v1538
      %v1582 = vadd.f32 %v1398, %v1541
      %v1583 = vadd.f32 %v1399, %v1544
      %v1584 = vadd.f32 %v1400, %v1547
      %v1585 = vadd.f32 %v1401, %v1550
      %v1586 = vadd.f32 %v1402, %v1553
      %v1587 = vadd.f32 %v1403, %v1556
      %v1588 = vadd.f32 %v1404, %v1559
      %v1589 = vadd.f32 %v1405, %v1562
      %v1590 = vadd.f32 %v1406, %v1565
      %v1591 = vadd.f32 %v1407, %v1568
      %v1592 = vadd.f32 %v1408, %v1571
      %s1593 = scalar_lea.vmem %s1, 32
      %v1594 = vld [vmem:[%s1593] sm:$0xf]
      %vm1595 = vcmask 1040384
      %v1596 = vrot.slane %v225, 7
      %v1597 = vrot.slane %v226, 7
      %v1598 = vsel %vm1595, %v1596, %v1597
      %v1599 = vrot.slane %v227, 7
      %v1600 = vsel %vm1595, %v1597, %v1599
      %v1601 = vrot.slane %v228, 7
      %v1602 = vsel %vm1595, %v1599, %v1601
      %v1603 = vrot.slane %v229, 7
      %v1604 = vsel %vm1595, %v1601, %v1603
      %v1605 = vrot.slane %v230, 7
      %v1606 = vsel %vm1595, %v1603, %v1605
      %v1607 = vrot.slane %v231, 7
      %v1608 = vsel %vm1595, %v1605, %v1607
      %v1609 = vrot.slane %v232, 7
      %v1610 = vsel %vm1595, %v1607, %v1609
      %v1611 = vrot.slane %v233, 7
      %v1612 = vsel %vm1595, %v1609, %v1611
      %v1613 = vrot.slane %v234, 7
      %v1614 = vsel %vm1595, %v1611, %v1613
      %v1615 = vrot.slane %v235, 7
      %v1616 = vsel %vm1595, %v1613, %v1615
      %v1617 = vrot.slane %v236, 7
      %v1618 = vsel %vm1595, %v1615, %v1617
      %v1619 = vrot.slane %v237, 7
      %v1620 = vsel %vm1595, %v1617, %v1619
      %v1621 = vrot.slane %v238, 7
      %v1622 = vsel %vm1595, %v1619, %v1621
      %v1623 = vrot.slane %v239, 7
      %v1624 = vsel %vm1595, %v1621, %v1623
      %v1625 = vrot.slane %v240, 7
      %v1626 = vsel %vm1595, %v1623, %v1625
      %v1627 = vrot.slane %v241, 7
      %v1628 = vsel %vm1595, %v1625, %v1627
      %v1629 = vrot.slane %v242, 7
      %v1630 = vsel %vm1595, %v1627, %v1629
      %v1631 = vrot.slane %v243, 7
      %v1632 = vsel %vm1595, %v1629, %v1631
      %v1633 = vrot.slane %v244, 7
      %v1634 = vsel %vm1595, %v1631, %v1633
      %v1635 = vrot.slane %v245, 7
      %v1636 = vsel %vm1595, %v1633, %v1635
      %v1637 = vsel %vm320, %v1598, 0
      %v1639 = vsel %vm320, %v1600, 0
      %v1641 = vsel %vm320, %v1602, 0
      %v1643 = vsel %vm320, %v1604, 0
      %v1645 = vsel %vm320, %v1606, 0
      %v1647 = vsel %vm320, %v1608, 0
      %v1649 = vsel %vm320, %v1610, 0
      %v1651 = vsel %vm320, %v1612, 0
      %v1653 = vsel %vm320, %v1614, 0
      %v1655 = vsel %vm320, %v1616, 0
      %v1657 = vsel %vm320, %v1618, 0
      %v1659 = vsel %vm320, %v1620, 0
      %v1661 = vsel %vm320, %v1622, 0
      %v1663 = vsel %vm320, %v1624, 0
      %v1665 = vsel %vm320, %v1626, 0
      %v1667 = vsel %vm320, %v1628, 0
      %v1669 = vsel %vm320, %v1630, 0
      %v1671 = vsel %vm320, %v1632, 0
      %v1673 = vsel %vm320, %v1634, 0
      %v1675 = vsel %vm320, %v1636, 0
      %v1678 = vsel %vm361, %v1594, 0
      %1680 = vmatpush.msra.mxu0 0.0
      %1681 = vmatpush.msra.mxu0 0.0
      %1682 = vmatpush.msra.mxu0 0.0
      %1683 = vmatpush.msra.mxu0 0.0
      %1684 = vmatpush.msra.mxu0 0.0
      %1685 = vmatpush.msra.mxu0 0.0
      %1686 = vmatpush.msra.mxu0 0.0
      %1687 = vmatpush.msra.mxu0 0.0
      %1688 = vmatpush.msra.mxu0 0.0
      %1689 = vmatpush.msra.mxu0 0.0
      %1690 = vmatpush.msra.mxu0 0.0
      %1691 = vmatpush.msra.mxu0 0.0
      %1692 = vmatpush.msra.mxu0 0.0
      %1693 = vmatpush.msra.mxu0 0.0
      %1694 = vmatpush.msra.mxu0 0.0
      %1695 = vmatpush.msra.mxu0 %v1678
      %1696 = vmatmul.f32.gmra.mxu0 %v1637
      %v1697 = vpop.f32.mrf.mxu0
      %v1698 = vadd.f32 0.0, %v1697
      %1699 = vmatmul.f32.gmra.mxu0 %v1639
      %v1700 = vpop.f32.mrf.mxu0
      %v1701 = vadd.f32 0.0, %v1700
      %1702 = vmatmul.f32.gmra.mxu0 %v1641
      %v1703 = vpop.f32.mrf.mxu0
      %v1704 = vadd.f32 0.0, %v1703
      %1705 = vmatmul.f32.gmra.mxu0 %v1643
      %v1706 = vpop.f32.mrf.mxu0
      %v1707 = vadd.f32 0.0, %v1706
      %1708 = vmatmul.f32.gmra.mxu0 %v1645
      %v1709 = vpop.f32.mrf.mxu0
      %v1710 = vadd.f32 0.0, %v1709
      %1711 = vmatmul.f32.gmra.mxu0 %v1647
      %v1712 = vpop.f32.mrf.mxu0
      %v1713 = vadd.f32 0.0, %v1712
      %1714 = vmatmul.f32.gmra.mxu0 %v1649
      %v1715 = vpop.f32.mrf.mxu0
      %v1716 = vadd.f32 0.0, %v1715
      %1717 = vmatmul.f32.gmra.mxu0 %v1651
      %v1718 = vpop.f32.mrf.mxu0
      %v1719 = vadd.f32 0.0, %v1718
      %1720 = vmatmul.f32.gmra.mxu0 %v1653
      %v1721 = vpop.f32.mrf.mxu0
      %v1722 = vadd.f32 0.0, %v1721
      %1723 = vmatmul.f32.gmra.mxu0 %v1655
      %v1724 = vpop.f32.mrf.mxu0
      %v1725 = vadd.f32 0.0, %v1724
      %1726 = vmatmul.f32.gmra.mxu0 %v1657
      %v1727 = vpop.f32.mrf.mxu0
      %v1728 = vadd.f32 0.0, %v1727
      %1729 = vmatmul.f32.gmra.mxu0 %v1659
      %v1730 = vpop.f32.mrf.mxu0
      %v1731 = vadd.f32 0.0, %v1730
      %1732 = vmatmul.f32.gmra.mxu0 %v1661
      %v1733 = vpop.f32.mrf.mxu0
      %v1734 = vadd.f32 0.0, %v1733
      %1735 = vmatmul.f32.gmra.mxu0 %v1663
      %v1736 = vpop.f32.mrf.mxu0
      %v1737 = vadd.f32 0.0, %v1736
      %1738 = vmatmul.f32.gmra.mxu0 %v1665
      %v1739 = vpop.f32.mrf.mxu0
      %v1740 = vadd.f32 0.0, %v1739
      %1741 = vmatmul.f32.gmra.mxu0 %v1667
      %v1742 = vpop.f32.mrf.mxu0
      %v1743 = vadd.f32 0.0, %v1742
      %1744 = vmatmul.f32.gmra.mxu0 %v1669
      %v1745 = vpop.f32.mrf.mxu0
      %v1746 = vadd.f32 0.0, %v1745
      %1747 = vmatmul.f32.gmra.mxu0 %v1671
      %v1748 = vpop.f32.mrf.mxu0
      %v1749 = vadd.f32 0.0, %v1748
      %1750 = vmatmul.f32.gmra.mxu0 %v1673
      %v1751 = vpop.f32.mrf.mxu0
      %v1752 = vadd.f32 0.0, %v1751
      %1753 = vmatmul.f32.gmra.mxu0 %v1675
      %v1754 = vpop.f32.mrf.mxu0
      %v1755 = vadd.f32 0.0, %v1754
      %1756 = vdwg.mxu0
      %v1757 = vadd.f32 %v1573, %v1698
      %v1758 = vadd.f32 %v1574, %v1701
      %v1759 = vadd.f32 %v1575, %v1704
      %v1760 = vadd.f32 %v1576, %v1707
      %v1761 = vadd.f32 %v1577, %v1710
      %v1762 = vadd.f32 %v1578, %v1713
      %v1763 = vadd.f32 %v1579, %v1716
      %v1764 = vadd.f32 %v1580, %v1719
      %v1765 = vadd.f32 %v1581, %v1722
      %v1766 = vadd.f32 %v1582, %v1725
      %v1767 = vadd.f32 %v1583, %v1728
      %v1768 = vadd.f32 %v1584, %v1731
      %v1769 = vadd.f32 %v1585, %v1734
      %v1770 = vadd.f32 %v1586, %v1737
      %v1771 = vadd.f32 %v1587, %v1740
      %v1772 = vadd.f32 %v1588, %v1743
      %v1773 = vadd.f32 %v1589, %v1746
      %v1774 = vadd.f32 %v1590, %v1749
      %v1775 = vadd.f32 %v1591, %v1752
      %v1776 = vadd.f32 %v1592, %v1755
      %s1777 = scalar_lea.vmem %s1, 36
      %v1778 = vld [vmem:[%s1777] sm:$0xf]
      %v1779 = vsel %vm320, %v243, 0
      %v1781 = vsel %vm320, %v244, 0
      %v1783 = vsel %vm320, %v245, 0
      %v1786 = vsel %vm361, %v1778, 0
      %1788 = vmatpush.msra.mxu0 0.0
      %1789 = vmatpush.msra.mxu0 0.0
      %1790 = vmatpush.msra.mxu0 0.0
      %1791 = vmatpush.msra.mxu0 0.0
      %1792 = vmatpush.msra.mxu0 0.0
      %1793 = vmatpush.msra.mxu0 0.0
      %1794 = vmatpush.msra.mxu0 0.0
      %1795 = vmatpush.msra.mxu0 0.0
      %1796 = vmatpush.msra.mxu0 0.0
      %1797 = vmatpush.msra.mxu0 0.0
      %1798 = vmatpush.msra.mxu0 0.0
      %1799 = vmatpush.msra.mxu0 0.0
      %1800 = vmatpush.msra.mxu0 0.0
      %1801 = vmatpush.msra.mxu0 0.0
      %1802 = vmatpush.msra.mxu0 0.0
      %1803 = vmatpush.msra.mxu0 %v1786
      %1804 = vmatmul.f32.gmra.mxu0 %v448
      %v1805 = vpop.f32.mrf.mxu0
      %v1806 = vadd.f32 0.0, %v1805
      %1807 = vmatmul.f32.gmra.mxu0 %v450
      %v1808 = vpop.f32.mrf.mxu0
      %v1809 = vadd.f32 0.0, %v1808
      %1810 = vmatmul.f32.gmra.mxu0 %v452
      %v1811 = vpop.f32.mrf.mxu0
      %v1812 = vadd.f32 0.0, %v1811
      %1813 = vmatmul.f32.gmra.mxu0 %v454
      %v1814 = vpop.f32.mrf.mxu0
      %v1815 = vadd.f32 0.0, %v1814
      %1816 = vmatmul.f32.gmra.mxu0 %v456
      %v1817 = vpop.f32.mrf.mxu0
      %v1818 = vadd.f32 0.0, %v1817
      %1819 = vmatmul.f32.gmra.mxu0 %v458
      %v1820 = vpop.f32.mrf.mxu0
      %v1821 = vadd.f32 0.0, %v1820
      %1822 = vmatmul.f32.gmra.mxu0 %v460
      %v1823 = vpop.f32.mrf.mxu0
      %v1824 = vadd.f32 0.0, %v1823
      %1825 = vmatmul.f32.gmra.mxu0 %v462
      %v1826 = vpop.f32.mrf.mxu0
      %v1827 = vadd.f32 0.0, %v1826
      %1828 = vmatmul.f32.gmra.mxu0 %v464
      %v1829 = vpop.f32.mrf.mxu0
      %v1830 = vadd.f32 0.0, %v1829
      %1831 = vmatmul.f32.gmra.mxu0 %v466
      %v1832 = vpop.f32.mrf.mxu0
      %v1833 = vadd.f32 0.0, %v1832
      %1834 = vmatmul.f32.gmra.mxu0 %v468
      %v1835 = vpop.f32.mrf.mxu0
      %v1836 = vadd.f32 0.0, %v1835
      %1837 = vmatmul.f32.gmra.mxu0 %v470
      %v1838 = vpop.f32.mrf.mxu0
      %v1839 = vadd.f32 0.0, %v1838
      %1840 = vmatmul.f32.gmra.mxu0 %v472
      %v1841 = vpop.f32.mrf.mxu0
      %v1842 = vadd.f32 0.0, %v1841
      %1843 = vmatmul.f32.gmra.mxu0 %v474
      %v1844 = vpop.f32.mrf.mxu0
      %v1845 = vadd.f32 0.0, %v1844
      %1846 = vmatmul.f32.gmra.mxu0 %v476
      %v1847 = vpop.f32.mrf.mxu0
      %v1848 = vadd.f32 0.0, %v1847
      %1849 = vmatmul.f32.gmra.mxu0 %v478
      %v1850 = vpop.f32.mrf.mxu0
      %v1851 = vadd.f32 0.0, %v1850
      %1852 = vmatmul.f32.gmra.mxu0 %v480
      %v1853 = vpop.f32.mrf.mxu0
      %v1854 = vadd.f32 0.0, %v1853
      %1855 = vmatmul.f32.gmra.mxu0 %v1779
      %v1856 = vpop.f32.mrf.mxu0
      %v1857 = vadd.f32 0.0, %v1856
      %1858 = vmatmul.f32.gmra.mxu0 %v1781
      %v1859 = vpop.f32.mrf.mxu0
      %v1860 = vadd.f32 0.0, %v1859
      %1861 = vmatmul.f32.gmra.mxu0 %v1783
      %v1862 = vpop.f32.mrf.mxu0
      %v1863 = vadd.f32 0.0, %v1862
      %1864 = vdwg.mxu0
      %v1865 = vadd.f32 %v1757, %v1806
      %v1866 = vadd.f32 %v1758, %v1809
      %v1867 = vadd.f32 %v1759, %v1812
      %v1868 = vadd.f32 %v1760, %v1815
      %v1869 = vadd.f32 %v1761, %v1818
      %v1870 = vadd.f32 %v1762, %v1821
      %v1871 = vadd.f32 %v1763, %v1824
      %v1872 = vadd.f32 %v1764, %v1827
      %v1873 = vadd.f32 %v1765, %v1830
      %v1874 = vadd.f32 %v1766, %v1833
      %v1875 = vadd.f32 %v1767, %v1836
      %v1876 = vadd.f32 %v1768, %v1839
      %v1877 = vadd.f32 %v1769, %v1842
      %v1878 = vadd.f32 %v1770, %v1845
      %v1879 = vadd.f32 %v1771, %v1848
      %v1880 = vadd.f32 %v1772, %v1851
      %v1881 = vadd.f32 %v1773, %v1854
      %v1882 = vadd.f32 %v1774, %v1857
      %v1883 = vadd.f32 %v1775, %v1860
      %v1884 = vadd.f32 %v1776, %v1863
      %s1885 = scalar_lea.vmem %s1, 40
      %v1886 = vld [vmem:[%s1885] sm:$0xf]
      %v1888 = vsel %vm320, %v246, 0
      %v1891 = vsel %vm320, %v247, 0
      %v1894 = vsel %vm361, %v1886, 0
      %1896 = vmatpush.msra.mxu0 0.0
      %1897 = vmatpush.msra.mxu0 0.0
      %1898 = vmatpush.msra.mxu0 0.0
      %1899 = vmatpush.msra.mxu0 0.0
      %1900 = vmatpush.msra.mxu0 0.0
      %1901 = vmatpush.msra.mxu0 0.0
      %1902 = vmatpush.msra.mxu0 0.0
      %1903 = vmatpush.msra.mxu0 0.0
      %1904 = vmatpush.msra.mxu0 0.0
      %1905 = vmatpush.msra.mxu0 0.0
      %1906 = vmatpush.msra.mxu0 0.0
      %1907 = vmatpush.msra.mxu0 0.0
      %1908 = vmatpush.msra.mxu0 0.0
      %1909 = vmatpush.msra.mxu0 0.0
      %1910 = vmatpush.msra.mxu0 0.0
      %1911 = vmatpush.msra.mxu0 %v1894
      %1912 = vmatmul.f32.gmra.mxu0 %v452
      %v1913 = vpop.f32.mrf.mxu0
      %v1914 = vadd.f32 0.0, %v1913
      %1915 = vmatmul.f32.gmra.mxu0 %v454
      %v1916 = vpop.f32.mrf.mxu0
      %v1917 = vadd.f32 0.0, %v1916
      %1918 = vmatmul.f32.gmra.mxu0 %v456
      %v1919 = vpop.f32.mrf.mxu0
      %v1920 = vadd.f32 0.0, %v1919
      %1921 = vmatmul.f32.gmra.mxu0 %v458
      %v1922 = vpop.f32.mrf.mxu0
      %v1923 = vadd.f32 0.0, %v1922
      %1924 = vmatmul.f32.gmra.mxu0 %v460
      %v1925 = vpop.f32.mrf.mxu0
      %v1926 = vadd.f32 0.0, %v1925
      %1927 = vmatmul.f32.gmra.mxu0 %v462
      %v1928 = vpop.f32.mrf.mxu0
      %v1929 = vadd.f32 0.0, %v1928
      %1930 = vmatmul.f32.gmra.mxu0 %v464
      %v1931 = vpop.f32.mrf.mxu0
      %v1932 = vadd.f32 0.0, %v1931
      %1933 = vmatmul.f32.gmra.mxu0 %v466
      %v1934 = vpop.f32.mrf.mxu0
      %v1935 = vadd.f32 0.0, %v1934
      %1936 = vmatmul.f32.gmra.mxu0 %v468
      %v1937 = vpop.f32.mrf.mxu0
      %v1938 = vadd.f32 0.0, %v1937
      %1939 = vmatmul.f32.gmra.mxu0 %v470
      %v1940 = vpop.f32.mrf.mxu0
      %v1941 = vadd.f32 0.0, %v1940
      %1942 = vmatmul.f32.gmra.mxu0 %v472
      %v1943 = vpop.f32.mrf.mxu0
      %v1944 = vadd.f32 0.0, %v1943
      %1945 = vmatmul.f32.gmra.mxu0 %v474
      %v1946 = vpop.f32.mrf.mxu0
      %v1947 = vadd.f32 0.0, %v1946
      %1948 = vmatmul.f32.gmra.mxu0 %v476
      %v1949 = vpop.f32.mrf.mxu0
      %v1950 = vadd.f32 0.0, %v1949
      %1951 = vmatmul.f32.gmra.mxu0 %v478
      %v1952 = vpop.f32.mrf.mxu0
      %v1953 = vadd.f32 0.0, %v1952
      %1954 = vmatmul.f32.gmra.mxu0 %v480
      %v1955 = vpop.f32.mrf.mxu0
      %v1956 = vadd.f32 0.0, %v1955
      %1957 = vmatmul.f32.gmra.mxu0 %v1779
      %v1958 = vpop.f32.mrf.mxu0
      %v1959 = vadd.f32 0.0, %v1958
      %1960 = vmatmul.f32.gmra.mxu0 %v1781
      %v1961 = vpop.f32.mrf.mxu0
      %v1962 = vadd.f32 0.0, %v1961
      %1963 = vmatmul.f32.gmra.mxu0 %v1783
      %v1964 = vpop.f32.mrf.mxu0
      %v1965 = vadd.f32 0.0, %v1964
      %1966 = vmatmul.f32.gmra.mxu0 %v1888
      %v1967 = vpop.f32.mrf.mxu0
      %v1968 = vadd.f32 0.0, %v1967
      %1969 = vmatmul.f32.gmra.mxu0 %v1891
      %v1970 = vpop.f32.mrf.mxu0
      %v1971 = vadd.f32 0.0, %v1970
      %1972 = vdwg.mxu0
      %v1973 = vadd.f32 %v1865, %v1914
      %v1974 = vadd.f32 %v1866, %v1917
      %v1975 = vadd.f32 %v1867, %v1920
      %v1976 = vadd.f32 %v1868, %v1923
      %v1977 = vadd.f32 %v1869, %v1926
      %v1978 = vadd.f32 %v1870, %v1929
      %v1979 = vadd.f32 %v1871, %v1932
      %v1980 = vadd.f32 %v1872, %v1935
      %v1981 = vadd.f32 %v1873, %v1938
      %v1982 = vadd.f32 %v1874, %v1941
      %v1983 = vadd.f32 %v1875, %v1944
      %v1984 = vadd.f32 %v1876, %v1947
      %v1985 = vadd.f32 %v1877, %v1950
      %v1986 = vadd.f32 %v1878, %v1953
      %v1987 = vadd.f32 %v1879, %v1956
      %v1988 = vadd.f32 %v1880, %v1959
      %v1989 = vadd.f32 %v1881, %v1962
      %v1990 = vadd.f32 %v1882, %v1965
      %v1991 = vadd.f32 %v1883, %v1968
      %v1992 = vadd.f32 %v1884, %v1971
      %s1993 = scalar_lea.vmem %s1, 44
      %v1994 = vld [vmem:[%s1993] sm:$0xf]
      %v1996 = vrot.slane %v244, 1
      %v1997 = vsel %vm278, %v318, %v1996
      %v1998 = vrot.slane %v245, 1
      %v1999 = vsel %vm278, %v1996, %v1998
      %v2000 = vrot.slane %v246, 1
      %v2001 = vsel %vm278, %v1998, %v2000
      %v2002 = vrot.slane %v247, 1
      %v2003 = vsel %vm278, %v2000, %v2002
      %v2004 = vrot.slane %v248, 1
      %v2005 = vsel %vm278, %v2002, %v2004
      %v2006 = vsel %vm320, %v1997, 0
      %v2008 = vsel %vm320, %v1999, 0
      %v2010 = vsel %vm320, %v2001, 0
      %v2012 = vsel %vm320, %v2003, 0
      %v2014 = vsel %vm320, %v2005, 0
      %v2017 = vsel %vm361, %v1994, 0
      %2019 = vmatpush.msra.mxu0 0.0
      %2020 = vmatpush.msra.mxu0 0.0
      %2021 = vmatpush.msra.mxu0 0.0
      %2022 = vmatpush.msra.mxu0 0.0
      %2023 = vmatpush.msra.mxu0 0.0
      %2024 = vmatpush.msra.mxu0 0.0
      %2025 = vmatpush.msra.mxu0 0.0
      %2026 = vmatpush.msra.mxu0 0.0
      %2027 = vmatpush.msra.mxu0 0.0
      %2028 = vmatpush.msra.mxu0 0.0
      %2029 = vmatpush.msra.mxu0 0.0
      %2030 = vmatpush.msra.mxu0 0.0
      %2031 = vmatpush.msra.mxu0 0.0
      %2032 = vmatpush.msra.mxu0 0.0
      %2033 = vmatpush.msra.mxu0 0.0
      %2034 = vmatpush.msra.mxu0 %v2017
      %2035 = vmatmul.f32.gmra.mxu0 %v331
      %v2036 = vpop.f32.mrf.mxu0
      %v2037 = vadd.f32 0.0, %v2036
      %2038 = vmatmul.f32.gmra.mxu0 %v333
      %v2039 = vpop.f32.mrf.mxu0
      %v2040 = vadd.f32 0.0, %v2039
      %2041 = vmatmul.f32.gmra.mxu0 %v335
      %v2042 = vpop.f32.mrf.mxu0
      %v2043 = vadd.f32 0.0, %v2042
      %2044 = vmatmul.f32.gmra.mxu0 %v337
      %v2045 = vpop.f32.mrf.mxu0
      %v2046 = vadd.f32 0.0, %v2045
      %2047 = vmatmul.f32.gmra.mxu0 %v339
      %v2048 = vpop.f32.mrf.mxu0
      %v2049 = vadd.f32 0.0, %v2048
      %2050 = vmatmul.f32.gmra.mxu0 %v341
      %v2051 = vpop.f32.mrf.mxu0
      %v2052 = vadd.f32 0.0, %v2051
      %2053 = vmatmul.f32.gmra.mxu0 %v343
      %v2054 = vpop.f32.mrf.mxu0
      %v2055 = vadd.f32 0.0, %v2054
      %2056 = vmatmul.f32.gmra.mxu0 %v345
      %v2057 = vpop.f32.mrf.mxu0
      %v2058 = vadd.f32 0.0, %v2057
      %2059 = vmatmul.f32.gmra.mxu0 %v347
      %v2060 = vpop.f32.mrf.mxu0
      %v2061 = vadd.f32 0.0, %v2060
      %2062 = vmatmul.f32.gmra.mxu0 %v349
      %v2063 = vpop.f32.mrf.mxu0
      %v2064 = vadd.f32 0.0, %v2063
      %2065 = vmatmul.f32.gmra.mxu0 %v351
      %v2066 = vpop.f32.mrf.mxu0
      %v2067 = vadd.f32 0.0, %v2066
      %2068 = vmatmul.f32.gmra.mxu0 %v353
      %v2069 = vpop.f32.mrf.mxu0
      %v2070 = vadd.f32 0.0, %v2069
      %2071 = vmatmul.f32.gmra.mxu0 %v355
      %v2072 = vpop.f32.mrf.mxu0
      %v2073 = vadd.f32 0.0, %v2072
      %2074 = vmatmul.f32.gmra.mxu0 %v357
      %v2075 = vpop.f32.mrf.mxu0
      %v2076 = vadd.f32 0.0, %v2075
      %2077 = vmatmul.f32.gmra.mxu0 %v359
      %v2078 = vpop.f32.mrf.mxu0
      %v2079 = vadd.f32 0.0, %v2078
      %2080 = vmatmul.f32.gmra.mxu0 %v2006
      %v2081 = vpop.f32.mrf.mxu0
      %v2082 = vadd.f32 0.0, %v2081
      %2083 = vmatmul.f32.gmra.mxu0 %v2008
      %v2084 = vpop.f32.mrf.mxu0
      %v2085 = vadd.f32 0.0, %v2084
      %2086 = vmatmul.f32.gmra.mxu0 %v2010
      %v2087 = vpop.f32.mrf.mxu0
      %v2088 = vadd.f32 0.0, %v2087
      %2089 = vmatmul.f32.gmra.mxu0 %v2012
      %v2090 = vpop.f32.mrf.mxu0
      %v2091 = vadd.f32 0.0, %v2090
      %2092 = vmatmul.f32.gmra.mxu0 %v2014
      %v2093 = vpop.f32.mrf.mxu0
      %v2094 = vadd.f32 0.0, %v2093
      %2095 = vdwg.mxu0
      %v2096 = vadd.f32 %v1973, %v2037
      %v2097 = vadd.f32 %v1974, %v2040
      %v2098 = vadd.f32 %v1975, %v2043
      %v2099 = vadd.f32 %v1976, %v2046
      %v2100 = vadd.f32 %v1977, %v2049
      %v2101 = vadd.f32 %v1978, %v2052
      %v2102 = vadd.f32 %v1979, %v2055
      %v2103 = vadd.f32 %v1980, %v2058
      %v2104 = vadd.f32 %v1981, %v2061
      %v2105 = vadd.f32 %v1982, %v2064
      %v2106 = vadd.f32 %v1983, %v2067
      %v2107 = vadd.f32 %v1984, %v2070
      %v2108 = vadd.f32 %v1985, %v2073
      %v2109 = vadd.f32 %v1986, %v2076
      %v2110 = vadd.f32 %v1987, %v2079
      %v2111 = vadd.f32 %v1988, %v2082
      %v2112 = vadd.f32 %v1989, %v2085
      %v2113 = vadd.f32 %v1990, %v2088
      %v2114 = vadd.f32 %v1991, %v2091
      %v2115 = vadd.f32 %v1992, %v2094
      %s2116 = scalar_lea.vmem %s1, 48
      %v2117 = vld [vmem:[%s2116] sm:$0xf]
      %v2118 = vrot.slane %v244, 2
      %v2119 = vsel %vm564, %v604, %v2118
      %v2120 = vrot.slane %v245, 2
      %v2121 = vsel %vm564, %v2118, %v2120
      %v2122 = vrot.slane %v246, 2
      %v2123 = vsel %vm564, %v2120, %v2122
      %v2124 = vrot.slane %v247, 2
      %v2125 = vsel %vm564, %v2122, %v2124
      %v2126 = vrot.slane %v248, 2
      %v2127 = vsel %vm564, %v2124, %v2126
      %v2128 = vsel %vm320, %v2119, 0
      %v2130 = vsel %vm320, %v2121, 0
      %v2132 = vsel %vm320, %v2123, 0
      %v2134 = vsel %vm320, %v2125, 0
      %v2136 = vsel %vm320, %v2127, 0
      %v2139 = vsel %vm361, %v2117, 0
      %2141 = vmatpush.msra.mxu0 0.0
      %2142 = vmatpush.msra.mxu0 0.0
      %2143 = vmatpush.msra.mxu0 0.0
      %2144 = vmatpush.msra.mxu0 0.0
      %2145 = vmatpush.msra.mxu0 0.0
      %2146 = vmatpush.msra.mxu0 0.0
      %2147 = vmatpush.msra.mxu0 0.0
      %2148 = vmatpush.msra.mxu0 0.0
      %2149 = vmatpush.msra.mxu0 0.0
      %2150 = vmatpush.msra.mxu0 0.0
      %2151 = vmatpush.msra.mxu0 0.0
      %2152 = vmatpush.msra.mxu0 0.0
      %2153 = vmatpush.msra.mxu0 0.0
      %2154 = vmatpush.msra.mxu0 0.0
      %2155 = vmatpush.msra.mxu0 0.0
      %2156 = vmatpush.msra.mxu0 %v2139
      %2157 = vmatmul.f32.gmra.mxu0 %v616
      %v2158 = vpop.f32.mrf.mxu0
      %v2159 = vadd.f32 0.0, %v2158
      %2160 = vmatmul.f32.gmra.mxu0 %v618
      %v2161 = vpop.f32.mrf.mxu0
      %v2162 = vadd.f32 0.0, %v2161
      %2163 = vmatmul.f32.gmra.mxu0 %v620
      %v2164 = vpop.f32.mrf.mxu0
      %v2165 = vadd.f32 0.0, %v2164
      %2166 = vmatmul.f32.gmra.mxu0 %v622
      %v2167 = vpop.f32.mrf.mxu0
      %v2168 = vadd.f32 0.0, %v2167
      %2169 = vmatmul.f32.gmra.mxu0 %v624
      %v2170 = vpop.f32.mrf.mxu0
      %v2171 = vadd.f32 0.0, %v2170
      %2172 = vmatmul.f32.gmra.mxu0 %v626
      %v2173 = vpop.f32.mrf.mxu0
      %v2174 = vadd.f32 0.0, %v2173
      %2175 = vmatmul.f32.gmra.mxu0 %v628
      %v2176 = vpop.f32.mrf.mxu0
      %v2177 = vadd.f32 0.0, %v2176
      %2178 = vmatmul.f32.gmra.mxu0 %v630
      %v2179 = vpop.f32.mrf.mxu0
      %v2180 = vadd.f32 0.0, %v2179
      %2181 = vmatmul.f32.gmra.mxu0 %v632
      %v2182 = vpop.f32.mrf.mxu0
      %v2183 = vadd.f32 0.0, %v2182
      %2184 = vmatmul.f32.gmra.mxu0 %v634
      %v2185 = vpop.f32.mrf.mxu0
      %v2186 = vadd.f32 0.0, %v2185
      %2187 = vmatmul.f32.gmra.mxu0 %v636
      %v2188 = vpop.f32.mrf.mxu0
      %v2189 = vadd.f32 0.0, %v2188
      %2190 = vmatmul.f32.gmra.mxu0 %v638
      %v2191 = vpop.f32.mrf.mxu0
      %v2192 = vadd.f32 0.0, %v2191
      %2193 = vmatmul.f32.gmra.mxu0 %v640
      %v2194 = vpop.f32.mrf.mxu0
      %v2195 = vadd.f32 0.0, %v2194
      %2196 = vmatmul.f32.gmra.mxu0 %v642
      %v2197 = vpop.f32.mrf.mxu0
      %v2198 = vadd.f32 0.0, %v2197
      %2199 = vmatmul.f32.gmra.mxu0 %v644
      %v2200 = vpop.f32.mrf.mxu0
      %v2201 = vadd.f32 0.0, %v2200
      %2202 = vmatmul.f32.gmra.mxu0 %v2128
      %v2203 = vpop.f32.mrf.mxu0
      %v2204 = vadd.f32 0.0, %v2203
      %2205 = vmatmul.f32.gmra.mxu0 %v2130
      %v2206 = vpop.f32.mrf.mxu0
      %v2207 = vadd.f32 0.0, %v2206
      %2208 = vmatmul.f32.gmra.mxu0 %v2132
      %v2209 = vpop.f32.mrf.mxu0
      %v2210 = vadd.f32 0.0, %v2209
      %2211 = vmatmul.f32.gmra.mxu0 %v2134
      %v2212 = vpop.f32.mrf.mxu0
      %v2213 = vadd.f32 0.0, %v2212
      %2214 = vmatmul.f32.gmra.mxu0 %v2136
      %v2215 = vpop.f32.mrf.mxu0
      %v2216 = vadd.f32 0.0, %v2215
      %2217 = vdwg.mxu0
      %v2218 = vadd.f32 %v2096, %v2159
      %v2219 = vadd.f32 %v2097, %v2162
      %v2220 = vadd.f32 %v2098, %v2165
      %v2221 = vadd.f32 %v2099, %v2168
      %v2222 = vadd.f32 %v2100, %v2171
      %v2223 = vadd.f32 %v2101, %v2174
      %v2224 = vadd.f32 %v2102, %v2177
      %v2225 = vadd.f32 %v2103, %v2180
      %v2226 = vadd.f32 %v2104, %v2183
      %v2227 = vadd.f32 %v2105, %v2186
      %v2228 = vadd.f32 %v2106, %v2189
      %v2229 = vadd.f32 %v2107, %v2192
      %v2230 = vadd.f32 %v2108, %v2195
      %v2231 = vadd.f32 %v2109, %v2198
      %v2232 = vadd.f32 %v2110, %v2201
      %v2233 = vadd.f32 %v2111, %v2204
      %v2234 = vadd.f32 %v2112, %v2207
      %v2235 = vadd.f32 %v2113, %v2210
      %v2236 = vadd.f32 %v2114, %v2213
      %v2237 = vadd.f32 %v2115, %v2216
      %s2238 = scalar_lea.vmem %s1, 52
      %v2239 = vld [vmem:[%s2238] sm:$0xf]
      %v2240 = vrot.slane %v244, 3
      %v2241 = vsel %vm748, %v788, %v2240
      %v2242 = vrot.slane %v245, 3
      %v2243 = vsel %vm748, %v2240, %v2242
      %v2244 = vrot.slane %v246, 3
      %v2245 = vsel %vm748, %v2242, %v2244
      %v2246 = vrot.slane %v247, 3
      %v2247 = vsel %vm748, %v2244, %v2246
      %v2248 = vrot.slane %v248, 3
      %v2249 = vsel %vm748, %v2246, %v2248
      %v2250 = vsel %vm320, %v2241, 0
      %v2252 = vsel %vm320, %v2243, 0
      %v2254 = vsel %vm320, %v2245, 0
      %v2256 = vsel %vm320, %v2247, 0
      %v2258 = vsel %vm320, %v2249, 0
      %v2261 = vsel %vm361, %v2239, 0
      %2263 = vmatpush.msra.mxu0 0.0
      %2264 = vmatpush.msra.mxu0 0.0
      %2265 = vmatpush.msra.mxu0 0.0
      %2266 = vmatpush.msra.mxu0 0.0
      %2267 = vmatpush.msra.mxu0 0.0
      %2268 = vmatpush.msra.mxu0 0.0
      %2269 = vmatpush.msra.mxu0 0.0
      %2270 = vmatpush.msra.mxu0 0.0
      %2271 = vmatpush.msra.mxu0 0.0
      %2272 = vmatpush.msra.mxu0 0.0
      %2273 = vmatpush.msra.mxu0 0.0
      %2274 = vmatpush.msra.mxu0 0.0
      %2275 = vmatpush.msra.mxu0 0.0
      %2276 = vmatpush.msra.mxu0 0.0
      %2277 = vmatpush.msra.mxu0 0.0
      %2278 = vmatpush.msra.mxu0 %v2261
      %2279 = vmatmul.f32.gmra.mxu0 %v800
      %v2280 = vpop.f32.mrf.mxu0
      %v2281 = vadd.f32 0.0, %v2280
      %2282 = vmatmul.f32.gmra.mxu0 %v802
      %v2283 = vpop.f32.mrf.mxu0
      %v2284 = vadd.f32 0.0, %v2283
      %2285 = vmatmul.f32.gmra.mxu0 %v804
      %v2286 = vpop.f32.mrf.mxu0
      %v2287 = vadd.f32 0.0, %v2286
      %2288 = vmatmul.f32.gmra.mxu0 %v806
      %v2289 = vpop.f32.mrf.mxu0
      %v2290 = vadd.f32 0.0, %v2289
      %2291 = vmatmul.f32.gmra.mxu0 %v808
      %v2292 = vpop.f32.mrf.mxu0
      %v2293 = vadd.f32 0.0, %v2292
      %2294 = vmatmul.f32.gmra.mxu0 %v810
      %v2295 = vpop.f32.mrf.mxu0
      %v2296 = vadd.f32 0.0, %v2295
      %2297 = vmatmul.f32.gmra.mxu0 %v812
      %v2298 = vpop.f32.mrf.mxu0
      %v2299 = vadd.f32 0.0, %v2298
      %2300 = vmatmul.f32.gmra.mxu0 %v814
      %v2301 = vpop.f32.mrf.mxu0
      %v2302 = vadd.f32 0.0, %v2301
      %2303 = vmatmul.f32.gmra.mxu0 %v816
      %v2304 = vpop.f32.mrf.mxu0
      %v2305 = vadd.f32 0.0, %v2304
      %2306 = vmatmul.f32.gmra.mxu0 %v818
      %v2307 = vpop.f32.mrf.mxu0
      %v2308 = vadd.f32 0.0, %v2307
      %2309 = vmatmul.f32.gmra.mxu0 %v820
      %v2310 = vpop.f32.mrf.mxu0
      %v2311 = vadd.f32 0.0, %v2310
      %2312 = vmatmul.f32.gmra.mxu0 %v822
      %v2313 = vpop.f32.mrf.mxu0
      %v2314 = vadd.f32 0.0, %v2313
      %2315 = vmatmul.f32.gmra.mxu0 %v824
      %v2316 = vpop.f32.mrf.mxu0
      %v2317 = vadd.f32 0.0, %v2316
      %2318 = vmatmul.f32.gmra.mxu0 %v826
      %v2319 = vpop.f32.mrf.mxu0
      %v2320 = vadd.f32 0.0, %v2319
      %2321 = vmatmul.f32.gmra.mxu0 %v828
      %v2322 = vpop.f32.mrf.mxu0
      %v2323 = vadd.f32 0.0, %v2322
      %2324 = vmatmul.f32.gmra.mxu0 %v2250
      %v2325 = vpop.f32.mrf.mxu0
      %v2326 = vadd.f32 0.0, %v2325
      %2327 = vmatmul.f32.gmra.mxu0 %v2252
      %v2328 = vpop.f32.mrf.mxu0
      %v2329 = vadd.f32 0.0, %v2328
      %2330 = vmatmul.f32.gmra.mxu0 %v2254
      %v2331 = vpop.f32.mrf.mxu0
      %v2332 = vadd.f32 0.0, %v2331
      %2333 = vmatmul.f32.gmra.mxu0 %v2256
      %v2334 = vpop.f32.mrf.mxu0
      %v2335 = vadd.f32 0.0, %v2334
      %2336 = vmatmul.f32.gmra.mxu0 %v2258
      %v2337 = vpop.f32.mrf.mxu0
      %v2338 = vadd.f32 0.0, %v2337
      %2339 = vdwg.mxu0
      %v2340 = vadd.f32 %v2218, %v2281
      %v2341 = vadd.f32 %v2219, %v2284
      %v2342 = vadd.f32 %v2220, %v2287
      %v2343 = vadd.f32 %v2221, %v2290
      %v2344 = vadd.f32 %v2222, %v2293
      %v2345 = vadd.f32 %v2223, %v2296
      %v2346 = vadd.f32 %v2224, %v2299
      %v2347 = vadd.f32 %v2225, %v2302
      %v2348 = vadd.f32 %v2226, %v2305
      %v2349 = vadd.f32 %v2227, %v2308
      %v2350 = vadd.f32 %v2228, %v2311
      %v2351 = vadd.f32 %v2229, %v2314
      %v2352 = vadd.f32 %v2230, %v2317
      %v2353 = vadd.f32 %v2231, %v2320
      %v2354 = vadd.f32 %v2232, %v2323
      %v2355 = vadd.f32 %v2233, %v2326
      %v2356 = vadd.f32 %v2234, %v2329
      %v2357 = vadd.f32 %v2235, %v2332
      %v2358 = vadd.f32 %v2236, %v2335
      %v2359 = vadd.f32 %v2237, %v2338
      %s2360 = scalar_lea.vmem %s1, 56
      %v2361 = vld [vmem:[%s2360] sm:$0xf]
      %v2362 = vrot.slane %v246, 4
      %v2363 = vsel %vm361, %v1119, %v2362
      %v2364 = vrot.slane %v247, 4
      %v2365 = vsel %vm361, %v2362, %v2364
      %v2366 = vrot.slane %v248, 4
      %v2367 = vsel %vm361, %v2364, %v2366
      %v2368 = vsel %vm320, %v2363, 0
      %v2370 = vsel %vm320, %v2365, 0
      %v2372 = vsel %vm320, %v2367, 0
      %v2375 = vsel %vm361, %v2361, 0
      %2377 = vmatpush.msra.mxu0 0.0
      %2378 = vmatpush.msra.mxu0 0.0
      %2379 = vmatpush.msra.mxu0 0.0
      %2380 = vmatpush.msra.mxu0 0.0
      %2381 = vmatpush.msra.mxu0 0.0
      %2382 = vmatpush.msra.mxu0 0.0
      %2383 = vmatpush.msra.mxu0 0.0
      %2384 = vmatpush.msra.mxu0 0.0
      %2385 = vmatpush.msra.mxu0 0.0
      %2386 = vmatpush.msra.mxu0 0.0
      %2387 = vmatpush.msra.mxu0 0.0
      %2388 = vmatpush.msra.mxu0 0.0
      %2389 = vmatpush.msra.mxu0 0.0
      %2390 = vmatpush.msra.mxu0 0.0
      %2391 = vmatpush.msra.mxu0 0.0
      %2392 = vmatpush.msra.mxu0 %v2375
      %2393 = vmatmul.f32.gmra.mxu0 %v983
      %v2394 = vpop.f32.mrf.mxu0
      %v2395 = vadd.f32 0.0, %v2394
      %2396 = vmatmul.f32.gmra.mxu0 %v985
      %v2397 = vpop.f32.mrf.mxu0
      %v2398 = vadd.f32 0.0, %v2397
      %2399 = vmatmul.f32.gmra.mxu0 %v987
      %v2400 = vpop.f32.mrf.mxu0
      %v2401 = vadd.f32 0.0, %v2400
      %2402 = vmatmul.f32.gmra.mxu0 %v989
      %v2403 = vpop.f32.mrf.mxu0
      %v2404 = vadd.f32 0.0, %v2403
      %2405 = vmatmul.f32.gmra.mxu0 %v991
      %v2406 = vpop.f32.mrf.mxu0
      %v2407 = vadd.f32 0.0, %v2406
      %2408 = vmatmul.f32.gmra.mxu0 %v993
      %v2409 = vpop.f32.mrf.mxu0
      %v2410 = vadd.f32 0.0, %v2409
      %2411 = vmatmul.f32.gmra.mxu0 %v995
      %v2412 = vpop.f32.mrf.mxu0
      %v2413 = vadd.f32 0.0, %v2412
      %2414 = vmatmul.f32.gmra.mxu0 %v997
      %v2415 = vpop.f32.mrf.mxu0
      %v2416 = vadd.f32 0.0, %v2415
      %2417 = vmatmul.f32.gmra.mxu0 %v999
      %v2418 = vpop.f32.mrf.mxu0
      %v2419 = vadd.f32 0.0, %v2418
      %2420 = vmatmul.f32.gmra.mxu0 %v1001
      %v2421 = vpop.f32.mrf.mxu0
      %v2422 = vadd.f32 0.0, %v2421
      %2423 = vmatmul.f32.gmra.mxu0 %v1003
      %v2424 = vpop.f32.mrf.mxu0
      %v2425 = vadd.f32 0.0, %v2424
      %2426 = vmatmul.f32.gmra.mxu0 %v1005
      %v2427 = vpop.f32.mrf.mxu0
      %v2428 = vadd.f32 0.0, %v2427
      %2429 = vmatmul.f32.gmra.mxu0 %v1007
      %v2430 = vpop.f32.mrf.mxu0
      %v2431 = vadd.f32 0.0, %v2430
      %2432 = vmatmul.f32.gmra.mxu0 %v1009
      %v2433 = vpop.f32.mrf.mxu0
      %v2434 = vadd.f32 0.0, %v2433
      %2435 = vmatmul.f32.gmra.mxu0 %v1011
      %v2436 = vpop.f32.mrf.mxu0
      %v2437 = vadd.f32 0.0, %v2436
      %2438 = vmatmul.f32.gmra.mxu0 %v1121
      %v2439 = vpop.f32.mrf.mxu0
      %v2440 = vadd.f32 0.0, %v2439
      %2441 = vmatmul.f32.gmra.mxu0 %v1123
      %v2442 = vpop.f32.mrf.mxu0
      %v2443 = vadd.f32 0.0, %v2442
      %2444 = vmatmul.f32.gmra.mxu0 %v2368
      %v2445 = vpop.f32.mrf.mxu0
      %v2446 = vadd.f32 0.0, %v2445
      %2447 = vmatmul.f32.gmra.mxu0 %v2370
      %v2448 = vpop.f32.mrf.mxu0
      %v2449 = vadd.f32 0.0, %v2448
      %2450 = vmatmul.f32.gmra.mxu0 %v2372
      %v2451 = vpop.f32.mrf.mxu0
      %v2452 = vadd.f32 0.0, %v2451
      %2453 = vdwg.mxu0
      %v2454 = vadd.f32 %v2340, %v2395
      %v2455 = vadd.f32 %v2341, %v2398
      %v2456 = vadd.f32 %v2342, %v2401
      %v2457 = vadd.f32 %v2343, %v2404
      %v2458 = vadd.f32 %v2344, %v2407
      %v2459 = vadd.f32 %v2345, %v2410
      %v2460 = vadd.f32 %v2346, %v2413
      %v2461 = vadd.f32 %v2347, %v2416
      %v2462 = vadd.f32 %v2348, %v2419
      %v2463 = vadd.f32 %v2349, %v2422
      %v2464 = vadd.f32 %v2350, %v2425
      %v2465 = vadd.f32 %v2351, %v2428
      %v2466 = vadd.f32 %v2352, %v2431
      %v2467 = vadd.f32 %v2353, %v2434
      %v2468 = vadd.f32 %v2354, %v2437
      %v2469 = vadd.f32 %v2355, %v2440
      %v2470 = vadd.f32 %v2356, %v2443
      %v2471 = vadd.f32 %v2357, %v2446
      %v2472 = vadd.f32 %v2358, %v2449
      %v2473 = vadd.f32 %v2359, %v2452
      %s2474 = scalar_lea.vmem %s1, 60
      %v2475 = vld [vmem:[%s2474] sm:$0xf]
      %v2478 = vrot.slane %v249, 4
      %v2479 = vsel %vm361, %v2366, %v2478
      %v2480 = vrot.slane %v250, 4
      %v2481 = vsel %vm361, %v2478, %v2480
      %v2482 = vsel %vm320, %v2479, 0
      %v2484 = vsel %vm320, %v2481, 0
      %v2487 = vsel %vm361, %v2475, 0
      %2489 = vmatpush.msra.mxu0 0.0
      %2490 = vmatpush.msra.mxu0 0.0
      %2491 = vmatpush.msra.mxu0 0.0
      %2492 = vmatpush.msra.mxu0 0.0
      %2493 = vmatpush.msra.mxu0 0.0
      %2494 = vmatpush.msra.mxu0 0.0
      %2495 = vmatpush.msra.mxu0 0.0
      %2496 = vmatpush.msra.mxu0 0.0
      %2497 = vmatpush.msra.mxu0 0.0
      %2498 = vmatpush.msra.mxu0 0.0
      %2499 = vmatpush.msra.mxu0 0.0
      %2500 = vmatpush.msra.mxu0 0.0
      %2501 = vmatpush.msra.mxu0 0.0
      %2502 = vmatpush.msra.mxu0 0.0
      %2503 = vmatpush.msra.mxu0 0.0
      %2504 = vmatpush.msra.mxu0 %v2487
      %2505 = vmatmul.f32.gmra.mxu0 %v987
      %v2506 = vpop.f32.mrf.mxu0
      %v2507 = vadd.f32 0.0, %v2506
      %2508 = vmatmul.f32.gmra.mxu0 %v989
      %v2509 = vpop.f32.mrf.mxu0
      %v2510 = vadd.f32 0.0, %v2509
      %2511 = vmatmul.f32.gmra.mxu0 %v991
      %v2512 = vpop.f32.mrf.mxu0
      %v2513 = vadd.f32 0.0, %v2512
      %2514 = vmatmul.f32.gmra.mxu0 %v993
      %v2515 = vpop.f32.mrf.mxu0
      %v2516 = vadd.f32 0.0, %v2515
      %2517 = vmatmul.f32.gmra.mxu0 %v995
      %v2518 = vpop.f32.mrf.mxu0
      %v2519 = vadd.f32 0.0, %v2518
      %2520 = vmatmul.f32.gmra.mxu0 %v997
      %v2521 = vpop.f32.mrf.mxu0
      %v2522 = vadd.f32 0.0, %v2521
      %2523 = vmatmul.f32.gmra.mxu0 %v999
      %v2524 = vpop.f32.mrf.mxu0
      %v2525 = vadd.f32 0.0, %v2524
      %2526 = vmatmul.f32.gmra.mxu0 %v1001
      %v2527 = vpop.f32.mrf.mxu0
      %v2528 = vadd.f32 0.0, %v2527
      %2529 = vmatmul.f32.gmra.mxu0 %v1003
      %v2530 = vpop.f32.mrf.mxu0
      %v2531 = vadd.f32 0.0, %v2530
      %2532 = vmatmul.f32.gmra.mxu0 %v1005
      %v2533 = vpop.f32.mrf.mxu0
      %v2534 = vadd.f32 0.0, %v2533
      %2535 = vmatmul.f32.gmra.mxu0 %v1007
      %v2536 = vpop.f32.mrf.mxu0
      %v2537 = vadd.f32 0.0, %v2536
      %2538 = vmatmul.f32.gmra.mxu0 %v1009
      %v2539 = vpop.f32.mrf.mxu0
      %v2540 = vadd.f32 0.0, %v2539
      %2541 = vmatmul.f32.gmra.mxu0 %v1011
      %v2542 = vpop.f32.mrf.mxu0
      %v2543 = vadd.f32 0.0, %v2542
      %2544 = vmatmul.f32.gmra.mxu0 %v1121
      %v2545 = vpop.f32.mrf.mxu0
      %v2546 = vadd.f32 0.0, %v2545
      %2547 = vmatmul.f32.gmra.mxu0 %v1123
      %v2548 = vpop.f32.mrf.mxu0
      %v2549 = vadd.f32 0.0, %v2548
      %2550 = vmatmul.f32.gmra.mxu0 %v2368
      %v2551 = vpop.f32.mrf.mxu0
      %v2552 = vadd.f32 0.0, %v2551
      %2553 = vmatmul.f32.gmra.mxu0 %v2370
      %v2554 = vpop.f32.mrf.mxu0
      %v2555 = vadd.f32 0.0, %v2554
      %2556 = vmatmul.f32.gmra.mxu0 %v2372
      %v2557 = vpop.f32.mrf.mxu0
      %v2558 = vadd.f32 0.0, %v2557
      %2559 = vmatmul.f32.gmra.mxu0 %v2482
      %v2560 = vpop.f32.mrf.mxu0
      %v2561 = vadd.f32 0.0, %v2560
      %2562 = vmatmul.f32.gmra.mxu0 %v2484
      %v2563 = vpop.f32.mrf.mxu0
      %v2564 = vadd.f32 0.0, %v2563
      %2565 = vdwg.mxu0
      %v2566 = vadd.f32 %v2454, %v2507
      %v2567 = vadd.f32 %v2455, %v2510
      %v2568 = vadd.f32 %v2456, %v2513
      %v2569 = vadd.f32 %v2457, %v2516
      %v2570 = vadd.f32 %v2458, %v2519
      %v2571 = vadd.f32 %v2459, %v2522
      %v2572 = vadd.f32 %v2460, %v2525
      %v2573 = vadd.f32 %v2461, %v2528
      %v2574 = vadd.f32 %v2462, %v2531
      %v2575 = vadd.f32 %v2463, %v2534
      %v2576 = vadd.f32 %v2464, %v2537
      %v2577 = vadd.f32 %v2465, %v2540
      %v2578 = vadd.f32 %v2466, %v2543
      %v2579 = vadd.f32 %v2467, %v2546
      %v2580 = vadd.f32 %v2468, %v2549
      %v2581 = vadd.f32 %v2469, %v2552
      %v2582 = vadd.f32 %v2470, %v2555
      %v2583 = vadd.f32 %v2471, %v2558
      %v2584 = vadd.f32 %v2472, %v2561
      %v2585 = vadd.f32 %v2473, %v2564
      %s2586 = scalar_lea.vmem %s1, 64
      %v2587 = vld [vmem:[%s2586] sm:$0xf]
      %v2588 = vrot.slane %v246, 5
      %v2589 = vsel %vm1227, %v1267, %v2588
      %v2590 = vrot.slane %v247, 5
      %v2591 = vsel %vm1227, %v2588, %v2590
      %v2592 = vrot.slane %v248, 5
      %v2593 = vsel %vm1227, %v2590, %v2592
      %v2594 = vrot.slane %v249, 5
      %v2595 = vsel %vm1227, %v2592, %v2594
      %v2596 = vrot.slane %v250, 5
      %v2597 = vsel %vm1227, %v2594, %v2596
      %v2598 = vsel %vm320, %v2589, 0
      %v2600 = vsel %vm320, %v2591, 0
      %v2602 = vsel %vm320, %v2593, 0
      %v2604 = vsel %vm320, %v2595, 0
      %v2606 = vsel %vm320, %v2597, 0
      %v2609 = vsel %vm361, %v2587, 0
      %2611 = vmatpush.msra.mxu0 0.0
      %2612 = vmatpush.msra.mxu0 0.0
      %2613 = vmatpush.msra.mxu0 0.0
      %2614 = vmatpush.msra.mxu0 0.0
      %2615 = vmatpush.msra.mxu0 0.0
      %2616 = vmatpush.msra.mxu0 0.0
      %2617 = vmatpush.msra.mxu0 0.0
      %2618 = vmatpush.msra.mxu0 0.0
      %2619 = vmatpush.msra.mxu0 0.0
      %2620 = vmatpush.msra.mxu0 0.0
      %2621 = vmatpush.msra.mxu0 0.0
      %2622 = vmatpush.msra.mxu0 0.0
      %2623 = vmatpush.msra.mxu0 0.0
      %2624 = vmatpush.msra.mxu0 0.0
      %2625 = vmatpush.msra.mxu0 0.0
      %2626 = vmatpush.msra.mxu0 %v2609
      %2627 = vmatmul.f32.gmra.mxu0 %v1279
      %v2628 = vpop.f32.mrf.mxu0
      %v2629 = vadd.f32 0.0, %v2628
      %2630 = vmatmul.f32.gmra.mxu0 %v1281
      %v2631 = vpop.f32.mrf.mxu0
      %v2632 = vadd.f32 0.0, %v2631
      %2633 = vmatmul.f32.gmra.mxu0 %v1283
      %v2634 = vpop.f32.mrf.mxu0
      %v2635 = vadd.f32 0.0, %v2634
      %2636 = vmatmul.f32.gmra.mxu0 %v1285
      %v2637 = vpop.f32.mrf.mxu0
      %v2638 = vadd.f32 0.0, %v2637
      %2639 = vmatmul.f32.gmra.mxu0 %v1287
      %v2640 = vpop.f32.mrf.mxu0
      %v2641 = vadd.f32 0.0, %v2640
      %2642 = vmatmul.f32.gmra.mxu0 %v1289
      %v2643 = vpop.f32.mrf.mxu0
      %v2644 = vadd.f32 0.0, %v2643
      %2645 = vmatmul.f32.gmra.mxu0 %v1291
      %v2646 = vpop.f32.mrf.mxu0
      %v2647 = vadd.f32 0.0, %v2646
      %2648 = vmatmul.f32.gmra.mxu0 %v1293
      %v2649 = vpop.f32.mrf.mxu0
      %v2650 = vadd.f32 0.0, %v2649
      %2651 = vmatmul.f32.gmra.mxu0 %v1295
      %v2652 = vpop.f32.mrf.mxu0
      %v2653 = vadd.f32 0.0, %v2652
      %2654 = vmatmul.f32.gmra.mxu0 %v1297
      %v2655 = vpop.f32.mrf.mxu0
      %v2656 = vadd.f32 0.0, %v2655
      %2657 = vmatmul.f32.gmra.mxu0 %v1299
      %v2658 = vpop.f32.mrf.mxu0
      %v2659 = vadd.f32 0.0, %v2658
      %2660 = vmatmul.f32.gmra.mxu0 %v1301
      %v2661 = vpop.f32.mrf.mxu0
      %v2662 = vadd.f32 0.0, %v2661
      %2663 = vmatmul.f32.gmra.mxu0 %v1303
      %v2664 = vpop.f32.mrf.mxu0
      %v2665 = vadd.f32 0.0, %v2664
      %2666 = vmatmul.f32.gmra.mxu0 %v1305
      %v2667 = vpop.f32.mrf.mxu0
      %v2668 = vadd.f32 0.0, %v2667
      %2669 = vmatmul.f32.gmra.mxu0 %v1307
      %v2670 = vpop.f32.mrf.mxu0
      %v2671 = vadd.f32 0.0, %v2670
      %2672 = vmatmul.f32.gmra.mxu0 %v2598
      %v2673 = vpop.f32.mrf.mxu0
      %v2674 = vadd.f32 0.0, %v2673
      %2675 = vmatmul.f32.gmra.mxu0 %v2600
      %v2676 = vpop.f32.mrf.mxu0
      %v2677 = vadd.f32 0.0, %v2676
      %2678 = vmatmul.f32.gmra.mxu0 %v2602
      %v2679 = vpop.f32.mrf.mxu0
      %v2680 = vadd.f32 0.0, %v2679
      %2681 = vmatmul.f32.gmra.mxu0 %v2604
      %v2682 = vpop.f32.mrf.mxu0
      %v2683 = vadd.f32 0.0, %v2682
      %2684 = vmatmul.f32.gmra.mxu0 %v2606
      %v2685 = vpop.f32.mrf.mxu0
      %v2686 = vadd.f32 0.0, %v2685
      %2687 = vdwg.mxu0
      %v2688 = vadd.f32 %v2566, %v2629
      %v2689 = vadd.f32 %v2567, %v2632
      %v2690 = vadd.f32 %v2568, %v2635
      %v2691 = vadd.f32 %v2569, %v2638
      %v2692 = vadd.f32 %v2570, %v2641
      %v2693 = vadd.f32 %v2571, %v2644
      %v2694 = vadd.f32 %v2572, %v2647
      %v2695 = vadd.f32 %v2573, %v2650
      %v2696 = vadd.f32 %v2574, %v2653
      %v2697 = vadd.f32 %v2575, %v2656
      %v2698 = vadd.f32 %v2576, %v2659
      %v2699 = vadd.f32 %v2577, %v2662
      %v2700 = vadd.f32 %v2578, %v2665
      %v2701 = vadd.f32 %v2579, %v2668
      %v2702 = vadd.f32 %v2580, %v2671
      %v2703 = vadd.f32 %v2581, %v2674
      %v2704 = vadd.f32 %v2582, %v2677
      %v2705 = vadd.f32 %v2583, %v2680
      %v2706 = vadd.f32 %v2584, %v2683
      %v2707 = vadd.f32 %v2585, %v2686
      %s2708 = scalar_lea.vmem %s1, 68
      %v2709 = vld [vmem:[%s2708] sm:$0xf]
      %v2710 = vrot.slane %v246, 6
      %v2711 = vsel %vm1411, %v1451, %v2710
      %v2712 = vrot.slane %v247, 6
      %v2713 = vsel %vm1411, %v2710, %v2712
      %v2714 = vrot.slane %v248, 6
      %v2715 = vsel %vm1411, %v2712, %v2714
      %v2716 = vrot.slane %v249, 6
      %v2717 = vsel %vm1411, %v2714, %v2716
      %v2718 = vrot.slane %v250, 6
      %v2719 = vsel %vm1411, %v2716, %v2718
      %v2720 = vsel %vm320, %v2711, 0
      %v2722 = vsel %vm320, %v2713, 0
      %v2724 = vsel %vm320, %v2715, 0
      %v2726 = vsel %vm320, %v2717, 0
      %v2728 = vsel %vm320, %v2719, 0
      %v2731 = vsel %vm361, %v2709, 0
      %2733 = vmatpush.msra.mxu0 0.0
      %2734 = vmatpush.msra.mxu0 0.0
      %2735 = vmatpush.msra.mxu0 0.0
      %2736 = vmatpush.msra.mxu0 0.0
      %2737 = vmatpush.msra.mxu0 0.0
      %2738 = vmatpush.msra.mxu0 0.0
      %2739 = vmatpush.msra.mxu0 0.0
      %2740 = vmatpush.msra.mxu0 0.0
      %2741 = vmatpush.msra.mxu0 0.0
      %2742 = vmatpush.msra.mxu0 0.0
      %2743 = vmatpush.msra.mxu0 0.0
      %2744 = vmatpush.msra.mxu0 0.0
      %2745 = vmatpush.msra.mxu0 0.0
      %2746 = vmatpush.msra.mxu0 0.0
      %2747 = vmatpush.msra.mxu0 0.0
      %2748 = vmatpush.msra.mxu0 %v2731
      %2749 = vmatmul.f32.gmra.mxu0 %v1463
      %v2750 = vpop.f32.mrf.mxu0
      %v2751 = vadd.f32 0.0, %v2750
      %2752 = vmatmul.f32.gmra.mxu0 %v1465
      %v2753 = vpop.f32.mrf.mxu0
      %v2754 = vadd.f32 0.0, %v2753
      %2755 = vmatmul.f32.gmra.mxu0 %v1467
      %v2756 = vpop.f32.mrf.mxu0
      %v2757 = vadd.f32 0.0, %v2756
      %2758 = vmatmul.f32.gmra.mxu0 %v1469
      %v2759 = vpop.f32.mrf.mxu0
      %v2760 = vadd.f32 0.0, %v2759
      %2761 = vmatmul.f32.gmra.mxu0 %v1471
      %v2762 = vpop.f32.mrf.mxu0
      %v2763 = vadd.f32 0.0, %v2762
      %2764 = vmatmul.f32.gmra.mxu0 %v1473
      %v2765 = vpop.f32.mrf.mxu0
      %v2766 = vadd.f32 0.0, %v2765
      %2767 = vmatmul.f32.gmra.mxu0 %v1475
      %v2768 = vpop.f32.mrf.mxu0
      %v2769 = vadd.f32 0.0, %v2768
      %2770 = vmatmul.f32.gmra.mxu0 %v1477
      %v2771 = vpop.f32.mrf.mxu0
      %v2772 = vadd.f32 0.0, %v2771
      %2773 = vmatmul.f32.gmra.mxu0 %v1479
      %v2774 = vpop.f32.mrf.mxu0
      %v2775 = vadd.f32 0.0, %v2774
      %2776 = vmatmul.f32.gmra.mxu0 %v1481
      %v2777 = vpop.f32.mrf.mxu0
      %v2778 = vadd.f32 0.0, %v2777
      %2779 = vmatmul.f32.gmra.mxu0 %v1483
      %v2780 = vpop.f32.mrf.mxu0
      %v2781 = vadd.f32 0.0, %v2780
      %2782 = vmatmul.f32.gmra.mxu0 %v1485
      %v2783 = vpop.f32.mrf.mxu0
      %v2784 = vadd.f32 0.0, %v2783
      %2785 = vmatmul.f32.gmra.mxu0 %v1487
      %v2786 = vpop.f32.mrf.mxu0
      %v2787 = vadd.f32 0.0, %v2786
      %2788 = vmatmul.f32.gmra.mxu0 %v1489
      %v2789 = vpop.f32.mrf.mxu0
      %v2790 = vadd.f32 0.0, %v2789
      %2791 = vmatmul.f32.gmra.mxu0 %v1491
      %v2792 = vpop.f32.mrf.mxu0
      %v2793 = vadd.f32 0.0, %v2792
      %2794 = vmatmul.f32.gmra.mxu0 %v2720
      %v2795 = vpop.f32.mrf.mxu0
      %v2796 = vadd.f32 0.0, %v2795
      %2797 = vmatmul.f32.gmra.mxu0 %v2722
      %v2798 = vpop.f32.mrf.mxu0
      %v2799 = vadd.f32 0.0, %v2798
      %2800 = vmatmul.f32.gmra.mxu0 %v2724
      %v2801 = vpop.f32.mrf.mxu0
      %v2802 = vadd.f32 0.0, %v2801
      %2803 = vmatmul.f32.gmra.mxu0 %v2726
      %v2804 = vpop.f32.mrf.mxu0
      %v2805 = vadd.f32 0.0, %v2804
      %2806 = vmatmul.f32.gmra.mxu0 %v2728
      %v2807 = vpop.f32.mrf.mxu0
      %v2808 = vadd.f32 0.0, %v2807
      %2809 = vdwg.mxu0
      %v2810 = vadd.f32 %v2688, %v2751
      %v2811 = vadd.f32 %v2689, %v2754
      %v2812 = vadd.f32 %v2690, %v2757
      %v2813 = vadd.f32 %v2691, %v2760
      %v2814 = vadd.f32 %v2692, %v2763
      %v2815 = vadd.f32 %v2693, %v2766
      %v2816 = vadd.f32 %v2694, %v2769
      %v2817 = vadd.f32 %v2695, %v2772
      %v2818 = vadd.f32 %v2696, %v2775
      %v2819 = vadd.f32 %v2697, %v2778
      %v2820 = vadd.f32 %v2698, %v2781
      %v2821 = vadd.f32 %v2699, %v2784
      %v2822 = vadd.f32 %v2700, %v2787
      %v2823 = vadd.f32 %v2701, %v2790
      %v2824 = vadd.f32 %v2702, %v2793
      %v2825 = vadd.f32 %v2703, %v2796
      %v2826 = vadd.f32 %v2704, %v2799
      %v2827 = vadd.f32 %v2705, %v2802
      %v2828 = vadd.f32 %v2706, %v2805
      %v2829 = vadd.f32 %v2707, %v2808
      %s2830 = scalar_lea.vmem %s1, 72
      %v2831 = vld [vmem:[%s2830] sm:$0xf]
      %v2832 = vrot.slane %v246, 7
      %v2833 = vsel %vm1595, %v1635, %v2832
      %v2834 = vrot.slane %v247, 7
      %v2835 = vsel %vm1595, %v2832, %v2834
      %v2836 = vrot.slane %v248, 7
      %v2837 = vsel %vm1595, %v2834, %v2836
      %v2838 = vrot.slane %v249, 7
      %v2839 = vsel %vm1595, %v2836, %v2838
      %v2840 = vrot.slane %v250, 7
      %v2841 = vsel %vm1595, %v2838, %v2840
      %v2842 = vsel %vm320, %v2833, 0
      %v2844 = vsel %vm320, %v2835, 0
      %v2846 = vsel %vm320, %v2837, 0
      %v2848 = vsel %vm320, %v2839, 0
      %v2850 = vsel %vm320, %v2841, 0
      %v2853 = vsel %vm361, %v2831, 0
      %2855 = vmatpush.msra.mxu0 0.0
      %2856 = vmatpush.msra.mxu0 0.0
      %2857 = vmatpush.msra.mxu0 0.0
      %2858 = vmatpush.msra.mxu0 0.0
      %2859 = vmatpush.msra.mxu0 0.0
      %2860 = vmatpush.msra.mxu0 0.0
      %2861 = vmatpush.msra.mxu0 0.0
      %2862 = vmatpush.msra.mxu0 0.0
      %2863 = vmatpush.msra.mxu0 0.0
      %2864 = vmatpush.msra.mxu0 0.0
      %2865 = vmatpush.msra.mxu0 0.0
      %2866 = vmatpush.msra.mxu0 0.0
      %2867 = vmatpush.msra.mxu0 0.0
      %2868 = vmatpush.msra.mxu0 0.0
      %2869 = vmatpush.msra.mxu0 0.0
      %2870 = vmatpush.msra.mxu0 %v2853
      %2871 = vmatmul.f32.gmra.mxu0 %v1647
      %v2872 = vpop.f32.mrf.mxu0
      %v2873 = vadd.f32 0.0, %v2872
      %2874 = vmatmul.f32.gmra.mxu0 %v1649
      %v2875 = vpop.f32.mrf.mxu0
      %v2876 = vadd.f32 0.0, %v2875
      %2877 = vmatmul.f32.gmra.mxu0 %v1651
      %v2878 = vpop.f32.mrf.mxu0
      %v2879 = vadd.f32 0.0, %v2878
      %2880 = vmatmul.f32.gmra.mxu0 %v1653
      %v2881 = vpop.f32.mrf.mxu0
      %v2882 = vadd.f32 0.0, %v2881
      %2883 = vmatmul.f32.gmra.mxu0 %v1655
      %v2884 = vpop.f32.mrf.mxu0
      %v2885 = vadd.f32 0.0, %v2884
      %2886 = vmatmul.f32.gmra.mxu0 %v1657
      %v2887 = vpop.f32.mrf.mxu0
      %v2888 = vadd.f32 0.0, %v2887
      %2889 = vmatmul.f32.gmra.mxu0 %v1659
      %v2890 = vpop.f32.mrf.mxu0
      %v2891 = vadd.f32 0.0, %v2890
      %2892 = vmatmul.f32.gmra.mxu0 %v1661
      %v2893 = vpop.f32.mrf.mxu0
      %v2894 = vadd.f32 0.0, %v2893
      %2895 = vmatmul.f32.gmra.mxu0 %v1663
      %v2896 = vpop.f32.mrf.mxu0
      %v2897 = vadd.f32 0.0, %v2896
      %2898 = vmatmul.f32.gmra.mxu0 %v1665
      %v2899 = vpop.f32.mrf.mxu0
      %v2900 = vadd.f32 0.0, %v2899
      %2901 = vmatmul.f32.gmra.mxu0 %v1667
      %v2902 = vpop.f32.mrf.mxu0
      %v2903 = vadd.f32 0.0, %v2902
      %2904 = vmatmul.f32.gmra.mxu0 %v1669
      %v2905 = vpop.f32.mrf.mxu0
      %v2906 = vadd.f32 0.0, %v2905
      %2907 = vmatmul.f32.gmra.mxu0 %v1671
      %v2908 = vpop.f32.mrf.mxu0
      %v2909 = vadd.f32 0.0, %v2908
      %2910 = vmatmul.f32.gmra.mxu0 %v1673
      %v2911 = vpop.f32.mrf.mxu0
      %v2912 = vadd.f32 0.0, %v2911
      %2913 = vmatmul.f32.gmra.mxu0 %v1675
      %v2914 = vpop.f32.mrf.mxu0
      %v2915 = vadd.f32 0.0, %v2914
      %2916 = vmatmul.f32.gmra.mxu0 %v2842
      %v2917 = vpop.f32.mrf.mxu0
      %v2918 = vadd.f32 0.0, %v2917
      %2919 = vmatmul.f32.gmra.mxu0 %v2844
      %v2920 = vpop.f32.mrf.mxu0
      %v2921 = vadd.f32 0.0, %v2920
      %2922 = vmatmul.f32.gmra.mxu0 %v2846
      %v2923 = vpop.f32.mrf.mxu0
      %v2924 = vadd.f32 0.0, %v2923
      %2925 = vmatmul.f32.gmra.mxu0 %v2848
      %v2926 = vpop.f32.mrf.mxu0
      %v2927 = vadd.f32 0.0, %v2926
      %2928 = vmatmul.f32.gmra.mxu0 %v2850
      %v2929 = vpop.f32.mrf.mxu0
      %v2930 = vadd.f32 0.0, %v2929
      %2931 = vdwg.mxu0
      %v2932 = vadd.f32 %v2810, %v2873
      %v2933 = vadd.f32 %v2811, %v2876
      %v2934 = vadd.f32 %v2812, %v2879
      %v2935 = vadd.f32 %v2813, %v2882
      %v2936 = vadd.f32 %v2814, %v2885
      %v2937 = vadd.f32 %v2815, %v2888
      %v2938 = vadd.f32 %v2816, %v2891
      %v2939 = vadd.f32 %v2817, %v2894
      %v2940 = vadd.f32 %v2818, %v2897
      %v2941 = vadd.f32 %v2819, %v2900
      %v2942 = vadd.f32 %v2820, %v2903
      %v2943 = vadd.f32 %v2821, %v2906
      %v2944 = vadd.f32 %v2822, %v2909
      %v2945 = vadd.f32 %v2823, %v2912
      %v2946 = vadd.f32 %v2824, %v2915
      %v2947 = vadd.f32 %v2825, %v2918
      %v2948 = vadd.f32 %v2826, %v2921
      %v2949 = vadd.f32 %v2827, %v2924
      %v2950 = vadd.f32 %v2828, %v2927
      %v2951 = vadd.f32 %v2829, %v2930
      %s2952 = scalar_lea.vmem %s1, 76
      %v2953 = vld [vmem:[%s2952] sm:$0xf]
      %v2954 = vsel %vm320, %v248, 0
      %v2956 = vsel %vm320, %v249, 0
      %v2958 = vsel %vm320, %v250, 0
      %v2961 = vsel %vm361, %v2953, 0
      %2963 = vmatpush.msra.mxu0 0.0
      %2964 = vmatpush.msra.mxu0 0.0
      %2965 = vmatpush.msra.mxu0 0.0
      %2966 = vmatpush.msra.mxu0 0.0
      %2967 = vmatpush.msra.mxu0 0.0
      %2968 = vmatpush.msra.mxu0 0.0
      %2969 = vmatpush.msra.mxu0 0.0
      %2970 = vmatpush.msra.mxu0 0.0
      %2971 = vmatpush.msra.mxu0 0.0
      %2972 = vmatpush.msra.mxu0 0.0
      %2973 = vmatpush.msra.mxu0 0.0
      %2974 = vmatpush.msra.mxu0 0.0
      %2975 = vmatpush.msra.mxu0 0.0
      %2976 = vmatpush.msra.mxu0 0.0
      %2977 = vmatpush.msra.mxu0 0.0
      %2978 = vmatpush.msra.mxu0 %v2961
      %2979 = vmatmul.f32.gmra.mxu0 %v458
      %v2980 = vpop.f32.mrf.mxu0
      %v2981 = vadd.f32 0.0, %v2980
      %2982 = vmatmul.f32.gmra.mxu0 %v460
      %v2983 = vpop.f32.mrf.mxu0
      %v2984 = vadd.f32 0.0, %v2983
      %2985 = vmatmul.f32.gmra.mxu0 %v462
      %v2986 = vpop.f32.mrf.mxu0
      %v2987 = vadd.f32 0.0, %v2986
      %2988 = vmatmul.f32.gmra.mxu0 %v464
      %v2989 = vpop.f32.mrf.mxu0
      %v2990 = vadd.f32 0.0, %v2989
      %2991 = vmatmul.f32.gmra.mxu0 %v466
      %v2992 = vpop.f32.mrf.mxu0
      %v2993 = vadd.f32 0.0, %v2992
      %2994 = vmatmul.f32.gmra.mxu0 %v468
      %v2995 = vpop.f32.mrf.mxu0
      %v2996 = vadd.f32 0.0, %v2995
      %2997 = vmatmul.f32.gmra.mxu0 %v470
      %v2998 = vpop.f32.mrf.mxu0
      %v2999 = vadd.f32 0.0, %v2998
      %3000 = vmatmul.f32.gmra.mxu0 %v472
      %v3001 = vpop.f32.mrf.mxu0
      %v3002 = vadd.f32 0.0, %v3001
      %3003 = vmatmul.f32.gmra.mxu0 %v474
      %v3004 = vpop.f32.mrf.mxu0
      %v3005 = vadd.f32 0.0, %v3004
      %3006 = vmatmul.f32.gmra.mxu0 %v476
      %v3007 = vpop.f32.mrf.mxu0
      %v3008 = vadd.f32 0.0, %v3007
      %3009 = vmatmul.f32.gmra.mxu0 %v478
      %v3010 = vpop.f32.mrf.mxu0
      %v3011 = vadd.f32 0.0, %v3010
      %3012 = vmatmul.f32.gmra.mxu0 %v480
      %v3013 = vpop.f32.mrf.mxu0
      %v3014 = vadd.f32 0.0, %v3013
      %3015 = vmatmul.f32.gmra.mxu0 %v1779
      %v3016 = vpop.f32.mrf.mxu0
      %v3017 = vadd.f32 0.0, %v3016
      %3018 = vmatmul.f32.gmra.mxu0 %v1781
      %v3019 = vpop.f32.mrf.mxu0
      %v3020 = vadd.f32 0.0, %v3019
      %3021 = vmatmul.f32.gmra.mxu0 %v1783
      %v3022 = vpop.f32.mrf.mxu0
      %v3023 = vadd.f32 0.0, %v3022
      %3024 = vmatmul.f32.gmra.mxu0 %v1888
      %v3025 = vpop.f32.mrf.mxu0
      %v3026 = vadd.f32 0.0, %v3025
      %3027 = vmatmul.f32.gmra.mxu0 %v1891
      %v3028 = vpop.f32.mrf.mxu0
      %v3029 = vadd.f32 0.0, %v3028
      %3030 = vmatmul.f32.gmra.mxu0 %v2954
      %v3031 = vpop.f32.mrf.mxu0
      %v3032 = vadd.f32 0.0, %v3031
      %3033 = vmatmul.f32.gmra.mxu0 %v2956
      %v3034 = vpop.f32.mrf.mxu0
      %v3035 = vadd.f32 0.0, %v3034
      %3036 = vmatmul.f32.gmra.mxu0 %v2958
      %v3037 = vpop.f32.mrf.mxu0
      %v3038 = vadd.f32 0.0, %v3037
      %3039 = vdwg.mxu0
      %v3040 = vadd.f32 %v2932, %v2981
      %v3041 = vadd.f32 %v2933, %v2984
      %v3042 = vadd.f32 %v2934, %v2987
      %v3043 = vadd.f32 %v2935, %v2990
      %v3044 = vadd.f32 %v2936, %v2993
      %v3045 = vadd.f32 %v2937, %v2996
      %v3046 = vadd.f32 %v2938, %v2999
      %v3047 = vadd.f32 %v2939, %v3002
      %v3048 = vadd.f32 %v2940, %v3005
      %v3049 = vadd.f32 %v2941, %v3008
      %v3050 = vadd.f32 %v2942, %v3011
      %v3051 = vadd.f32 %v2943, %v3014
      %v3052 = vadd.f32 %v2944, %v3017
      %v3053 = vadd.f32 %v2945, %v3020
      %v3054 = vadd.f32 %v2946, %v3023
      %v3055 = vadd.f32 %v2947, %v3026
      %v3056 = vadd.f32 %v2948, %v3029
      %v3057 = vadd.f32 %v2949, %v3032
      %v3058 = vadd.f32 %v2950, %v3035
      %v3059 = vadd.f32 %v2951, %v3038
      %s3060 = scalar_lea.vmem %s1, 80
      %v3061 = vld [vmem:[%s3060] sm:$0xf]
      %v3063 = vsel %vm320, %v251, 0
      %v3066 = vsel %vm320, %v252, 0
      %v3069 = vsel %vm361, %v3061, 0
      %3071 = vmatpush.msra.mxu0 0.0
      %3072 = vmatpush.msra.mxu0 0.0
      %3073 = vmatpush.msra.mxu0 0.0
      %3074 = vmatpush.msra.mxu0 0.0
      %3075 = vmatpush.msra.mxu0 0.0
      %3076 = vmatpush.msra.mxu0 0.0
      %3077 = vmatpush.msra.mxu0 0.0
      %3078 = vmatpush.msra.mxu0 0.0
      %3079 = vmatpush.msra.mxu0 0.0
      %3080 = vmatpush.msra.mxu0 0.0
      %3081 = vmatpush.msra.mxu0 0.0
      %3082 = vmatpush.msra.mxu0 0.0
      %3083 = vmatpush.msra.mxu0 0.0
      %3084 = vmatpush.msra.mxu0 0.0
      %3085 = vmatpush.msra.mxu0 0.0
      %3086 = vmatpush.msra.mxu0 %v3069
      %3087 = vmatmul.f32.gmra.mxu0 %v462
      %v3088 = vpop.f32.mrf.mxu0
      %v3089 = vadd.f32 0.0, %v3088
      %3090 = vmatmul.f32.gmra.mxu0 %v464
      %v3091 = vpop.f32.mrf.mxu0
      %v3092 = vadd.f32 0.0, %v3091
      %3093 = vmatmul.f32.gmra.mxu0 %v466
      %v3094 = vpop.f32.mrf.mxu0
      %v3095 = vadd.f32 0.0, %v3094
      %3096 = vmatmul.f32.gmra.mxu0 %v468
      %v3097 = vpop.f32.mrf.mxu0
      %v3098 = vadd.f32 0.0, %v3097
      %3099 = vmatmul.f32.gmra.mxu0 %v470
      %v3100 = vpop.f32.mrf.mxu0
      %v3101 = vadd.f32 0.0, %v3100
      %3102 = vmatmul.f32.gmra.mxu0 %v472
      %v3103 = vpop.f32.mrf.mxu0
      %v3104 = vadd.f32 0.0, %v3103
      %3105 = vmatmul.f32.gmra.mxu0 %v474
      %v3106 = vpop.f32.mrf.mxu0
      %v3107 = vadd.f32 0.0, %v3106
      %3108 = vmatmul.f32.gmra.mxu0 %v476
      %v3109 = vpop.f32.mrf.mxu0
      %v3110 = vadd.f32 0.0, %v3109
      %3111 = vmatmul.f32.gmra.mxu0 %v478
      %v3112 = vpop.f32.mrf.mxu0
      %v3113 = vadd.f32 0.0, %v3112
      %3114 = vmatmul.f32.gmra.mxu0 %v480
      %v3115 = vpop.f32.mrf.mxu0
      %v3116 = vadd.f32 0.0, %v3115
      %3117 = vmatmul.f32.gmra.mxu0 %v1779
      %v3118 = vpop.f32.mrf.mxu0
      %v3119 = vadd.f32 0.0, %v3118
      %3120 = vmatmul.f32.gmra.mxu0 %v1781
      %v3121 = vpop.f32.mrf.mxu0
      %v3122 = vadd.f32 0.0, %v3121
      %3123 = vmatmul.f32.gmra.mxu0 %v1783
      %v3124 = vpop.f32.mrf.mxu0
      %v3125 = vadd.f32 0.0, %v3124
      %3126 = vmatmul.f32.gmra.mxu0 %v1888
      %v3127 = vpop.f32.mrf.mxu0
      %v3128 = vadd.f32 0.0, %v3127
      %3129 = vmatmul.f32.gmra.mxu0 %v1891
      %v3130 = vpop.f32.mrf.mxu0
      %v3131 = vadd.f32 0.0, %v3130
      %3132 = vmatmul.f32.gmra.mxu0 %v2954
      %v3133 = vpop.f32.mrf.mxu0
      %v3134 = vadd.f32 0.0, %v3133
      %3135 = vmatmul.f32.gmra.mxu0 %v2956
      %v3136 = vpop.f32.mrf.mxu0
      %v3137 = vadd.f32 0.0, %v3136
      %3138 = vmatmul.f32.gmra.mxu0 %v2958
      %v3139 = vpop.f32.mrf.mxu0
      %v3140 = vadd.f32 0.0, %v3139
      %3141 = vmatmul.f32.gmra.mxu0 %v3063
      %v3142 = vpop.f32.mrf.mxu0
      %v3143 = vadd.f32 0.0, %v3142
      %3144 = vmatmul.f32.gmra.mxu0 %v3066
      %v3145 = vpop.f32.mrf.mxu0
      %v3146 = vadd.f32 0.0, %v3145
      %3147 = vdwg.mxu0
      %v3148 = vadd.f32 %v3040, %v3089
      %v3149 = vadd.f32 %v3041, %v3092
      %v3150 = vadd.f32 %v3042, %v3095
      %v3151 = vadd.f32 %v3043, %v3098
      %v3152 = vadd.f32 %v3044, %v3101
      %v3153 = vadd.f32 %v3045, %v3104
      %v3154 = vadd.f32 %v3046, %v3107
      %v3155 = vadd.f32 %v3047, %v3110
      %v3156 = vadd.f32 %v3048, %v3113
      %v3157 = vadd.f32 %v3049, %v3116
      %v3158 = vadd.f32 %v3050, %v3119
      %v3159 = vadd.f32 %v3051, %v3122
      %v3160 = vadd.f32 %v3052, %v3125
      %v3161 = vadd.f32 %v3053, %v3128
      %v3162 = vadd.f32 %v3054, %v3131
      %v3163 = vadd.f32 %v3055, %v3134
      %v3164 = vadd.f32 %v3056, %v3137
      %v3165 = vadd.f32 %v3057, %v3140
      %v3166 = vadd.f32 %v3058, %v3143
      %v3167 = vadd.f32 %v3059, %v3146
      %s3168 = scalar_lea.vmem %s1, 84
      %v3169 = vld [vmem:[%s3168] sm:$0xf]
      %v3171 = vrot.slane %v249, 1
      %v3172 = vsel %vm278, %v2004, %v3171
      %v3173 = vrot.slane %v250, 1
      %v3174 = vsel %vm278, %v3171, %v3173
      %v3175 = vrot.slane %v251, 1
      %v3176 = vsel %vm278, %v3173, %v3175
      %v3177 = vrot.slane %v252, 1
      %v3178 = vsel %vm278, %v3175, %v3177
      %v3179 = vrot.slane %v253, 1
      %v3180 = vsel %vm278, %v3177, %v3179
      %v3181 = vsel %vm320, %v3172, 0
      %v3183 = vsel %vm320, %v3174, 0
      %v3185 = vsel %vm320, %v3176, 0
      %v3187 = vsel %vm320, %v3178, 0
      %v3189 = vsel %vm320, %v3180, 0
      %v3192 = vsel %vm361, %v3169, 0
      %3194 = vmatpush.msra.mxu0 0.0
      %3195 = vmatpush.msra.mxu0 0.0
      %3196 = vmatpush.msra.mxu0 0.0
      %3197 = vmatpush.msra.mxu0 0.0
      %3198 = vmatpush.msra.mxu0 0.0
      %3199 = vmatpush.msra.mxu0 0.0
      %3200 = vmatpush.msra.mxu0 0.0
      %3201 = vmatpush.msra.mxu0 0.0
      %3202 = vmatpush.msra.mxu0 0.0
      %3203 = vmatpush.msra.mxu0 0.0
      %3204 = vmatpush.msra.mxu0 0.0
      %3205 = vmatpush.msra.mxu0 0.0
      %3206 = vmatpush.msra.mxu0 0.0
      %3207 = vmatpush.msra.mxu0 0.0
      %3208 = vmatpush.msra.mxu0 0.0
      %3209 = vmatpush.msra.mxu0 %v3192
      %3210 = vmatmul.f32.gmra.mxu0 %v341
      %v3211 = vpop.f32.mrf.mxu0
      %v3212 = vadd.f32 0.0, %v3211
      %3213 = vmatmul.f32.gmra.mxu0 %v343
      %v3214 = vpop.f32.mrf.mxu0
      %v3215 = vadd.f32 0.0, %v3214
      %3216 = vmatmul.f32.gmra.mxu0 %v345
      %v3217 = vpop.f32.mrf.mxu0
      %v3218 = vadd.f32 0.0, %v3217
      %3219 = vmatmul.f32.gmra.mxu0 %v347
      %v3220 = vpop.f32.mrf.mxu0
      %v3221 = vadd.f32 0.0, %v3220
      %3222 = vmatmul.f32.gmra.mxu0 %v349
      %v3223 = vpop.f32.mrf.mxu0
      %v3224 = vadd.f32 0.0, %v3223
      %3225 = vmatmul.f32.gmra.mxu0 %v351
      %v3226 = vpop.f32.mrf.mxu0
      %v3227 = vadd.f32 0.0, %v3226
      %3228 = vmatmul.f32.gmra.mxu0 %v353
      %v3229 = vpop.f32.mrf.mxu0
      %v3230 = vadd.f32 0.0, %v3229
      %3231 = vmatmul.f32.gmra.mxu0 %v355
      %v3232 = vpop.f32.mrf.mxu0
      %v3233 = vadd.f32 0.0, %v3232
      %3234 = vmatmul.f32.gmra.mxu0 %v357
      %v3235 = vpop.f32.mrf.mxu0
      %v3236 = vadd.f32 0.0, %v3235
      %3237 = vmatmul.f32.gmra.mxu0 %v359
      %v3238 = vpop.f32.mrf.mxu0
      %v3239 = vadd.f32 0.0, %v3238
      %3240 = vmatmul.f32.gmra.mxu0 %v2006
      %v3241 = vpop.f32.mrf.mxu0
      %v3242 = vadd.f32 0.0, %v3241
      %3243 = vmatmul.f32.gmra.mxu0 %v2008
      %v3244 = vpop.f32.mrf.mxu0
      %v3245 = vadd.f32 0.0, %v3244
      %3246 = vmatmul.f32.gmra.mxu0 %v2010
      %v3247 = vpop.f32.mrf.mxu0
      %v3248 = vadd.f32 0.0, %v3247
      %3249 = vmatmul.f32.gmra.mxu0 %v2012
      %v3250 = vpop.f32.mrf.mxu0
      %v3251 = vadd.f32 0.0, %v3250
      %3252 = vmatmul.f32.gmra.mxu0 %v2014
      %v3253 = vpop.f32.mrf.mxu0
      %v3254 = vadd.f32 0.0, %v3253
      %3255 = vmatmul.f32.gmra.mxu0 %v3181
      %v3256 = vpop.f32.mrf.mxu0
      %v3257 = vadd.f32 0.0, %v3256
      %3258 = vmatmul.f32.gmra.mxu0 %v3183
      %v3259 = vpop.f32.mrf.mxu0
      %v3260 = vadd.f32 0.0, %v3259
      %3261 = vmatmul.f32.gmra.mxu0 %v3185
      %v3262 = vpop.f32.mrf.mxu0
      %v3263 = vadd.f32 0.0, %v3262
      %3264 = vmatmul.f32.gmra.mxu0 %v3187
      %v3265 = vpop.f32.mrf.mxu0
      %v3266 = vadd.f32 0.0, %v3265
      %3267 = vmatmul.f32.gmra.mxu0 %v3189
      %v3268 = vpop.f32.mrf.mxu0
      %v3269 = vadd.f32 0.0, %v3268
      %3270 = vdwg.mxu0
      %v3271 = vadd.f32 %v3148, %v3212
      %v3272 = vadd.f32 %v3149, %v3215
      %v3273 = vadd.f32 %v3150, %v3218
      %v3274 = vadd.f32 %v3151, %v3221
      %v3275 = vadd.f32 %v3152, %v3224
      %v3276 = vadd.f32 %v3153, %v3227
      %v3277 = vadd.f32 %v3154, %v3230
      %v3278 = vadd.f32 %v3155, %v3233
      %v3279 = vadd.f32 %v3156, %v3236
      %v3280 = vadd.f32 %v3157, %v3239
      %v3281 = vadd.f32 %v3158, %v3242
      %v3282 = vadd.f32 %v3159, %v3245
      %v3283 = vadd.f32 %v3160, %v3248
      %v3284 = vadd.f32 %v3161, %v3251
      %v3285 = vadd.f32 %v3162, %v3254
      %v3286 = vadd.f32 %v3163, %v3257
      %v3287 = vadd.f32 %v3164, %v3260
      %v3288 = vadd.f32 %v3165, %v3263
      %v3289 = vadd.f32 %v3166, %v3266
      %v3290 = vadd.f32 %v3167, %v3269
      %s3291 = scalar_lea.vmem %s1, 88
      %v3292 = vld [vmem:[%s3291] sm:$0xf]
      %v3293 = vrot.slane %v249, 2
      %v3294 = vsel %vm564, %v2126, %v3293
      %v3295 = vrot.slane %v250, 2
      %v3296 = vsel %vm564, %v3293, %v3295
      %v3297 = vrot.slane %v251, 2
      %v3298 = vsel %vm564, %v3295, %v3297
      %v3299 = vrot.slane %v252, 2
      %v3300 = vsel %vm564, %v3297, %v3299
      %v3301 = vrot.slane %v253, 2
      %v3302 = vsel %vm564, %v3299, %v3301
      %v3303 = vsel %vm320, %v3294, 0
      %v3305 = vsel %vm320, %v3296, 0
      %v3307 = vsel %vm320, %v3298, 0
      %v3309 = vsel %vm320, %v3300, 0
      %v3311 = vsel %vm320, %v3302, 0
      %v3314 = vsel %vm361, %v3292, 0
      %3316 = vmatpush.msra.mxu0 0.0
      %3317 = vmatpush.msra.mxu0 0.0
      %3318 = vmatpush.msra.mxu0 0.0
      %3319 = vmatpush.msra.mxu0 0.0
      %3320 = vmatpush.msra.mxu0 0.0
      %3321 = vmatpush.msra.mxu0 0.0
      %3322 = vmatpush.msra.mxu0 0.0
      %3323 = vmatpush.msra.mxu0 0.0
      %3324 = vmatpush.msra.mxu0 0.0
      %3325 = vmatpush.msra.mxu0 0.0
      %3326 = vmatpush.msra.mxu0 0.0
      %3327 = vmatpush.msra.mxu0 0.0
      %3328 = vmatpush.msra.mxu0 0.0
      %3329 = vmatpush.msra.mxu0 0.0
      %3330 = vmatpush.msra.mxu0 0.0
      %3331 = vmatpush.msra.mxu0 %v3314
      %3332 = vmatmul.f32.gmra.mxu0 %v626
      %v3333 = vpop.f32.mrf.mxu0
      %v3334 = vadd.f32 0.0, %v3333
      %3335 = vmatmul.f32.gmra.mxu0 %v628
      %v3336 = vpop.f32.mrf.mxu0
      %v3337 = vadd.f32 0.0, %v3336
      %3338 = vmatmul.f32.gmra.mxu0 %v630
      %v3339 = vpop.f32.mrf.mxu0
      %v3340 = vadd.f32 0.0, %v3339
      %3341 = vmatmul.f32.gmra.mxu0 %v632
      %v3342 = vpop.f32.mrf.mxu0
      %v3343 = vadd.f32 0.0, %v3342
      %3344 = vmatmul.f32.gmra.mxu0 %v634
      %v3345 = vpop.f32.mrf.mxu0
      %v3346 = vadd.f32 0.0, %v3345
      %3347 = vmatmul.f32.gmra.mxu0 %v636
      %v3348 = vpop.f32.mrf.mxu0
      %v3349 = vadd.f32 0.0, %v3348
      %3350 = vmatmul.f32.gmra.mxu0 %v638
      %v3351 = vpop.f32.mrf.mxu0
      %v3352 = vadd.f32 0.0, %v3351
      %3353 = vmatmul.f32.gmra.mxu0 %v640
      %v3354 = vpop.f32.mrf.mxu0
      %v3355 = vadd.f32 0.0, %v3354
      %3356 = vmatmul.f32.gmra.mxu0 %v642
      %v3357 = vpop.f32.mrf.mxu0
      %v3358 = vadd.f32 0.0, %v3357
      %3359 = vmatmul.f32.gmra.mxu0 %v644
      %v3360 = vpop.f32.mrf.mxu0
      %v3361 = vadd.f32 0.0, %v3360
      %3362 = vmatmul.f32.gmra.mxu0 %v2128
      %v3363 = vpop.f32.mrf.mxu0
      %v3364 = vadd.f32 0.0, %v3363
      %3365 = vmatmul.f32.gmra.mxu0 %v2130
      %v3366 = vpop.f32.mrf.mxu0
      %v3367 = vadd.f32 0.0, %v3366
      %3368 = vmatmul.f32.gmra.mxu0 %v2132
      %v3369 = vpop.f32.mrf.mxu0
      %v3370 = vadd.f32 0.0, %v3369
      %3371 = vmatmul.f32.gmra.mxu0 %v2134
      %v3372 = vpop.f32.mrf.mxu0
      %v3373 = vadd.f32 0.0, %v3372
      %3374 = vmatmul.f32.gmra.mxu0 %v2136
      %v3375 = vpop.f32.mrf.mxu0
      %v3376 = vadd.f32 0.0, %v3375
      %3377 = vmatmul.f32.gmra.mxu0 %v3303
      %v3378 = vpop.f32.mrf.mxu0
      %v3379 = vadd.f32 0.0, %v3378
      %3380 = vmatmul.f32.gmra.mxu0 %v3305
      %v3381 = vpop.f32.mrf.mxu0
      %v3382 = vadd.f32 0.0, %v3381
      %3383 = vmatmul.f32.gmra.mxu0 %v3307
      %v3384 = vpop.f32.mrf.mxu0
      %v3385 = vadd.f32 0.0, %v3384
      %3386 = vmatmul.f32.gmra.mxu0 %v3309
      %v3387 = vpop.f32.mrf.mxu0
      %v3388 = vadd.f32 0.0, %v3387
      %3389 = vmatmul.f32.gmra.mxu0 %v3311
      %v3390 = vpop.f32.mrf.mxu0
      %v3391 = vadd.f32 0.0, %v3390
      %3392 = vdwg.mxu0
      %v3393 = vadd.f32 %v3271, %v3334
      %v3394 = vadd.f32 %v3272, %v3337
      %v3395 = vadd.f32 %v3273, %v3340
      %v3396 = vadd.f32 %v3274, %v3343
      %v3397 = vadd.f32 %v3275, %v3346
      %v3398 = vadd.f32 %v3276, %v3349
      %v3399 = vadd.f32 %v3277, %v3352
      %v3400 = vadd.f32 %v3278, %v3355
      %v3401 = vadd.f32 %v3279, %v3358
      %v3402 = vadd.f32 %v3280, %v3361
      %v3403 = vadd.f32 %v3281, %v3364
      %v3404 = vadd.f32 %v3282, %v3367
      %v3405 = vadd.f32 %v3283, %v3370
      %v3406 = vadd.f32 %v3284, %v3373
      %v3407 = vadd.f32 %v3285, %v3376
      %v3408 = vadd.f32 %v3286, %v3379
      %v3409 = vadd.f32 %v3287, %v3382
      %v3410 = vadd.f32 %v3288, %v3385
      %v3411 = vadd.f32 %v3289, %v3388
      %v3412 = vadd.f32 %v3290, %v3391
      %s3413 = scalar_lea.vmem %s1, 92
      %v3414 = vld [vmem:[%s3413] sm:$0xf]
      %v3415 = vrot.slane %v249, 3
      %v3416 = vsel %vm748, %v2248, %v3415
      %v3417 = vrot.slane %v250, 3
      %v3418 = vsel %vm748, %v3415, %v3417
      %v3419 = vrot.slane %v251, 3
      %v3420 = vsel %vm748, %v3417, %v3419
      %v3421 = vrot.slane %v252, 3
      %v3422 = vsel %vm748, %v3419, %v3421
      %v3423 = vrot.slane %v253, 3
      %v3424 = vsel %vm748, %v3421, %v3423
      %v3425 = vsel %vm320, %v3416, 0
      %v3427 = vsel %vm320, %v3418, 0
      %v3429 = vsel %vm320, %v3420, 0
      %v3431 = vsel %vm320, %v3422, 0
      %v3433 = vsel %vm320, %v3424, 0
      %v3436 = vsel %vm361, %v3414, 0
      %3438 = vmatpush.msra.mxu0 0.0
      %3439 = vmatpush.msra.mxu0 0.0
      %3440 = vmatpush.msra.mxu0 0.0
      %3441 = vmatpush.msra.mxu0 0.0
      %3442 = vmatpush.msra.mxu0 0.0
      %3443 = vmatpush.msra.mxu0 0.0
      %3444 = vmatpush.msra.mxu0 0.0
      %3445 = vmatpush.msra.mxu0 0.0
      %3446 = vmatpush.msra.mxu0 0.0
      %3447 = vmatpush.msra.mxu0 0.0
      %3448 = vmatpush.msra.mxu0 0.0
      %3449 = vmatpush.msra.mxu0 0.0
      %3450 = vmatpush.msra.mxu0 0.0
      %3451 = vmatpush.msra.mxu0 0.0
      %3452 = vmatpush.msra.mxu0 0.0
      %3453 = vmatpush.msra.mxu0 %v3436
      %3454 = vmatmul.f32.gmra.mxu0 %v810
      %v3455 = vpop.f32.mrf.mxu0
      %v3456 = vadd.f32 0.0, %v3455
      %3457 = vmatmul.f32.gmra.mxu0 %v812
      %v3458 = vpop.f32.mrf.mxu0
      %v3459 = vadd.f32 0.0, %v3458
      %3460 = vmatmul.f32.gmra.mxu0 %v814
      %v3461 = vpop.f32.mrf.mxu0
      %v3462 = vadd.f32 0.0, %v3461
      %3463 = vmatmul.f32.gmra.mxu0 %v816
      %v3464 = vpop.f32.mrf.mxu0
      %v3465 = vadd.f32 0.0, %v3464
      %3466 = vmatmul.f32.gmra.mxu0 %v818
      %v3467 = vpop.f32.mrf.mxu0
      %v3468 = vadd.f32 0.0, %v3467
      %3469 = vmatmul.f32.gmra.mxu0 %v820
      %v3470 = vpop.f32.mrf.mxu0
      %v3471 = vadd.f32 0.0, %v3470
      %3472 = vmatmul.f32.gmra.mxu0 %v822
      %v3473 = vpop.f32.mrf.mxu0
      %v3474 = vadd.f32 0.0, %v3473
      %3475 = vmatmul.f32.gmra.mxu0 %v824
      %v3476 = vpop.f32.mrf.mxu0
      %v3477 = vadd.f32 0.0, %v3476
      %3478 = vmatmul.f32.gmra.mxu0 %v826
      %v3479 = vpop.f32.mrf.mxu0
      %v3480 = vadd.f32 0.0, %v3479
      %3481 = vmatmul.f32.gmra.mxu0 %v828
      %v3482 = vpop.f32.mrf.mxu0
      %v3483 = vadd.f32 0.0, %v3482
      %3484 = vmatmul.f32.gmra.mxu0 %v2250
      %v3485 = vpop.f32.mrf.mxu0
      %v3486 = vadd.f32 0.0, %v3485
      %3487 = vmatmul.f32.gmra.mxu0 %v2252
      %v3488 = vpop.f32.mrf.mxu0
      %v3489 = vadd.f32 0.0, %v3488
      %3490 = vmatmul.f32.gmra.mxu0 %v2254
      %v3491 = vpop.f32.mrf.mxu0
      %v3492 = vadd.f32 0.0, %v3491
      %3493 = vmatmul.f32.gmra.mxu0 %v2256
      %v3494 = vpop.f32.mrf.mxu0
      %v3495 = vadd.f32 0.0, %v3494
      %3496 = vmatmul.f32.gmra.mxu0 %v2258
      %v3497 = vpop.f32.mrf.mxu0
      %v3498 = vadd.f32 0.0, %v3497
      %3499 = vmatmul.f32.gmra.mxu0 %v3425
      %v3500 = vpop.f32.mrf.mxu0
      %v3501 = vadd.f32 0.0, %v3500
      %3502 = vmatmul.f32.gmra.mxu0 %v3427
      %v3503 = vpop.f32.mrf.mxu0
      %v3504 = vadd.f32 0.0, %v3503
      %3505 = vmatmul.f32.gmra.mxu0 %v3429
      %v3506 = vpop.f32.mrf.mxu0
      %v3507 = vadd.f32 0.0, %v3506
      %3508 = vmatmul.f32.gmra.mxu0 %v3431
      %v3509 = vpop.f32.mrf.mxu0
      %v3510 = vadd.f32 0.0, %v3509
      %3511 = vmatmul.f32.gmra.mxu0 %v3433
      %v3512 = vpop.f32.mrf.mxu0
      %v3513 = vadd.f32 0.0, %v3512
      %3514 = vdwg.mxu0
      %v3515 = vadd.f32 %v3393, %v3456
      %v3516 = vadd.f32 %v3394, %v3459
      %v3517 = vadd.f32 %v3395, %v3462
      %v3518 = vadd.f32 %v3396, %v3465
      %v3519 = vadd.f32 %v3397, %v3468
      %v3520 = vadd.f32 %v3398, %v3471
      %v3521 = vadd.f32 %v3399, %v3474
      %v3522 = vadd.f32 %v3400, %v3477
      %v3523 = vadd.f32 %v3401, %v3480
      %v3524 = vadd.f32 %v3402, %v3483
      %v3525 = vadd.f32 %v3403, %v3486
      %v3526 = vadd.f32 %v3404, %v3489
      %v3527 = vadd.f32 %v3405, %v3492
      %v3528 = vadd.f32 %v3406, %v3495
      %v3529 = vadd.f32 %v3407, %v3498
      %v3530 = vadd.f32 %v3408, %v3501
      %v3531 = vadd.f32 %v3409, %v3504
      %v3532 = vadd.f32 %v3410, %v3507
      %v3533 = vadd.f32 %v3411, %v3510
      %v3534 = vadd.f32 %v3412, %v3513
      %s3535 = scalar_lea.vmem %s1, 96
      %v3536 = vld [vmem:[%s3535] sm:$0xf]
      %v3537 = vrot.slane %v251, 4
      %v3538 = vsel %vm361, %v2480, %v3537
      %v3539 = vrot.slane %v252, 4
      %v3540 = vsel %vm361, %v3537, %v3539
      %v3541 = vrot.slane %v253, 4
      %v3542 = vsel %vm361, %v3539, %v3541
      %v3543 = vsel %vm320, %v3538, 0
      %v3545 = vsel %vm320, %v3540, 0
      %v3547 = vsel %vm320, %v3542, 0
      %v3550 = vsel %vm361, %v3536, 0
      %3552 = vmatpush.msra.mxu0 0.0
      %3553 = vmatpush.msra.mxu0 0.0
      %3554 = vmatpush.msra.mxu0 0.0
      %3555 = vmatpush.msra.mxu0 0.0
      %3556 = vmatpush.msra.mxu0 0.0
      %3557 = vmatpush.msra.mxu0 0.0
      %3558 = vmatpush.msra.mxu0 0.0
      %3559 = vmatpush.msra.mxu0 0.0
      %3560 = vmatpush.msra.mxu0 0.0
      %3561 = vmatpush.msra.mxu0 0.0
      %3562 = vmatpush.msra.mxu0 0.0
      %3563 = vmatpush.msra.mxu0 0.0
      %3564 = vmatpush.msra.mxu0 0.0
      %3565 = vmatpush.msra.mxu0 0.0
      %3566 = vmatpush.msra.mxu0 0.0
      %3567 = vmatpush.msra.mxu0 %v3550
      %3568 = vmatmul.f32.gmra.mxu0 %v993
      %v3569 = vpop.f32.mrf.mxu0
      %v3570 = vadd.f32 0.0, %v3569
      %3571 = vmatmul.f32.gmra.mxu0 %v995
      %v3572 = vpop.f32.mrf.mxu0
      %v3573 = vadd.f32 0.0, %v3572
      %3574 = vmatmul.f32.gmra.mxu0 %v997
      %v3575 = vpop.f32.mrf.mxu0
      %v3576 = vadd.f32 0.0, %v3575
      %3577 = vmatmul.f32.gmra.mxu0 %v999
      %v3578 = vpop.f32.mrf.mxu0
      %v3579 = vadd.f32 0.0, %v3578
      %3580 = vmatmul.f32.gmra.mxu0 %v1001
      %v3581 = vpop.f32.mrf.mxu0
      %v3582 = vadd.f32 0.0, %v3581
      %3583 = vmatmul.f32.gmra.mxu0 %v1003
      %v3584 = vpop.f32.mrf.mxu0
      %v3585 = vadd.f32 0.0, %v3584
      %3586 = vmatmul.f32.gmra.mxu0 %v1005
      %v3587 = vpop.f32.mrf.mxu0
      %v3588 = vadd.f32 0.0, %v3587
      %3589 = vmatmul.f32.gmra.mxu0 %v1007
      %v3590 = vpop.f32.mrf.mxu0
      %v3591 = vadd.f32 0.0, %v3590
      %3592 = vmatmul.f32.gmra.mxu0 %v1009
      %v3593 = vpop.f32.mrf.mxu0
      %v3594 = vadd.f32 0.0, %v3593
      %3595 = vmatmul.f32.gmra.mxu0 %v1011
      %v3596 = vpop.f32.mrf.mxu0
      %v3597 = vadd.f32 0.0, %v3596
      %3598 = vmatmul.f32.gmra.mxu0 %v1121
      %v3599 = vpop.f32.mrf.mxu0
      %v3600 = vadd.f32 0.0, %v3599
      %3601 = vmatmul.f32.gmra.mxu0 %v1123
      %v3602 = vpop.f32.mrf.mxu0
      %v3603 = vadd.f32 0.0, %v3602
      %3604 = vmatmul.f32.gmra.mxu0 %v2368
      %v3605 = vpop.f32.mrf.mxu0
      %v3606 = vadd.f32 0.0, %v3605
      %3607 = vmatmul.f32.gmra.mxu0 %v2370
      %v3608 = vpop.f32.mrf.mxu0
      %v3609 = vadd.f32 0.0, %v3608
      %3610 = vmatmul.f32.gmra.mxu0 %v2372
      %v3611 = vpop.f32.mrf.mxu0
      %v3612 = vadd.f32 0.0, %v3611
      %3613 = vmatmul.f32.gmra.mxu0 %v2482
      %v3614 = vpop.f32.mrf.mxu0
      %v3615 = vadd.f32 0.0, %v3614
      %3616 = vmatmul.f32.gmra.mxu0 %v2484
      %v3617 = vpop.f32.mrf.mxu0
      %v3618 = vadd.f32 0.0, %v3617
      %3619 = vmatmul.f32.gmra.mxu0 %v3543
      %v3620 = vpop.f32.mrf.mxu0
      %v3621 = vadd.f32 0.0, %v3620
      %3622 = vmatmul.f32.gmra.mxu0 %v3545
      %v3623 = vpop.f32.mrf.mxu0
      %v3624 = vadd.f32 0.0, %v3623
      %3625 = vmatmul.f32.gmra.mxu0 %v3547
      %v3626 = vpop.f32.mrf.mxu0
      %v3627 = vadd.f32 0.0, %v3626
      %3628 = vdwg.mxu0
      %v3629 = vadd.f32 %v3515, %v3570
      %v3630 = vadd.f32 %v3516, %v3573
      %v3631 = vadd.f32 %v3517, %v3576
      %v3632 = vadd.f32 %v3518, %v3579
      %v3633 = vadd.f32 %v3519, %v3582
      %v3634 = vadd.f32 %v3520, %v3585
      %v3635 = vadd.f32 %v3521, %v3588
      %v3636 = vadd.f32 %v3522, %v3591
      %v3637 = vadd.f32 %v3523, %v3594
      %v3638 = vadd.f32 %v3524, %v3597
      %v3639 = vadd.f32 %v3525, %v3600
      %v3640 = vadd.f32 %v3526, %v3603
      %v3641 = vadd.f32 %v3527, %v3606
      %v3642 = vadd.f32 %v3528, %v3609
      %v3643 = vadd.f32 %v3529, %v3612
      %v3644 = vadd.f32 %v3530, %v3615
      %v3645 = vadd.f32 %v3531, %v3618
      %v3646 = vadd.f32 %v3532, %v3621
      %v3647 = vadd.f32 %v3533, %v3624
      %v3648 = vadd.f32 %v3534, %v3627
      %v3649 = vld [vmem:[%s2] sm:$0x1]
      %v3651 = vperm.slane %v3649, 0
      %v3653 = vmul.f32 %v3629, %v3651
      %v3654 = vmul.f32 %v3630, %v3651
      %v3655 = vmul.f32 %v3631, %v3651
      %v3656 = vmul.f32 %v3632, %v3651
      %v3657 = vmul.f32 %v3633, %v3651
      %v3658 = vmul.f32 %v3634, %v3651
      %v3659 = vmul.f32 %v3635, %v3651
      %v3660 = vmul.f32 %v3636, %v3651
      %v3661 = vmul.f32 %v3637, %v3651
      %v3662 = vmul.f32 %v3638, %v3651
      %v3663 = vmul.f32 %v3639, %v3651
      %v3664 = vmul.f32 %v3640, %v3651
      %v3665 = vmul.f32 %v3641, %v3651
      %v3666 = vmul.f32 %v3642, %v3651
      %v3667 = vmul.f32 %v3643, %v3651
      %v3668 = vmul.f32 %v3644, %v3651
      %v3669 = vmul.f32 %v3645, %v3651
      %v3670 = vmul.f32 %v3646, %v3651
      %v3671 = vmul.f32 %v3647, %v3651
      %v3672 = vmul.f32 %v3648, %v3651
      %v3673 = vld [vmem:[%s3] sm:$0x1]
      %v3675 = vperm.slane %v3673, 0
      %v3677 = vadd.f32 %v3653, %v3675
      %v3678 = vadd.f32 %v3654, %v3675
      %v3679 = vadd.f32 %v3655, %v3675
      %v3680 = vadd.f32 %v3656, %v3675
      %v3681 = vadd.f32 %v3657, %v3675
      %v3682 = vadd.f32 %v3658, %v3675
      %v3683 = vadd.f32 %v3659, %v3675
      %v3684 = vadd.f32 %v3660, %v3675
      %v3685 = vadd.f32 %v3661, %v3675
      %v3686 = vadd.f32 %v3662, %v3675
      %v3687 = vadd.f32 %v3663, %v3675
      %v3688 = vadd.f32 %v3664, %v3675
      %v3689 = vadd.f32 %v3665, %v3675
      %v3690 = vadd.f32 %v3666, %v3675
      %v3691 = vadd.f32 %v3667, %v3675
      %v3692 = vadd.f32 %v3668, %v3675
      %v3693 = vadd.f32 %v3669, %v3675
      %v3694 = vadd.f32 %v3670, %v3675
      %v3695 = vadd.f32 %v3671, %v3675
      %v3696 = vadd.f32 %v3672, %v3675
      %v3697 = vmax.f32 %v3677, 0.0
      %v3698 = vmax.f32 %v3678, 0.0
      %v3699 = vmax.f32 %v3679, 0.0
      %v3700 = vmax.f32 %v3680, 0.0
      %v3701 = vmax.f32 %v3681, 0.0
      %v3702 = vmax.f32 %v3682, 0.0
      %v3703 = vmax.f32 %v3683, 0.0
      %v3704 = vmax.f32 %v3684, 0.0
      %v3705 = vmax.f32 %v3685, 0.0
      %v3706 = vmax.f32 %v3686, 0.0
      %v3707 = vmax.f32 %v3687, 0.0
      %v3708 = vmax.f32 %v3688, 0.0
      %v3709 = vmax.f32 %v3689, 0.0
      %v3710 = vmax.f32 %v3690, 0.0
      %v3711 = vmax.f32 %v3691, 0.0
      %v3712 = vmax.f32 %v3692, 0.0
      %v3713 = vmax.f32 %v3693, 0.0
      %v3714 = vmax.f32 %v3694, 0.0
      %v3715 = vmax.f32 %v3695, 0.0
      %v3716 = vmax.f32 %v3696, 0.0
      %3717 = vst [vmem:[%s219] sm:$0xff] %v3697
      %3718 = vst [vmem:[%s219 + $0x8] sm:$0xff] %v3698
      %3719 = vst [vmem:[%s219 + $0x10] sm:$0xff] %v3699
      %3720 = vst [vmem:[%s219 + $0x18] sm:$0xff] %v3700
      %3721 = vst [vmem:[%s219 + $0x20] sm:$0xff] %v3701
      %3722 = vst [vmem:[%s219 + $0x28] sm:$0xff] %v3702
      %3723 = vst [vmem:[%s219 + $0x30] sm:$0xff] %v3703
      %3724 = vst [vmem:[%s219 + $0x38] sm:$0xff] %v3704
      %3725 = vst [vmem:[%s219 + $0x40] sm:$0xff] %v3705
      %3726 = vst [vmem:[%s219 + $0x48] sm:$0xff] %v3706
      %3727 = vst [vmem:[%s219 + $0x50] sm:$0xff] %v3707
      %3728 = vst [vmem:[%s219 + $0x58] sm:$0xff] %v3708
      %3729 = vst [vmem:[%s219 + $0x60] sm:$0xff] %v3709
      %3730 = vst [vmem:[%s219 + $0x68] sm:$0xff] %v3710
      %3731 = vst [vmem:[%s219 + $0x70] sm:$0xff] %v3711
      %3732 = vst [vmem:[%s219 + $0x78] sm:$0xff] %v3712
      %3733 = vst [vmem:[%s219 + $0x80] sm:$0xff] %v3713
      %3734 = vst [vmem:[%s219 + $0x88] sm:$0xff] %v3714
      %3735 = vst [vmem:[%s219 + $0x90] sm:$0xff] %v3715
      %3736 = vst [vmem:[%s219 + $0x98] sm:$0xff] %v3716
      %s3737 = smul.u32 20, %s20
      %p3738 = scmp.lt.s32.totalorder %s19, 1
      %s3739 = scalar_select %p3738, %s19, 1
      %p3740 = scmp.lt.s32.totalorder %s3737, 39
      %s3741 = scalar_select %p3740, %s3737, 39
      %s3742 = smul.addr %s3739, 40
      %s3743 = sadd.s32 %s3741, %s3742
      %s3744 = smul.addr %s3743, 8
      %s3745 = scalar_lea.vmem %s4, %s3744
      // Predicated region
      $region37: #{_lambda_.5} parent=35 // pred_check
        %p3746 = pneg %p136
      $region38: #{_lambda_.5} parent=35 // pred_check_branch
        %3748 = sbr.rel (%p3746) target = $region40
      $region39: #{_lambda_.5} parent=35 // pred_region
        %s3749 = smul.u32 20, %s20
      $region40: #{_lambda_.5} parent=35 // pred_fallthru
        _
    $region36: #{_lambda_.5} parent=5 // pred_fallthru
      _
    %p3750 = scmp.le.s32.totalorder 2, %s10
    // Predicated region
    $region41: #{_lambda_.5} parent=5 // pred_check
      %p3751 = pneg %p3750
    $region42: #{_lambda_.5} parent=5 // pred_check_branch
      %3753 = sbr.rel (%p3751) target = $region44
    $region43: #{_lambda_.5} parent=5 // pred_region
      %s3754 = ssub.s32 %s10, 2
      // Predicated region
      $region45: #{_lambda_.5} parent=43 // pred_check
        %p3755 = pneg %p142
      $region46: #{_lambda_.5} parent=43 // pred_check_branch
        %3757 = sbr.rel (%p3755) target = $region48
      $region47: #{_lambda_.5} parent=43 // pred_region
        %s3758 = smul.u32 20, %s22
        %p3759 = scmp.lt.s32.totalorder %s21, 1
        %s3760 = scalar_select %p3759, %s21, 1
        %p3761 = scmp.lt.s32.totalorder %s3758, 39
        %s3762 = scalar_select %p3761, %s3758, 39
        %s3763 = smul.addr %s3760, 40
        %s3764 = sadd.s32 %s3762, %s3763
        %s3765 = smul.addr %s3764, 8
        %s3766 = scalar_lea.vmem %s4, %s3765
      $region48: #{_lambda_.5} parent=43 // pred_fallthru
        _
    $region44: #{_lambda_.5} parent=5 // pred_fallthru
      _
  $region6: #{_lambda_.5} parent=0 // loop_footer
    %s14 = sadd.s32 1, %s10
  $region7: #{_lambda_.5} parent=0 // loop_footer_branch
    %9 = sbr.rel target = $region3
  $region8: #{_lambda_.5} parent=0 // loop_exit
    _

// kernel: _lambda_.4
$region0: #{_lambda_.4}
  #allocation0 [shape = 'u32[]', space=smem, size = 0x4, offset = 0x4, fixed_abs, tag = 'smem constant byte address 0x4 - core index']
  #allocation1 [shape = 'u32[72,128]{1,0:T(1,128)}', space=vmem, size = 0x9000, scoped, tag = 'internal scratch']
  %s0 = inlined_call_operand.vmem [shape: f32[2,342,4], index: 0, kind: input, shape index: {}]
  %s1 = inlined_call_operand.vmem [shape: f32[9,4,128], index: 1, kind: input, shape index: {}]
  %s2 = inlined_call_operand.vmem [shape: f32[1,128], index: 2, kind: input, shape index: {}]
  %s3 = inlined_call_operand.vmem [shape: f32[1,128], index: 3, kind: input, shape index: {}]
  %s4 = inlined_call_operand.vmem [shape: f32[2,288,128], index: 4, kind: output, shape index: {}]
  %s5 = sld [smem:[#allocation0]]
  $region49: #{_lambda_.4} parent=0
    _
  %s7 = ssub.s32 1, %s5
  %s8 = scalar_select 0, %s7, %s5
  loop: start=0, step=1, limit=6
  $region2: #{_lambda_.4} parent=0 // loop_pre_header
    _
  $region3: #{_lambda_.4} parent=0 // loop_header
    %s10 = sphi 0, %s14
    %p11 = scmp.ge.s32.totalorder %s10, 6
    %s17 = sphi 0, %s29
    %s18 = sphi 0, %s25
    %s19 = sphi 0, %s17
    %s20 = sphi 0, %s18
    %s21 = sphi 0, %s19
    %s22 = sphi 0, %s20
    %s32 = sphi 0, %s34
    %s35 = sphi 0, %s32
    %s36 = sphi 0, %s35
    %s52 = sphi 0, %s36
    %s56 = sphi 0, %s56
    %s58 = sphi 0, %s56
    %s59 = sphi 0, %s58
    %s73 = sphi 0, %s59
    %s77 = sphi 0, %s77
    %s79 = sphi 0, %s77
    %s80 = sphi 0, %s79
    %s94 = sphi 0, %s80
    %s98 = sphi 0, %s98
    %s100 = sphi 0, %s98
    %s101 = sphi 0, %s100
    %s115 = sphi 0, %s101
    %s123 = sphi 0, %s125
    %s126 = sphi 0, %s123
    %s127 = sphi 0, %s126
    %s143 = sphi 0, %s127
  $region4: #{_lambda_.4} parent=0 // loop_header_branch
    %13 = sbr.rel (%p11) target = $region8
  $region5: #{_lambda_.4} parent=0 // loop_body
    %s15 = ssub.s32 %s10, 1
    %s16 = ssub.s32 %s10, 2
    %s23 = sadd.s32 1, %s18
    %p24 = scmp.ge.s32.totalorder %s23, 2
    %s25 = scalar_select %p24, 0, %s23
    %s26 = sadd.s32 1, %s17
    %s27 = scalar_select %p24, %s26, %s17
    %p28 = scmp.ge.s32.totalorder %s27, 2
    %s29 = scalar_select %p28, 0, %s27
    %s30 = ssub.s32 %s17, %s29
    %p31 = scmp.eq.s32.totalorder %s30, 0
    %s33 = sadd.s32 %s32, 1
    %s34 = scalar_select %p31, %s32, %s33
    %p37 = pneg %p31
    %p38 = scmp.eq.s32.totalorder %s10, 3
    %p39 = por %p37, %p38
    %p40 = scmp.ne.s32.totalorder %s32, %s35
    %p41 = scmp.eq.s32.totalorder %s10, 0
    %p42 = por %p40, %p41
    %p43 = scmp.ne.s32.totalorder %s32, %s35
    %p44 = scmp.eq.s32.totalorder %s15, 3
    %p45 = por %p43, %p44
    %p46 = scmp.ne.s32.totalorder %s35, %s36
    %p47 = scmp.eq.s32.totalorder %s15, 0
    %p48 = por %p46, %p47
    %p49 = scmp.ne.s32.totalorder %s35, %s36
    %p50 = scmp.eq.s32.totalorder %s16, 3
    %p51 = por %p49, %p50
    %p53 = scmp.ne.s32.totalorder %s36, %s52
    %p54 = scmp.eq.s32.totalorder %s16, 0
    %p55 = por %p53, %p54
    %s57 = sadd.s32 %s56, 1
    %p60 = scmp.eq.s32.totalorder %s10, 3
    %p61 = scmp.ne.s32.totalorder %s56, %s58
    %p62 = scmp.eq.s32.totalorder %s10, 0
    %p63 = por %p61, %p62
    %p64 = scmp.ne.s32.totalorder %s56, %s58
    %p65 = scmp.eq.s32.totalorder %s15, 3
    %p66 = por %p64, %p65
    %p67 = scmp.ne.s32.totalorder %s58, %s59
    %p68 = scmp.eq.s32.totalorder %s15, 0
    %p69 = por %p67, %p68
    %p70 = scmp.ne.s32.totalorder %s58, %s59
    %p71 = scmp.eq.s32.totalorder %s16, 3
    %p72 = por %p70, %p71
    %p74 = scmp.ne.s32.totalorder %s59, %s73
    %p75 = scmp.eq.s32.totalorder %s16, 0
    %p76 = por %p74, %p75
    %s78 = sadd.s32 %s77, 1
    %p81 = scmp.eq.s32.totalorder %s10, 3
    %p82 = scmp.ne.s32.totalorder %s77, %s79
    %p83 = scmp.eq.s32.totalorder %s10, 0
    %p84 = por %p82, %p83
    %p85 = scmp.ne.s32.totalorder %s77, %s79
    %p86 = scmp.eq.s32.totalorder %s15, 3
    %p87 = por %p85, %p86
    %p88 = scmp.ne.s32.totalorder %s79, %s80
    %p89 = scmp.eq.s32.totalorder %s15, 0
    %p90 = por %p88, %p89
    %p91 = scmp.ne.s32.totalorder %s79, %s80
    %p92 = scmp.eq.s32.totalorder %s16, 3
    %p93 = por %p91, %p92
    %p95 = scmp.ne.s32.totalorder %s80, %s94
    %p96 = scmp.eq.s32.totalorder %s16, 0
    %p97 = por %p95, %p96
    %s99 = sadd.s32 %s98, 1
    %p102 = scmp.eq.s32.totalorder %s10, 3
    %p103 = scmp.ne.s32.totalorder %s98, %s100
    %p104 = scmp.eq.s32.totalorder %s10, 0
    %p105 = por %p103, %p104
    %p106 = scmp.ne.s32.totalorder %s98, %s100
    %p107 = scmp.eq.s32.totalorder %s15, 3
    %p108 = por %p106, %p107
    %p109 = scmp.ne.s32.totalorder %s100, %s101
    %p110 = scmp.eq.s32.totalorder %s15, 0
    %p111 = por %p109, %p110
    %p112 = scmp.ne.s32.totalorder %s100, %s101
    %p113 = scmp.eq.s32.totalorder %s16, 3
    %p114 = por %p112, %p113
    %p116 = scmp.ne.s32.totalorder %s101, %s115
    %p117 = scmp.eq.s32.totalorder %s16, 0
    %p118 = por %p116, %p117
    %s119 = ssub.s32 %s17, %s29
    %s120 = ssub.s32 %s18, %s25
    %s121 = sor.u32 %s119, %s120
    %p122 = scmp.eq.s32.totalorder %s121, 0
    %s124 = sadd.s32 %s123, 1
    %s125 = scalar_select %p122, %s123, %s124
    %p128 = pneg %p122
    %p129 = scmp.eq.s32.totalorder %s10, 3
    %p130 = por %p128, %p129
    %p131 = scmp.ne.s32.totalorder %s123, %s126
    %p132 = scmp.eq.s32.totalorder %s10, 0
    %p133 = por %p131, %p132
    %p134 = scmp.ne.s32.totalorder %s123, %s126
    %p135 = scmp.eq.s32.totalorder %s15, 3
    %p136 = por %p134, %p135
    %p137 = scmp.ne.s32.totalorder %s126, %s127
    %p138 = scmp.eq.s32.totalorder %s15, 0
    %p139 = por %p137, %p138
    %p140 = scmp.ne.s32.totalorder %s126, %s127
    %p141 = scmp.eq.s32.totalorder %s16, 3
    %p142 = por %p140, %p141
    %p144 = scmp.ne.s32.totalorder %s127, %s143
    %p145 = scmp.eq.s32.totalorder %s16, 0
    %p146 = por %p144, %p145
    %p147 = scmp.le.s32.totalorder 1, %s10
    %p148 = scmp.lt.s32.totalorder %s10, 5
    %p149 = pnand %p147, %p148
    %p150 = pneg %p149
    // Predicated region
    $region9: #{_lambda_.4} parent=5 // pred_check
      _
    $region10: #{_lambda_.4} parent=5 // pred_check_branch
      %152 = sbr.rel (%p149) target = $region12
    $region11: #{_lambda_.4} parent=5 // pred_region
      %s153 = ssub.s32 %s10, 1
      // Predicated region
      $region13: #{_lambda_.4} parent=11 // pred_check
        %p154 = pneg %p69
      $region14: #{_lambda_.4} parent=11 // pred_check_branch
        %156 = sbr.rel (%p154) target = $region16
      $region15: #{_lambda_.4} parent=11 // pred_region
        _
      $region16: #{_lambda_.4} parent=11 // pred_fallthru
        _
      // Predicated region
      $region17: #{_lambda_.4} parent=11 // pred_check
        %p157 = pneg %p90
      $region18: #{_lambda_.4} parent=11 // pred_check_branch
        %159 = sbr.rel (%p157) target = $region20
      $region19: #{_lambda_.4} parent=11 // pred_region
        _
      $region20: #{_lambda_.4} parent=11 // pred_fallthru
        _
      // Predicated region
      $region21: #{_lambda_.4} parent=11 // pred_check
        %p160 = pneg %p111
      $region22: #{_lambda_.4} parent=11 // pred_check_branch
        %162 = sbr.rel (%p160) target = $region24
      $region23: #{_lambda_.4} parent=11 // pred_region
        _
      $region24: #{_lambda_.4} parent=11 // pred_fallthru
        _
    $region12: #{_lambda_.4} parent=5 // pred_fallthru
      _
    %p163 = scmp.lt.s32.totalorder %s10, 4
    // Predicated region
    $region25: #{_lambda_.4} parent=5 // pred_check
      %p164 = pneg %p163
    $region26: #{_lambda_.4} parent=5 // pred_check_branch
      %166 = sbr.rel (%p164) target = $region28
    $region27: #{_lambda_.4} parent=5 // pred_region
      // Predicated region
      $region29: #{_lambda_.4} parent=27 // pred_check
        %p167 = pneg %p42
      $region30: #{_lambda_.4} parent=27 // pred_check_branch
        %169 = sbr.rel (%p167) target = $region32
      $region31: #{_lambda_.4} parent=27 // pred_region
        %p170 = scmp.lt.s32.totalorder %s17, 1
        %s171 = scalar_select %p170, %s17, 1
        %s172 = smul.addr %s171, 43
        %s173 = smul.addr %s172, 8
        %s174 = scalar_lea.vmem %s0, %s173
      $region32: #{_lambda_.4} parent=27 // pred_fallthru
        _
    $region28: #{_lambda_.4} parent=5 // pred_fallthru
      _
    %p175 = scmp.le.s32.totalorder 1, %s10
    %p176 = scmp.lt.s32.totalorder %s10, 5
    %p177 = pnand %p175, %p176
    %p178 = pneg %p177
    // Predicated region
    $region33: #{_lambda_.4} parent=5 // pred_check
      _
    $region34: #{_lambda_.4} parent=5 // pred_check_branch
      %180 = sbr.rel (%p177) target = $region36
    $region35: #{_lambda_.4} parent=5 // pred_region
      %s181 = ssub.s32 %s10, 1
      %p182 = scmp.lt.s32.totalorder %s19, 1
      %s183 = scalar_select %p182, %s19, 1
      %s184 = smul.addr %s183, 43
      %s185 = smul.addr %s184, 8
      %s186 = scalar_lea.vmem %s0, %s185
      %p187 = pneg %p48
      %p188 = pneg %p45
      %p189 = pneg %p69
      %p190 = pneg %p66
      %p191 = pneg %p90
      %p192 = pneg %p87
      %p193 = pneg %p111
      %p194 = pneg %p108
      %p195 = pneg %p139
      %p196 = pneg %p136
      %s197 = smul.u32 18, %s20
      %p198 = scmp.lt.s32.totalorder %s19, 1
      %s199 = scalar_select %p198, %s19, 1
      %p200 = scmp.lt.s32.totalorder %s197, 35
      %s201 = scalar_select %p200, %s197, 35
      %s202 = smul.addr %s199, 36
      %s203 = sadd.s32 %s201, %s202
      %s204 = smul.addr %s203, 8
      %s205 = scalar_lea.vmem %s4, %s204
      %p206 = scmp.lt.s32.totalorder %s19, 1
      %s207 = scalar_select %p206, %s19, 1
      %s208 = smul.addr %s207, 43
      %s209 = smul.addr %s208, 8
      %s210 = scalar_lea.vmem %s0, %s209
      %s211 = smul.u32 18, %s20
      %p212 = scmp.lt.s32.totalorder %s19, 1
      %s213 = scalar_select %p212, %s19, 1
      %p214 = scmp.lt.s32.totalorder %s211, 35
      %s215 = scalar_select %p214, %s211, 35
      %s216 = smul.addr %s213, 36
      %s217 = sadd.s32 %s215, %s216
      %s218 = smul.addr %s217, 8
      %s219 = scalar_lea.vmem %s4, %s218
      %s220 = smul.u32 18, %s20
      %s221 = smul.u32 %s20, 144
      %s222 = scalar_lea.vmem %s210, %s221
      %v223 = vld [vmem:[%s222] sm:$0xff]
      %v224 = vld [vmem:[%s222 + $0x8] sm:$0xff]
      %v225 = vld [vmem:[%s222 + $0x10] sm:$0xff]
      %v226 = vld [vmem:[%s222 + $0x18] sm:$0xff]
      %v227 = vld [vmem:[%s222 + $0x20] sm:$0xff]
      %v228 = vld [vmem:[%s222 + $0x28] sm:$0xff]
      %v229 = vld [vmem:[%s222 + $0x30] sm:$0xff]
      %v230 = vld [vmem:[%s222 + $0x38] sm:$0xff]
      %v231 = vld [vmem:[%s222 + $0x40] sm:$0xff]
      %v232 = vld [vmem:[%s222 + $0x48] sm:$0xff]
      %v233 = vld [vmem:[%s222 + $0x50] sm:$0xff]
      %v234 = vld [vmem:[%s222 + $0x58] sm:$0xff]
      %v235 = vld [vmem:[%s222 + $0x60] sm:$0xff]
      %v236 = vld [vmem:[%s222 + $0x68] sm:$0xff]
      %v237 = vld [vmem:[%s222 + $0x70] sm:$0xff]
      %v238 = vld [vmem:[%s222 + $0x78] sm:$0xff]
      %v239 = vld [vmem:[%s222 + $0x80] sm:$0xff]
      %v240 = vld [vmem:[%s222 + $0x88] sm:$0xff]
      %v241 = vld [vmem:[%s222 + $0x90] sm:$0xff]
      %v242 = vld [vmem:[%s222 + $0x98] sm:$0xff]
      %v243 = vld [vmem:[%s222 + $0xa0] sm:$0xff]
      %v244 = vld [vmem:[%s222 + $0xa8] sm:$0xff]
      %v245 = vld [vmem:[%s222 + $0xb0] sm:$0xff]
      %v246 = vld [vmem:[%s1] sm:$0xf]
      %s247 = scalar_lea.vmem %s1, 4
      %v248 = vld [vmem:[%s247] sm:$0xf]
      %vm268 = vcmask 1046528
      %v269 = vrot.slane %v223, 1
      %v270 = vrot.slane %v224, 1
      %v271 = vsel %vm268, %v269, %v270
      %v272 = vrot.slane %v225, 1
      %v273 = vsel %vm268, %v270, %v272
      %v274 = vrot.slane %v226, 1
      %v275 = vsel %vm268, %v272, %v274
      %v276 = vrot.slane %v227, 1
      %v277 = vsel %vm268, %v274, %v276
      %v278 = vrot.slane %v228, 1
      %v279 = vsel %vm268, %v276, %v278
      %v280 = vrot.slane %v229, 1
      %v281 = vsel %vm268, %v278, %v280
      %v282 = vrot.slane %v230, 1
      %v283 = vsel %vm268, %v280, %v282
      %v284 = vrot.slane %v231, 1
      %v285 = vsel %vm268, %v282, %v284
      %v286 = vrot.slane %v232, 1
      %v287 = vsel %vm268, %v284, %v286
      %v288 = vrot.slane %v233, 1
      %v289 = vsel %vm268, %v286, %v288
      %v290 = vrot.slane %v234, 1
      %v291 = vsel %vm268, %v288, %v290
      %v292 = vrot.slane %v235, 1
      %v293 = vsel %vm268, %v290, %v292
      %v294 = vrot.slane %v236, 1
      %v295 = vsel %vm268, %v292, %v294
      %v296 = vrot.slane %v237, 1
      %v297 = vsel %vm268, %v294, %v296
      %v298 = vrot.slane %v238, 1
      %v299 = vsel %vm268, %v296, %v298
      %v300 = vrot.slane %v239, 1
      %v301 = vsel %vm268, %v298, %v300
      %v302 = vrot.slane %v240, 1
      %v303 = vsel %vm268, %v300, %v302
      %v304 = vrot.slane %v241, 1
      %v305 = vsel %vm268, %v302, %v304
      %vm306 = vcmask 31744
      %v307 = vsel %vm306, %v271, 0
      %v309 = vsel %vm306, %v273, 0
      %v311 = vsel %vm306, %v275, 0
      %v313 = vsel %vm306, %v277, 0
      %v315 = vsel %vm306, %v279, 0
      %v317 = vsel %vm306, %v281, 0
      %v319 = vsel %vm306, %v283, 0
      %v321 = vsel %vm306, %v285, 0
      %v323 = vsel %vm306, %v287, 0
      %v325 = vsel %vm306, %v289, 0
      %v327 = vsel %vm306, %v291, 0
      %v329 = vsel %vm306, %v293, 0
      %v331 = vsel %vm306, %v295, 0
      %v333 = vsel %vm306, %v297, 0
      %v335 = vsel %vm306, %v299, 0
      %v337 = vsel %vm306, %v301, 0
      %v339 = vsel %vm306, %v303, 0
      %v341 = vsel %vm306, %v305, 0
      %vm343 = vcmask 1043456
      %v345 = vsel %vm343, %v248, 0
      %347 = vmatpush.msra.mxu0 0.0
      %348 = vmatpush.msra.mxu0 0.0
      %349 = vmatpush.msra.mxu0 0.0
      %350 = vmatpush.msra.mxu0 0.0
      %351 = vmatpush.msra.mxu0 0.0
      %352 = vmatpush.msra.mxu0 0.0
      %353 = vmatpush.msra.mxu0 0.0
      %354 = vmatpush.msra.mxu0 0.0
      %355 = vmatpush.msra.mxu0 0.0
      %356 = vmatpush.msra.mxu0 0.0
      %357 = vmatpush.msra.mxu0 0.0
      %358 = vmatpush.msra.mxu0 0.0
      %359 = vmatpush.msra.mxu0 0.0
      %360 = vmatpush.msra.mxu0 0.0
      %361 = vmatpush.msra.mxu0 0.0
      %362 = vmatpush.msra.mxu0 %v345
      %363 = vmatmul.f32.gmra.mxu0 %v307
      %v364 = vpop.f32.mrf.mxu0
      %v365 = vadd.f32 0.0, %v364
      %366 = vmatmul.f32.gmra.mxu0 %v309
      %v367 = vpop.f32.mrf.mxu0
      %v368 = vadd.f32 0.0, %v367
      %369 = vmatmul.f32.gmra.mxu0 %v311
      %v370 = vpop.f32.mrf.mxu0
      %v371 = vadd.f32 0.0, %v370
      %372 = vmatmul.f32.gmra.mxu0 %v313
      %v373 = vpop.f32.mrf.mxu0
      %v374 = vadd.f32 0.0, %v373
      %375 = vmatmul.f32.gmra.mxu0 %v315
      %v376 = vpop.f32.mrf.mxu0
      %v377 = vadd.f32 0.0, %v376
      %378 = vmatmul.f32.gmra.mxu0 %v317
      %v379 = vpop.f32.mrf.mxu0
      %v380 = vadd.f32 0.0, %v379
      %381 = vmatmul.f32.gmra.mxu0 %v319
      %v382 = vpop.f32.mrf.mxu0
      %v383 = vadd.f32 0.0, %v382
      %384 = vmatmul.f32.gmra.mxu0 %v321
      %v385 = vpop.f32.mrf.mxu0
      %v386 = vadd.f32 0.0, %v385
      %387 = vmatmul.f32.gmra.mxu0 %v323
      %v388 = vpop.f32.mrf.mxu0
      %v389 = vadd.f32 0.0, %v388
      %390 = vmatmul.f32.gmra.mxu0 %v325
      %v391 = vpop.f32.mrf.mxu0
      %v392 = vadd.f32 0.0, %v391
      %393 = vmatmul.f32.gmra.mxu0 %v327
      %v394 = vpop.f32.mrf.mxu0
      %v395 = vadd.f32 0.0, %v394
      %396 = vmatmul.f32.gmra.mxu0 %v329
      %v397 = vpop.f32.mrf.mxu0
      %v398 = vadd.f32 0.0, %v397
      %399 = vmatmul.f32.gmra.mxu0 %v331
      %v400 = vpop.f32.mrf.mxu0
      %v401 = vadd.f32 0.0, %v400
      %402 = vmatmul.f32.gmra.mxu0 %v333
      %v403 = vpop.f32.mrf.mxu0
      %v404 = vadd.f32 0.0, %v403
      %405 = vmatmul.f32.gmra.mxu0 %v335
      %v406 = vpop.f32.mrf.mxu0
      %v407 = vadd.f32 0.0, %v406
      %408 = vmatmul.f32.gmra.mxu0 %v337
      %v409 = vpop.f32.mrf.mxu0
      %v410 = vadd.f32 0.0, %v409
      %411 = vmatmul.f32.gmra.mxu0 %v339
      %v412 = vpop.f32.mrf.mxu0
      %v413 = vadd.f32 0.0, %v412
      %414 = vmatmul.f32.gmra.mxu0 %v341
      %v415 = vpop.f32.mrf.mxu0
      %v416 = vadd.f32 0.0, %v415
      %417 = vdwg.mxu0
      %v418 = vsel %vm306, %v223, 0
      %v420 = vsel %vm306, %v224, 0
      %v422 = vsel %vm306, %v225, 0
      %v424 = vsel %vm306, %v226, 0
      %v426 = vsel %vm306, %v227, 0
      %v428 = vsel %vm306, %v228, 0
      %v430 = vsel %vm306, %v229, 0
      %v432 = vsel %vm306, %v230, 0
      %v434 = vsel %vm306, %v231, 0
      %v436 = vsel %vm306, %v232, 0
      %v438 = vsel %vm306, %v233, 0
      %v440 = vsel %vm306, %v234, 0
      %v442 = vsel %vm306, %v235, 0
      %v444 = vsel %vm306, %v236, 0
      %v446 = vsel %vm306, %v237, 0
      %v448 = vsel %vm306, %v238, 0
      %v450 = vsel %vm306, %v239, 0
      %v452 = vsel %vm306, %v240, 0
      %v455 = vsel %vm343, %v246, 0
      %457 = vmatpush.msra.mxu0 0.0
      %458 = vmatpush.msra.mxu0 0.0
      %459 = vmatpush.msra.mxu0 0.0
      %460 = vmatpush.msra.mxu0 0.0
      %461 = vmatpush.msra.mxu0 0.0
      %462 = vmatpush.msra.mxu0 0.0
      %463 = vmatpush.msra.mxu0 0.0
      %464 = vmatpush.msra.mxu0 0.0
      %465 = vmatpush.msra.mxu0 0.0
      %466 = vmatpush.msra.mxu0 0.0
      %467 = vmatpush.msra.mxu0 0.0
      %468 = vmatpush.msra.mxu0 0.0
      %469 = vmatpush.msra.mxu0 0.0
      %470 = vmatpush.msra.mxu0 0.0
      %471 = vmatpush.msra.mxu0 0.0
      %472 = vmatpush.msra.mxu0 %v455
      %473 = vmatmul.f32.gmra.mxu0 %v418
      %v474 = vpop.f32.mrf.mxu0
      %v475 = vadd.f32 %v365, %v474
      %476 = vmatmul.f32.gmra.mxu0 %v420
      %v477 = vpop.f32.mrf.mxu0
      %v478 = vadd.f32 %v368, %v477
      %479 = vmatmul.f32.gmra.mxu0 %v422
      %v480 = vpop.f32.mrf.mxu0
      %v481 = vadd.f32 %v371, %v480
      %482 = vmatmul.f32.gmra.mxu0 %v424
      %v483 = vpop.f32.mrf.mxu0
      %v484 = vadd.f32 %v374, %v483
      %485 = vmatmul.f32.gmra.mxu0 %v426
      %v486 = vpop.f32.mrf.mxu0
      %v487 = vadd.f32 %v377, %v486
      %488 = vmatmul.f32.gmra.mxu0 %v428
      %v489 = vpop.f32.mrf.mxu0
      %v490 = vadd.f32 %v380, %v489
      %491 = vmatmul.f32.gmra.mxu0 %v430
      %v492 = vpop.f32.mrf.mxu0
      %v493 = vadd.f32 %v383, %v492
      %494 = vmatmul.f32.gmra.mxu0 %v432
      %v495 = vpop.f32.mrf.mxu0
      %v496 = vadd.f32 %v386, %v495
      %497 = vmatmul.f32.gmra.mxu0 %v434
      %v498 = vpop.f32.mrf.mxu0
      %v499 = vadd.f32 %v389, %v498
      %500 = vmatmul.f32.gmra.mxu0 %v436
      %v501 = vpop.f32.mrf.mxu0
      %v502 = vadd.f32 %v392, %v501
      %503 = vmatmul.f32.gmra.mxu0 %v438
      %v504 = vpop.f32.mrf.mxu0
      %v505 = vadd.f32 %v395, %v504
      %506 = vmatmul.f32.gmra.mxu0 %v440
      %v507 = vpop.f32.mrf.mxu0
      %v508 = vadd.f32 %v398, %v507
      %509 = vmatmul.f32.gmra.mxu0 %v442
      %v510 = vpop.f32.mrf.mxu0
      %v511 = vadd.f32 %v401, %v510
      %512 = vmatmul.f32.gmra.mxu0 %v444
      %v513 = vpop.f32.mrf.mxu0
      %v514 = vadd.f32 %v404, %v513
      %515 = vmatmul.f32.gmra.mxu0 %v446
      %v516 = vpop.f32.mrf.mxu0
      %v517 = vadd.f32 %v407, %v516
      %518 = vmatmul.f32.gmra.mxu0 %v448
      %v519 = vpop.f32.mrf.mxu0
      %v520 = vadd.f32 %v410, %v519
      %521 = vmatmul.f32.gmra.mxu0 %v450
      %v522 = vpop.f32.mrf.mxu0
      %v523 = vadd.f32 %v413, %v522
      %524 = vmatmul.f32.gmra.mxu0 %v452
      %v525 = vpop.f32.mrf.mxu0
      %v526 = vadd.f32 %v416, %v525
      %527 = vdwg.mxu0
      %s528 = scalar_lea.vmem %s1, 8
      %v529 = vld [vmem:[%s528] sm:$0xf]
      %vm530 = vcmask 1045504
      %v531 = vrot.slane %v223, 2
      %v532 = vrot.slane %v224, 2
      %v533 = vsel %vm530, %v531, %v532
      %v534 = vrot.slane %v225, 2
      %v535 = vsel %vm530, %v532, %v534
      %v536 = vrot.slane %v226, 2
      %v537 = vsel %vm530, %v534, %v536
      %v538 = vrot.slane %v227, 2
      %v539 = vsel %vm530, %v536, %v538
      %v540 = vrot.slane %v228, 2
      %v541 = vsel %vm530, %v538, %v540
      %v542 = vrot.slane %v229, 2
      %v543 = vsel %vm530, %v540, %v542
      %v544 = vrot.slane %v230, 2
      %v545 = vsel %vm530, %v542, %v544
      %v546 = vrot.slane %v231, 2
      %v547 = vsel %vm530, %v544, %v546
      %v548 = vrot.slane %v232, 2
      %v549 = vsel %vm530, %v546, %v548
      %v550 = vrot.slane %v233, 2
      %v551 = vsel %vm530, %v548, %v550
      %v552 = vrot.slane %v234, 2
      %v553 = vsel %vm530, %v550, %v552
      %v554 = vrot.slane %v235, 2
      %v555 = vsel %vm530, %v552, %v554
      %v556 = vrot.slane %v236, 2
      %v557 = vsel %vm530, %v554, %v556
      %v558 = vrot.slane %v237, 2
      %v559 = vsel %vm530, %v556, %v558
      %v560 = vrot.slane %v238, 2
      %v561 = vsel %vm530, %v558, %v560
      %v562 = vrot.slane %v239, 2
      %v563 = vsel %vm530, %v560, %v562
      %v564 = vrot.slane %v240, 2
      %v565 = vsel %vm530, %v562, %v564
      %v566 = vrot.slane %v241, 2
      %v567 = vsel %vm530, %v564, %v566
      %v568 = vsel %vm306, %v533, 0
      %v570 = vsel %vm306, %v535, 0
      %v572 = vsel %vm306, %v537, 0
      %v574 = vsel %vm306, %v539, 0
      %v576 = vsel %vm306, %v541, 0
      %v578 = vsel %vm306, %v543, 0
      %v580 = vsel %vm306, %v545, 0
      %v582 = vsel %vm306, %v547, 0
      %v584 = vsel %vm306, %v549, 0
      %v586 = vsel %vm306, %v551, 0
      %v588 = vsel %vm306, %v553, 0
      %v590 = vsel %vm306, %v555, 0
      %v592 = vsel %vm306, %v557, 0
      %v594 = vsel %vm306, %v559, 0
      %v596 = vsel %vm306, %v561, 0
      %v598 = vsel %vm306, %v563, 0
      %v600 = vsel %vm306, %v565, 0
      %v602 = vsel %vm306, %v567, 0
      %v605 = vsel %vm343, %v529, 0
      %607 = vmatpush.msra.mxu0 0.0
      %608 = vmatpush.msra.mxu0 0.0
      %609 = vmatpush.msra.mxu0 0.0
      %610 = vmatpush.msra.mxu0 0.0
      %611 = vmatpush.msra.mxu0 0.0
      %612 = vmatpush.msra.mxu0 0.0
      %613 = vmatpush.msra.mxu0 0.0
      %614 = vmatpush.msra.mxu0 0.0
      %615 = vmatpush.msra.mxu0 0.0
      %616 = vmatpush.msra.mxu0 0.0
      %617 = vmatpush.msra.mxu0 0.0
      %618 = vmatpush.msra.mxu0 0.0
      %619 = vmatpush.msra.mxu0 0.0
      %620 = vmatpush.msra.mxu0 0.0
      %621 = vmatpush.msra.mxu0 0.0
      %622 = vmatpush.msra.mxu0 %v605
      %623 = vmatmul.f32.gmra.mxu0 %v568
      %v624 = vpop.f32.mrf.mxu0
      %v625 = vadd.f32 0.0, %v624
      %626 = vmatmul.f32.gmra.mxu0 %v570
      %v627 = vpop.f32.mrf.mxu0
      %v628 = vadd.f32 0.0, %v627
      %629 = vmatmul.f32.gmra.mxu0 %v572
      %v630 = vpop.f32.mrf.mxu0
      %v631 = vadd.f32 0.0, %v630
      %632 = vmatmul.f32.gmra.mxu0 %v574
      %v633 = vpop.f32.mrf.mxu0
      %v634 = vadd.f32 0.0, %v633
      %635 = vmatmul.f32.gmra.mxu0 %v576
      %v636 = vpop.f32.mrf.mxu0
      %v637 = vadd.f32 0.0, %v636
      %638 = vmatmul.f32.gmra.mxu0 %v578
      %v639 = vpop.f32.mrf.mxu0
      %v640 = vadd.f32 0.0, %v639
      %641 = vmatmul.f32.gmra.mxu0 %v580
      %v642 = vpop.f32.mrf.mxu0
      %v643 = vadd.f32 0.0, %v642
      %644 = vmatmul.f32.gmra.mxu0 %v582
      %v645 = vpop.f32.mrf.mxu0
      %v646 = vadd.f32 0.0, %v645
      %647 = vmatmul.f32.gmra.mxu0 %v584
      %v648 = vpop.f32.mrf.mxu0
      %v649 = vadd.f32 0.0, %v648
      %650 = vmatmul.f32.gmra.mxu0 %v586
      %v651 = vpop.f32.mrf.mxu0
      %v652 = vadd.f32 0.0, %v651
      %653 = vmatmul.f32.gmra.mxu0 %v588
      %v654 = vpop.f32.mrf.mxu0
      %v655 = vadd.f32 0.0, %v654
      %656 = vmatmul.f32.gmra.mxu0 %v590
      %v657 = vpop.f32.mrf.mxu0
      %v658 = vadd.f32 0.0, %v657
      %659 = vmatmul.f32.gmra.mxu0 %v592
      %v660 = vpop.f32.mrf.mxu0
      %v661 = vadd.f32 0.0, %v660
      %662 = vmatmul.f32.gmra.mxu0 %v594
      %v663 = vpop.f32.mrf.mxu0
      %v664 = vadd.f32 0.0, %v663
      %665 = vmatmul.f32.gmra.mxu0 %v596
      %v666 = vpop.f32.mrf.mxu0
      %v667 = vadd.f32 0.0, %v666
      %668 = vmatmul.f32.gmra.mxu0 %v598
      %v669 = vpop.f32.mrf.mxu0
      %v670 = vadd.f32 0.0, %v669
      %671 = vmatmul.f32.gmra.mxu0 %v600
      %v672 = vpop.f32.mrf.mxu0
      %v673 = vadd.f32 0.0, %v672
      %674 = vmatmul.f32.gmra.mxu0 %v602
      %v675 = vpop.f32.mrf.mxu0
      %v676 = vadd.f32 0.0, %v675
      %677 = vdwg.mxu0
      %v678 = vadd.f32 %v475, %v625
      %v679 = vadd.f32 %v478, %v628
      %v680 = vadd.f32 %v481, %v631
      %v681 = vadd.f32 %v484, %v634
      %v682 = vadd.f32 %v487, %v637
      %v683 = vadd.f32 %v490, %v640
      %v684 = vadd.f32 %v493, %v643
      %v685 = vadd.f32 %v496, %v646
      %v686 = vadd.f32 %v499, %v649
      %v687 = vadd.f32 %v502, %v652
      %v688 = vadd.f32 %v505, %v655
      %v689 = vadd.f32 %v508, %v658
      %v690 = vadd.f32 %v511, %v661
      %v691 = vadd.f32 %v514, %v664
      %v692 = vadd.f32 %v517, %v667
      %v693 = vadd.f32 %v520, %v670
      %v694 = vadd.f32 %v523, %v673
      %v695 = vadd.f32 %v526, %v676
      %s696 = scalar_lea.vmem %s1, 12
      %v697 = vld [vmem:[%s696] sm:$0xf]
      %v700 = vrot.slane %v242, 2
      %v701 = vsel %vm530, %v566, %v700
      %v702 = vrot.slane %v243, 2
      %v703 = vsel %vm530, %v700, %v702
      %v704 = vsel %vm306, %v701, 0
      %v706 = vsel %vm306, %v703, 0
      %v709 = vsel %vm343, %v697, 0
      %711 = vmatpush.msra.mxu0 0.0
      %712 = vmatpush.msra.mxu0 0.0
      %713 = vmatpush.msra.mxu0 0.0
      %714 = vmatpush.msra.mxu0 0.0
      %715 = vmatpush.msra.mxu0 0.0
      %716 = vmatpush.msra.mxu0 0.0
      %717 = vmatpush.msra.mxu0 0.0
      %718 = vmatpush.msra.mxu0 0.0
      %719 = vmatpush.msra.mxu0 0.0
      %720 = vmatpush.msra.mxu0 0.0
      %721 = vmatpush.msra.mxu0 0.0
      %722 = vmatpush.msra.mxu0 0.0
      %723 = vmatpush.msra.mxu0 0.0
      %724 = vmatpush.msra.mxu0 0.0
      %725 = vmatpush.msra.mxu0 0.0
      %726 = vmatpush.msra.mxu0 %v709
      %727 = vmatmul.f32.gmra.mxu0 %v572
      %v728 = vpop.f32.mrf.mxu0
      %v729 = vadd.f32 0.0, %v728
      %730 = vmatmul.f32.gmra.mxu0 %v574
      %v731 = vpop.f32.mrf.mxu0
      %v732 = vadd.f32 0.0, %v731
      %733 = vmatmul.f32.gmra.mxu0 %v576
      %v734 = vpop.f32.mrf.mxu0
      %v735 = vadd.f32 0.0, %v734
      %736 = vmatmul.f32.gmra.mxu0 %v578
      %v737 = vpop.f32.mrf.mxu0
      %v738 = vadd.f32 0.0, %v737
      %739 = vmatmul.f32.gmra.mxu0 %v580
      %v740 = vpop.f32.mrf.mxu0
      %v741 = vadd.f32 0.0, %v740
      %742 = vmatmul.f32.gmra.mxu0 %v582
      %v743 = vpop.f32.mrf.mxu0
      %v744 = vadd.f32 0.0, %v743
      %745 = vmatmul.f32.gmra.mxu0 %v584
      %v746 = vpop.f32.mrf.mxu0
      %v747 = vadd.f32 0.0, %v746
      %748 = vmatmul.f32.gmra.mxu0 %v586
      %v749 = vpop.f32.mrf.mxu0
      %v750 = vadd.f32 0.0, %v749
      %751 = vmatmul.f32.gmra.mxu0 %v588
      %v752 = vpop.f32.mrf.mxu0
      %v753 = vadd.f32 0.0, %v752
      %754 = vmatmul.f32.gmra.mxu0 %v590
      %v755 = vpop.f32.mrf.mxu0
      %v756 = vadd.f32 0.0, %v755
      %757 = vmatmul.f32.gmra.mxu0 %v592
      %v758 = vpop.f32.mrf.mxu0
      %v759 = vadd.f32 0.0, %v758
      %760 = vmatmul.f32.gmra.mxu0 %v594
      %v761 = vpop.f32.mrf.mxu0
      %v762 = vadd.f32 0.0, %v761
      %763 = vmatmul.f32.gmra.mxu0 %v596
      %v764 = vpop.f32.mrf.mxu0
      %v765 = vadd.f32 0.0, %v764
      %766 = vmatmul.f32.gmra.mxu0 %v598
      %v767 = vpop.f32.mrf.mxu0
      %v768 = vadd.f32 0.0, %v767
      %769 = vmatmul.f32.gmra.mxu0 %v600
      %v770 = vpop.f32.mrf.mxu0
      %v771 = vadd.f32 0.0, %v770
      %772 = vmatmul.f32.gmra.mxu0 %v602
      %v773 = vpop.f32.mrf.mxu0
      %v774 = vadd.f32 0.0, %v773
      %775 = vmatmul.f32.gmra.mxu0 %v704
      %v776 = vpop.f32.mrf.mxu0
      %v777 = vadd.f32 0.0, %v776
      %778 = vmatmul.f32.gmra.mxu0 %v706
      %v779 = vpop.f32.mrf.mxu0
      %v780 = vadd.f32 0.0, %v779
      %781 = vdwg.mxu0
      %v782 = vadd.f32 %v678, %v729
      %v783 = vadd.f32 %v679, %v732
      %v784 = vadd.f32 %v680, %v735
      %v785 = vadd.f32 %v681, %v738
      %v786 = vadd.f32 %v682, %v741
      %v787 = vadd.f32 %v683, %v744
      %v788 = vadd.f32 %v684, %v747
      %v789 = vadd.f32 %v685, %v750
      %v790 = vadd.f32 %v686, %v753
      %v791 = vadd.f32 %v687, %v756
      %v792 = vadd.f32 %v688, %v759
      %v793 = vadd.f32 %v689, %v762
      %v794 = vadd.f32 %v690, %v765
      %v795 = vadd.f32 %v691, %v768
      %v796 = vadd.f32 %v692, %v771
      %v797 = vadd.f32 %v693, %v774
      %v798 = vadd.f32 %v694, %v777
      %v799 = vadd.f32 %v695, %v780
      %s800 = scalar_lea.vmem %s1, 16
      %v801 = vld [vmem:[%s800] sm:$0xf]
      %vm802 = vcmask 1044480
      %v803 = vrot.slane %v225, 3
      %v804 = vrot.slane %v226, 3
      %v805 = vsel %vm802, %v803, %v804
      %v806 = vrot.slane %v227, 3
      %v807 = vsel %vm802, %v804, %v806
      %v808 = vrot.slane %v228, 3
      %v809 = vsel %vm802, %v806, %v808
      %v810 = vrot.slane %v229, 3
      %v811 = vsel %vm802, %v808, %v810
      %v812 = vrot.slane %v230, 3
      %v813 = vsel %vm802, %v810, %v812
      %v814 = vrot.slane %v231, 3
      %v815 = vsel %vm802, %v812, %v814
      %v816 = vrot.slane %v232, 3
      %v817 = vsel %vm802, %v814, %v816
      %v818 = vrot.slane %v233, 3
      %v819 = vsel %vm802, %v816, %v818
      %v820 = vrot.slane %v234, 3
      %v821 = vsel %vm802, %v818, %v820
      %v822 = vrot.slane %v235, 3
      %v823 = vsel %vm802, %v820, %v822
      %v824 = vrot.slane %v236, 3
      %v825 = vsel %vm802, %v822, %v824
      %v826 = vrot.slane %v237, 3
      %v827 = vsel %vm802, %v824, %v826
      %v828 = vrot.slane %v238, 3
      %v829 = vsel %vm802, %v826, %v828
      %v830 = vrot.slane %v239, 3
      %v831 = vsel %vm802, %v828, %v830
      %v832 = vrot.slane %v240, 3
      %v833 = vsel %vm802, %v830, %v832
      %v834 = vrot.slane %v241, 3
      %v835 = vsel %vm802, %v832, %v834
      %v836 = vrot.slane %v242, 3
      %v837 = vsel %vm802, %v834, %v836
      %v838 = vrot.slane %v243, 3
      %v839 = vsel %vm802, %v836, %v838
      %v840 = vsel %vm306, %v805, 0
      %v842 = vsel %vm306, %v807, 0
      %v844 = vsel %vm306, %v809, 0
      %v846 = vsel %vm306, %v811, 0
      %v848 = vsel %vm306, %v813, 0
      %v850 = vsel %vm306, %v815, 0
      %v852 = vsel %vm306, %v817, 0
      %v854 = vsel %vm306, %v819, 0
      %v856 = vsel %vm306, %v821, 0
      %v858 = vsel %vm306, %v823, 0
      %v860 = vsel %vm306, %v825, 0
      %v862 = vsel %vm306, %v827, 0
      %v864 = vsel %vm306, %v829, 0
      %v866 = vsel %vm306, %v831, 0
      %v868 = vsel %vm306, %v833, 0
      %v870 = vsel %vm306, %v835, 0
      %v872 = vsel %vm306, %v837, 0
      %v874 = vsel %vm306, %v839, 0
      %v877 = vsel %vm343, %v801, 0
      %879 = vmatpush.msra.mxu0 0.0
      %880 = vmatpush.msra.mxu0 0.0
      %881 = vmatpush.msra.mxu0 0.0
      %882 = vmatpush.msra.mxu0 0.0
      %883 = vmatpush.msra.mxu0 0.0
      %884 = vmatpush.msra.mxu0 0.0
      %885 = vmatpush.msra.mxu0 0.0
      %886 = vmatpush.msra.mxu0 0.0
      %887 = vmatpush.msra.mxu0 0.0
      %888 = vmatpush.msra.mxu0 0.0
      %889 = vmatpush.msra.mxu0 0.0
      %890 = vmatpush.msra.mxu0 0.0
      %891 = vmatpush.msra.mxu0 0.0
      %892 = vmatpush.msra.mxu0 0.0
      %893 = vmatpush.msra.mxu0 0.0
      %894 = vmatpush.msra.mxu0 %v877
      %895 = vmatmul.f32.gmra.mxu0 %v840
      %v896 = vpop.f32.mrf.mxu0
      %v897 = vadd.f32 0.0, %v896
      %898 = vmatmul.f32.gmra.mxu0 %v842
      %v899 = vpop.f32.mrf.mxu0
      %v900 = vadd.f32 0.0, %v899
      %901 = vmatmul.f32.gmra.mxu0 %v844
      %v902 = vpop.f32.mrf.mxu0
      %v903 = vadd.f32 0.0, %v902
      %904 = vmatmul.f32.gmra.mxu0 %v846
      %v905 = vpop.f32.mrf.mxu0
      %v906 = vadd.f32 0.0, %v905
      %907 = vmatmul.f32.gmra.mxu0 %v848
      %v908 = vpop.f32.mrf.mxu0
      %v909 = vadd.f32 0.0, %v908
      %910 = vmatmul.f32.gmra.mxu0 %v850
      %v911 = vpop.f32.mrf.mxu0
      %v912 = vadd.f32 0.0, %v911
      %913 = vmatmul.f32.gmra.mxu0 %v852
      %v914 = vpop.f32.mrf.mxu0
      %v915 = vadd.f32 0.0, %v914
      %916 = vmatmul.f32.gmra.mxu0 %v854
      %v917 = vpop.f32.mrf.mxu0
      %v918 = vadd.f32 0.0, %v917
      %919 = vmatmul.f32.gmra.mxu0 %v856
      %v920 = vpop.f32.mrf.mxu0
      %v921 = vadd.f32 0.0, %v920
      %922 = vmatmul.f32.gmra.mxu0 %v858
      %v923 = vpop.f32.mrf.mxu0
      %v924 = vadd.f32 0.0, %v923
      %925 = vmatmul.f32.gmra.mxu0 %v860
      %v926 = vpop.f32.mrf.mxu0
      %v927 = vadd.f32 0.0, %v926
      %928 = vmatmul.f32.gmra.mxu0 %v862
      %v929 = vpop.f32.mrf.mxu0
      %v930 = vadd.f32 0.0, %v929
      %931 = vmatmul.f32.gmra.mxu0 %v864
      %v932 = vpop.f32.mrf.mxu0
      %v933 = vadd.f32 0.0, %v932
      %934 = vmatmul.f32.gmra.mxu0 %v866
      %v935 = vpop.f32.mrf.mxu0
      %v936 = vadd.f32 0.0, %v935
      %937 = vmatmul.f32.gmra.mxu0 %v868
      %v938 = vpop.f32.mrf.mxu0
      %v939 = vadd.f32 0.0, %v938
      %940 = vmatmul.f32.gmra.mxu0 %v870
      %v941 = vpop.f32.mrf.mxu0
      %v942 = vadd.f32 0.0, %v941
      %943 = vmatmul.f32.gmra.mxu0 %v872
      %v944 = vpop.f32.mrf.mxu0
      %v945 = vadd.f32 0.0, %v944
      %946 = vmatmul.f32.gmra.mxu0 %v874
      %v947 = vpop.f32.mrf.mxu0
      %v948 = vadd.f32 0.0, %v947
      %949 = vdwg.mxu0
      %v950 = vadd.f32 %v782, %v897
      %v951 = vadd.f32 %v783, %v900
      %v952 = vadd.f32 %v784, %v903
      %v953 = vadd.f32 %v785, %v906
      %v954 = vadd.f32 %v786, %v909
      %v955 = vadd.f32 %v787, %v912
      %v956 = vadd.f32 %v788, %v915
      %v957 = vadd.f32 %v789, %v918
      %v958 = vadd.f32 %v790, %v921
      %v959 = vadd.f32 %v791, %v924
      %v960 = vadd.f32 %v792, %v927
      %v961 = vadd.f32 %v793, %v930
      %v962 = vadd.f32 %v794, %v933
      %v963 = vadd.f32 %v795, %v936
      %v964 = vadd.f32 %v796, %v939
      %v965 = vadd.f32 %v797, %v942
      %v966 = vadd.f32 %v798, %v945
      %v967 = vadd.f32 %v799, %v948
      %s968 = scalar_lea.vmem %s1, 20
      %v969 = vld [vmem:[%s968] sm:$0xf]
      %v970 = vrot.slane %v225, 4
      %v971 = vrot.slane %v226, 4
      %v972 = vsel %vm343, %v970, %v971
      %v973 = vrot.slane %v227, 4
      %v974 = vsel %vm343, %v971, %v973
      %v975 = vrot.slane %v228, 4
      %v976 = vsel %vm343, %v973, %v975
      %v977 = vrot.slane %v229, 4
      %v978 = vsel %vm343, %v975, %v977
      %v979 = vrot.slane %v230, 4
      %v980 = vsel %vm343, %v977, %v979
      %v981 = vrot.slane %v231, 4
      %v982 = vsel %vm343, %v979, %v981
      %v983 = vrot.slane %v232, 4
      %v984 = vsel %vm343, %v981, %v983
      %v985 = vrot.slane %v233, 4
      %v986 = vsel %vm343, %v983, %v985
      %v987 = vrot.slane %v234, 4
      %v988 = vsel %vm343, %v985, %v987
      %v989 = vrot.slane %v235, 4
      %v990 = vsel %vm343, %v987, %v989
      %v991 = vrot.slane %v236, 4
      %v992 = vsel %vm343, %v989, %v991
      %v993 = vrot.slane %v237, 4
      %v994 = vsel %vm343, %v991, %v993
      %v995 = vrot.slane %v238, 4
      %v996 = vsel %vm343, %v993, %v995
      %v997 = vrot.slane %v239, 4
      %v998 = vsel %vm343, %v995, %v997
      %v999 = vrot.slane %v240, 4
      %v1000 = vsel %vm343, %v997, %v999
      %v1001 = vrot.slane %v241, 4
      %v1002 = vsel %vm343, %v999, %v1001
      %v1003 = vrot.slane %v242, 4
      %v1004 = vsel %vm343, %v1001, %v1003
      %v1005 = vrot.slane %v243, 4
      %v1006 = vsel %vm343, %v1003, %v1005
      %v1007 = vsel %vm306, %v972, 0
      %v1009 = vsel %vm306, %v974, 0
      %v1011 = vsel %vm306, %v976, 0
      %v1013 = vsel %vm306, %v978, 0
      %v1015 = vsel %vm306, %v980, 0
      %v1017 = vsel %vm306, %v982, 0
      %v1019 = vsel %vm306, %v984, 0
      %v1021 = vsel %vm306, %v986, 0
      %v1023 = vsel %vm306, %v988, 0
      %v1025 = vsel %vm306, %v990, 0
      %v1027 = vsel %vm306, %v992, 0
      %v1029 = vsel %vm306, %v994, 0
      %v1031 = vsel %vm306, %v996, 0
      %v1033 = vsel %vm306, %v998, 0
      %v1035 = vsel %vm306, %v1000, 0
      %v1037 = vsel %vm306, %v1002, 0
      %v1039 = vsel %vm306, %v1004, 0
      %v1041 = vsel %vm306, %v1006, 0
      %v1044 = vsel %vm343, %v969, 0
      %1046 = vmatpush.msra.mxu0 0.0
      %1047 = vmatpush.msra.mxu0 0.0
      %1048 = vmatpush.msra.mxu0 0.0
      %1049 = vmatpush.msra.mxu0 0.0
      %1050 = vmatpush.msra.mxu0 0.0
      %1051 = vmatpush.msra.mxu0 0.0
      %1052 = vmatpush.msra.mxu0 0.0
      %1053 = vmatpush.msra.mxu0 0.0
      %1054 = vmatpush.msra.mxu0 0.0
      %1055 = vmatpush.msra.mxu0 0.0
      %1056 = vmatpush.msra.mxu0 0.0
      %1057 = vmatpush.msra.mxu0 0.0
      %1058 = vmatpush.msra.mxu0 0.0
      %1059 = vmatpush.msra.mxu0 0.0
      %1060 = vmatpush.msra.mxu0 0.0
      %1061 = vmatpush.msra.mxu0 %v1044
      %1062 = vmatmul.f32.gmra.mxu0 %v1007
      %v1063 = vpop.f32.mrf.mxu0
      %v1064 = vadd.f32 0.0, %v1063
      %1065 = vmatmul.f32.gmra.mxu0 %v1009
      %v1066 = vpop.f32.mrf.mxu0
      %v1067 = vadd.f32 0.0, %v1066
      %1068 = vmatmul.f32.gmra.mxu0 %v1011
      %v1069 = vpop.f32.mrf.mxu0
      %v1070 = vadd.f32 0.0, %v1069
      %1071 = vmatmul.f32.gmra.mxu0 %v1013
      %v1072 = vpop.f32.mrf.mxu0
      %v1073 = vadd.f32 0.0, %v1072
      %1074 = vmatmul.f32.gmra.mxu0 %v1015
      %v1075 = vpop.f32.mrf.mxu0
      %v1076 = vadd.f32 0.0, %v1075
      %1077 = vmatmul.f32.gmra.mxu0 %v1017
      %v1078 = vpop.f32.mrf.mxu0
      %v1079 = vadd.f32 0.0, %v1078
      %1080 = vmatmul.f32.gmra.mxu0 %v1019
      %v1081 = vpop.f32.mrf.mxu0
      %v1082 = vadd.f32 0.0, %v1081
      %1083 = vmatmul.f32.gmra.mxu0 %v1021
      %v1084 = vpop.f32.mrf.mxu0
      %v1085 = vadd.f32 0.0, %v1084
      %1086 = vmatmul.f32.gmra.mxu0 %v1023
      %v1087 = vpop.f32.mrf.mxu0
      %v1088 = vadd.f32 0.0, %v1087
      %1089 = vmatmul.f32.gmra.mxu0 %v1025
      %v1090 = vpop.f32.mrf.mxu0
      %v1091 = vadd.f32 0.0, %v1090
      %1092 = vmatmul.f32.gmra.mxu0 %v1027
      %v1093 = vpop.f32.mrf.mxu0
      %v1094 = vadd.f32 0.0, %v1093
      %1095 = vmatmul.f32.gmra.mxu0 %v1029
      %v1096 = vpop.f32.mrf.mxu0
      %v1097 = vadd.f32 0.0, %v1096
      %1098 = vmatmul.f32.gmra.mxu0 %v1031
      %v1099 = vpop.f32.mrf.mxu0
      %v1100 = vadd.f32 0.0, %v1099
      %1101 = vmatmul.f32.gmra.mxu0 %v1033
      %v1102 = vpop.f32.mrf.mxu0
      %v1103 = vadd.f32 0.0, %v1102
      %1104 = vmatmul.f32.gmra.mxu0 %v1035
      %v1105 = vpop.f32.mrf.mxu0
      %v1106 = vadd.f32 0.0, %v1105
      %1107 = vmatmul.f32.gmra.mxu0 %v1037
      %v1108 = vpop.f32.mrf.mxu0
      %v1109 = vadd.f32 0.0, %v1108
      %1110 = vmatmul.f32.gmra.mxu0 %v1039
      %v1111 = vpop.f32.mrf.mxu0
      %v1112 = vadd.f32 0.0, %v1111
      %1113 = vmatmul.f32.gmra.mxu0 %v1041
      %v1114 = vpop.f32.mrf.mxu0
      %v1115 = vadd.f32 0.0, %v1114
      %1116 = vdwg.mxu0
      %v1117 = vadd.f32 %v950, %v1064
      %v1118 = vadd.f32 %v951, %v1067
      %v1119 = vadd.f32 %v952, %v1070
      %v1120 = vadd.f32 %v953, %v1073
      %v1121 = vadd.f32 %v954, %v1076
      %v1122 = vadd.f32 %v955, %v1079
      %v1123 = vadd.f32 %v956, %v1082
      %v1124 = vadd.f32 %v957, %v1085
      %v1125 = vadd.f32 %v958, %v1088
      %v1126 = vadd.f32 %v959, %v1091
      %v1127 = vadd.f32 %v960, %v1094
      %v1128 = vadd.f32 %v961, %v1097
      %v1129 = vadd.f32 %v962, %v1100
      %v1130 = vadd.f32 %v963, %v1103
      %v1131 = vadd.f32 %v964, %v1106
      %v1132 = vadd.f32 %v965, %v1109
      %v1133 = vadd.f32 %v966, %v1112
      %v1134 = vadd.f32 %v967, %v1115
      %s1135 = scalar_lea.vmem %s1, 24
      %v1136 = vld [vmem:[%s1135] sm:$0xf]
      %v1139 = vrot.slane %v244, 4
      %v1140 = vsel %vm343, %v1005, %v1139
      %v1141 = vrot.slane %v245, 4
      %v1142 = vsel %vm343, %v1139, %v1141
      %v1143 = vsel %vm306, %v1140, 0
      %v1145 = vsel %vm306, %v1142, 0
      %v1148 = vsel %vm343, %v1136, 0
      %1150 = vmatpush.msra.mxu0 0.0
      %1151 = vmatpush.msra.mxu0 0.0
      %1152 = vmatpush.msra.mxu0 0.0
      %1153 = vmatpush.msra.mxu0 0.0
      %1154 = vmatpush.msra.mxu0 0.0
      %1155 = vmatpush.msra.mxu0 0.0
      %1156 = vmatpush.msra.mxu0 0.0
      %1157 = vmatpush.msra.mxu0 0.0
      %1158 = vmatpush.msra.mxu0 0.0
      %1159 = vmatpush.msra.mxu0 0.0
      %1160 = vmatpush.msra.mxu0 0.0
      %1161 = vmatpush.msra.mxu0 0.0
      %1162 = vmatpush.msra.mxu0 0.0
      %1163 = vmatpush.msra.mxu0 0.0
      %1164 = vmatpush.msra.mxu0 0.0
      %1165 = vmatpush.msra.mxu0 %v1148
      %1166 = vmatmul.f32.gmra.mxu0 %v1011
      %v1167 = vpop.f32.mrf.mxu0
      %v1168 = vadd.f32 0.0, %v1167
      %1169 = vmatmul.f32.gmra.mxu0 %v1013
      %v1170 = vpop.f32.mrf.mxu0
      %v1171 = vadd.f32 0.0, %v1170
      %1172 = vmatmul.f32.gmra.mxu0 %v1015
      %v1173 = vpop.f32.mrf.mxu0
      %v1174 = vadd.f32 0.0, %v1173
      %1175 = vmatmul.f32.gmra.mxu0 %v1017
      %v1176 = vpop.f32.mrf.mxu0
      %v1177 = vadd.f32 0.0, %v1176
      %1178 = vmatmul.f32.gmra.mxu0 %v1019
      %v1179 = vpop.f32.mrf.mxu0
      %v1180 = vadd.f32 0.0, %v1179
      %1181 = vmatmul.f32.gmra.mxu0 %v1021
      %v1182 = vpop.f32.mrf.mxu0
      %v1183 = vadd.f32 0.0, %v1182
      %1184 = vmatmul.f32.gmra.mxu0 %v1023
      %v1185 = vpop.f32.mrf.mxu0
      %v1186 = vadd.f32 0.0, %v1185
      %1187 = vmatmul.f32.gmra.mxu0 %v1025
      %v1188 = vpop.f32.mrf.mxu0
      %v1189 = vadd.f32 0.0, %v1188
      %1190 = vmatmul.f32.gmra.mxu0 %v1027
      %v1191 = vpop.f32.mrf.mxu0
      %v1192 = vadd.f32 0.0, %v1191
      %1193 = vmatmul.f32.gmra.mxu0 %v1029
      %v1194 = vpop.f32.mrf.mxu0
      %v1195 = vadd.f32 0.0, %v1194
      %1196 = vmatmul.f32.gmra.mxu0 %v1031
      %v1197 = vpop.f32.mrf.mxu0
      %v1198 = vadd.f32 0.0, %v1197
      %1199 = vmatmul.f32.gmra.mxu0 %v1033
      %v1200 = vpop.f32.mrf.mxu0
      %v1201 = vadd.f32 0.0, %v1200
      %1202 = vmatmul.f32.gmra.mxu0 %v1035
      %v1203 = vpop.f32.mrf.mxu0
      %v1204 = vadd.f32 0.0, %v1203
      %1205 = vmatmul.f32.gmra.mxu0 %v1037
      %v1206 = vpop.f32.mrf.mxu0
      %v1207 = vadd.f32 0.0, %v1206
      %1208 = vmatmul.f32.gmra.mxu0 %v1039
      %v1209 = vpop.f32.mrf.mxu0
      %v1210 = vadd.f32 0.0, %v1209
      %1211 = vmatmul.f32.gmra.mxu0 %v1041
      %v1212 = vpop.f32.mrf.mxu0
      %v1213 = vadd.f32 0.0, %v1212
      %1214 = vmatmul.f32.gmra.mxu0 %v1143
      %v1215 = vpop.f32.mrf.mxu0
      %v1216 = vadd.f32 0.0, %v1215
      %1217 = vmatmul.f32.gmra.mxu0 %v1145
      %v1218 = vpop.f32.mrf.mxu0
      %v1219 = vadd.f32 0.0, %v1218
      %1220 = vdwg.mxu0
      %v1221 = vadd.f32 %v1117, %v1168
      %v1222 = vadd.f32 %v1118, %v1171
      %v1223 = vadd.f32 %v1119, %v1174
      %v1224 = vadd.f32 %v1120, %v1177
      %v1225 = vadd.f32 %v1121, %v1180
      %v1226 = vadd.f32 %v1122, %v1183
      %v1227 = vadd.f32 %v1123, %v1186
      %v1228 = vadd.f32 %v1124, %v1189
      %v1229 = vadd.f32 %v1125, %v1192
      %v1230 = vadd.f32 %v1126, %v1195
      %v1231 = vadd.f32 %v1127, %v1198
      %v1232 = vadd.f32 %v1128, %v1201
      %v1233 = vadd.f32 %v1129, %v1204
      %v1234 = vadd.f32 %v1130, %v1207
      %v1235 = vadd.f32 %v1131, %v1210
      %v1236 = vadd.f32 %v1132, %v1213
      %v1237 = vadd.f32 %v1133, %v1216
      %v1238 = vadd.f32 %v1134, %v1219
      %s1239 = scalar_lea.vmem %s1, 28
      %v1240 = vld [vmem:[%s1239] sm:$0xf]
      %vm1241 = vcmask 1042432
      %v1242 = vrot.slane %v227, 5
      %v1243 = vrot.slane %v228, 5
      %v1244 = vsel %vm1241, %v1242, %v1243
      %v1245 = vrot.slane %v229, 5
      %v1246 = vsel %vm1241, %v1243, %v1245
      %v1247 = vrot.slane %v230, 5
      %v1248 = vsel %vm1241, %v1245, %v1247
      %v1249 = vrot.slane %v231, 5
      %v1250 = vsel %vm1241, %v1247, %v1249
      %v1251 = vrot.slane %v232, 5
      %v1252 = vsel %vm1241, %v1249, %v1251
      %v1253 = vrot.slane %v233, 5
      %v1254 = vsel %vm1241, %v1251, %v1253
      %v1255 = vrot.slane %v234, 5
      %v1256 = vsel %vm1241, %v1253, %v1255
      %v1257 = vrot.slane %v235, 5
      %v1258 = vsel %vm1241, %v1255, %v1257
      %v1259 = vrot.slane %v236, 5
      %v1260 = vsel %vm1241, %v1257, %v1259
      %v1261 = vrot.slane %v237, 5
      %v1262 = vsel %vm1241, %v1259, %v1261
      %v1263 = vrot.slane %v238, 5
      %v1264 = vsel %vm1241, %v1261, %v1263
      %v1265 = vrot.slane %v239, 5
      %v1266 = vsel %vm1241, %v1263, %v1265
      %v1267 = vrot.slane %v240, 5
      %v1268 = vsel %vm1241, %v1265, %v1267
      %v1269 = vrot.slane %v241, 5
      %v1270 = vsel %vm1241, %v1267, %v1269
      %v1271 = vrot.slane %v242, 5
      %v1272 = vsel %vm1241, %v1269, %v1271
      %v1273 = vrot.slane %v243, 5
      %v1274 = vsel %vm1241, %v1271, %v1273
      %v1275 = vrot.slane %v244, 5
      %v1276 = vsel %vm1241, %v1273, %v1275
      %v1277 = vrot.slane %v245, 5
      %v1278 = vsel %vm1241, %v1275, %v1277
      %v1279 = vsel %vm306, %v1244, 0
      %v1281 = vsel %vm306, %v1246, 0
      %v1283 = vsel %vm306, %v1248, 0
      %v1285 = vsel %vm306, %v1250, 0
      %v1287 = vsel %vm306, %v1252, 0
      %v1289 = vsel %vm306, %v1254, 0
      %v1291 = vsel %vm306, %v1256, 0
      %v1293 = vsel %vm306, %v1258, 0
      %v1295 = vsel %vm306, %v1260, 0
      %v1297 = vsel %vm306, %v1262, 0
      %v1299 = vsel %vm306, %v1264, 0
      %v1301 = vsel %vm306, %v1266, 0
      %v1303 = vsel %vm306, %v1268, 0
      %v1305 = vsel %vm306, %v1270, 0
      %v1307 = vsel %vm306, %v1272, 0
      %v1309 = vsel %vm306, %v1274, 0
      %v1311 = vsel %vm306, %v1276, 0
      %v1313 = vsel %vm306, %v1278, 0
      %v1316 = vsel %vm343, %v1240, 0
      %1318 = vmatpush.msra.mxu0 0.0
      %1319 = vmatpush.msra.mxu0 0.0
      %1320 = vmatpush.msra.mxu0 0.0
      %1321 = vmatpush.msra.mxu0 0.0
      %1322 = vmatpush.msra.mxu0 0.0
      %1323 = vmatpush.msra.mxu0 0.0
      %1324 = vmatpush.msra.mxu0 0.0
      %1325 = vmatpush.msra.mxu0 0.0
      %1326 = vmatpush.msra.mxu0 0.0
      %1327 = vmatpush.msra.mxu0 0.0
      %1328 = vmatpush.msra.mxu0 0.0
      %1329 = vmatpush.msra.mxu0 0.0
      %1330 = vmatpush.msra.mxu0 0.0
      %1331 = vmatpush.msra.mxu0 0.0
      %1332 = vmatpush.msra.mxu0 0.0
      %1333 = vmatpush.msra.mxu0 %v1316
      %1334 = vmatmul.f32.gmra.mxu0 %v1279
      %v1335 = vpop.f32.mrf.mxu0
      %v1336 = vadd.f32 0.0, %v1335
      %1337 = vmatmul.f32.gmra.mxu0 %v1281
      %v1338 = vpop.f32.mrf.mxu0
      %v1339 = vadd.f32 0.0, %v1338
      %1340 = vmatmul.f32.gmra.mxu0 %v1283
      %v1341 = vpop.f32.mrf.mxu0
      %v1342 = vadd.f32 0.0, %v1341
      %1343 = vmatmul.f32.gmra.mxu0 %v1285
      %v1344 = vpop.f32.mrf.mxu0
      %v1345 = vadd.f32 0.0, %v1344
      %1346 = vmatmul.f32.gmra.mxu0 %v1287
      %v1347 = vpop.f32.mrf.mxu0
      %v1348 = vadd.f32 0.0, %v1347
      %1349 = vmatmul.f32.gmra.mxu0 %v1289
      %v1350 = vpop.f32.mrf.mxu0
      %v1351 = vadd.f32 0.0, %v1350
      %1352 = vmatmul.f32.gmra.mxu0 %v1291
      %v1353 = vpop.f32.mrf.mxu0
      %v1354 = vadd.f32 0.0, %v1353
      %1355 = vmatmul.f32.gmra.mxu0 %v1293
      %v1356 = vpop.f32.mrf.mxu0
      %v1357 = vadd.f32 0.0, %v1356
      %1358 = vmatmul.f32.gmra.mxu0 %v1295
      %v1359 = vpop.f32.mrf.mxu0
      %v1360 = vadd.f32 0.0, %v1359
      %1361 = vmatmul.f32.gmra.mxu0 %v1297
      %v1362 = vpop.f32.mrf.mxu0
      %v1363 = vadd.f32 0.0, %v1362
      %1364 = vmatmul.f32.gmra.mxu0 %v1299
      %v1365 = vpop.f32.mrf.mxu0
      %v1366 = vadd.f32 0.0, %v1365
      %1367 = vmatmul.f32.gmra.mxu0 %v1301
      %v1368 = vpop.f32.mrf.mxu0
      %v1369 = vadd.f32 0.0, %v1368
      %1370 = vmatmul.f32.gmra.mxu0 %v1303
      %v1371 = vpop.f32.mrf.mxu0
      %v1372 = vadd.f32 0.0, %v1371
      %1373 = vmatmul.f32.gmra.mxu0 %v1305
      %v1374 = vpop.f32.mrf.mxu0
      %v1375 = vadd.f32 0.0, %v1374
      %1376 = vmatmul.f32.gmra.mxu0 %v1307
      %v1377 = vpop.f32.mrf.mxu0
      %v1378 = vadd.f32 0.0, %v1377
      %1379 = vmatmul.f32.gmra.mxu0 %v1309
      %v1380 = vpop.f32.mrf.mxu0
      %v1381 = vadd.f32 0.0, %v1380
      %1382 = vmatmul.f32.gmra.mxu0 %v1311
      %v1383 = vpop.f32.mrf.mxu0
      %v1384 = vadd.f32 0.0, %v1383
      %1385 = vmatmul.f32.gmra.mxu0 %v1313
      %v1386 = vpop.f32.mrf.mxu0
      %v1387 = vadd.f32 0.0, %v1386
      %1388 = vdwg.mxu0
      %v1389 = vadd.f32 %v1221, %v1336
      %v1390 = vadd.f32 %v1222, %v1339
      %v1391 = vadd.f32 %v1223, %v1342
      %v1392 = vadd.f32 %v1224, %v1345
      %v1393 = vadd.f32 %v1225, %v1348
      %v1394 = vadd.f32 %v1226, %v1351
      %v1395 = vadd.f32 %v1227, %v1354
      %v1396 = vadd.f32 %v1228, %v1357
      %v1397 = vadd.f32 %v1229, %v1360
      %v1398 = vadd.f32 %v1230, %v1363
      %v1399 = vadd.f32 %v1231, %v1366
      %v1400 = vadd.f32 %v1232, %v1369
      %v1401 = vadd.f32 %v1233, %v1372
      %v1402 = vadd.f32 %v1234, %v1375
      %v1403 = vadd.f32 %v1235, %v1378
      %v1404 = vadd.f32 %v1236, %v1381
      %v1405 = vadd.f32 %v1237, %v1384
      %v1406 = vadd.f32 %v1238, %v1387
      %s1407 = scalar_lea.vmem %s1, 32
      %v1408 = vld [vmem:[%s1407] sm:$0xf]
      %vm1409 = vcmask 1041408
      %v1410 = vrot.slane %v227, 6
      %v1411 = vrot.slane %v228, 6
      %v1412 = vsel %vm1409, %v1410, %v1411
      %v1413 = vrot.slane %v229, 6
      %v1414 = vsel %vm1409, %v1411, %v1413
      %v1415 = vrot.slane %v230, 6
      %v1416 = vsel %vm1409, %v1413, %v1415
      %v1417 = vrot.slane %v231, 6
      %v1418 = vsel %vm1409, %v1415, %v1417
      %v1419 = vrot.slane %v232, 6
      %v1420 = vsel %vm1409, %v1417, %v1419
      %v1421 = vrot.slane %v233, 6
      %v1422 = vsel %vm1409, %v1419, %v1421
      %v1423 = vrot.slane %v234, 6
      %v1424 = vsel %vm1409, %v1421, %v1423
      %v1425 = vrot.slane %v235, 6
      %v1426 = vsel %vm1409, %v1423, %v1425
      %v1427 = vrot.slane %v236, 6
      %v1428 = vsel %vm1409, %v1425, %v1427
      %v1429 = vrot.slane %v237, 6
      %v1430 = vsel %vm1409, %v1427, %v1429
      %v1431 = vrot.slane %v238, 6
      %v1432 = vsel %vm1409, %v1429, %v1431
      %v1433 = vrot.slane %v239, 6
      %v1434 = vsel %vm1409, %v1431, %v1433
      %v1435 = vrot.slane %v240, 6
      %v1436 = vsel %vm1409, %v1433, %v1435
      %v1437 = vrot.slane %v241, 6
      %v1438 = vsel %vm1409, %v1435, %v1437
      %v1439 = vrot.slane %v242, 6
      %v1440 = vsel %vm1409, %v1437, %v1439
      %v1441 = vrot.slane %v243, 6
      %v1442 = vsel %vm1409, %v1439, %v1441
      %v1443 = vrot.slane %v244, 6
      %v1444 = vsel %vm1409, %v1441, %v1443
      %v1445 = vrot.slane %v245, 6
      %v1446 = vsel %vm1409, %v1443, %v1445
      %v1447 = vsel %vm306, %v1412, 0
      %v1449 = vsel %vm306, %v1414, 0
      %v1451 = vsel %vm306, %v1416, 0
      %v1453 = vsel %vm306, %v1418, 0
      %v1455 = vsel %vm306, %v1420, 0
      %v1457 = vsel %vm306, %v1422, 0
      %v1459 = vsel %vm306, %v1424, 0
      %v1461 = vsel %vm306, %v1426, 0
      %v1463 = vsel %vm306, %v1428, 0
      %v1465 = vsel %vm306, %v1430, 0
      %v1467 = vsel %vm306, %v1432, 0
      %v1469 = vsel %vm306, %v1434, 0
      %v1471 = vsel %vm306, %v1436, 0
      %v1473 = vsel %vm306, %v1438, 0
      %v1475 = vsel %vm306, %v1440, 0
      %v1477 = vsel %vm306, %v1442, 0
      %v1479 = vsel %vm306, %v1444, 0
      %v1481 = vsel %vm306, %v1446, 0
      %v1484 = vsel %vm343, %v1408, 0
      %1486 = vmatpush.msra.mxu0 0.0
      %1487 = vmatpush.msra.mxu0 0.0
      %1488 = vmatpush.msra.mxu0 0.0
      %1489 = vmatpush.msra.mxu0 0.0
      %1490 = vmatpush.msra.mxu0 0.0
      %1491 = vmatpush.msra.mxu0 0.0
      %1492 = vmatpush.msra.mxu0 0.0
      %1493 = vmatpush.msra.mxu0 0.0
      %1494 = vmatpush.msra.mxu0 0.0
      %1495 = vmatpush.msra.mxu0 0.0
      %1496 = vmatpush.msra.mxu0 0.0
      %1497 = vmatpush.msra.mxu0 0.0
      %1498 = vmatpush.msra.mxu0 0.0
      %1499 = vmatpush.msra.mxu0 0.0
      %1500 = vmatpush.msra.mxu0 0.0
      %1501 = vmatpush.msra.mxu0 %v1484
      %1502 = vmatmul.f32.gmra.mxu0 %v1447
      %v1503 = vpop.f32.mrf.mxu0
      %v1504 = vadd.f32 0.0, %v1503
      %1505 = vmatmul.f32.gmra.mxu0 %v1449
      %v1506 = vpop.f32.mrf.mxu0
      %v1507 = vadd.f32 0.0, %v1506
      %1508 = vmatmul.f32.gmra.mxu0 %v1451
      %v1509 = vpop.f32.mrf.mxu0
      %v1510 = vadd.f32 0.0, %v1509
      %1511 = vmatmul.f32.gmra.mxu0 %v1453
      %v1512 = vpop.f32.mrf.mxu0
      %v1513 = vadd.f32 0.0, %v1512
      %1514 = vmatmul.f32.gmra.mxu0 %v1455
      %v1515 = vpop.f32.mrf.mxu0
      %v1516 = vadd.f32 0.0, %v1515
      %1517 = vmatmul.f32.gmra.mxu0 %v1457
      %v1518 = vpop.f32.mrf.mxu0
      %v1519 = vadd.f32 0.0, %v1518
      %1520 = vmatmul.f32.gmra.mxu0 %v1459
      %v1521 = vpop.f32.mrf.mxu0
      %v1522 = vadd.f32 0.0, %v1521
      %1523 = vmatmul.f32.gmra.mxu0 %v1461
      %v1524 = vpop.f32.mrf.mxu0
      %v1525 = vadd.f32 0.0, %v1524
      %1526 = vmatmul.f32.gmra.mxu0 %v1463
      %v1527 = vpop.f32.mrf.mxu0
      %v1528 = vadd.f32 0.0, %v1527
      %1529 = vmatmul.f32.gmra.mxu0 %v1465
      %v1530 = vpop.f32.mrf.mxu0
      %v1531 = vadd.f32 0.0, %v1530
      %1532 = vmatmul.f32.gmra.mxu0 %v1467
      %v1533 = vpop.f32.mrf.mxu0
      %v1534 = vadd.f32 0.0, %v1533
      %1535 = vmatmul.f32.gmra.mxu0 %v1469
      %v1536 = vpop.f32.mrf.mxu0
      %v1537 = vadd.f32 0.0, %v1536
      %1538 = vmatmul.f32.gmra.mxu0 %v1471
      %v1539 = vpop.f32.mrf.mxu0
      %v1540 = vadd.f32 0.0, %v1539
      %1541 = vmatmul.f32.gmra.mxu0 %v1473
      %v1542 = vpop.f32.mrf.mxu0
      %v1543 = vadd.f32 0.0, %v1542
      %1544 = vmatmul.f32.gmra.mxu0 %v1475
      %v1545 = vpop.f32.mrf.mxu0
      %v1546 = vadd.f32 0.0, %v1545
      %1547 = vmatmul.f32.gmra.mxu0 %v1477
      %v1548 = vpop.f32.mrf.mxu0
      %v1549 = vadd.f32 0.0, %v1548
      %1550 = vmatmul.f32.gmra.mxu0 %v1479
      %v1551 = vpop.f32.mrf.mxu0
      %v1552 = vadd.f32 0.0, %v1551
      %1553 = vmatmul.f32.gmra.mxu0 %v1481
      %v1554 = vpop.f32.mrf.mxu0
      %v1555 = vadd.f32 0.0, %v1554
      %1556 = vdwg.mxu0
      %v1557 = vadd.f32 %v1389, %v1504
      %v1558 = vadd.f32 %v1390, %v1507
      %v1559 = vadd.f32 %v1391, %v1510
      %v1560 = vadd.f32 %v1392, %v1513
      %v1561 = vadd.f32 %v1393, %v1516
      %v1562 = vadd.f32 %v1394, %v1519
      %v1563 = vadd.f32 %v1395, %v1522
      %v1564 = vadd.f32 %v1396, %v1525
      %v1565 = vadd.f32 %v1397, %v1528
      %v1566 = vadd.f32 %v1398, %v1531
      %v1567 = vadd.f32 %v1399, %v1534
      %v1568 = vadd.f32 %v1400, %v1537
      %v1569 = vadd.f32 %v1401, %v1540
      %v1570 = vadd.f32 %v1402, %v1543
      %v1571 = vadd.f32 %v1403, %v1546
      %v1572 = vadd.f32 %v1404, %v1549
      %v1573 = vadd.f32 %v1405, %v1552
      %v1574 = vadd.f32 %v1406, %v1555
      %v1575 = vld [vmem:[%s2] sm:$0x1]
      %v1577 = vperm.slane %v1575, 0
      %v1579 = vmul.f32 %v1557, %v1577
      %v1580 = vmul.f32 %v1558, %v1577
      %v1581 = vmul.f32 %v1559, %v1577
      %v1582 = vmul.f32 %v1560, %v1577
      %v1583 = vmul.f32 %v1561, %v1577
      %v1584 = vmul.f32 %v1562, %v1577
      %v1585 = vmul.f32 %v1563, %v1577
      %v1586 = vmul.f32 %v1564, %v1577
      %v1587 = vmul.f32 %v1565, %v1577
      %v1588 = vmul.f32 %v1566, %v1577
      %v1589 = vmul.f32 %v1567, %v1577
      %v1590 = vmul.f32 %v1568, %v1577
      %v1591 = vmul.f32 %v1569, %v1577
      %v1592 = vmul.f32 %v1570, %v1577
      %v1593 = vmul.f32 %v1571, %v1577
      %v1594 = vmul.f32 %v1572, %v1577
      %v1595 = vmul.f32 %v1573, %v1577
      %v1596 = vmul.f32 %v1574, %v1577
      %v1597 = vld [vmem:[%s3] sm:$0x1]
      %v1599 = vperm.slane %v1597, 0
      %v1601 = vadd.f32 %v1579, %v1599
      %v1602 = vadd.f32 %v1580, %v1599
      %v1603 = vadd.f32 %v1581, %v1599
      %v1604 = vadd.f32 %v1582, %v1599
      %v1605 = vadd.f32 %v1583, %v1599
      %v1606 = vadd.f32 %v1584, %v1599
      %v1607 = vadd.f32 %v1585, %v1599
      %v1608 = vadd.f32 %v1586, %v1599
      %v1609 = vadd.f32 %v1587, %v1599
      %v1610 = vadd.f32 %v1588, %v1599
      %v1611 = vadd.f32 %v1589, %v1599
      %v1612 = vadd.f32 %v1590, %v1599
      %v1613 = vadd.f32 %v1591, %v1599
      %v1614 = vadd.f32 %v1592, %v1599
      %v1615 = vadd.f32 %v1593, %v1599
      %v1616 = vadd.f32 %v1594, %v1599
      %v1617 = vadd.f32 %v1595, %v1599
      %v1618 = vadd.f32 %v1596, %v1599
      %v1619 = vmax.f32 %v1601, 0.0
      %v1620 = vmax.f32 %v1602, 0.0
      %v1621 = vmax.f32 %v1603, 0.0
      %v1622 = vmax.f32 %v1604, 0.0
      %v1623 = vmax.f32 %v1605, 0.0
      %v1624 = vmax.f32 %v1606, 0.0
      %v1625 = vmax.f32 %v1607, 0.0
      %v1626 = vmax.f32 %v1608, 0.0
      %v1627 = vmax.f32 %v1609, 0.0
      %v1628 = vmax.f32 %v1610, 0.0
      %v1629 = vmax.f32 %v1611, 0.0
      %v1630 = vmax.f32 %v1612, 0.0
      %v1631 = vmax.f32 %v1613, 0.0
      %v1632 = vmax.f32 %v1614, 0.0
      %v1633 = vmax.f32 %v1615, 0.0
      %v1634 = vmax.f32 %v1616, 0.0
      %v1635 = vmax.f32 %v1617, 0.0
      %v1636 = vmax.f32 %v1618, 0.0
      %1637 = vst [vmem:[%s219] sm:$0xff] %v1619
      %1638 = vst [vmem:[%s219 + $0x8] sm:$0xff] %v1620
      %1639 = vst [vmem:[%s219 + $0x10] sm:$0xff] %v1621
      %1640 = vst [vmem:[%s219 + $0x18] sm:$0xff] %v1622
      %1641 = vst [vmem:[%s219 + $0x20] sm:$0xff] %v1623
      %1642 = vst [vmem:[%s219 + $0x28] sm:$0xff] %v1624
      %1643 = vst [vmem:[%s219 + $0x30] sm:$0xff] %v1625
      %1644 = vst [vmem:[%s219 + $0x38] sm:$0xff] %v1626
      %1645 = vst [vmem:[%s219 + $0x40] sm:$0xff] %v1627
      %1646 = vst [vmem:[%s219 + $0x48] sm:$0xff] %v1628
      %1647 = vst [vmem:[%s219 + $0x50] sm:$0xff] %v1629
      %1648 = vst [vmem:[%s219 + $0x58] sm:$0xff] %v1630
      %1649 = vst [vmem:[%s219 + $0x60] sm:$0xff] %v1631
      %1650 = vst [vmem:[%s219 + $0x68] sm:$0xff] %v1632
      %1651 = vst [vmem:[%s219 + $0x70] sm:$0xff] %v1633
      %1652 = vst [vmem:[%s219 + $0x78] sm:$0xff] %v1634
      %1653 = vst [vmem:[%s219 + $0x80] sm:$0xff] %v1635
      %1654 = vst [vmem:[%s219 + $0x88] sm:$0xff] %v1636
      %s1655 = smul.u32 18, %s20
      %p1656 = scmp.lt.s32.totalorder %s19, 1
      %s1657 = scalar_select %p1656, %s19, 1
      %p1658 = scmp.lt.s32.totalorder %s1655, 35
      %s1659 = scalar_select %p1658, %s1655, 35
      %s1660 = smul.addr %s1657, 36
      %s1661 = sadd.s32 %s1659, %s1660
      %s1662 = smul.addr %s1661, 8
      %s1663 = scalar_lea.vmem %s4, %s1662
      // Predicated region
      $region37: #{_lambda_.4} parent=35 // pred_check
        %p1664 = pneg %p136
      $region38: #{_lambda_.4} parent=35 // pred_check_branch
        %1666 = sbr.rel (%p1664) target = $region40
      $region39: #{_lambda_.4} parent=35 // pred_region
        %s1667 = smul.u32 18, %s20
      $region40: #{_lambda_.4} parent=35 // pred_fallthru
        _
    $region36: #{_lambda_.4} parent=5 // pred_fallthru
      _
    %p1668 = scmp.le.s32.totalorder 2, %s10
    // Predicated region
    $region41: #{_lambda_.4} parent=5 // pred_check
      %p1669 = pneg %p1668
    $region42: #{_lambda_.4} parent=5 // pred_check_branch
      %1671 = sbr.rel (%p1669) target = $region44
    $region43: #{_lambda_.4} parent=5 // pred_region
      %s1672 = ssub.s32 %s10, 2
      // Predicated region
      $region45: #{_lambda_.4} parent=43 // pred_check
        %p1673 = pneg %p142
      $region46: #{_lambda_.4} parent=43 // pred_check_branch
        %1675 = sbr.rel (%p1673) target = $region48
      $region47: #{_lambda_.4} parent=43 // pred_region
        %s1676 = smul.u32 18, %s22
        %p1677 = scmp.lt.s32.totalorder %s21, 1
        %s1678 = scalar_select %p1677, %s21, 1
        %p1679 = scmp.lt.s32.totalorder %s1676, 35
        %s1680 = scalar_select %p1679, %s1676, 35
        %s1681 = smul.addr %s1678, 36
        %s1682 = sadd.s32 %s1680, %s1681
        %s1683 = smul.addr %s1682, 8
        %s1684 = scalar_lea.vmem %s4, %s1683
      $region48: #{_lambda_.4} parent=43 // pred_fallthru
        _
    $region44: #{_lambda_.4} parent=5 // pred_fallthru
      _
  $region6: #{_lambda_.4} parent=0 // loop_footer
    %s14 = sadd.s32 1, %s10
  $region7: #{_lambda_.4} parent=0 // loop_footer_branch
    %9 = sbr.rel target = $region3
  $region8: #{_lambda_.4} parent=0 // loop_exit
    _

</llo_original>
